<compile_context>
chip_gen: v7x
topology: tpu7x:2x2x1
jax: 0.10.0
libtpu: 0.0.40
codegen_flags: <defaults>
</compile_context>

<pallas_src>
import functools

import jax
import jax.numpy as jnp
from jax import lax
from jax.experimental import pallas as pl
from jax.experimental.pallas import tpu as pltpu

SOS_TOKEN = 1

HIDDEN = 32      # H
VOCAB = 64       # V
N_LAYERS = 2     # L (encoder and decoder)
SEQ_LEN = 8      # T
MAX_LENGTH = 10  # greedy decode steps

_F32 = jnp.float32
_BF16 = jnp.bfloat16

# ---- weight-slab row offsets (all 16-row aligned for bf16 sublane tiling) ----
_H, _V = HIDDEN, VOCAB
_R_EGIW0 = 0                        # (V, 6H)    emb @ [Wih0_f | Wih0_b]
_R_EWHH0 = _R_EGIW0 + _V            # (H, 6H)    [Whh0_f | Whh0_b]
_R_EGIW1 = _R_EWHH0 + _H            # (2H, 6H)   [Wih1_f | Wih1_b]
_R_EWHH1 = _R_EGIW1 + 2 * _H        # (H, 6H)    [Whh1_f | Whh1_b]
_R_DRHS = _R_EWHH1 + _H             # (V+2H, 7H) fused decoder step-start RHS
_R_DWIH1 = _R_DRHS + _V + 2 * _H    # (H, 3H)    decoder layer-1 W_ih
_R_WCWO = _R_DWIH1 + _H             # (H, 2H+V)  [Wc_rnn^T | Wc_ctx | Wo]
_W_ROWS = _R_WCWO + _H              # 384
_W_COLS = 7 * _H                    # 224


# ----------------------------- shared GRU math ------------------------------
def _gru_cell(gi, gh, h, H):
    # PyTorch GRU gate order (r, z, n); r/z sigmoids fused into one EUP issue.
    rz = jax.nn.sigmoid(gi[:, :2 * H] + gh[:, :2 * H])
    n = jnp.tanh(gi[:, 2 * H:] + rz[:, :H] * gh[:, 2 * H:])
    z = rz[:, H:]
    return (1.0 - z) * n + z * h


# ------------------------------- fused kernel -------------------------------
def seq2seq_greedy_kernel(seq_ref, h0_ref, w_ref, b_ref, tok_ref, sc_ref):
    H, V = HIDDEN, VOCAB
    H2, H3, H6 = 2 * H, 3 * H, 6 * H
    T = seq_ref.shape[0]
    M = tok_ref.shape[0]
    trans_b = (((1,), (1,)), ((), ()))   # contract on last dim of both operands

    # =============================== encoder ===============================
    enc_giw0 = w_ref[_R_EGIW0:_R_EGIW0 + V, :H6]          # (V, 6H)  bf16
    enc_whh0 = w_ref[_R_EWHH0:_R_EWHH0 + H, :H6]          # (H, 6H)
    enc_giw1 = w_ref[_R_EGIW1:_R_EGIW1 + H2, :H6]         # (2H, 6H)
    enc_whh1 = w_ref[_R_EWHH1:_R_EWHH1 + H, :H6]          # (H, 6H)
    enc_gib0 = b_ref[0:1, :H6]                            # f32 biases
    enc_bhh0 = b_ref[1:2, :H6]
    enc_gib1 = b_ref[2:3, :H6]
    enc_bhh1 = b_ref[3:4, :H6]

    seq = seq_ref[...]                                                # (T, 1)
    onehot_seq = (seq == lax.broadcasted_iota(jnp.int32, (T, V), 1)).astype(_BF16)
    # layer-0 input gates, both directions, emb folded: one MXU issue
    gi0_all = jnp.dot(onehot_seq, enc_giw0, preferred_element_type=_F32) + enc_gib0

    h0 = h0_ref[...]                                                  # (4, H)

    def bidi_layer(gi_all, hfb, whh_pack, bhh_pack):
        # hfb (2,H): row0 = fwd hidden, row1 = bwd hidden.  Both directions'
        # recurrent matmuls packed into ONE MXU issue per timestep; both
        # directions' gate nonlinearities fused into one sigmoid + one tanh.
        fwd = [None] * T
        bwd = [None] * T
        for i in range(T):                      # fully unrolled (T = 8)
            tf, tb = i, T - 1 - i
            gh2 = jnp.dot(hfb.astype(_BF16), whh_pack,
                          preferred_element_type=_F32) + bhh_pack     # (2, 6H)
            gi = jnp.concatenate([gi_all[tf:tf + 1, :H3],
                                  gi_all[tb:tb + 1, H3:]], axis=0)    # (2, 3H)
            gh = jnp.concatenate([gh2[0:1, :H3], gh2[1:2, H3:]], axis=0)
            hfb = _gru_cell(gi, gh, hfb, H)                           # (2, H)
            fwd[tf] = hfb[0:1]
            bwd[tb] = hfb[1:2]
        return jnp.concatenate(fwd, axis=0), jnp.concatenate(bwd, axis=0), hfb

    out0f, out0b, hfin0 = bidi_layer(gi0_all, h0[0:2], enc_whh0, enc_bhh0)

    # layer-1 input gates: single (T,2H)@(2H,6H) matmul (fwd|bwd lane concat)
    out0 = jnp.concatenate([out0f, out0b], axis=1).astype(_BF16)      # (T, 2H)
    gi1_all = jnp.dot(out0, enc_giw1, preferred_element_type=_F32) + enc_gib1
    out1f, out1b, _ = bidi_layer(gi1_all, h0[2:4], enc_whh1, enc_bhh1)

    enc_out_f = out1f + out1b                                         # (T, H)
    enc_out = enc_out_f.astype(_BF16)

    # =============================== decoder ===============================
    dec_rhs = w_ref[_R_DRHS:_R_DRHS + V + H2, :]           # (V+2H, 7H) bf16
    dec_wih1 = w_ref[_R_DWIH1:_R_DWIH1 + H, :H3]           # (H, 3H)
    wc_rnnT = w_ref[_R_WCWO:_R_WCWO + H, :H]               # (H, H)  = Wc[:H].T
    wc_ctx = w_ref[_R_WCWO:_R_WCWO + H, H:H2]              # (H, H)
    wo = w_ref[_R_WCWO:_R_WCWO + H, H2:H2 + V]             # (H, V)
    dec_bF = b_ref[4:5, :]                                 # (1, 7H) fused bias
    dec_gib1 = b_ref[5:6, :H3]
    bc = b_ref[6:7, :H]
    bo = b_ref[7:8, :V]

    # attention + Wc_rnn RHS packed once (no per-step transpose on the chain)
    att_rhs = jnp.concatenate([enc_out_f, wc_rnnT.astype(_F32)],
                              axis=0).astype(_BF16)                   # (T+H, H)

    # decoder_hidden = encoder_hidden[:n_layers] = layer-0 final (fwd, bwd)
    h0d = hfin0[0:1]
    h1d = hfin0[1:2]

    iota_v = lax.broadcasted_iota(jnp.int32, (1, V), 1)
    tok = jnp.full((1, 1), SOS_TOKEN, jnp.int32)

    for step in range(M):                  # fully unrolled greedy decode loop
        # fused step-start matmul: [onehot | h0d | h1d] = (1, 128) against a
        # block RHS giving (rz0_in | gi0_n | gh0_n | gh1) in one MXU issue.
        onehot = (iota_v == tok).astype(_F32)                          # (1, V)
        lhs = jnp.concatenate([onehot, h0d, h1d], axis=1).astype(_BF16)
        res = jnp.dot(lhs, dec_rhs, preferred_element_type=_F32) + dec_bF

        rz0 = jax.nn.sigmoid(res[:, :H2])
        n0 = jnp.tanh(res[:, H2:H3] + rz0[:, :H] * res[:, H3:H3 + H])
        h0d = (1.0 - rz0[:, H:]) * n0 + rz0[:, H:] * h0d
        gh1 = res[:, H3 + H:]                                          # (1, 3H)

        gi1 = jnp.dot(h0d.astype(_BF16), dec_wih1,
                      preferred_element_type=_F32) + dec_gib1
        h1d = _gru_cell(gi1, gh1, h1d, H)
        rnn = h1d                                                      # (1, H)

        # Luong 'dot' attention; scores e and rnn@Wc_rnn in one packed issue
        ar = lax.dot_general(rnn.astype(_BF16), att_rhs, trans_b,
                             preferred_element_type=_F32)              # (1, T+H)
        e = ar[:, :T]
        # no max-subtraction: |e| <= 2H with tanh-bounded GRU states (|h0|<=1)
        w_att = jnp.exp(e)
        w_att = w_att * pl.reciprocal(jnp.sum(w_att, axis=1, keepdims=True),
                                      approx=True)
        ctx = jnp.dot(w_att.astype(_BF16), enc_out,
                      preferred_element_type=_F32)                     # (1, H)
        cat = jnp.tanh(ar[:, T:] + jnp.dot(ctx.astype(_BF16), wc_ctx,
                                           preferred_element_type=_F32) + bc)
        logits = jnp.dot(cat.astype(_BF16), wo, preferred_element_type=_F32) + bo
        logits = logits - jnp.max(logits, axis=1, keepdims=True)
        p = jnp.exp(logits)
        # exact reciprocal so returned scores are a true softmax (<= 1.0)
        p = p * pl.reciprocal(jnp.sum(p, axis=1, keepdims=True))

        # torch.max(output, dim=1): (value, first index on ties)
        score = jnp.max(p, axis=1, keepdims=True)                      # (1, 1)
        tok = jnp.min(jnp.where(p >= score, iota_v, V),
                      axis=1, keepdims=True).astype(jnp.int32)         # (1, 1)

        tok_ref[step:step + 1, :] = tok
        sc_ref[step:step + 1, :] = score


# --------------------------------- wrapper ----------------------------------
def build_params(key, V=VOCAB, H=HIDDEN):
    ks = jax.random.split(key, 16)
    s = 0.1
    nrm = lambda k, shp: (s * jax.random.normal(k, shp)).astype(jnp.float32)
    return dict(
        emb=nrm(ks[0], (V, H)),
        enc_wih0=nrm(ks[1], (2, H, 3 * H)),
        enc_whh0=nrm(ks[2], (2, H, 3 * H)),
        enc_b0=nrm(ks[3], (2, 2, 3 * H)),
        enc_wih1=nrm(ks[4], (2, 2 * H, 3 * H)),
        enc_whh1=nrm(ks[5], (2, H, 3 * H)),
        enc_b1=nrm(ks[6], (2, 2, 3 * H)),
        dec_wih=nrm(ks[7], (2, H, 3 * H)),
        dec_whh=nrm(ks[8], (2, H, 3 * H)),
        dec_b=nrm(ks[9], (2, 2, 3 * H)),
        wc=nrm(ks[10], (2 * H, H)),
        bc=nrm(ks[11], (1, H)),
        wo=nrm(ks[12], (H, V)),
        bo=nrm(ks[13], (1, V)),
    )


def _pad_cols(x, cols):
    return jnp.pad(x, ((0, 0), (0, cols - x.shape[1])))


@functools.partial(jax.jit, static_argnames=("max_length",))
def greedy_search_decode(input_seq, input_length, max_length, hidden, params):
    """Mirrors GreedySearchDecoder.forward (batch = 1, seq-major)."""
    # TODO(synk): pack_padded_sequence masking for input_length < T is not
    # modelled; with batch=1 and input_length == T it is a no-op.
    del input_length
    H, V = HIDDEN, VOCAB
    f32 = jnp.float32
    WC = _W_COLS
    emb = params["emb"]

    # ---- encoder blocks (emb folded into layer-0 input gates, N-packed) ----
    egiw0 = jnp.concatenate([emb @ params["enc_wih0"][0],
                             emb @ params["enc_wih0"][1]], axis=1)      # (V, 6H)
    ewhh0 = jnp.concatenate([params["enc_whh0"][0],
                             params["enc_whh0"][1]], axis=1)            # (H, 6H)
    egiw1 = jnp.concatenate([params["enc_wih1"][0],
                             params["enc_wih1"][1]], axis=1)            # (2H, 6H)
    ewhh1 = jnp.concatenate([params["enc_whh1"][0],
                             params["enc_whh1"][1]], axis=1)            # (H, 6H)

    # ---- decoder fused step-start RHS (V+2H, 7H) block matrix ----
    dgiw0 = emb @ params["dec_wih"][0]                                  # (V, 3H)
    dwhh0 = params["dec_whh"][0]
    dwhh1 = params["dec_whh"][1]
    Z = jnp.zeros
    dec_rhs = jnp.concatenate([
        jnp.concatenate([dgiw0[:, :2 * H], dgiw0[:, 2 * H:],
                         Z((V, H), f32), Z((V, 3 * H), f32)], axis=1),
        jnp.concatenate([dwhh0[:, :2 * H], Z((H, H), f32),
                         dwhh0[:, 2 * H:], Z((H, 3 * H), f32)], axis=1),
        jnp.concatenate([Z((H, 4 * H), f32), dwhh1], axis=1),
    ], axis=0)                                                          # (128, 224)

    wcwo = jnp.concatenate([params["wc"][:H].T, params["wc"][H:],
                            params["wo"]], axis=1)                      # (H, 2H+V)

    # ---- one bf16 weight slab (4 input DMAs total instead of 22) ----
    wslab = jnp.concatenate([
        _pad_cols(egiw0, WC), _pad_cols(ewhh0, WC),
        _pad_cols(egiw1, WC), _pad_cols(ewhh1, WC),
        dec_rhs,
        _pad_cols(params["dec_wih"][1], WC), _pad_cols(wcwo, WC),
    ], axis=0).astype(jnp.bfloat16)                                     # (384, 224)

    # ---- one f32 bias slab (8, 224) ----
    egib0 = jnp.concatenate([params["enc_b0"][0, 0], params["enc_b0"][1, 0]])[None]
    ebhh0 = jnp.concatenate([params["enc_b0"][0, 1], params["enc_b0"][1, 1]])[None]
    egib1 = jnp.concatenate([params["enc_b1"][0, 0], params["enc_b1"][1, 0]])[None]
    ebhh1 = jnp.concatenate([params["enc_b1"][0, 1], params["enc_b1"][1, 1]])[None]
    dgb0, dbhh0 = params["dec_b"][0, 0], params["dec_b"][0, 1]
    dgb1, dbhh1 = params["dec_b"][1, 0], params["dec_b"][1, 1]
    dec_bias_fused = jnp.concatenate(
        [dgb0[:2 * H] + dbhh0[:2 * H], dgb0[2 * H:], dbhh0[2 * H:], dbhh1])[None]
    bslab = jnp.concatenate([
        _pad_cols(egib0, WC), _pad_cols(ebhh0, WC),
        _pad_cols(egib1, WC), _pad_cols(ebhh1, WC),
        dec_bias_fused,
        _pad_cols(dgb1[None], WC), _pad_cols(params["bc"], WC),
        _pad_cols(params["bo"], WC),
    ], axis=0).astype(f32)                                              # (8, 224)

    h0 = hidden.reshape(2 * N_LAYERS, H).astype(f32)

    vmem = pl.BlockSpec(memory_space=pltpu.MemorySpace.VMEM)
    toks, scores = pl.pallas_call(
        seq2seq_greedy_kernel,
        out_shape=(jax.ShapeDtypeStruct((max_length, 1), jnp.int32),
                   jax.ShapeDtypeStruct((max_length, 1), f32)),
        in_specs=[vmem, vmem, vmem, vmem],
        out_specs=(vmem, vmem),
    )(input_seq.astype(jnp.int32), h0, wslab, bslab)

    return toks.reshape(max_length), scores.reshape(max_length)


if __name__ == "__main__":
    key = jax.random.PRNGKey(0)
    k_params, k_seq = jax.random.split(key)

    params = build_params(k_params)
    input_seq = jax.random.randint(k_seq, (SEQ_LEN, 1), 3, VOCAB, dtype=jnp.int32)
    input_length = jnp.int32(SEQ_LEN)
    hidden = jnp.zeros((2 * N_LAYERS, 1, HIDDEN), jnp.float32)

    all_tokens, all_scores = greedy_search_decode(
        input_seq, input_length, MAX_LENGTH, hidden, params)
    jax.block_until_ready((all_tokens, all_scores))

    assert all_tokens.shape == (MAX_LENGTH,) and all_tokens.dtype == jnp.int32
    assert all_scores.shape == (MAX_LENGTH,) and all_scores.dtype == jnp.float32
    assert bool(jnp.all(all_scores > 0.0) & jnp.all(all_scores <= 1.0))
    print("KERNEL_OK")
</pallas_src>

<mosaic_0001>
module attributes {stable_mosaic.version = 11 : i64} {
  func.func @seq2seq_greedy_kernel(%arg0: memref<8x1xi32, #tpu.memory_space<vmem>>, %arg1: memref<4x32xf32, #tpu.memory_space<vmem>>, %arg2: memref<384x224xbf16, #tpu.memory_space<vmem>>, %arg3: memref<8x224xf32, #tpu.memory_space<vmem>>, %arg4: memref<10x1xi32, #tpu.memory_space<vmem>>, %arg5: memref<10x1xf32, #tpu.memory_space<vmem>>) attributes {dimension_semantics = [], scalar_prefetch = 0 : i64, scratch_operands = 0 : i64, tpu.core_type = #tpu.core_type<tc>} {
    %c0 = arith.constant 0 : index
    %c0_0 = arith.constant 0 : index
    %0 = vector.load %arg2[%c0, %c0_0] : memref<384x224xbf16, #tpu.memory_space<vmem>>, vector<64x192xbf16>
    %c64 = arith.constant 64 : index
    %c0_1 = arith.constant 0 : index
    %1 = vector.load %arg2[%c64, %c0_1] : memref<384x224xbf16, #tpu.memory_space<vmem>>, vector<32x192xbf16>
    %c96 = arith.constant 96 : index
    %c0_2 = arith.constant 0 : index
    %2 = vector.load %arg2[%c96, %c0_2] : memref<384x224xbf16, #tpu.memory_space<vmem>>, vector<64x192xbf16>
    %c160 = arith.constant 160 : index
    %c0_3 = arith.constant 0 : index
    %3 = vector.load %arg2[%c160, %c0_3] : memref<384x224xbf16, #tpu.memory_space<vmem>>, vector<32x192xbf16>
    %c0_4 = arith.constant 0 : index
    %c0_5 = arith.constant 0 : index
    %4 = vector.load %arg3[%c0_4, %c0_5] : memref<8x224xf32, #tpu.memory_space<vmem>>, vector<1x192xf32>
    %c1 = arith.constant 1 : index
    %c0_6 = arith.constant 0 : index
    %5 = vector.load %arg3[%c1, %c0_6] : memref<8x224xf32, #tpu.memory_space<vmem>>, vector<1x192xf32>
    %c2 = arith.constant 2 : index
    %c0_7 = arith.constant 0 : index
    %6 = vector.load %arg3[%c2, %c0_7] : memref<8x224xf32, #tpu.memory_space<vmem>>, vector<1x192xf32>
    %c3 = arith.constant 3 : index
    %c0_8 = arith.constant 0 : index
    %7 = vector.load %arg3[%c3, %c0_8] : memref<8x224xf32, #tpu.memory_space<vmem>>, vector<1x192xf32>
    %c0_9 = arith.constant 0 : index
    %c0_10 = arith.constant 0 : index
    %8 = vector.load %arg0[%c0_9, %c0_10] : memref<8x1xi32, #tpu.memory_space<vmem>>, vector<8x1xi32>
    %9 = tpu.iota {dimensions = array<i32: 1>} : vector<8x64xi32>
    %10 = vector.broadcast %8 : vector<8x1xi32> to vector<8x64xi32>
    %11 = arith.cmpi eq, %10, %9 : vector<8x64xi32>
    %12 = arith.extui %11 : vector<8x64xi1> to vector<8x64xi32>
    %13 = arith.sitofp %12 : vector<8x64xi32> to vector<8x64xf32>
    %14 = arith.truncf %13 : vector<8x64xf32> to vector<8x64xbf16>
    %cst = arith.constant dense<0.000000e+00> : vector<8x192xf32>
    %15 = tpu.matmul %14, %0, %cst {dimension_numbers = #tpu.dot_dimension_numbers<[1], [0], [0], [1], [0, 0, 1, 1], [], []>} : vector<8x64xbf16>, vector<64x192xbf16>, vector<8x192xf32> -> vector<8x192xf32>
    %16 = vector.broadcast %4 : vector<1x192xf32> to vector<8x192xf32>
    %17 = arith.addf %15, %16 : vector<8x192xf32>
    %c0_11 = arith.constant 0 : index
    %c0_12 = arith.constant 0 : index
    %18 = vector.load %arg1[%c0_11, %c0_12] : memref<4x32xf32, #tpu.memory_space<vmem>>, vector<4x32xf32>
    %19 = vector.extract_strided_slice %18 {offsets = [0, 0], sizes = [2, 32], strides = [1, 1]} : vector<4x32xf32> to vector<2x32xf32>
    %20 = arith.truncf %19 : vector<2x32xf32> to vector<2x32xbf16>
    %cst_13 = arith.constant dense<0.000000e+00> : vector<2x192xf32>
    %21 = tpu.matmul %20, %1, %cst_13 {dimension_numbers = #tpu.dot_dimension_numbers<[1], [0], [0], [1], [0, 0, 1, 1], [], []>} : vector<2x32xbf16>, vector<32x192xbf16>, vector<2x192xf32> -> vector<2x192xf32>
    %22 = vector.broadcast %5 : vector<1x192xf32> to vector<2x192xf32>
    %23 = arith.addf %21, %22 : vector<2x192xf32>
    %24 = vector.extract_strided_slice %17 {offsets = [0, 0], sizes = [1, 96], strides = [1, 1]} : vector<8x192xf32> to vector<1x96xf32>
    %25 = vector.extract_strided_slice %17 {offsets = [7, 96], sizes = [1, 96], strides = [1, 1]} : vector<8x192xf32> to vector<1x96xf32>
    %26 = tpu.concatenate %24, %25 in 0 : vector<1x96xf32>, vector<1x96xf32> -> vector<2x96xf32>
    %27 = vector.extract_strided_slice %23 {offsets = [0, 0], sizes = [1, 96], strides = [1, 1]} : vector<2x192xf32> to vector<1x96xf32>
    %28 = vector.extract_strided_slice %23 {offsets = [1, 96], sizes = [1, 96], strides = [1, 1]} : vector<2x192xf32> to vector<1x96xf32>
    %29 = tpu.concatenate %27, %28 in 0 : vector<1x96xf32>, vector<1x96xf32> -> vector<2x96xf32>
    %30 = vector.extract_strided_slice %26 {offsets = [0, 0], sizes = [2, 64], strides = [1, 1]} : vector<2x96xf32> to vector<2x64xf32>
    %31 = vector.extract_strided_slice %29 {offsets = [0, 0], sizes = [2, 64], strides = [1, 1]} : vector<2x96xf32> to vector<2x64xf32>
    %32 = arith.addf %30, %31 : vector<2x64xf32>
    %33 = arith.negf %32 : vector<2x64xf32>
    %34 = math.exp %33 : vector<2x64xf32>
    %cst_14 = arith.constant 1.000000e+00 : f32
    %35 = vector.broadcast %cst_14 : f32 to vector<2x64xf32>
    %36 = arith.addf %35, %34 : vector<2x64xf32>
    %37 = arith.divf %35, %36 : vector<2x64xf32>
    %38 = vector.extract_strided_slice %26 {offsets = [0, 64], sizes = [2, 32], strides = [1, 1]} : vector<2x96xf32> to vector<2x32xf32>
    %39 = vector.extract_strided_slice %37 {offsets = [0, 0], sizes = [2, 32], strides = [1, 1]} : vector<2x64xf32> to vector<2x32xf32>
    %40 = vector.extract_strided_slice %29 {offsets = [0, 64], sizes = [2, 32], strides = [1, 1]} : vector<2x96xf32> to vector<2x32xf32>
    %41 = arith.mulf %39, %40 : vector<2x32xf32>
    %42 = arith.addf %38, %41 : vector<2x32xf32>
    %43 = math.tanh %42 : vector<2x32xf32>
    %44 = vector.extract_strided_slice %37 {offsets = [0, 32], sizes = [2, 32], strides = [1, 1]} : vector<2x64xf32> to vector<2x32xf32>
    %cst_15 = arith.constant 1.000000e+00 : f32
    %45 = vector.broadcast %cst_15 : f32 to vector<2x32xf32>
    %46 = arith.subf %45, %44 : vector<2x32xf32>
    %47 = arith.mulf %46, %43 : vector<2x32xf32>
    %48 = arith.mulf %44, %19 : vector<2x32xf32>
    %49 = arith.addf %47, %48 : vector<2x32xf32>
    %50 = vector.extract_strided_slice %49 {offsets = [0, 0], sizes = [1, 32], strides = [1, 1]} : vector<2x32xf32> to vector<1x32xf32>
    %51 = vector.extract_strided_slice %49 {offsets = [1, 0], sizes = [1, 32], strides = [1, 1]} : vector<2x32xf32> to vector<1x32xf32>
    %52 = arith.truncf %49 : vector<2x32xf32> to vector<2x32xbf16>
    %cst_16 = arith.constant dense<0.000000e+00> : vector<2x192xf32>
    %53 = tpu.matmul %52, %1, %cst_16 {dimension_numbers = #tpu.dot_dimension_numbers<[1], [0], [0], [1], [0, 0, 1, 1], [], []>} : vector<2x32xbf16>, vector<32x192xbf16>, vector<2x192xf32> -> vector<2x192xf32>
    %54 = vector.broadcast %5 : vector<1x192xf32> to vector<2x192xf32>
    %55 = arith.addf %53, %54 : vector<2x192xf32>
    %56 = vector.extract_strided_slice %17 {offsets = [1, 0], sizes = [1, 96], strides = [1, 1]} : vector<8x192xf32> to vector<1x96xf32>
    %57 = vector.extract_strided_slice %17 {offsets = [6, 96], sizes = [1, 96], strides = [1, 1]} : vector<8x192xf32> to vector<1x96xf32>
    %58 = tpu.concatenate %56, %57 in 0 : vector<1x96xf32>, vector<1x96xf32> -> vector<2x96xf32>
    %59 = vector.extract_strided_slice %55 {offsets = [0, 0], sizes = [1, 96], strides = [1, 1]} : vector<2x192xf32> to vector<1x96xf32>
    %60 = vector.extract_strided_slice %55 {offsets = [1, 96], sizes = [1, 96], strides = [1, 1]} : vector<2x192xf32> to vector<1x96xf32>
    %61 = tpu.concatenate %59, %60 in 0 : vector<1x96xf32>, vector<1x96xf32> -> vector<2x96xf32>
    %62 = vector.extract_strided_slice %58 {offsets = [0, 0], sizes = [2, 64], strides = [1, 1]} : vector<2x96xf32> to vector<2x64xf32>
    %63 = vector.extract_strided_slice %61 {offsets = [0, 0], sizes = [2, 64], strides = [1, 1]} : vector<2x96xf32> to vector<2x64xf32>
    %64 = arith.addf %62, %63 : vector<2x64xf32>
    %65 = arith.negf %64 : vector<2x64xf32>
    %66 = math.exp %65 : vector<2x64xf32>
    %cst_17 = arith.constant 1.000000e+00 : f32
    %67 = vector.broadcast %cst_17 : f32 to vector<2x64xf32>
    %68 = arith.addf %67, %66 : vector<2x64xf32>
    %69 = arith.divf %67, %68 : vector<2x64xf32>
    %70 = vector.extract_strided_slice %58 {offsets = [0, 64], sizes = [2, 32], strides = [1, 1]} : vector<2x96xf32> to vector<2x32xf32>
    %71 = vector.extract_strided_slice %69 {offsets = [0, 0], sizes = [2, 32], strides = [1, 1]} : vector<2x64xf32> to vector<2x32xf32>
    %72 = vector.extract_strided_slice %61 {offsets = [0, 64], sizes = [2, 32], strides = [1, 1]} : vector<2x96xf32> to vector<2x32xf32>
    %73 = arith.mulf %71, %72 : vector<2x32xf32>
    %74 = arith.addf %70, %73 : vector<2x32xf32>
    %75 = math.tanh %74 : vector<2x32xf32>
    %76 = vector.extract_strided_slice %69 {offsets = [0, 32], sizes = [2, 32], strides = [1, 1]} : vector<2x64xf32> to vector<2x32xf32>
    %cst_18 = arith.constant 1.000000e+00 : f32
    %77 = vector.broadcast %cst_18 : f32 to vector<2x32xf32>
    %78 = arith.subf %77, %76 : vector<2x32xf32>
    %79 = arith.mulf %78, %75 : vector<2x32xf32>
    %80 = arith.mulf %76, %49 : vector<2x32xf32>
    %81 = arith.addf %79, %80 : vector<2x32xf32>
    %82 = vector.extract_strided_slice %81 {offsets = [0, 0], sizes = [1, 32], strides = [1, 1]} : vector<2x32xf32> to vector<1x32xf32>
    %83 = vector.extract_strided_slice %81 {offsets = [1, 0], sizes = [1, 32], strides = [1, 1]} : vector<2x32xf32> to vector<1x32xf32>
    %84 = arith.truncf %81 : vector<2x32xf32> to vector<2x32xbf16>
    %cst_19 = arith.constant dense<0.000000e+00> : vector<2x192xf32>
    %85 = tpu.matmul %84, %1, %cst_19 {dimension_numbers = #tpu.dot_dimension_numbers<[1], [0], [0], [1], [0, 0, 1, 1], [], []>} : vector<2x32xbf16>, vector<32x192xbf16>, vector<2x192xf32> -> vector<2x192xf32>
    %86 = vector.broadcast %5 : vector<1x192xf32> to vector<2x192xf32>
    %87 = arith.addf %85, %86 : vector<2x192xf32>
    %88 = vector.extract_strided_slice %17 {offsets = [2, 0], sizes = [1, 96], strides = [1, 1]} : vector<8x192xf32> to vector<1x96xf32>
    %89 = vector.extract_strided_slice %17 {offsets = [5, 96], sizes = [1, 96], strides = [1, 1]} : vector<8x192xf32> to vector<1x96xf32>
    %90 = tpu.concatenate %88, %89 in 0 : vector<1x96xf32>, vector<1x96xf32> -> vector<2x96xf32>
    %91 = vector.extract_strided_slice %87 {offsets = [0, 0], sizes = [1, 96], strides = [1, 1]} : vector<2x192xf32> to vector<1x96xf32>
    %92 = vector.extract_strided_slice %87 {offsets = [1, 96], sizes = [1, 96], strides = [1, 1]} : vector<2x192xf32> to vector<1x96xf32>
    %93 = tpu.concatenate %91, %92 in 0 : vector<1x96xf32>, vector<1x96xf32> -> vector<2x96xf32>
    %94 = vector.extract_strided_slice %90 {offsets = [0, 0], sizes = [2, 64], strides = [1, 1]} : vector<2x96xf32> to vector<2x64xf32>
    %95 = vector.extract_strided_slice %93 {offsets = [0, 0], sizes = [2, 64], strides = [1, 1]} : vector<2x96xf32> to vector<2x64xf32>
    %96 = arith.addf %94, %95 : vector<2x64xf32>
    %97 = arith.negf %96 : vector<2x64xf32>
    %98 = math.exp %97 : vector<2x64xf32>
    %cst_20 = arith.constant 1.000000e+00 : f32
    %99 = vector.broadcast %cst_20 : f32 to vector<2x64xf32>
    %100 = arith.addf %99, %98 : vector<2x64xf32>
    %101 = arith.divf %99, %100 : vector<2x64xf32>
    %102 = vector.extract_strided_slice %90 {offsets = [0, 64], sizes = [2, 32], strides = [1, 1]} : vector<2x96xf32> to vector<2x32xf32>
    %103 = vector.extract_strided_slice %101 {offsets = [0, 0], sizes = [2, 32], strides = [1, 1]} : vector<2x64xf32> to vector<2x32xf32>
    %104 = vector.extract_strided_slice %93 {offsets = [0, 64], sizes = [2, 32], strides = [1, 1]} : vector<2x96xf32> to vector<2x32xf32>
    %105 = arith.mulf %103, %104 : vector<2x32xf32>
    %106 = arith.addf %102, %105 : vector<2x32xf32>
    %107 = math.tanh %106 : vector<2x32xf32>
    %108 = vector.extract_strided_slice %101 {offsets = [0, 32], sizes = [2, 32], strides = [1, 1]} : vector<2x64xf32> to vector<2x32xf32>
    %cst_21 = arith.constant 1.000000e+00 : f32
    %109 = vector.broadcast %cst_21 : f32 to vector<2x32xf32>
    %110 = arith.subf %109, %108 : vector<2x32xf32>
    %111 = arith.mulf %110, %107 : vector<2x32xf32>
    %112 = arith.mulf %108, %81 : vector<2x32xf32>
    %113 = arith.addf %111, %112 : vector<2x32xf32>
    %114 = vector.extract_strided_slice %113 {offsets = [0, 0], sizes = [1, 32], strides = [1, 1]} : vector<2x32xf32> to vector<1x32xf32>
    %115 = vector.extract_strided_slice %113 {offsets = [1, 0], sizes = [1, 32], strides = [1, 1]} : vector<2x32xf32> to vector<1x32xf32>
    %116 = arith.truncf %113 : vector<2x32xf32> to vector<2x32xbf16>
    %cst_22 = arith.constant dense<0.000000e+00> : vector<2x192xf32>
    %117 = tpu.matmul %116, %1, %cst_22 {dimension_numbers = #tpu.dot_dimension_numbers<[1], [0], [0], [1], [0, 0, 1, 1], [], []>} : vector<2x32xbf16>, vector<32x192xbf16>, vector<2x192xf32> -> vector<2x192xf32>
    %118 = vector.broadcast %5 : vector<1x192xf32> to vector<2x192xf32>
    %119 = arith.addf %117, %118 : vector<2x192xf32>
    %120 = vector.extract_strided_slice %17 {offsets = [3, 0], sizes = [1, 96], strides = [1, 1]} : vector<8x192xf32> to vector<1x96xf32>
    %121 = vector.extract_strided_slice %17 {offsets = [4, 96], sizes = [1, 96], strides = [1, 1]} : vector<8x192xf32> to vector<1x96xf32>
    %122 = tpu.concatenate %120, %121 in 0 : vector<1x96xf32>, vector<1x96xf32> -> vector<2x96xf32>
    %123 = vector.extract_strided_slice %119 {offsets = [0, 0], sizes = [1, 96], strides = [1, 1]} : vector<2x192xf32> to vector<1x96xf32>
    %124 = vector.extract_strided_slice %119 {offsets = [1, 96], sizes = [1, 96], strides = [1, 1]} : vector<2x192xf32> to vector<1x96xf32>
    %125 = tpu.concatenate %123, %124 in 0 : vector<1x96xf32>, vector<1x96xf32> -> vector<2x96xf32>
    %126 = vector.extract_strided_slice %122 {offsets = [0, 0], sizes = [2, 64], strides = [1, 1]} : vector<2x96xf32> to vector<2x64xf32>
    %127 = vector.extract_strided_slice %125 {offsets = [0, 0], sizes = [2, 64], strides = [1, 1]} : vector<2x96xf32> to vector<2x64xf32>
    %128 = arith.addf %126, %127 : vector<2x64xf32>
    %129 = arith.negf %128 : vector<2x64xf32>
    %130 = math.exp %129 : vector<2x64xf32>
    %cst_23 = arith.constant 1.000000e+00 : f32
    %131 = vector.broadcast %cst_23 : f32 to vector<2x64xf32>
    %132 = arith.addf %131, %130 : vector<2x64xf32>
    %133 = arith.divf %131, %132 : vector<2x64xf32>
    %134 = vector.extract_strided_slice %122 {offsets = [0, 64], sizes = [2, 32], strides = [1, 1]} : vector<2x96xf32> to vector<2x32xf32>
    %135 = vector.extract_strided_slice %133 {offsets = [0, 0], sizes = [2, 32], strides = [1, 1]} : vector<2x64xf32> to vector<2x32xf32>
    %136 = vector.extract_strided_slice %125 {offsets = [0, 64], sizes = [2, 32], strides = [1, 1]} : vector<2x96xf32> to vector<2x32xf32>
    %137 = arith.mulf %135, %136 : vector<2x32xf32>
    %138 = arith.addf %134, %137 : vector<2x32xf32>
    %139 = math.tanh %138 : vector<2x32xf32>
    %140 = vector.extract_strided_slice %133 {offsets = [0, 32], sizes = [2, 32], strides = [1, 1]} : vector<2x64xf32> to vector<2x32xf32>
    %cst_24 = arith.constant 1.000000e+00 : f32
    %141 = vector.broadcast %cst_24 : f32 to vector<2x32xf32>
    %142 = arith.subf %141, %140 : vector<2x32xf32>
    %143 = arith.mulf %142, %139 : vector<2x32xf32>
    %144 = arith.mulf %140, %113 : vector<2x32xf32>
    %145 = arith.addf %143, %144 : vector<2x32xf32>
    %146 = vector.extract_strided_slice %145 {offsets = [0, 0], sizes = [1, 32], strides = [1, 1]} : vector<2x32xf32> to vector<1x32xf32>
    %147 = vector.extract_strided_slice %145 {offsets = [1, 0], sizes = [1, 32], strides = [1, 1]} : vector<2x32xf32> to vector<1x32xf32>
    %148 = arith.truncf %145 : vector<2x32xf32> to vector<2x32xbf16>
    %cst_25 = arith.constant dense<0.000000e+00> : vector<2x192xf32>
    %149 = tpu.matmul %148, %1, %cst_25 {dimension_numbers = #tpu.dot_dimension_numbers<[1], [0], [0], [1], [0, 0, 1, 1], [], []>} : vector<2x32xbf16>, vector<32x192xbf16>, vector<2x192xf32> -> vector<2x192xf32>
    %150 = vector.broadcast %5 : vector<1x192xf32> to vector<2x192xf32>
    %151 = arith.addf %149, %150 : vector<2x192xf32>
    %152 = vector.extract_strided_slice %17 {offsets = [4, 0], sizes = [1, 96], strides = [1, 1]} : vector<8x192xf32> to vector<1x96xf32>
    %153 = vector.extract_strided_slice %17 {offsets = [3, 96], sizes = [1, 96], strides = [1, 1]} : vector<8x192xf32> to vector<1x96xf32>
    %154 = tpu.concatenate %152, %153 in 0 : vector<1x96xf32>, vector<1x96xf32> -> vector<2x96xf32>
    %155 = vector.extract_strided_slice %151 {offsets = [0, 0], sizes = [1, 96], strides = [1, 1]} : vector<2x192xf32> to vector<1x96xf32>
    %156 = vector.extract_strided_slice %151 {offsets = [1, 96], sizes = [1, 96], strides = [1, 1]} : vector<2x192xf32> to vector<1x96xf32>
    %157 = tpu.concatenate %155, %156 in 0 : vector<1x96xf32>, vector<1x96xf32> -> vector<2x96xf32>
    %158 = vector.extract_strided_slice %154 {offsets = [0, 0], sizes = [2, 64], strides = [1, 1]} : vector<2x96xf32> to vector<2x64xf32>
    %159 = vector.extract_strided_slice %157 {offsets = [0, 0], sizes = [2, 64], strides = [1, 1]} : vector<2x96xf32> to vector<2x64xf32>
    %160 = arith.addf %158, %159 : vector<2x64xf32>
    %161 = arith.negf %160 : vector<2x64xf32>
    %162 = math.exp %161 : vector<2x64xf32>
    %cst_26 = arith.constant 1.000000e+00 : f32
    %163 = vector.broadcast %cst_26 : f32 to vector<2x64xf32>
    %164 = arith.addf %163, %162 : vector<2x64xf32>
    %165 = arith.divf %163, %164 : vector<2x64xf32>
    %166 = vector.extract_strided_slice %154 {offsets = [0, 64], sizes = [2, 32], strides = [1, 1]} : vector<2x96xf32> to vector<2x32xf32>
    %167 = vector.extract_strided_slice %165 {offsets = [0, 0], sizes = [2, 32], strides = [1, 1]} : vector<2x64xf32> to vector<2x32xf32>
    %168 = vector.extract_strided_slice %157 {offsets = [0, 64], sizes = [2, 32], strides = [1, 1]} : vector<2x96xf32> to vector<2x32xf32>
    %169 = arith.mulf %167, %168 : vector<2x32xf32>
    %170 = arith.addf %166, %169 : vector<2x32xf32>
    %171 = math.tanh %170 : vector<2x32xf32>
    %172 = vector.extract_strided_slice %165 {offsets = [0, 32], sizes = [2, 32], strides = [1, 1]} : vector<2x64xf32> to vector<2x32xf32>
    %cst_27 = arith.constant 1.000000e+00 : f32
    %173 = vector.broadcast %cst_27 : f32 to vector<2x32xf32>
    %174 = arith.subf %173, %172 : vector<2x32xf32>
    %175 = arith.mulf %174, %171 : vector<2x32xf32>
    %176 = arith.mulf %172, %145 : vector<2x32xf32>
    %177 = arith.addf %175, %176 : vector<2x32xf32>
    %178 = vector.extract_strided_slice %177 {offsets = [0, 0], sizes = [1, 32], strides = [1, 1]} : vector<2x32xf32> to vector<1x32xf32>
    %179 = vector.extract_strided_slice %177 {offsets = [1, 0], sizes = [1, 32], strides = [1, 1]} : vector<2x32xf32> to vector<1x32xf32>
    %180 = arith.truncf %177 : vector<2x32xf32> to vector<2x32xbf16>
    %cst_28 = arith.constant dense<0.000000e+00> : vector<2x192xf32>
    %181 = tpu.matmul %180, %1, %cst_28 {dimension_numbers = #tpu.dot_dimension_numbers<[1], [0], [0], [1], [0, 0, 1, 1], [], []>} : vector<2x32xbf16>, vector<32x192xbf16>, vector<2x192xf32> -> vector<2x192xf32>
    %182 = vector.broadcast %5 : vector<1x192xf32> to vector<2x192xf32>
    %183 = arith.addf %181, %182 : vector<2x192xf32>
    %184 = vector.extract_strided_slice %17 {offsets = [5, 0], sizes = [1, 96], strides = [1, 1]} : vector<8x192xf32> to vector<1x96xf32>
    %185 = vector.extract_strided_slice %17 {offsets = [2, 96], sizes = [1, 96], strides = [1, 1]} : vector<8x192xf32> to vector<1x96xf32>
    %186 = tpu.concatenate %184, %185 in 0 : vector<1x96xf32>, vector<1x96xf32> -> vector<2x96xf32>
    %187 = vector.extract_strided_slice %183 {offsets = [0, 0], sizes = [1, 96], strides = [1, 1]} : vector<2x192xf32> to vector<1x96xf32>
    %188 = vector.extract_strided_slice %183 {offsets = [1, 96], sizes = [1, 96], strides = [1, 1]} : vector<2x192xf32> to vector<1x96xf32>
    %189 = tpu.concatenate %187, %188 in 0 : vector<1x96xf32>, vector<1x96xf32> -> vector<2x96xf32>
    %190 = vector.extract_strided_slice %186 {offsets = [0, 0], sizes = [2, 64], strides = [1, 1]} : vector<2x96xf32> to vector<2x64xf32>
    %191 = vector.extract_strided_slice %189 {offsets = [0, 0], sizes = [2, 64], strides = [1, 1]} : vector<2x96xf32> to vector<2x64xf32>
    %192 = arith.addf %190, %191 : vector<2x64xf32>
    %193 = arith.negf %192 : vector<2x64xf32>
    %194 = math.exp %193 : vector<2x64xf32>
    %cst_29 = arith.constant 1.000000e+00 : f32
    %195 = vector.broadcast %cst_29 : f32 to vector<2x64xf32>
    %196 = arith.addf %195, %194 : vector<2x64xf32>
    %197 = arith.divf %195, %196 : vector<2x64xf32>
    %198 = vector.extract_strided_slice %186 {offsets = [0, 64], sizes = [2, 32], strides = [1, 1]} : vector<2x96xf32> to vector<2x32xf32>
    %199 = vector.extract_strided_slice %197 {offsets = [0, 0], sizes = [2, 32], strides = [1, 1]} : vector<2x64xf32> to vector<2x32xf32>
    %200 = vector.extract_strided_slice %189 {offsets = [0, 64], sizes = [2, 32], strides = [1, 1]} : vector<2x96xf32> to vector<2x32xf32>
    %201 = arith.mulf %199, %200 : vector<2x32xf32>
    %202 = arith.addf %198, %201 : vector<2x32xf32>
    %203 = math.tanh %202 : vector<2x32xf32>
    %204 = vector.extract_strided_slice %197 {offsets = [0, 32], sizes = [2, 32], strides = [1, 1]} : vector<2x64xf32> to vector<2x32xf32>
    %cst_30 = arith.constant 1.000000e+00 : f32
    %205 = vector.broadcast %cst_30 : f32 to vector<2x32xf32>
    %206 = arith.subf %205, %204 : vector<2x32xf32>
    %207 = arith.mulf %206, %203 : vector<2x32xf32>
    %208 = arith.mulf %204, %177 : vector<2x32xf32>
    %209 = arith.addf %207, %208 : vector<2x32xf32>
    %210 = vector.extract_strided_slice %209 {offsets = [0, 0], sizes = [1, 32], strides = [1, 1]} : vector<2x32xf32> to vector<1x32xf32>
    %211 = vector.extract_strided_slice %209 {offsets = [1, 0], sizes = [1, 32], strides = [1, 1]} : vector<2x32xf32> to vector<1x32xf32>
    %212 = arith.truncf %209 : vector<2x32xf32> to vector<2x32xbf16>
    %cst_31 = arith.constant dense<0.000000e+00> : vector<2x192xf32>
    %213 = tpu.matmul %212, %1, %cst_31 {dimension_numbers = #tpu.dot_dimension_numbers<[1], [0], [0], [1], [0, 0, 1, 1], [], []>} : vector<2x32xbf16>, vector<32x192xbf16>, vector<2x192xf32> -> vector<2x192xf32>
    %214 = vector.broadcast %5 : vector<1x192xf32> to vector<2x192xf32>
    %215 = arith.addf %213, %214 : vector<2x192xf32>
    %216 = vector.extract_strided_slice %17 {offsets = [6, 0], sizes = [1, 96], strides = [1, 1]} : vector<8x192xf32> to vector<1x96xf32>
    %217 = vector.extract_strided_slice %17 {offsets = [1, 96], sizes = [1, 96], strides = [1, 1]} : vector<8x192xf32> to vector<1x96xf32>
    %218 = tpu.concatenate %216, %217 in 0 : vector<1x96xf32>, vector<1x96xf32> -> vector<2x96xf32>
    %219 = vector.extract_strided_slice %215 {offsets = [0, 0], sizes = [1, 96], strides = [1, 1]} : vector<2x192xf32> to vector<1x96xf32>
    %220 = vector.extract_strided_slice %215 {offsets = [1, 96], sizes = [1, 96], strides = [1, 1]} : vector<2x192xf32> to vector<1x96xf32>
    %221 = tpu.concatenate %219, %220 in 0 : vector<1x96xf32>, vector<1x96xf32> -> vector<2x96xf32>
    %222 = vector.extract_strided_slice %218 {offsets = [0, 0], sizes = [2, 64], strides = [1, 1]} : vector<2x96xf32> to vector<2x64xf32>
    %223 = vector.extract_strided_slice %221 {offsets = [0, 0], sizes = [2, 64], strides = [1, 1]} : vector<2x96xf32> to vector<2x64xf32>
    %224 = arith.addf %222, %223 : vector<2x64xf32>
    %225 = arith.negf %224 : vector<2x64xf32>
    %226 = math.exp %225 : vector<2x64xf32>
    %cst_32 = arith.constant 1.000000e+00 : f32
    %227 = vector.broadcast %cst_32 : f32 to vector<2x64xf32>
    %228 = arith.addf %227, %226 : vector<2x64xf32>
    %229 = arith.divf %227, %228 : vector<2x64xf32>
    %230 = vector.extract_strided_slice %218 {offsets = [0, 64], sizes = [2, 32], strides = [1, 1]} : vector<2x96xf32> to vector<2x32xf32>
    %231 = vector.extract_strided_slice %229 {offsets = [0, 0], sizes = [2, 32], strides = [1, 1]} : vector<2x64xf32> to vector<2x32xf32>
    %232 = vector.extract_strided_slice %221 {offsets = [0, 64], sizes = [2, 32], strides = [1, 1]} : vector<2x96xf32> to vector<2x32xf32>
    %233 = arith.mulf %231, %232 : vector<2x32xf32>
    %234 = arith.addf %230, %233 : vector<2x32xf32>
    %235 = math.tanh %234 : vector<2x32xf32>
    %236 = vector.extract_strided_slice %229 {offsets = [0, 32], sizes = [2, 32], strides = [1, 1]} : vector<2x64xf32> to vector<2x32xf32>
    %cst_33 = arith.constant 1.000000e+00 : f32
    %237 = vector.broadcast %cst_33 : f32 to vector<2x32xf32>
    %238 = arith.subf %237, %236 : vector<2x32xf32>
    %239 = arith.mulf %238, %235 : vector<2x32xf32>
    %240 = arith.mulf %236, %209 : vector<2x32xf32>
    %241 = arith.addf %239, %240 : vector<2x32xf32>
    %242 = vector.extract_strided_slice %241 {offsets = [0, 0], sizes = [1, 32], strides = [1, 1]} : vector<2x32xf32> to vector<1x32xf32>
    %243 = vector.extract_strided_slice %241 {offsets = [1, 0], sizes = [1, 32], strides = [1, 1]} : vector<2x32xf32> to vector<1x32xf32>
    %244 = arith.truncf %241 : vector<2x32xf32> to vector<2x32xbf16>
    %cst_34 = arith.constant dense<0.000000e+00> : vector<2x192xf32>
    %245 = tpu.matmul %244, %1, %cst_34 {dimension_numbers = #tpu.dot_dimension_numbers<[1], [0], [0], [1], [0, 0, 1, 1], [], []>} : vector<2x32xbf16>, vector<32x192xbf16>, vector<2x192xf32> -> vector<2x192xf32>
    %246 = vector.broadcast %5 : vector<1x192xf32> to vector<2x192xf32>
    %247 = arith.addf %245, %246 : vector<2x192xf32>
    %248 = vector.extract_strided_slice %17 {offsets = [7, 0], sizes = [1, 96], strides = [1, 1]} : vector<8x192xf32> to vector<1x96xf32>
    %249 = vector.extract_strided_slice %17 {offsets = [0, 96], sizes = [1, 96], strides = [1, 1]} : vector<8x192xf32> to vector<1x96xf32>
    %250 = tpu.concatenate %248, %249 in 0 : vector<1x96xf32>, vector<1x96xf32> -> vector<2x96xf32>
    %251 = vector.extract_strided_slice %247 {offsets = [0, 0], sizes = [1, 96], strides = [1, 1]} : vector<2x192xf32> to vector<1x96xf32>
    %252 = vector.extract_strided_slice %247 {offsets = [1, 96], sizes = [1, 96], strides = [1, 1]} : vector<2x192xf32> to vector<1x96xf32>
    %253 = tpu.concatenate %251, %252 in 0 : vector<1x96xf32>, vector<1x96xf32> -> vector<2x96xf32>
    %254 = vector.extract_strided_slice %250 {offsets = [0, 0], sizes = [2, 64], strides = [1, 1]} : vector<2x96xf32> to vector<2x64xf32>
    %255 = vector.extract_strided_slice %253 {offsets = [0, 0], sizes = [2, 64], strides = [1, 1]} : vector<2x96xf32> to vector<2x64xf32>
    %256 = arith.addf %254, %255 : vector<2x64xf32>
    %257 = arith.negf %256 : vector<2x64xf32>
    %258 = math.exp %257 : vector<2x64xf32>
    %cst_35 = arith.constant 1.000000e+00 : f32
    %259 = vector.broadcast %cst_35 : f32 to vector<2x64xf32>
    %260 = arith.addf %259, %258 : vector<2x64xf32>
    %261 = arith.divf %259, %260 : vector<2x64xf32>
    %262 = vector.extract_strided_slice %250 {offsets = [0, 64], sizes = [2, 32], strides = [1, 1]} : vector<2x96xf32> to vector<2x32xf32>
    %263 = vector.extract_strided_slice %261 {offsets = [0, 0], sizes = [2, 32], strides = [1, 1]} : vector<2x64xf32> to vector<2x32xf32>
    %264 = vector.extract_strided_slice %253 {offsets = [0, 64], sizes = [2, 32], strides = [1, 1]} : vector<2x96xf32> to vector<2x32xf32>
    %265 = arith.mulf %263, %264 : vector<2x32xf32>
    %266 = arith.addf %262, %265 : vector<2x32xf32>
    %267 = math.tanh %266 : vector<2x32xf32>
    %268 = vector.extract_strided_slice %261 {offsets = [0, 32], sizes = [2, 32], strides = [1, 1]} : vector<2x64xf32> to vector<2x32xf32>
    %cst_36 = arith.constant 1.000000e+00 : f32
    %269 = vector.broadcast %cst_36 : f32 to vector<2x32xf32>
    %270 = arith.subf %269, %268 : vector<2x32xf32>
    %271 = arith.mulf %270, %267 : vector<2x32xf32>
    %272 = arith.mulf %268, %241 : vector<2x32xf32>
    %273 = arith.addf %271, %272 : vector<2x32xf32>
    %274 = vector.extract_strided_slice %273 {offsets = [0, 0], sizes = [1, 32], strides = [1, 1]} : vector<2x32xf32> to vector<1x32xf32>
    %275 = vector.extract_strided_slice %273 {offsets = [1, 0], sizes = [1, 32], strides = [1, 1]} : vector<2x32xf32> to vector<1x32xf32>
    %276 = tpu.concatenate %50, %82, %114, %146, %178, %210, %242, %274 in 0 : vector<1x32xf32>, vector<1x32xf32>, vector<1x32xf32>, vector<1x32xf32>, vector<1x32xf32>, vector<1x32xf32>, vector<1x32xf32>, vector<1x32xf32> -> vector<8x32xf32>
    %277 = tpu.concatenate %275, %243, %211, %179, %147, %115, %83, %51 in 0 : vector<1x32xf32>, vector<1x32xf32>, vector<1x32xf32>, vector<1x32xf32>, vector<1x32xf32>, vector<1x32xf32>, vector<1x32xf32>, vector<1x32xf32> -> vector<8x32xf32>
    %278 = tpu.concatenate %276, %277 in 1 : vector<8x32xf32>, vector<8x32xf32> -> vector<8x64xf32>
    %279 = arith.truncf %278 : vector<8x64xf32> to vector<8x64xbf16>
    %cst_37 = arith.constant dense<0.000000e+00> : vector<8x192xf32>
    %280 = tpu.matmul %279, %2, %cst_37 {dimension_numbers = #tpu.dot_dimension_numbers<[1], [0], [0], [1], [0, 0, 1, 1], [], []>} : vector<8x64xbf16>, vector<64x192xbf16>, vector<8x192xf32> -> vector<8x192xf32>
    %281 = vector.broadcast %6 : vector<1x192xf32> to vector<8x192xf32>
    %282 = arith.addf %280, %281 : vector<8x192xf32>
    %283 = vector.extract_strided_slice %18 {offsets = [2, 0], sizes = [2, 32], strides = [1, 1]} : vector<4x32xf32> to vector<2x32xf32>
    %284 = arith.truncf %283 : vector<2x32xf32> to vector<2x32xbf16>
    %cst_38 = arith.constant dense<0.000000e+00> : vector<2x192xf32>
    %285 = tpu.matmul %284, %3, %cst_38 {dimension_numbers = #tpu.dot_dimension_numbers<[1], [0], [0], [1], [0, 0, 1, 1], [], []>} : vector<2x32xbf16>, vector<32x192xbf16>, vector<2x192xf32> -> vector<2x192xf32>
    %286 = vector.broadcast %7 : vector<1x192xf32> to vector<2x192xf32>
    %287 = arith.addf %285, %286 : vector<2x192xf32>
    %288 = vector.extract_strided_slice %282 {offsets = [0, 0], sizes = [1, 96], strides = [1, 1]} : vector<8x192xf32> to vector<1x96xf32>
    %289 = vector.extract_strided_slice %282 {offsets = [7, 96], sizes = [1, 96], strides = [1, 1]} : vector<8x192xf32> to vector<1x96xf32>
    %290 = tpu.concatenate %288, %289 in 0 : vector<1x96xf32>, vector<1x96xf32> -> vector<2x96xf32>
    %291 = vector.extract_strided_slice %287 {offsets = [0, 0], sizes = [1, 96], strides = [1, 1]} : vector<2x192xf32> to vector<1x96xf32>
    %292 = vector.extract_strided_slice %287 {offsets = [1, 96], sizes = [1, 96], strides = [1, 1]} : vector<2x192xf32> to vector<1x96xf32>
    %293 = tpu.concatenate %291, %292 in 0 : vector<1x96xf32>, vector<1x96xf32> -> vector<2x96xf32>
    %294 = vector.extract_strided_slice %290 {offsets = [0, 0], sizes = [2, 64], strides = [1, 1]} : vector<2x96xf32> to vector<2x64xf32>
    %295 = vector.extract_strided_slice %293 {offsets = [0, 0], sizes = [2, 64], strides = [1, 1]} : vector<2x96xf32> to vector<2x64xf32>
    %296 = arith.addf %294, %295 : vector<2x64xf32>
    %297 = arith.negf %296 : vector<2x64xf32>
    %298 = math.exp %297 : vector<2x64xf32>
    %cst_39 = arith.constant 1.000000e+00 : f32
    %299 = vector.broadcast %cst_39 : f32 to vector<2x64xf32>
    %300 = arith.addf %299, %298 : vector<2x64xf32>
    %301 = arith.divf %299, %300 : vector<2x64xf32>
    %302 = vector.extract_strided_slice %290 {offsets = [0, 64], sizes = [2, 32], strides = [1, 1]} : vector<2x96xf32> to vector<2x32xf32>
    %303 = vector.extract_strided_slice %301 {offsets = [0, 0], sizes = [2, 32], strides = [1, 1]} : vector<2x64xf32> to vector<2x32xf32>
    %304 = vector.extract_strided_slice %293 {offsets = [0, 64], sizes = [2, 32], strides = [1, 1]} : vector<2x96xf32> to vector<2x32xf32>
    %305 = arith.mulf %303, %304 : vector<2x32xf32>
    %306 = arith.addf %302, %305 : vector<2x32xf32>
    %307 = math.tanh %306 : vector<2x32xf32>
    %308 = vector.extract_strided_slice %301 {offsets = [0, 32], sizes = [2, 32], strides = [1, 1]} : vector<2x64xf32> to vector<2x32xf32>
    %cst_40 = arith.constant 1.000000e+00 : f32
    %309 = vector.broadcast %cst_40 : f32 to vector<2x32xf32>
    %310 = arith.subf %309, %308 : vector<2x32xf32>
    %311 = arith.mulf %310, %307 : vector<2x32xf32>
    %312 = arith.mulf %308, %283 : vector<2x32xf32>
    %313 = arith.addf %311, %312 : vector<2x32xf32>
    %314 = vector.extract_strided_slice %313 {offsets = [0, 0], sizes = [1, 32], strides = [1, 1]} : vector<2x32xf32> to vector<1x32xf32>
    %315 = vector.extract_strided_slice %313 {offsets = [1, 0], sizes = [1, 32], strides = [1, 1]} : vector<2x32xf32> to vector<1x32xf32>
    %316 = arith.truncf %313 : vector<2x32xf32> to vector<2x32xbf16>
    %cst_41 = arith.constant dense<0.000000e+00> : vector<2x192xf32>
    %317 = tpu.matmul %316, %3, %cst_41 {dimension_numbers = #tpu.dot_dimension_numbers<[1], [0], [0], [1], [0, 0, 1, 1], [], []>} : vector<2x32xbf16>, vector<32x192xbf16>, vector<2x192xf32> -> vector<2x192xf32>
    %318 = vector.broadcast %7 : vector<1x192xf32> to vector<2x192xf32>
    %319 = arith.addf %317, %318 : vector<2x192xf32>
    %320 = vector.extract_strided_slice %282 {offsets = [1, 0], sizes = [1, 96], strides = [1, 1]} : vector<8x192xf32> to vector<1x96xf32>
    %321 = vector.extract_strided_slice %282 {offsets = [6, 96], sizes = [1, 96], strides = [1, 1]} : vector<8x192xf32> to vector<1x96xf32>
    %322 = tpu.concatenate %320, %321 in 0 : vector<1x96xf32>, vector<1x96xf32> -> vector<2x96xf32>
    %323 = vector.extract_strided_slice %319 {offsets = [0, 0], sizes = [1, 96], strides = [1, 1]} : vector<2x192xf32> to vector<1x96xf32>
    %324 = vector.extract_strided_slice %319 {offsets = [1, 96], sizes = [1, 96], strides = [1, 1]} : vector<2x192xf32> to vector<1x96xf32>
    %325 = tpu.concatenate %323, %324 in 0 : vector<1x96xf32>, vector<1x96xf32> -> vector<2x96xf32>
    %326 = vector.extract_strided_slice %322 {offsets = [0, 0], sizes = [2, 64], strides = [1, 1]} : vector<2x96xf32> to vector<2x64xf32>
    %327 = vector.extract_strided_slice %325 {offsets = [0, 0], sizes = [2, 64], strides = [1, 1]} : vector<2x96xf32> to vector<2x64xf32>
    %328 = arith.addf %326, %327 : vector<2x64xf32>
    %329 = arith.negf %328 : vector<2x64xf32>
    %330 = math.exp %329 : vector<2x64xf32>
    %cst_42 = arith.constant 1.000000e+00 : f32
    %331 = vector.broadcast %cst_42 : f32 to vector<2x64xf32>
    %332 = arith.addf %331, %330 : vector<2x64xf32>
    %333 = arith.divf %331, %332 : vector<2x64xf32>
    %334 = vector.extract_strided_slice %322 {offsets = [0, 64], sizes = [2, 32], strides = [1, 1]} : vector<2x96xf32> to vector<2x32xf32>
    %335 = vector.extract_strided_slice %333 {offsets = [0, 0], sizes = [2, 32], strides = [1, 1]} : vector<2x64xf32> to vector<2x32xf32>
    %336 = vector.extract_strided_slice %325 {offsets = [0, 64], sizes = [2, 32], strides = [1, 1]} : vector<2x96xf32> to vector<2x32xf32>
    %337 = arith.mulf %335, %336 : vector<2x32xf32>
    %338 = arith.addf %334, %337 : vector<2x32xf32>
    %339 = math.tanh %338 : vector<2x32xf32>
    %340 = vector.extract_strided_slice %333 {offsets = [0, 32], sizes = [2, 32], strides = [1, 1]} : vector<2x64xf32> to vector<2x32xf32>
    %cst_43 = arith.constant 1.000000e+00 : f32
    %341 = vector.broadcast %cst_43 : f32 to vector<2x32xf32>
    %342 = arith.subf %341, %340 : vector<2x32xf32>
    %343 = arith.mulf %342, %339 : vector<2x32xf32>
    %344 = arith.mulf %340, %313 : vector<2x32xf32>
    %345 = arith.addf %343, %344 : vector<2x32xf32>
    %346 = vector.extract_strided_slice %345 {offsets = [0, 0], sizes = [1, 32], strides = [1, 1]} : vector<2x32xf32> to vector<1x32xf32>
    %347 = vector.extract_strided_slice %345 {offsets = [1, 0], sizes = [1, 32], strides = [1, 1]} : vector<2x32xf32> to vector<1x32xf32>
    %348 = arith.truncf %345 : vector<2x32xf32> to vector<2x32xbf16>
    %cst_44 = arith.constant dense<0.000000e+00> : vector<2x192xf32>
    %349 = tpu.matmul %348, %3, %cst_44 {dimension_numbers = #tpu.dot_dimension_numbers<[1], [0], [0], [1], [0, 0, 1, 1], [], []>} : vector<2x32xbf16>, vector<32x192xbf16>, vector<2x192xf32> -> vector<2x192xf32>
    %350 = vector.broadcast %7 : vector<1x192xf32> to vector<2x192xf32>
    %351 = arith.addf %349, %350 : vector<2x192xf32>
    %352 = vector.extract_strided_slice %282 {offsets = [2, 0], sizes = [1, 96], strides = [1, 1]} : vector<8x192xf32> to vector<1x96xf32>
    %353 = vector.extract_strided_slice %282 {offsets = [5, 96], sizes = [1, 96], strides = [1, 1]} : vector<8x192xf32> to vector<1x96xf32>
    %354 = tpu.concatenate %352, %353 in 0 : vector<1x96xf32>, vector<1x96xf32> -> vector<2x96xf32>
    %355 = vector.extract_strided_slice %351 {offsets = [0, 0], sizes = [1, 96], strides = [1, 1]} : vector<2x192xf32> to vector<1x96xf32>
    %356 = vector.extract_strided_slice %351 {offsets = [1, 96], sizes = [1, 96], strides = [1, 1]} : vector<2x192xf32> to vector<1x96xf32>
    %357 = tpu.concatenate %355, %356 in 0 : vector<1x96xf32>, vector<1x96xf32> -> vector<2x96xf32>
    %358 = vector.extract_strided_slice %354 {offsets = [0, 0], sizes = [2, 64], strides = [1, 1]} : vector<2x96xf32> to vector<2x64xf32>
    %359 = vector.extract_strided_slice %357 {offsets = [0, 0], sizes = [2, 64], strides = [1, 1]} : vector<2x96xf32> to vector<2x64xf32>
    %360 = arith.addf %358, %359 : vector<2x64xf32>
    %361 = arith.negf %360 : vector<2x64xf32>
    %362 = math.exp %361 : vector<2x64xf32>
    %cst_45 = arith.constant 1.000000e+00 : f32
    %363 = vector.broadcast %cst_45 : f32 to vector<2x64xf32>
    %364 = arith.addf %363, %362 : vector<2x64xf32>
    %365 = arith.divf %363, %364 : vector<2x64xf32>
    %366 = vector.extract_strided_slice %354 {offsets = [0, 64], sizes = [2, 32], strides = [1, 1]} : vector<2x96xf32> to vector<2x32xf32>
    %367 = vector.extract_strided_slice %365 {offsets = [0, 0], sizes = [2, 32], strides = [1, 1]} : vector<2x64xf32> to vector<2x32xf32>
    %368 = vector.extract_strided_slice %357 {offsets = [0, 64], sizes = [2, 32], strides = [1, 1]} : vector<2x96xf32> to vector<2x32xf32>
    %369 = arith.mulf %367, %368 : vector<2x32xf32>
    %370 = arith.addf %366, %369 : vector<2x32xf32>
    %371 = math.tanh %370 : vector<2x32xf32>
    %372 = vector.extract_strided_slice %365 {offsets = [0, 32], sizes = [2, 32], strides = [1, 1]} : vector<2x64xf32> to vector<2x32xf32>
    %cst_46 = arith.constant 1.000000e+00 : f32
    %373 = vector.broadcast %cst_46 : f32 to vector<2x32xf32>
    %374 = arith.subf %373, %372 : vector<2x32xf32>
    %375 = arith.mulf %374, %371 : vector<2x32xf32>
    %376 = arith.mulf %372, %345 : vector<2x32xf32>
    %377 = arith.addf %375, %376 : vector<2x32xf32>
    %378 = vector.extract_strided_slice %377 {offsets = [0, 0], sizes = [1, 32], strides = [1, 1]} : vector<2x32xf32> to vector<1x32xf32>
    %379 = vector.extract_strided_slice %377 {offsets = [1, 0], sizes = [1, 32], strides = [1, 1]} : vector<2x32xf32> to vector<1x32xf32>
    %380 = arith.truncf %377 : vector<2x32xf32> to vector<2x32xbf16>
    %cst_47 = arith.constant dense<0.000000e+00> : vector<2x192xf32>
    %381 = tpu.matmul %380, %3, %cst_47 {dimension_numbers = #tpu.dot_dimension_numbers<[1], [0], [0], [1], [0, 0, 1, 1], [], []>} : vector<2x32xbf16>, vector<32x192xbf16>, vector<2x192xf32> -> vector<2x192xf32>
    %382 = vector.broadcast %7 : vector<1x192xf32> to vector<2x192xf32>
    %383 = arith.addf %381, %382 : vector<2x192xf32>
    %384 = vector.extract_strided_slice %282 {offsets = [3, 0], sizes = [1, 96], strides = [1, 1]} : vector<8x192xf32> to vector<1x96xf32>
    %385 = vector.extract_strided_slice %282 {offsets = [4, 96], sizes = [1, 96], strides = [1, 1]} : vector<8x192xf32> to vector<1x96xf32>
    %386 = tpu.concatenate %384, %385 in 0 : vector<1x96xf32>, vector<1x96xf32> -> vector<2x96xf32>
    %387 = vector.extract_strided_slice %383 {offsets = [0, 0], sizes = [1, 96], strides = [1, 1]} : vector<2x192xf32> to vector<1x96xf32>
    %388 = vector.extract_strided_slice %383 {offsets = [1, 96], sizes = [1, 96], strides = [1, 1]} : vector<2x192xf32> to vector<1x96xf32>
    %389 = tpu.concatenate %387, %388 in 0 : vector<1x96xf32>, vector<1x96xf32> -> vector<2x96xf32>
    %390 = vector.extract_strided_slice %386 {offsets = [0, 0], sizes = [2, 64], strides = [1, 1]} : vector<2x96xf32> to vector<2x64xf32>
    %391 = vector.extract_strided_slice %389 {offsets = [0, 0], sizes = [2, 64], strides = [1, 1]} : vector<2x96xf32> to vector<2x64xf32>
    %392 = arith.addf %390, %391 : vector<2x64xf32>
    %393 = arith.negf %392 : vector<2x64xf32>
    %394 = math.exp %393 : vector<2x64xf32>
    %cst_48 = arith.constant 1.000000e+00 : f32
    %395 = vector.broadcast %cst_48 : f32 to vector<2x64xf32>
    %396 = arith.addf %395, %394 : vector<2x64xf32>
    %397 = arith.divf %395, %396 : vector<2x64xf32>
    %398 = vector.extract_strided_slice %386 {offsets = [0, 64], sizes = [2, 32], strides = [1, 1]} : vector<2x96xf32> to vector<2x32xf32>
    %399 = vector.extract_strided_slice %397 {offsets = [0, 0], sizes = [2, 32], strides = [1, 1]} : vector<2x64xf32> to vector<2x32xf32>
    %400 = vector.extract_strided_slice %389 {offsets = [0, 64], sizes = [2, 32], strides = [1, 1]} : vector<2x96xf32> to vector<2x32xf32>
    %401 = arith.mulf %399, %400 : vector<2x32xf32>
    %402 = arith.addf %398, %401 : vector<2x32xf32>
    %403 = math.tanh %402 : vector<2x32xf32>
    %404 = vector.extract_strided_slice %397 {offsets = [0, 32], sizes = [2, 32], strides = [1, 1]} : vector<2x64xf32> to vector<2x32xf32>
    %cst_49 = arith.constant 1.000000e+00 : f32
    %405 = vector.broadcast %cst_49 : f32 to vector<2x32xf32>
    %406 = arith.subf %405, %404 : vector<2x32xf32>
    %407 = arith.mulf %406, %403 : vector<2x32xf32>
    %408 = arith.mulf %404, %377 : vector<2x32xf32>
    %409 = arith.addf %407, %408 : vector<2x32xf32>
    %410 = vector.extract_strided_slice %409 {offsets = [0, 0], sizes = [1, 32], strides = [1, 1]} : vector<2x32xf32> to vector<1x32xf32>
    %411 = vector.extract_strided_slice %409 {offsets = [1, 0], sizes = [1, 32], strides = [1, 1]} : vector<2x32xf32> to vector<1x32xf32>
    %412 = arith.truncf %409 : vector<2x32xf32> to vector<2x32xbf16>
    %cst_50 = arith.constant dense<0.000000e+00> : vector<2x192xf32>
    %413 = tpu.matmul %412, %3, %cst_50 {dimension_numbers = #tpu.dot_dimension_numbers<[1], [0], [0], [1], [0, 0, 1, 1], [], []>} : vector<2x32xbf16>, vector<32x192xbf16>, vector<2x192xf32> -> vector<2x192xf32>
    %414 = vector.broadcast %7 : vector<1x192xf32> to vector<2x192xf32>
    %415 = arith.addf %413, %414 : vector<2x192xf32>
    %416 = vector.extract_strided_slice %282 {offsets = [4, 0], sizes = [1, 96], strides = [1, 1]} : vector<8x192xf32> to vector<1x96xf32>
    %417 = vector.extract_strided_slice %282 {offsets = [3, 96], sizes = [1, 96], strides = [1, 1]} : vector<8x192xf32> to vector<1x96xf32>
    %418 = tpu.concatenate %416, %417 in 0 : vector<1x96xf32>, vector<1x96xf32> -> vector<2x96xf32>
    %419 = vector.extract_strided_slice %415 {offsets = [0, 0], sizes = [1, 96], strides = [1, 1]} : vector<2x192xf32> to vector<1x96xf32>
    %420 = vector.extract_strided_slice %415 {offsets = [1, 96], sizes = [1, 96], strides = [1, 1]} : vector<2x192xf32> to vector<1x96xf32>
    %421 = tpu.concatenate %419, %420 in 0 : vector<1x96xf32>, vector<1x96xf32> -> vector<2x96xf32>
    %422 = vector.extract_strided_slice %418 {offsets = [0, 0], sizes = [2, 64], strides = [1, 1]} : vector<2x96xf32> to vector<2x64xf32>
    %423 = vector.extract_strided_slice %421 {offsets = [0, 0], sizes = [2, 64], strides = [1, 1]} : vector<2x96xf32> to vector<2x64xf32>
    %424 = arith.addf %422, %423 : vector<2x64xf32>
    %425 = arith.negf %424 : vector<2x64xf32>
    %426 = math.exp %425 : vector<2x64xf32>
    %cst_51 = arith.constant 1.000000e+00 : f32
    %427 = vector.broadcast %cst_51 : f32 to vector<2x64xf32>
    %428 = arith.addf %427, %426 : vector<2x64xf32>
    %429 = arith.divf %427, %428 : vector<2x64xf32>
    %430 = vector.extract_strided_slice %418 {offsets = [0, 64], sizes = [2, 32], strides = [1, 1]} : vector<2x96xf32> to vector<2x32xf32>
    %431 = vector.extract_strided_slice %429 {offsets = [0, 0], sizes = [2, 32], strides = [1, 1]} : vector<2x64xf32> to vector<2x32xf32>
    %432 = vector.extract_strided_slice %421 {offsets = [0, 64], sizes = [2, 32], strides = [1, 1]} : vector<2x96xf32> to vector<2x32xf32>
    %433 = arith.mulf %431, %432 : vector<2x32xf32>
    %434 = arith.addf %430, %433 : vector<2x32xf32>
    %435 = math.tanh %434 : vector<2x32xf32>
    %436 = vector.extract_strided_slice %429 {offsets = [0, 32], sizes = [2, 32], strides = [1, 1]} : vector<2x64xf32> to vector<2x32xf32>
    %cst_52 = arith.constant 1.000000e+00 : f32
    %437 = vector.broadcast %cst_52 : f32 to vector<2x32xf32>
    %438 = arith.subf %437, %436 : vector<2x32xf32>
    %439 = arith.mulf %438, %435 : vector<2x32xf32>
    %440 = arith.mulf %436, %409 : vector<2x32xf32>
    %441 = arith.addf %439, %440 : vector<2x32xf32>
    %442 = vector.extract_strided_slice %441 {offsets = [0, 0], sizes = [1, 32], strides = [1, 1]} : vector<2x32xf32> to vector<1x32xf32>
    %443 = vector.extract_strided_slice %441 {offsets = [1, 0], sizes = [1, 32], strides = [1, 1]} : vector<2x32xf32> to vector<1x32xf32>
    %444 = arith.truncf %441 : vector<2x32xf32> to vector<2x32xbf16>
    %cst_53 = arith.constant dense<0.000000e+00> : vector<2x192xf32>
    %445 = tpu.matmul %444, %3, %cst_53 {dimension_numbers = #tpu.dot_dimension_numbers<[1], [0], [0], [1], [0, 0, 1, 1], [], []>} : vector<2x32xbf16>, vector<32x192xbf16>, vector<2x192xf32> -> vector<2x192xf32>
    %446 = vector.broadcast %7 : vector<1x192xf32> to vector<2x192xf32>
    %447 = arith.addf %445, %446 : vector<2x192xf32>
    %448 = vector.extract_strided_slice %282 {offsets = [5, 0], sizes = [1, 96], strides = [1, 1]} : vector<8x192xf32> to vector<1x96xf32>
    %449 = vector.extract_strided_slice %282 {offsets = [2, 96], sizes = [1, 96], strides = [1, 1]} : vector<8x192xf32> to vector<1x96xf32>
    %450 = tpu.concatenate %448, %449 in 0 : vector<1x96xf32>, vector<1x96xf32> -> vector<2x96xf32>
    %451 = vector.extract_strided_slice %447 {offsets = [0, 0], sizes = [1, 96], strides = [1, 1]} : vector<2x192xf32> to vector<1x96xf32>
    %452 = vector.extract_strided_slice %447 {offsets = [1, 96], sizes = [1, 96], strides = [1, 1]} : vector<2x192xf32> to vector<1x96xf32>
    %453 = tpu.concatenate %451, %452 in 0 : vector<1x96xf32>, vector<1x96xf32> -> vector<2x96xf32>
    %454 = vector.extract_strided_slice %450 {offsets = [0, 0], sizes = [2, 64], strides = [1, 1]} : vector<2x96xf32> to vector<2x64xf32>
    %455 = vector.extract_strided_slice %453 {offsets = [0, 0], sizes = [2, 64], strides = [1, 1]} : vector<2x96xf32> to vector<2x64xf32>
    %456 = arith.addf %454, %455 : vector<2x64xf32>
    %457 = arith.negf %456 : vector<2x64xf32>
    %458 = math.exp %457 : vector<2x64xf32>
    %cst_54 = arith.constant 1.000000e+00 : f32
    %459 = vector.broadcast %cst_54 : f32 to vector<2x64xf32>
    %460 = arith.addf %459, %458 : vector<2x64xf32>
    %461 = arith.divf %459, %460 : vector<2x64xf32>
    %462 = vector.extract_strided_slice %450 {offsets = [0, 64], sizes = [2, 32], strides = [1, 1]} : vector<2x96xf32> to vector<2x32xf32>
    %463 = vector.extract_strided_slice %461 {offsets = [0, 0], sizes = [2, 32], strides = [1, 1]} : vector<2x64xf32> to vector<2x32xf32>
    %464 = vector.extract_strided_slice %453 {offsets = [0, 64], sizes = [2, 32], strides = [1, 1]} : vector<2x96xf32> to vector<2x32xf32>
    %465 = arith.mulf %463, %464 : vector<2x32xf32>
    %466 = arith.addf %462, %465 : vector<2x32xf32>
    %467 = math.tanh %466 : vector<2x32xf32>
    %468 = vector.extract_strided_slice %461 {offsets = [0, 32], sizes = [2, 32], strides = [1, 1]} : vector<2x64xf32> to vector<2x32xf32>
    %cst_55 = arith.constant 1.000000e+00 : f32
    %469 = vector.broadcast %cst_55 : f32 to vector<2x32xf32>
    %470 = arith.subf %469, %468 : vector<2x32xf32>
    %471 = arith.mulf %470, %467 : vector<2x32xf32>
    %472 = arith.mulf %468, %441 : vector<2x32xf32>
    %473 = arith.addf %471, %472 : vector<2x32xf32>
    %474 = vector.extract_strided_slice %473 {offsets = [0, 0], sizes = [1, 32], strides = [1, 1]} : vector<2x32xf32> to vector<1x32xf32>
    %475 = vector.extract_strided_slice %473 {offsets = [1, 0], sizes = [1, 32], strides = [1, 1]} : vector<2x32xf32> to vector<1x32xf32>
    %476 = arith.truncf %473 : vector<2x32xf32> to vector<2x32xbf16>
    %cst_56 = arith.constant dense<0.000000e+00> : vector<2x192xf32>
    %477 = tpu.matmul %476, %3, %cst_56 {dimension_numbers = #tpu.dot_dimension_numbers<[1], [0], [0], [1], [0, 0, 1, 1], [], []>} : vector<2x32xbf16>, vector<32x192xbf16>, vector<2x192xf32> -> vector<2x192xf32>
    %478 = vector.broadcast %7 : vector<1x192xf32> to vector<2x192xf32>
    %479 = arith.addf %477, %478 : vector<2x192xf32>
    %480 = vector.extract_strided_slice %282 {offsets = [6, 0], sizes = [1, 96], strides = [1, 1]} : vector<8x192xf32> to vector<1x96xf32>
    %481 = vector.extract_strided_slice %282 {offsets = [1, 96], sizes = [1, 96], strides = [1, 1]} : vector<8x192xf32> to vector<1x96xf32>
    %482 = tpu.concatenate %480, %481 in 0 : vector<1x96xf32>, vector<1x96xf32> -> vector<2x96xf32>
    %483 = vector.extract_strided_slice %479 {offsets = [0, 0], sizes = [1, 96], strides = [1, 1]} : vector<2x192xf32> to vector<1x96xf32>
    %484 = vector.extract_strided_slice %479 {offsets = [1, 96], sizes = [1, 96], strides = [1, 1]} : vector<2x192xf32> to vector<1x96xf32>
    %485 = tpu.concatenate %483, %484 in 0 : vector<1x96xf32>, vector<1x96xf32> -> vector<2x96xf32>
    %486 = vector.extract_strided_slice %482 {offsets = [0, 0], sizes = [2, 64], strides = [1, 1]} : vector<2x96xf32> to vector<2x64xf32>
    %487 = vector.extract_strided_slice %485 {offsets = [0, 0], sizes = [2, 64], strides = [1, 1]} : vector<2x96xf32> to vector<2x64xf32>
    %488 = arith.addf %486, %487 : vector<2x64xf32>
    %489 = arith.negf %488 : vector<2x64xf32>
    %490 = math.exp %489 : vector<2x64xf32>
    %cst_57 = arith.constant 1.000000e+00 : f32
    %491 = vector.broadcast %cst_57 : f32 to vector<2x64xf32>
    %492 = arith.addf %491, %490 : vector<2x64xf32>
    %493 = arith.divf %491, %492 : vector<2x64xf32>
    %494 = vector.extract_strided_slice %482 {offsets = [0, 64], sizes = [2, 32], strides = [1, 1]} : vector<2x96xf32> to vector<2x32xf32>
    %495 = vector.extract_strided_slice %493 {offsets = [0, 0], sizes = [2, 32], strides = [1, 1]} : vector<2x64xf32> to vector<2x32xf32>
    %496 = vector.extract_strided_slice %485 {offsets = [0, 64], sizes = [2, 32], strides = [1, 1]} : vector<2x96xf32> to vector<2x32xf32>
    %497 = arith.mulf %495, %496 : vector<2x32xf32>
    %498 = arith.addf %494, %497 : vector<2x32xf32>
    %499 = math.tanh %498 : vector<2x32xf32>
    %500 = vector.extract_strided_slice %493 {offsets = [0, 32], sizes = [2, 32], strides = [1, 1]} : vector<2x64xf32> to vector<2x32xf32>
    %cst_58 = arith.constant 1.000000e+00 : f32
    %501 = vector.broadcast %cst_58 : f32 to vector<2x32xf32>
    %502 = arith.subf %501, %500 : vector<2x32xf32>
    %503 = arith.mulf %502, %499 : vector<2x32xf32>
    %504 = arith.mulf %500, %473 : vector<2x32xf32>
    %505 = arith.addf %503, %504 : vector<2x32xf32>
    %506 = vector.extract_strided_slice %505 {offsets = [0, 0], sizes = [1, 32], strides = [1, 1]} : vector<2x32xf32> to vector<1x32xf32>
    %507 = vector.extract_strided_slice %505 {offsets = [1, 0], sizes = [1, 32], strides = [1, 1]} : vector<2x32xf32> to vector<1x32xf32>
    %508 = arith.truncf %505 : vector<2x32xf32> to vector<2x32xbf16>
    %cst_59 = arith.constant dense<0.000000e+00> : vector<2x192xf32>
    %509 = tpu.matmul %508, %3, %cst_59 {dimension_numbers = #tpu.dot_dimension_numbers<[1], [0], [0], [1], [0, 0, 1, 1], [], []>} : vector<2x32xbf16>, vector<32x192xbf16>, vector<2x192xf32> -> vector<2x192xf32>
    %510 = vector.broadcast %7 : vector<1x192xf32> to vector<2x192xf32>
    %511 = arith.addf %509, %510 : vector<2x192xf32>
    %512 = vector.extract_strided_slice %282 {offsets = [7, 0], sizes = [1, 96], strides = [1, 1]} : vector<8x192xf32> to vector<1x96xf32>
    %513 = vector.extract_strided_slice %282 {offsets = [0, 96], sizes = [1, 96], strides = [1, 1]} : vector<8x192xf32> to vector<1x96xf32>
    %514 = tpu.concatenate %512, %513 in 0 : vector<1x96xf32>, vector<1x96xf32> -> vector<2x96xf32>
    %515 = vector.extract_strided_slice %511 {offsets = [0, 0], sizes = [1, 96], strides = [1, 1]} : vector<2x192xf32> to vector<1x96xf32>
    %516 = vector.extract_strided_slice %511 {offsets = [1, 96], sizes = [1, 96], strides = [1, 1]} : vector<2x192xf32> to vector<1x96xf32>
    %517 = tpu.concatenate %515, %516 in 0 : vector<1x96xf32>, vector<1x96xf32> -> vector<2x96xf32>
    %518 = vector.extract_strided_slice %514 {offsets = [0, 0], sizes = [2, 64], strides = [1, 1]} : vector<2x96xf32> to vector<2x64xf32>
    %519 = vector.extract_strided_slice %517 {offsets = [0, 0], sizes = [2, 64], strides = [1, 1]} : vector<2x96xf32> to vector<2x64xf32>
    %520 = arith.addf %518, %519 : vector<2x64xf32>
    %521 = arith.negf %520 : vector<2x64xf32>
    %522 = math.exp %521 : vector<2x64xf32>
    %cst_60 = arith.constant 1.000000e+00 : f32
    %523 = vector.broadcast %cst_60 : f32 to vector<2x64xf32>
    %524 = arith.addf %523, %522 : vector<2x64xf32>
    %525 = arith.divf %523, %524 : vector<2x64xf32>
    %526 = vector.extract_strided_slice %514 {offsets = [0, 64], sizes = [2, 32], strides = [1, 1]} : vector<2x96xf32> to vector<2x32xf32>
    %527 = vector.extract_strided_slice %525 {offsets = [0, 0], sizes = [2, 32], strides = [1, 1]} : vector<2x64xf32> to vector<2x32xf32>
    %528 = vector.extract_strided_slice %517 {offsets = [0, 64], sizes = [2, 32], strides = [1, 1]} : vector<2x96xf32> to vector<2x32xf32>
    %529 = arith.mulf %527, %528 : vector<2x32xf32>
    %530 = arith.addf %526, %529 : vector<2x32xf32>
    %531 = math.tanh %530 : vector<2x32xf32>
    %532 = vector.extract_strided_slice %525 {offsets = [0, 32], sizes = [2, 32], strides = [1, 1]} : vector<2x64xf32> to vector<2x32xf32>
    %cst_61 = arith.constant 1.000000e+00 : f32
    %533 = vector.broadcast %cst_61 : f32 to vector<2x32xf32>
    %534 = arith.subf %533, %532 : vector<2x32xf32>
    %535 = arith.mulf %534, %531 : vector<2x32xf32>
    %536 = arith.mulf %532, %505 : vector<2x32xf32>
    %537 = arith.addf %535, %536 : vector<2x32xf32>
    %538 = vector.extract_strided_slice %537 {offsets = [0, 0], sizes = [1, 32], strides = [1, 1]} : vector<2x32xf32> to vector<1x32xf32>
    %539 = vector.extract_strided_slice %537 {offsets = [1, 0], sizes = [1, 32], strides = [1, 1]} : vector<2x32xf32> to vector<1x32xf32>
    %540 = tpu.concatenate %314, %346, %378, %410, %442, %474, %506, %538 in 0 : vector<1x32xf32>, vector<1x32xf32>, vector<1x32xf32>, vector<1x32xf32>, vector<1x32xf32>, vector<1x32xf32>, vector<1x32xf32>, vector<1x32xf32> -> vector<8x32xf32>
    %541 = tpu.concatenate %539, %507, %475, %443, %411, %379, %347, %315 in 0 : vector<1x32xf32>, vector<1x32xf32>, vector<1x32xf32>, vector<1x32xf32>, vector<1x32xf32>, vector<1x32xf32>, vector<1x32xf32>, vector<1x32xf32> -> vector<8x32xf32>
    %542 = arith.addf %540, %541 : vector<8x32xf32>
    %543 = arith.truncf %542 : vector<8x32xf32> to vector<8x32xbf16>
    %c192 = arith.constant 192 : index
    %c0_62 = arith.constant 0 : index
    %544 = vector.load %arg2[%c192, %c0_62] : memref<384x224xbf16, #tpu.memory_space<vmem>>, vector<128x224xbf16>
    %c320 = arith.constant 320 : index
    %c0_63 = arith.constant 0 : index
    %545 = vector.load %arg2[%c320, %c0_63] : memref<384x224xbf16, #tpu.memory_space<vmem>>, vector<32x96xbf16>
    %c352 = arith.constant 352 : index
    %c0_64 = arith.constant 0 : index
    %546 = vector.load %arg2[%c352, %c0_64] : memref<384x224xbf16, #tpu.memory_space<vmem>>, vector<32x32xbf16>
    %c352_65 = arith.constant 352 : index
    %c32 = arith.constant 32 : index
    %547 = vector.load %arg2[%c352_65, %c32] : memref<384x224xbf16, #tpu.memory_space<vmem>>, vector<32x32xbf16>
    %c352_66 = arith.constant 352 : index
    %c64_67 = arith.constant 64 : index
    %548 = vector.load %arg2[%c352_66, %c64_67] : memref<384x224xbf16, #tpu.memory_space<vmem>>, vector<32x64xbf16>
    %c4 = arith.constant 4 : index
    %c0_68 = arith.constant 0 : index
    %549 = vector.load %arg3[%c4, %c0_68] : memref<8x224xf32, #tpu.memory_space<vmem>>, vector<1x224xf32>
    %c5 = arith.constant 5 : index
    %c0_69 = arith.constant 0 : index
    %550 = vector.load %arg3[%c5, %c0_69] : memref<8x224xf32, #tpu.memory_space<vmem>>, vector<1x96xf32>
    %c6 = arith.constant 6 : index
    %c0_70 = arith.constant 0 : index
    %551 = vector.load %arg3[%c6, %c0_70] : memref<8x224xf32, #tpu.memory_space<vmem>>, vector<1x32xf32>
    %c7 = arith.constant 7 : index
    %c0_71 = arith.constant 0 : index
    %552 = vector.load %arg3[%c7, %c0_71] : memref<8x224xf32, #tpu.memory_space<vmem>>, vector<1x64xf32>
    %553 = arith.extf %546 : vector<32x32xbf16> to vector<32x32xf32>
    %554 = tpu.concatenate %542, %553 in 0 : vector<8x32xf32>, vector<32x32xf32> -> vector<40x32xf32>
    %555 = arith.truncf %554 : vector<40x32xf32> to vector<40x32xbf16>
    %556 = vector.extract_strided_slice %273 {offsets = [0, 0], sizes = [1, 32], strides = [1, 1]} : vector<2x32xf32> to vector<1x32xf32>
    %557 = vector.extract_strided_slice %273 {offsets = [1, 0], sizes = [1, 32], strides = [1, 1]} : vector<2x32xf32> to vector<1x32xf32>
    %558 = tpu.iota {dimensions = array<i32: 1>} : vector<1x64xi32>
    %c1_i32 = arith.constant 1 : i32
    %559 = vector.broadcast %c1_i32 : i32 to vector<1x1xi32>
    %560 = vector.broadcast %559 : vector<1x1xi32> to vector<1x64xi32>
    %561 = arith.cmpi eq, %558, %560 : vector<1x64xi32>
    %562 = arith.extui %561 : vector<1x64xi1> to vector<1x64xi32>
    %563 = arith.sitofp %562 : vector<1x64xi32> to vector<1x64xf32>
    %564 = tpu.concatenate %563, %556, %557 in 1 : vector<1x64xf32>, vector<1x32xf32>, vector<1x32xf32> -> vector<1x128xf32>
    %565 = arith.truncf %564 : vector<1x128xf32> to vector<1x128xbf16>
    %cst_72 = arith.constant dense<0.000000e+00> : vector<1x224xf32>
    %566 = tpu.matmul %565, %544, %cst_72 {dimension_numbers = #tpu.dot_dimension_numbers<[1], [0], [0], [1], [0, 0, 1, 1], [], []>} : vector<1x128xbf16>, vector<128x224xbf16>, vector<1x224xf32> -> vector<1x224xf32>
    %567 = arith.addf %566, %549 : vector<1x224xf32>
    %568 = vector.extract_strided_slice %567 {offsets = [0, 0], sizes = [1, 64], strides = [1, 1]} : vector<1x224xf32> to vector<1x64xf32>
    %569 = arith.negf %568 : vector<1x64xf32>
    %570 = math.exp %569 : vector<1x64xf32>
    %cst_73 = arith.constant 1.000000e+00 : f32
    %571 = vector.broadcast %cst_73 : f32 to vector<1x64xf32>
    %572 = arith.addf %571, %570 : vector<1x64xf32>
    %573 = arith.divf %571, %572 : vector<1x64xf32>
    %574 = vector.extract_strided_slice %567 {offsets = [0, 64], sizes = [1, 32], strides = [1, 1]} : vector<1x224xf32> to vector<1x32xf32>
    %575 = vector.extract_strided_slice %573 {offsets = [0, 0], sizes = [1, 32], strides = [1, 1]} : vector<1x64xf32> to vector<1x32xf32>
    %576 = vector.extract_strided_slice %567 {offsets = [0, 96], sizes = [1, 32], strides = [1, 1]} : vector<1x224xf32> to vector<1x32xf32>
    %577 = arith.mulf %575, %576 : vector<1x32xf32>
    %578 = arith.addf %574, %577 : vector<1x32xf32>
    %579 = math.tanh %578 : vector<1x32xf32>
    %580 = vector.extract_strided_slice %573 {offsets = [0, 32], sizes = [1, 32], strides = [1, 1]} : vector<1x64xf32> to vector<1x32xf32>
    %cst_74 = arith.constant 1.000000e+00 : f32
    %581 = vector.broadcast %cst_74 : f32 to vector<1x32xf32>
    %582 = arith.subf %581, %580 : vector<1x32xf32>
    %583 = arith.mulf %582, %579 : vector<1x32xf32>
    %584 = vector.extract_strided_slice %573 {offsets = [0, 32], sizes = [1, 32], strides = [1, 1]} : vector<1x64xf32> to vector<1x32xf32>
    %585 = arith.mulf %584, %556 : vector<1x32xf32>
    %586 = arith.addf %583, %585 : vector<1x32xf32>
    %587 = vector.extract_strided_slice %567 {offsets = [0, 128], sizes = [1, 96], strides = [1, 1]} : vector<1x224xf32> to vector<1x96xf32>
    %588 = arith.truncf %586 : vector<1x32xf32> to vector<1x32xbf16>
    %cst_75 = arith.constant dense<0.000000e+00> : vector<1x96xf32>
    %589 = tpu.matmul %588, %545, %cst_75 {dimension_numbers = #tpu.dot_dimension_numbers<[1], [0], [0], [1], [0, 0, 1, 1], [], []>} : vector<1x32xbf16>, vector<32x96xbf16>, vector<1x96xf32> -> vector<1x96xf32>
    %590 = arith.addf %589, %550 : vector<1x96xf32>
    %591 = vector.extract_strided_slice %590 {offsets = [0, 0], sizes = [1, 64], strides = [1, 1]} : vector<1x96xf32> to vector<1x64xf32>
    %592 = vector.extract_strided_slice %587 {offsets = [0, 0], sizes = [1, 64], strides = [1, 1]} : vector<1x96xf32> to vector<1x64xf32>
    %593 = arith.addf %591, %592 : vector<1x64xf32>
    %594 = arith.negf %593 : vector<1x64xf32>
    %595 = math.exp %594 : vector<1x64xf32>
    %cst_76 = arith.constant 1.000000e+00 : f32
    %596 = vector.broadcast %cst_76 : f32 to vector<1x64xf32>
    %597 = arith.addf %596, %595 : vector<1x64xf32>
    %598 = arith.divf %596, %597 : vector<1x64xf32>
    %599 = vector.extract_strided_slice %590 {offsets = [0, 64], sizes = [1, 32], strides = [1, 1]} : vector<1x96xf32> to vector<1x32xf32>
    %600 = vector.extract_strided_slice %598 {offsets = [0, 0], sizes = [1, 32], strides = [1, 1]} : vector<1x64xf32> to vector<1x32xf32>
    %601 = vector.extract_strided_slice %587 {offsets = [0, 64], sizes = [1, 32], strides = [1, 1]} : vector<1x96xf32> to vector<1x32xf32>
    %602 = arith.mulf %600, %601 : vector<1x32xf32>
    %603 = arith.addf %599, %602 : vector<1x32xf32>
    %604 = math.tanh %603 : vector<1x32xf32>
    %605 = vector.extract_strided_slice %598 {offsets = [0, 32], sizes = [1, 32], strides = [1, 1]} : vector<1x64xf32> to vector<1x32xf32>
    %cst_77 = arith.constant 1.000000e+00 : f32
    %606 = vector.broadcast %cst_77 : f32 to vector<1x32xf32>
    %607 = arith.subf %606, %605 : vector<1x32xf32>
    %608 = arith.mulf %607, %604 : vector<1x32xf32>
    %609 = arith.mulf %605, %557 : vector<1x32xf32>
    %610 = arith.addf %608, %609 : vector<1x32xf32>
    %611 = arith.truncf %610 : vector<1x32xf32> to vector<1x32xbf16>
    %cst_78 = arith.constant dense<0.000000e+00> : vector<1x40xf32>
    %612 = tpu.matmul %611, %555, %cst_78 {dimension_numbers = #tpu.dot_dimension_numbers<[1], [1], [0], [0], [0, 0, 1, 0], [], []>} : vector<1x32xbf16>, vector<40x32xbf16>, vector<1x40xf32> -> vector<1x40xf32>
    %613 = vector.extract_strided_slice %612 {offsets = [0, 0], sizes = [1, 8], strides = [1, 1]} : vector<1x40xf32> to vector<1x8xf32>
    %614 = math.exp %613 : vector<1x8xf32>
    %cst_79 = arith.constant dense<0.000000e+00> : vector<1xf32>
    %615 = vector.multi_reduction <add>, %614, %cst_79 [1] : vector<1x8xf32> to vector<1xf32>
    %616 = vector.shape_cast %615 : vector<1xf32> to vector<1x1xf32>
    %617 = tpu.reciprocal %616 {approx = true} : vector<1x1xf32> -> vector<1x1xf32>
    %618 = vector.broadcast %617 : vector<1x1xf32> to vector<1x8xf32>
    %619 = arith.mulf %614, %618 : vector<1x8xf32>
    %620 = arith.truncf %619 : vector<1x8xf32> to vector<1x8xbf16>
    %cst_80 = arith.constant dense<0.000000e+00> : vector<1x32xf32>
    %621 = tpu.matmul %620, %543, %cst_80 {dimension_numbers = #tpu.dot_dimension_numbers<[1], [0], [0], [1], [0, 0, 1, 1], [], []>} : vector<1x8xbf16>, vector<8x32xbf16>, vector<1x32xf32> -> vector<1x32xf32>
    %622 = vector.extract_strided_slice %612 {offsets = [0, 8], sizes = [1, 32], strides = [1, 1]} : vector<1x40xf32> to vector<1x32xf32>
    %623 = arith.truncf %621 : vector<1x32xf32> to vector<1x32xbf16>
    %cst_81 = arith.constant dense<0.000000e+00> : vector<1x32xf32>
    %624 = tpu.matmul %623, %547, %cst_81 {dimension_numbers = #tpu.dot_dimension_numbers<[1], [0], [0], [1], [0, 0, 1, 1], [], []>} : vector<1x32xbf16>, vector<32x32xbf16>, vector<1x32xf32> -> vector<1x32xf32>
    %625 = arith.addf %622, %624 : vector<1x32xf32>
    %626 = arith.addf %625, %551 : vector<1x32xf32>
    %627 = math.tanh %626 : vector<1x32xf32>
    %628 = arith.truncf %627 : vector<1x32xf32> to vector<1x32xbf16>
    %cst_82 = arith.constant dense<0.000000e+00> : vector<1x64xf32>
    %629 = tpu.matmul %628, %548, %cst_82 {dimension_numbers = #tpu.dot_dimension_numbers<[1], [0], [0], [1], [0, 0, 1, 1], [], []>} : vector<1x32xbf16>, vector<32x64xbf16>, vector<1x64xf32> -> vector<1x64xf32>
    %630 = arith.addf %629, %552 : vector<1x64xf32>
    %cst_83 = arith.constant dense<0xFF800000> : vector<1xf32>
    %631 = vector.multi_reduction <maximumf>, %630, %cst_83 [1] : vector<1x64xf32> to vector<1xf32>
    %632 = vector.shape_cast %631 : vector<1xf32> to vector<1x1xf32>
    %633 = vector.broadcast %632 : vector<1x1xf32> to vector<1x64xf32>
    %634 = arith.subf %630, %633 : vector<1x64xf32>
    %635 = math.exp %634 : vector<1x64xf32>
    %cst_84 = arith.constant dense<0.000000e+00> : vector<1xf32>
    %636 = vector.multi_reduction <add>, %635, %cst_84 [1] : vector<1x64xf32> to vector<1xf32>
    %637 = vector.shape_cast %636 : vector<1xf32> to vector<1x1xf32>
    %638 = tpu.reciprocal %637 : vector<1x1xf32> -> vector<1x1xf32>
    %639 = vector.broadcast %638 : vector<1x1xf32> to vector<1x64xf32>
    %640 = arith.mulf %635, %639 : vector<1x64xf32>
    %cst_85 = arith.constant dense<0xFF800000> : vector<1xf32>
    %641 = vector.multi_reduction <maximumf>, %640, %cst_85 [1] : vector<1x64xf32> to vector<1xf32>
    %642 = vector.shape_cast %641 : vector<1xf32> to vector<1x1xf32>
    %643 = vector.broadcast %642 : vector<1x1xf32> to vector<1x64xf32>
    %644 = arith.cmpf oge, %640, %643 : vector<1x64xf32>
    %c64_i32 = arith.constant 64 : i32
    %645 = vector.broadcast %c64_i32 : i32 to vector<1x64xi32>
    %646 = arith.select %644, %558, %645 : vector<1x64xi1>, vector<1x64xi32>
    %cst_86 = arith.constant dense<2147483647> : vector<1xi32>
    %647 = vector.multi_reduction <minsi>, %646, %cst_86 [1] : vector<1x64xi32> to vector<1xi32>
    %648 = vector.shape_cast %647 : vector<1xi32> to vector<1x1xi32>
    %c0_87 = arith.constant 0 : index
    %c0_88 = arith.constant 0 : index
    %649 = vector.load %arg4[%c0_87, %c0_88] : memref<10x1xi32, #tpu.memory_space<vmem>>, vector<1x1xi32>
    tpu.vector_store %arg4[%c0_87, %c0_88], %648 {strides = array<i32>} : memref<10x1xi32, #tpu.memory_space<vmem>>, vector<1x1xi32>,
    %c0_89 = arith.constant 0 : index
    %c0_90 = arith.constant 0 : index
    %650 = vector.load %arg5[%c0_89, %c0_90] : memref<10x1xf32, #tpu.memory_space<vmem>>, vector<1x1xf32>
    tpu.vector_store %arg5[%c0_89, %c0_90], %642 {strides = array<i32>} : memref<10x1xf32, #tpu.memory_space<vmem>>, vector<1x1xf32>,
    %651 = vector.broadcast %648 : vector<1x1xi32> to vector<1x64xi32>
    %652 = arith.cmpi eq, %558, %651 : vector<1x64xi32>
    %653 = arith.extui %652 : vector<1x64xi1> to vector<1x64xi32>
    %654 = arith.sitofp %653 : vector<1x64xi32> to vector<1x64xf32>
    %655 = tpu.concatenate %654, %586, %610 in 1 : vector<1x64xf32>, vector<1x32xf32>, vector<1x32xf32> -> vector<1x128xf32>
    %656 = arith.truncf %655 : vector<1x128xf32> to vector<1x128xbf16>
    %cst_91 = arith.constant dense<0.000000e+00> : vector<1x224xf32>
    %657 = tpu.matmul %656, %544, %cst_91 {dimension_numbers = #tpu.dot_dimension_numbers<[1], [0], [0], [1], [0, 0, 1, 1], [], []>} : vector<1x128xbf16>, vector<128x224xbf16>, vector<1x224xf32> -> vector<1x224xf32>
    %658 = arith.addf %657, %549 : vector<1x224xf32>
    %659 = vector.extract_strided_slice %658 {offsets = [0, 0], sizes = [1, 64], strides = [1, 1]} : vector<1x224xf32> to vector<1x64xf32>
    %660 = arith.negf %659 : vector<1x64xf32>
    %661 = math.exp %660 : vector<1x64xf32>
    %cst_92 = arith.constant 1.000000e+00 : f32
    %662 = vector.broadcast %cst_92 : f32 to vector<1x64xf32>
    %663 = arith.addf %662, %661 : vector<1x64xf32>
    %664 = arith.divf %662, %663 : vector<1x64xf32>
    %665 = vector.extract_strided_slice %658 {offsets = [0, 64], sizes = [1, 32], strides = [1, 1]} : vector<1x224xf32> to vector<1x32xf32>
    %666 = vector.extract_strided_slice %664 {offsets = [0, 0], sizes = [1, 32], strides = [1, 1]} : vector<1x64xf32> to vector<1x32xf32>
    %667 = vector.extract_strided_slice %658 {offsets = [0, 96], sizes = [1, 32], strides = [1, 1]} : vector<1x224xf32> to vector<1x32xf32>
    %668 = arith.mulf %666, %667 : vector<1x32xf32>
    %669 = arith.addf %665, %668 : vector<1x32xf32>
    %670 = math.tanh %669 : vector<1x32xf32>
    %671 = vector.extract_strided_slice %664 {offsets = [0, 32], sizes = [1, 32], strides = [1, 1]} : vector<1x64xf32> to vector<1x32xf32>
    %cst_93 = arith.constant 1.000000e+00 : f32
    %672 = vector.broadcast %cst_93 : f32 to vector<1x32xf32>
    %673 = arith.subf %672, %671 : vector<1x32xf32>
    %674 = arith.mulf %673, %670 : vector<1x32xf32>
    %675 = vector.extract_strided_slice %664 {offsets = [0, 32], sizes = [1, 32], strides = [1, 1]} : vector<1x64xf32> to vector<1x32xf32>
    %676 = arith.mulf %675, %586 : vector<1x32xf32>
    %677 = arith.addf %674, %676 : vector<1x32xf32>
    %678 = vector.extract_strided_slice %658 {offsets = [0, 128], sizes = [1, 96], strides = [1, 1]} : vector<1x224xf32> to vector<1x96xf32>
    %679 = arith.truncf %677 : vector<1x32xf32> to vector<1x32xbf16>
    %cst_94 = arith.constant dense<0.000000e+00> : vector<1x96xf32>
    %680 = tpu.matmul %679, %545, %cst_94 {dimension_numbers = #tpu.dot_dimension_numbers<[1], [0], [0], [1], [0, 0, 1, 1], [], []>} : vector<1x32xbf16>, vector<32x96xbf16>, vector<1x96xf32> -> vector<1x96xf32>
    %681 = arith.addf %680, %550 : vector<1x96xf32>
    %682 = vector.extract_strided_slice %681 {offsets = [0, 0], sizes = [1, 64], strides = [1, 1]} : vector<1x96xf32> to vector<1x64xf32>
    %683 = vector.extract_strided_slice %678 {offsets = [0, 0], sizes = [1, 64], strides = [1, 1]} : vector<1x96xf32> to vector<1x64xf32>
    %684 = arith.addf %682, %683 : vector<1x64xf32>
    %685 = arith.negf %684 : vector<1x64xf32>
    %686 = math.exp %685 : vector<1x64xf32>
    %cst_95 = arith.constant 1.000000e+00 : f32
    %687 = vector.broadcast %cst_95 : f32 to vector<1x64xf32>
    %688 = arith.addf %687, %686 : vector<1x64xf32>
    %689 = arith.divf %687, %688 : vector<1x64xf32>
    %690 = vector.extract_strided_slice %681 {offsets = [0, 64], sizes = [1, 32], strides = [1, 1]} : vector<1x96xf32> to vector<1x32xf32>
    %691 = vector.extract_strided_slice %689 {offsets = [0, 0], sizes = [1, 32], strides = [1, 1]} : vector<1x64xf32> to vector<1x32xf32>
    %692 = vector.extract_strided_slice %678 {offsets = [0, 64], sizes = [1, 32], strides = [1, 1]} : vector<1x96xf32> to vector<1x32xf32>
    %693 = arith.mulf %691, %692 : vector<1x32xf32>
    %694 = arith.addf %690, %693 : vector<1x32xf32>
    %695 = math.tanh %694 : vector<1x32xf32>
    %696 = vector.extract_strided_slice %689 {offsets = [0, 32], sizes = [1, 32], strides = [1, 1]} : vector<1x64xf32> to vector<1x32xf32>
    %cst_96 = arith.constant 1.000000e+00 : f32
    %697 = vector.broadcast %cst_96 : f32 to vector<1x32xf32>
    %698 = arith.subf %697, %696 : vector<1x32xf32>
    %699 = arith.mulf %698, %695 : vector<1x32xf32>
    %700 = arith.mulf %696, %610 : vector<1x32xf32>
    %701 = arith.addf %699, %700 : vector<1x32xf32>
    %702 = arith.truncf %701 : vector<1x32xf32> to vector<1x32xbf16>
    %cst_97 = arith.constant dense<0.000000e+00> : vector<1x40xf32>
    %703 = tpu.matmul %702, %555, %cst_97 {dimension_numbers = #tpu.dot_dimension_numbers<[1], [1], [0], [0], [0, 0, 1, 0], [], []>} : vector<1x32xbf16>, vector<40x32xbf16>, vector<1x40xf32> -> vector<1x40xf32>
    %704 = vector.extract_strided_slice %703 {offsets = [0, 0], sizes = [1, 8], strides = [1, 1]} : vector<1x40xf32> to vector<1x8xf32>
    %705 = math.exp %704 : vector<1x8xf32>
    %cst_98 = arith.constant dense<0.000000e+00> : vector<1xf32>
    %706 = vector.multi_reduction <add>, %705, %cst_98 [1] : vector<1x8xf32> to vector<1xf32>
    %707 = vector.shape_cast %706 : vector<1xf32> to vector<1x1xf32>
    %708 = tpu.reciprocal %707 {approx = true} : vector<1x1xf32> -> vector<1x1xf32>
    %709 = vector.broadcast %708 : vector<1x1xf32> to vector<1x8xf32>
    %710 = arith.mulf %705, %709 : vector<1x8xf32>
    %711 = arith.truncf %710 : vector<1x8xf32> to vector<1x8xbf16>
    %cst_99 = arith.constant dense<0.000000e+00> : vector<1x32xf32>
    %712 = tpu.matmul %711, %543, %cst_99 {dimension_numbers = #tpu.dot_dimension_numbers<[1], [0], [0], [1], [0, 0, 1, 1], [], []>} : vector<1x8xbf16>, vector<8x32xbf16>, vector<1x32xf32> -> vector<1x32xf32>
    %713 = vector.extract_strided_slice %703 {offsets = [0, 8], sizes = [1, 32], strides = [1, 1]} : vector<1x40xf32> to vector<1x32xf32>
    %714 = arith.truncf %712 : vector<1x32xf32> to vector<1x32xbf16>
    %cst_100 = arith.constant dense<0.000000e+00> : vector<1x32xf32>
    %715 = tpu.matmul %714, %547, %cst_100 {dimension_numbers = #tpu.dot_dimension_numbers<[1], [0], [0], [1], [0, 0, 1, 1], [], []>} : vector<1x32xbf16>, vector<32x32xbf16>, vector<1x32xf32> -> vector<1x32xf32>
    %716 = arith.addf %713, %715 : vector<1x32xf32>
    %717 = arith.addf %716, %551 : vector<1x32xf32>
    %718 = math.tanh %717 : vector<1x32xf32>
    %719 = arith.truncf %718 : vector<1x32xf32> to vector<1x32xbf16>
    %cst_101 = arith.constant dense<0.000000e+00> : vector<1x64xf32>
    %720 = tpu.matmul %719, %548, %cst_101 {dimension_numbers = #tpu.dot_dimension_numbers<[1], [0], [0], [1], [0, 0, 1, 1], [], []>} : vector<1x32xbf16>, vector<32x64xbf16>, vector<1x64xf32> -> vector<1x64xf32>
    %721 = arith.addf %720, %552 : vector<1x64xf32>
    %cst_102 = arith.constant dense<0xFF800000> : vector<1xf32>
    %722 = vector.multi_reduction <maximumf>, %721, %cst_102 [1] : vector<1x64xf32> to vector<1xf32>
    %723 = vector.shape_cast %722 : vector<1xf32> to vector<1x1xf32>
    %724 = vector.broadcast %723 : vector<1x1xf32> to vector<1x64xf32>
    %725 = arith.subf %721, %724 : vector<1x64xf32>
    %726 = math.exp %725 : vector<1x64xf32>
    %cst_103 = arith.constant dense<0.000000e+00> : vector<1xf32>
    %727 = vector.multi_reduction <add>, %726, %cst_103 [1] : vector<1x64xf32> to vector<1xf32>
    %728 = vector.shape_cast %727 : vector<1xf32> to vector<1x1xf32>
    %729 = tpu.reciprocal %728 : vector<1x1xf32> -> vector<1x1xf32>
    %730 = vector.broadcast %729 : vector<1x1xf32> to vector<1x64xf32>
    %731 = arith.mulf %726, %730 : vector<1x64xf32>
    %cst_104 = arith.constant dense<0xFF800000> : vector<1xf32>
    %732 = vector.multi_reduction <maximumf>, %731, %cst_104 [1] : vector<1x64xf32> to vector<1xf32>
    %733 = vector.shape_cast %732 : vector<1xf32> to vector<1x1xf32>
    %734 = vector.broadcast %733 : vector<1x1xf32> to vector<1x64xf32>
    %735 = arith.cmpf oge, %731, %734 : vector<1x64xf32>
    %c64_i32_105 = arith.constant 64 : i32
    %736 = vector.broadcast %c64_i32_105 : i32 to vector<1x64xi32>
    %737 = arith.select %735, %558, %736 : vector<1x64xi1>, vector<1x64xi32>
    %cst_106 = arith.constant dense<2147483647> : vector<1xi32>
    %738 = vector.multi_reduction <minsi>, %737, %cst_106 [1] : vector<1x64xi32> to vector<1xi32>
    %739 = vector.shape_cast %738 : vector<1xi32> to vector<1x1xi32>
    %c1_107 = arith.constant 1 : index
    %c0_108 = arith.constant 0 : index
    %740 = vector.load %arg4[%c1_107, %c0_108] : memref<10x1xi32, #tpu.memory_space<vmem>>, vector<1x1xi32>
    tpu.vector_store %arg4[%c1_107, %c0_108], %739 {strides = array<i32>} : memref<10x1xi32, #tpu.memory_space<vmem>>, vector<1x1xi32>,
    %c1_109 = arith.constant 1 : index
    %c0_110 = arith.constant 0 : index
    %741 = vector.load %arg5[%c1_109, %c0_110] : memref<10x1xf32, #tpu.memory_space<vmem>>, vector<1x1xf32>
    tpu.vector_store %arg5[%c1_109, %c0_110], %733 {strides = array<i32>} : memref<10x1xf32, #tpu.memory_space<vmem>>, vector<1x1xf32>,
    %742 = vector.broadcast %739 : vector<1x1xi32> to vector<1x64xi32>
    %743 = arith.cmpi eq, %558, %742 : vector<1x64xi32>
    %744 = arith.extui %743 : vector<1x64xi1> to vector<1x64xi32>
    %745 = arith.sitofp %744 : vector<1x64xi32> to vector<1x64xf32>
    %746 = tpu.concatenate %745, %677, %701 in 1 : vector<1x64xf32>, vector<1x32xf32>, vector<1x32xf32> -> vector<1x128xf32>
    %747 = arith.truncf %746 : vector<1x128xf32> to vector<1x128xbf16>
    %cst_111 = arith.constant dense<0.000000e+00> : vector<1x224xf32>
    %748 = tpu.matmul %747, %544, %cst_111 {dimension_numbers = #tpu.dot_dimension_numbers<[1], [0], [0], [1], [0, 0, 1, 1], [], []>} : vector<1x128xbf16>, vector<128x224xbf16>, vector<1x224xf32> -> vector<1x224xf32>
    %749 = arith.addf %748, %549 : vector<1x224xf32>
    %750 = vector.extract_strided_slice %749 {offsets = [0, 0], sizes = [1, 64], strides = [1, 1]} : vector<1x224xf32> to vector<1x64xf32>
    %751 = arith.negf %750 : vector<1x64xf32>
    %752 = math.exp %751 : vector<1x64xf32>
    %cst_112 = arith.constant 1.000000e+00 : f32
    %753 = vector.broadcast %cst_112 : f32 to vector<1x64xf32>
    %754 = arith.addf %753, %752 : vector<1x64xf32>
    %755 = arith.divf %753, %754 : vector<1x64xf32>
    %756 = vector.extract_strided_slice %749 {offsets = [0, 64], sizes = [1, 32], strides = [1, 1]} : vector<1x224xf32> to vector<1x32xf32>
    %757 = vector.extract_strided_slice %755 {offsets = [0, 0], sizes = [1, 32], strides = [1, 1]} : vector<1x64xf32> to vector<1x32xf32>
    %758 = vector.extract_strided_slice %749 {offsets = [0, 96], sizes = [1, 32], strides = [1, 1]} : vector<1x224xf32> to vector<1x32xf32>
    %759 = arith.mulf %757, %758 : vector<1x32xf32>
    %760 = arith.addf %756, %759 : vector<1x32xf32>
    %761 = math.tanh %760 : vector<1x32xf32>
    %762 = vector.extract_strided_slice %755 {offsets = [0, 32], sizes = [1, 32], strides = [1, 1]} : vector<1x64xf32> to vector<1x32xf32>
    %cst_113 = arith.constant 1.000000e+00 : f32
    %763 = vector.broadcast %cst_113 : f32 to vector<1x32xf32>
    %764 = arith.subf %763, %762 : vector<1x32xf32>
    %765 = arith.mulf %764, %761 : vector<1x32xf32>
    %766 = vector.extract_strided_slice %755 {offsets = [0, 32], sizes = [1, 32], strides = [1, 1]} : vector<1x64xf32> to vector<1x32xf32>
    %767 = arith.mulf %766, %677 : vector<1x32xf32>
    %768 = arith.addf %765, %767 : vector<1x32xf32>
    %769 = vector.extract_strided_slice %749 {offsets = [0, 128], sizes = [1, 96], strides = [1, 1]} : vector<1x224xf32> to vector<1x96xf32>
    %770 = arith.truncf %768 : vector<1x32xf32> to vector<1x32xbf16>
    %cst_114 = arith.constant dense<0.000000e+00> : vector<1x96xf32>
    %771 = tpu.matmul %770, %545, %cst_114 {dimension_numbers = #tpu.dot_dimension_numbers<[1], [0], [0], [1], [0, 0, 1, 1], [], []>} : vector<1x32xbf16>, vector<32x96xbf16>, vector<1x96xf32> -> vector<1x96xf32>
    %772 = arith.addf %771, %550 : vector<1x96xf32>
    %773 = vector.extract_strided_slice %772 {offsets = [0, 0], sizes = [1, 64], strides = [1, 1]} : vector<1x96xf32> to vector<1x64xf32>
    %774 = vector.extract_strided_slice %769 {offsets = [0, 0], sizes = [1, 64], strides = [1, 1]} : vector<1x96xf32> to vector<1x64xf32>
    %775 = arith.addf %773, %774 : vector<1x64xf32>
    %776 = arith.negf %775 : vector<1x64xf32>
    %777 = math.exp %776 : vector<1x64xf32>
    %cst_115 = arith.constant 1.000000e+00 : f32
    %778 = vector.broadcast %cst_115 : f32 to vector<1x64xf32>
    %779 = arith.addf %778, %777 : vector<1x64xf32>
    %780 = arith.divf %778, %779 : vector<1x64xf32>
    %781 = vector.extract_strided_slice %772 {offsets = [0, 64], sizes = [1, 32], strides = [1, 1]} : vector<1x96xf32> to vector<1x32xf32>
    %782 = vector.extract_strided_slice %780 {offsets = [0, 0], sizes = [1, 32], strides = [1, 1]} : vector<1x64xf32> to vector<1x32xf32>
    %783 = vector.extract_strided_slice %769 {offsets = [0, 64], sizes = [1, 32], strides = [1, 1]} : vector<1x96xf32> to vector<1x32xf32>
    %784 = arith.mulf %782, %783 : vector<1x32xf32>
    %785 = arith.addf %781, %784 : vector<1x32xf32>
    %786 = math.tanh %785 : vector<1x32xf32>
    %787 = vector.extract_strided_slice %780 {offsets = [0, 32], sizes = [1, 32], strides = [1, 1]} : vector<1x64xf32> to vector<1x32xf32>
    %cst_116 = arith.constant 1.000000e+00 : f32
    %788 = vector.broadcast %cst_116 : f32 to vector<1x32xf32>
    %789 = arith.subf %788, %787 : vector<1x32xf32>
    %790 = arith.mulf %789, %786 : vector<1x32xf32>
    %791 = arith.mulf %787, %701 : vector<1x32xf32>
    %792 = arith.addf %790, %791 : vector<1x32xf32>
    %793 = arith.truncf %792 : vector<1x32xf32> to vector<1x32xbf16>
    %cst_117 = arith.constant dense<0.000000e+00> : vector<1x40xf32>
    %794 = tpu.matmul %793, %555, %cst_117 {dimension_numbers = #tpu.dot_dimension_numbers<[1], [1], [0], [0], [0, 0, 1, 0], [], []>} : vector<1x32xbf16>, vector<40x32xbf16>, vector<1x40xf32> -> vector<1x40xf32>
    %795 = vector.extract_strided_slice %794 {offsets = [0, 0], sizes = [1, 8], strides = [1, 1]} : vector<1x40xf32> to vector<1x8xf32>
    %796 = math.exp %795 : vector<1x8xf32>
    %cst_118 = arith.constant dense<0.000000e+00> : vector<1xf32>
    %797 = vector.multi_reduction <add>, %796, %cst_118 [1] : vector<1x8xf32> to vector<1xf32>
    %798 = vector.shape_cast %797 : vector<1xf32> to vector<1x1xf32>
    %799 = tpu.reciprocal %798 {approx = true} : vector<1x1xf32> -> vector<1x1xf32>
    %800 = vector.broadcast %799 : vector<1x1xf32> to vector<1x8xf32>
    %801 = arith.mulf %796, %800 : vector<1x8xf32>
    %802 = arith.truncf %801 : vector<1x8xf32> to vector<1x8xbf16>
    %cst_119 = arith.constant dense<0.000000e+00> : vector<1x32xf32>
    %803 = tpu.matmul %802, %543, %cst_119 {dimension_numbers = #tpu.dot_dimension_numbers<[1], [0], [0], [1], [0, 0, 1, 1], [], []>} : vector<1x8xbf16>, vector<8x32xbf16>, vector<1x32xf32> -> vector<1x32xf32>
    %804 = vector.extract_strided_slice %794 {offsets = [0, 8], sizes = [1, 32], strides = [1, 1]} : vector<1x40xf32> to vector<1x32xf32>
    %805 = arith.truncf %803 : vector<1x32xf32> to vector<1x32xbf16>
    %cst_120 = arith.constant dense<0.000000e+00> : vector<1x32xf32>
    %806 = tpu.matmul %805, %547, %cst_120 {dimension_numbers = #tpu.dot_dimension_numbers<[1], [0], [0], [1], [0, 0, 1, 1], [], []>} : vector<1x32xbf16>, vector<32x32xbf16>, vector<1x32xf32> -> vector<1x32xf32>
    %807 = arith.addf %804, %806 : vector<1x32xf32>
    %808 = arith.addf %807, %551 : vector<1x32xf32>
    %809 = math.tanh %808 : vector<1x32xf32>
    %810 = arith.truncf %809 : vector<1x32xf32> to vector<1x32xbf16>
    %cst_121 = arith.constant dense<0.000000e+00> : vector<1x64xf32>
    %811 = tpu.matmul %810, %548, %cst_121 {dimension_numbers = #tpu.dot_dimension_numbers<[1], [0], [0], [1], [0, 0, 1, 1], [], []>} : vector<1x32xbf16>, vector<32x64xbf16>, vector<1x64xf32> -> vector<1x64xf32>
    %812 = arith.addf %811, %552 : vector<1x64xf32>
    %cst_122 = arith.constant dense<0xFF800000> : vector<1xf32>
    %813 = vector.multi_reduction <maximumf>, %812, %cst_122 [1] : vector<1x64xf32> to vector<1xf32>
    %814 = vector.shape_cast %813 : vector<1xf32> to vector<1x1xf32>
    %815 = vector.broadcast %814 : vector<1x1xf32> to vector<1x64xf32>
    %816 = arith.subf %812, %815 : vector<1x64xf32>
    %817 = math.exp %816 : vector<1x64xf32>
    %cst_123 = arith.constant dense<0.000000e+00> : vector<1xf32>
    %818 = vector.multi_reduction <add>, %817, %cst_123 [1] : vector<1x64xf32> to vector<1xf32>
    %819 = vector.shape_cast %818 : vector<1xf32> to vector<1x1xf32>
    %820 = tpu.reciprocal %819 : vector<1x1xf32> -> vector<1x1xf32>
    %821 = vector.broadcast %820 : vector<1x1xf32> to vector<1x64xf32>
    %822 = arith.mulf %817, %821 : vector<1x64xf32>
    %cst_124 = arith.constant dense<0xFF800000> : vector<1xf32>
    %823 = vector.multi_reduction <maximumf>, %822, %cst_124 [1] : vector<1x64xf32> to vector<1xf32>
    %824 = vector.shape_cast %823 : vector<1xf32> to vector<1x1xf32>
    %825 = vector.broadcast %824 : vector<1x1xf32> to vector<1x64xf32>
    %826 = arith.cmpf oge, %822, %825 : vector<1x64xf32>
    %c64_i32_125 = arith.constant 64 : i32
    %827 = vector.broadcast %c64_i32_125 : i32 to vector<1x64xi32>
    %828 = arith.select %826, %558, %827 : vector<1x64xi1>, vector<1x64xi32>
    %cst_126 = arith.constant dense<2147483647> : vector<1xi32>
    %829 = vector.multi_reduction <minsi>, %828, %cst_126 [1] : vector<1x64xi32> to vector<1xi32>
    %830 = vector.shape_cast %829 : vector<1xi32> to vector<1x1xi32>
    %c2_127 = arith.constant 2 : index
    %c0_128 = arith.constant 0 : index
    %831 = vector.load %arg4[%c2_127, %c0_128] : memref<10x1xi32, #tpu.memory_space<vmem>>, vector<1x1xi32>
    tpu.vector_store %arg4[%c2_127, %c0_128], %830 {strides = array<i32>} : memref<10x1xi32, #tpu.memory_space<vmem>>, vector<1x1xi32>,
    %c2_129 = arith.constant 2 : index
    %c0_130 = arith.constant 0 : index
    %832 = vector.load %arg5[%c2_129, %c0_130] : memref<10x1xf32, #tpu.memory_space<vmem>>, vector<1x1xf32>
    tpu.vector_store %arg5[%c2_129, %c0_130], %824 {strides = array<i32>} : memref<10x1xf32, #tpu.memory_space<vmem>>, vector<1x1xf32>,
    %833 = vector.broadcast %830 : vector<1x1xi32> to vector<1x64xi32>
    %834 = arith.cmpi eq, %558, %833 : vector<1x64xi32>
    %835 = arith.extui %834 : vector<1x64xi1> to vector<1x64xi32>
    %836 = arith.sitofp %835 : vector<1x64xi32> to vector<1x64xf32>
    %837 = tpu.concatenate %836, %768, %792 in 1 : vector<1x64xf32>, vector<1x32xf32>, vector<1x32xf32> -> vector<1x128xf32>
    %838 = arith.truncf %837 : vector<1x128xf32> to vector<1x128xbf16>
    %cst_131 = arith.constant dense<0.000000e+00> : vector<1x224xf32>
    %839 = tpu.matmul %838, %544, %cst_131 {dimension_numbers = #tpu.dot_dimension_numbers<[1], [0], [0], [1], [0, 0, 1, 1], [], []>} : vector<1x128xbf16>, vector<128x224xbf16>, vector<1x224xf32> -> vector<1x224xf32>
    %840 = arith.addf %839, %549 : vector<1x224xf32>
    %841 = vector.extract_strided_slice %840 {offsets = [0, 0], sizes = [1, 64], strides = [1, 1]} : vector<1x224xf32> to vector<1x64xf32>
    %842 = arith.negf %841 : vector<1x64xf32>
    %843 = math.exp %842 : vector<1x64xf32>
    %cst_132 = arith.constant 1.000000e+00 : f32
    %844 = vector.broadcast %cst_132 : f32 to vector<1x64xf32>
    %845 = arith.addf %844, %843 : vector<1x64xf32>
    %846 = arith.divf %844, %845 : vector<1x64xf32>
    %847 = vector.extract_strided_slice %840 {offsets = [0, 64], sizes = [1, 32], strides = [1, 1]} : vector<1x224xf32> to vector<1x32xf32>
    %848 = vector.extract_strided_slice %846 {offsets = [0, 0], sizes = [1, 32], strides = [1, 1]} : vector<1x64xf32> to vector<1x32xf32>
    %849 = vector.extract_strided_slice %840 {offsets = [0, 96], sizes = [1, 32], strides = [1, 1]} : vector<1x224xf32> to vector<1x32xf32>
    %850 = arith.mulf %848, %849 : vector<1x32xf32>
    %851 = arith.addf %847, %850 : vector<1x32xf32>
    %852 = math.tanh %851 : vector<1x32xf32>
    %853 = vector.extract_strided_slice %846 {offsets = [0, 32], sizes = [1, 32], strides = [1, 1]} : vector<1x64xf32> to vector<1x32xf32>
    %cst_133 = arith.constant 1.000000e+00 : f32
    %854 = vector.broadcast %cst_133 : f32 to vector<1x32xf32>
    %855 = arith.subf %854, %853 : vector<1x32xf32>
    %856 = arith.mulf %855, %852 : vector<1x32xf32>
    %857 = vector.extract_strided_slice %846 {offsets = [0, 32], sizes = [1, 32], strides = [1, 1]} : vector<1x64xf32> to vector<1x32xf32>
    %858 = arith.mulf %857, %768 : vector<1x32xf32>
    %859 = arith.addf %856, %858 : vector<1x32xf32>
    %860 = vector.extract_strided_slice %840 {offsets = [0, 128], sizes = [1, 96], strides = [1, 1]} : vector<1x224xf32> to vector<1x96xf32>
    %861 = arith.truncf %859 : vector<1x32xf32> to vector<1x32xbf16>
    %cst_134 = arith.constant dense<0.000000e+00> : vector<1x96xf32>
    %862 = tpu.matmul %861, %545, %cst_134 {dimension_numbers = #tpu.dot_dimension_numbers<[1], [0], [0], [1], [0, 0, 1, 1], [], []>} : vector<1x32xbf16>, vector<32x96xbf16>, vector<1x96xf32> -> vector<1x96xf32>
    %863 = arith.addf %862, %550 : vector<1x96xf32>
    %864 = vector.extract_strided_slice %863 {offsets = [0, 0], sizes = [1, 64], strides = [1, 1]} : vector<1x96xf32> to vector<1x64xf32>
    %865 = vector.extract_strided_slice %860 {offsets = [0, 0], sizes = [1, 64], strides = [1, 1]} : vector<1x96xf32> to vector<1x64xf32>
    %866 = arith.addf %864, %865 : vector<1x64xf32>
    %867 = arith.negf %866 : vector<1x64xf32>
    %868 = math.exp %867 : vector<1x64xf32>
    %cst_135 = arith.constant 1.000000e+00 : f32
    %869 = vector.broadcast %cst_135 : f32 to vector<1x64xf32>
    %870 = arith.addf %869, %868 : vector<1x64xf32>
    %871 = arith.divf %869, %870 : vector<1x64xf32>
    %872 = vector.extract_strided_slice %863 {offsets = [0, 64], sizes = [1, 32], strides = [1, 1]} : vector<1x96xf32> to vector<1x32xf32>
    %873 = vector.extract_strided_slice %871 {offsets = [0, 0], sizes = [1, 32], strides = [1, 1]} : vector<1x64xf32> to vector<1x32xf32>
    %874 = vector.extract_strided_slice %860 {offsets = [0, 64], sizes = [1, 32], strides = [1, 1]} : vector<1x96xf32> to vector<1x32xf32>
    %875 = arith.mulf %873, %874 : vector<1x32xf32>
    %876 = arith.addf %872, %875 : vector<1x32xf32>
    %877 = math.tanh %876 : vector<1x32xf32>
    %878 = vector.extract_strided_slice %871 {offsets = [0, 32], sizes = [1, 32], strides = [1, 1]} : vector<1x64xf32> to vector<1x32xf32>
    %cst_136 = arith.constant 1.000000e+00 : f32
    %879 = vector.broadcast %cst_136 : f32 to vector<1x32xf32>
    %880 = arith.subf %879, %878 : vector<1x32xf32>
    %881 = arith.mulf %880, %877 : vector<1x32xf32>
    %882 = arith.mulf %878, %792 : vector<1x32xf32>
    %883 = arith.addf %881, %882 : vector<1x32xf32>
    %884 = arith.truncf %883 : vector<1x32xf32> to vector<1x32xbf16>
    %cst_137 = arith.constant dense<0.000000e+00> : vector<1x40xf32>
    %885 = tpu.matmul %884, %555, %cst_137 {dimension_numbers = #tpu.dot_dimension_numbers<[1], [1], [0], [0], [0, 0, 1, 0], [], []>} : vector<1x32xbf16>, vector<40x32xbf16>, vector<1x40xf32> -> vector<1x40xf32>
    %886 = vector.extract_strided_slice %885 {offsets = [0, 0], sizes = [1, 8], strides = [1, 1]} : vector<1x40xf32> to vector<1x8xf32>
    %887 = math.exp %886 : vector<1x8xf32>
    %cst_138 = arith.constant dense<0.000000e+00> : vector<1xf32>
    %888 = vector.multi_reduction <add>, %887, %cst_138 [1] : vector<1x8xf32> to vector<1xf32>
    %889 = vector.shape_cast %888 : vector<1xf32> to vector<1x1xf32>
    %890 = tpu.reciprocal %889 {approx = true} : vector<1x1xf32> -> vector<1x1xf32>
    %891 = vector.broadcast %890 : vector<1x1xf32> to vector<1x8xf32>
    %892 = arith.mulf %887, %891 : vector<1x8xf32>
    %893 = arith.truncf %892 : vector<1x8xf32> to vector<1x8xbf16>
    %cst_139 = arith.constant dense<0.000000e+00> : vector<1x32xf32>
    %894 = tpu.matmul %893, %543, %cst_139 {dimension_numbers = #tpu.dot_dimension_numbers<[1], [0], [0], [1], [0, 0, 1, 1], [], []>} : vector<1x8xbf16>, vector<8x32xbf16>, vector<1x32xf32> -> vector<1x32xf32>
    %895 = vector.extract_strided_slice %885 {offsets = [0, 8], sizes = [1, 32], strides = [1, 1]} : vector<1x40xf32> to vector<1x32xf32>
    %896 = arith.truncf %894 : vector<1x32xf32> to vector<1x32xbf16>
    %cst_140 = arith.constant dense<0.000000e+00> : vector<1x32xf32>
    %897 = tpu.matmul %896, %547, %cst_140 {dimension_numbers = #tpu.dot_dimension_numbers<[1], [0], [0], [1], [0, 0, 1, 1], [], []>} : vector<1x32xbf16>, vector<32x32xbf16>, vector<1x32xf32> -> vector<1x32xf32>
    %898 = arith.addf %895, %897 : vector<1x32xf32>
    %899 = arith.addf %898, %551 : vector<1x32xf32>
    %900 = math.tanh %899 : vector<1x32xf32>
    %901 = arith.truncf %900 : vector<1x32xf32> to vector<1x32xbf16>
    %cst_141 = arith.constant dense<0.000000e+00> : vector<1x64xf32>
    %902 = tpu.matmul %901, %548, %cst_141 {dimension_numbers = #tpu.dot_dimension_numbers<[1], [0], [0], [1], [0, 0, 1, 1], [], []>} : vector<1x32xbf16>, vector<32x64xbf16>, vector<1x64xf32> -> vector<1x64xf32>
    %903 = arith.addf %902, %552 : vector<1x64xf32>
    %cst_142 = arith.constant dense<0xFF800000> : vector<1xf32>
    %904 = vector.multi_reduction <maximumf>, %903, %cst_142 [1] : vector<1x64xf32> to vector<1xf32>
    %905 = vector.shape_cast %904 : vector<1xf32> to vector<1x1xf32>
    %906 = vector.broadcast %905 : vector<1x1xf32> to vector<1x64xf32>
    %907 = arith.subf %903, %906 : vector<1x64xf32>
    %908 = math.exp %907 : vector<1x64xf32>
    %cst_143 = arith.constant dense<0.000000e+00> : vector<1xf32>
    %909 = vector.multi_reduction <add>, %908, %cst_143 [1] : vector<1x64xf32> to vector<1xf32>
    %910 = vector.shape_cast %909 : vector<1xf32> to vector<1x1xf32>
    %911 = tpu.reciprocal %910 : vector<1x1xf32> -> vector<1x1xf32>
    %912 = vector.broadcast %911 : vector<1x1xf32> to vector<1x64xf32>
    %913 = arith.mulf %908, %912 : vector<1x64xf32>
    %cst_144 = arith.constant dense<0xFF800000> : vector<1xf32>
    %914 = vector.multi_reduction <maximumf>, %913, %cst_144 [1] : vector<1x64xf32> to vector<1xf32>
    %915 = vector.shape_cast %914 : vector<1xf32> to vector<1x1xf32>
    %916 = vector.broadcast %915 : vector<1x1xf32> to vector<1x64xf32>
    %917 = arith.cmpf oge, %913, %916 : vector<1x64xf32>
    %c64_i32_145 = arith.constant 64 : i32
    %918 = vector.broadcast %c64_i32_145 : i32 to vector<1x64xi32>
    %919 = arith.select %917, %558, %918 : vector<1x64xi1>, vector<1x64xi32>
    %cst_146 = arith.constant dense<2147483647> : vector<1xi32>
    %920 = vector.multi_reduction <minsi>, %919, %cst_146 [1] : vector<1x64xi32> to vector<1xi32>
    %921 = vector.shape_cast %920 : vector<1xi32> to vector<1x1xi32>
    %c3_147 = arith.constant 3 : index
    %c0_148 = arith.constant 0 : index
    %922 = vector.load %arg4[%c3_147, %c0_148] : memref<10x1xi32, #tpu.memory_space<vmem>>, vector<1x1xi32>
    tpu.vector_store %arg4[%c3_147, %c0_148], %921 {strides = array<i32>} : memref<10x1xi32, #tpu.memory_space<vmem>>, vector<1x1xi32>,
    %c3_149 = arith.constant 3 : index
    %c0_150 = arith.constant 0 : index
    %923 = vector.load %arg5[%c3_149, %c0_150] : memref<10x1xf32, #tpu.memory_space<vmem>>, vector<1x1xf32>
    tpu.vector_store %arg5[%c3_149, %c0_150], %915 {strides = array<i32>} : memref<10x1xf32, #tpu.memory_space<vmem>>, vector<1x1xf32>,
    %924 = vector.broadcast %921 : vector<1x1xi32> to vector<1x64xi32>
    %925 = arith.cmpi eq, %558, %924 : vector<1x64xi32>
    %926 = arith.extui %925 : vector<1x64xi1> to vector<1x64xi32>
    %927 = arith.sitofp %926 : vector<1x64xi32> to vector<1x64xf32>
    %928 = tpu.concatenate %927, %859, %883 in 1 : vector<1x64xf32>, vector<1x32xf32>, vector<1x32xf32> -> vector<1x128xf32>
    %929 = arith.truncf %928 : vector<1x128xf32> to vector<1x128xbf16>
    %cst_151 = arith.constant dense<0.000000e+00> : vector<1x224xf32>
    %930 = tpu.matmul %929, %544, %cst_151 {dimension_numbers = #tpu.dot_dimension_numbers<[1], [0], [0], [1], [0, 0, 1, 1], [], []>} : vector<1x128xbf16>, vector<128x224xbf16>, vector<1x224xf32> -> vector<1x224xf32>
    %931 = arith.addf %930, %549 : vector<1x224xf32>
    %932 = vector.extract_strided_slice %931 {offsets = [0, 0], sizes = [1, 64], strides = [1, 1]} : vector<1x224xf32> to vector<1x64xf32>
    %933 = arith.negf %932 : vector<1x64xf32>
    %934 = math.exp %933 : vector<1x64xf32>
    %cst_152 = arith.constant 1.000000e+00 : f32
    %935 = vector.broadcast %cst_152 : f32 to vector<1x64xf32>
    %936 = arith.addf %935, %934 : vector<1x64xf32>
    %937 = arith.divf %935, %936 : vector<1x64xf32>
    %938 = vector.extract_strided_slice %931 {offsets = [0, 64], sizes = [1, 32], strides = [1, 1]} : vector<1x224xf32> to vector<1x32xf32>
    %939 = vector.extract_strided_slice %937 {offsets = [0, 0], sizes = [1, 32], strides = [1, 1]} : vector<1x64xf32> to vector<1x32xf32>
    %940 = vector.extract_strided_slice %931 {offsets = [0, 96], sizes = [1, 32], strides = [1, 1]} : vector<1x224xf32> to vector<1x32xf32>
    %941 = arith.mulf %939, %940 : vector<1x32xf32>
    %942 = arith.addf %938, %941 : vector<1x32xf32>
    %943 = math.tanh %942 : vector<1x32xf32>
    %944 = vector.extract_strided_slice %937 {offsets = [0, 32], sizes = [1, 32], strides = [1, 1]} : vector<1x64xf32> to vector<1x32xf32>
    %cst_153 = arith.constant 1.000000e+00 : f32
    %945 = vector.broadcast %cst_153 : f32 to vector<1x32xf32>
    %946 = arith.subf %945, %944 : vector<1x32xf32>
    %947 = arith.mulf %946, %943 : vector<1x32xf32>
    %948 = vector.extract_strided_slice %937 {offsets = [0, 32], sizes = [1, 32], strides = [1, 1]} : vector<1x64xf32> to vector<1x32xf32>
    %949 = arith.mulf %948, %859 : vector<1x32xf32>
    %950 = arith.addf %947, %949 : vector<1x32xf32>
    %951 = vector.extract_strided_slice %931 {offsets = [0, 128], sizes = [1, 96], strides = [1, 1]} : vector<1x224xf32> to vector<1x96xf32>
    %952 = arith.truncf %950 : vector<1x32xf32> to vector<1x32xbf16>
    %cst_154 = arith.constant dense<0.000000e+00> : vector<1x96xf32>
    %953 = tpu.matmul %952, %545, %cst_154 {dimension_numbers = #tpu.dot_dimension_numbers<[1], [0], [0], [1], [0, 0, 1, 1], [], []>} : vector<1x32xbf16>, vector<32x96xbf16>, vector<1x96xf32> -> vector<1x96xf32>
    %954 = arith.addf %953, %550 : vector<1x96xf32>
    %955 = vector.extract_strided_slice %954 {offsets = [0, 0], sizes = [1, 64], strides = [1, 1]} : vector<1x96xf32> to vector<1x64xf32>
    %956 = vector.extract_strided_slice %951 {offsets = [0, 0], sizes = [1, 64], strides = [1, 1]} : vector<1x96xf32> to vector<1x64xf32>
    %957 = arith.addf %955, %956 : vector<1x64xf32>
    %958 = arith.negf %957 : vector<1x64xf32>
    %959 = math.exp %958 : vector<1x64xf32>
    %cst_155 = arith.constant 1.000000e+00 : f32
    %960 = vector.broadcast %cst_155 : f32 to vector<1x64xf32>
    %961 = arith.addf %960, %959 : vector<1x64xf32>
    %962 = arith.divf %960, %961 : vector<1x64xf32>
    %963 = vector.extract_strided_slice %954 {offsets = [0, 64], sizes = [1, 32], strides = [1, 1]} : vector<1x96xf32> to vector<1x32xf32>
    %964 = vector.extract_strided_slice %962 {offsets = [0, 0], sizes = [1, 32], strides = [1, 1]} : vector<1x64xf32> to vector<1x32xf32>
    %965 = vector.extract_strided_slice %951 {offsets = [0, 64], sizes = [1, 32], strides = [1, 1]} : vector<1x96xf32> to vector<1x32xf32>
    %966 = arith.mulf %964, %965 : vector<1x32xf32>
    %967 = arith.addf %963, %966 : vector<1x32xf32>
    %968 = math.tanh %967 : vector<1x32xf32>
    %969 = vector.extract_strided_slice %962 {offsets = [0, 32], sizes = [1, 32], strides = [1, 1]} : vector<1x64xf32> to vector<1x32xf32>
    %cst_156 = arith.constant 1.000000e+00 : f32
    %970 = vector.broadcast %cst_156 : f32 to vector<1x32xf32>
    %971 = arith.subf %970, %969 : vector<1x32xf32>
    %972 = arith.mulf %971, %968 : vector<1x32xf32>
    %973 = arith.mulf %969, %883 : vector<1x32xf32>
    %974 = arith.addf %972, %973 : vector<1x32xf32>
    %975 = arith.truncf %974 : vector<1x32xf32> to vector<1x32xbf16>
    %cst_157 = arith.constant dense<0.000000e+00> : vector<1x40xf32>
    %976 = tpu.matmul %975, %555, %cst_157 {dimension_numbers = #tpu.dot_dimension_numbers<[1], [1], [0], [0], [0, 0, 1, 0], [], []>} : vector<1x32xbf16>, vector<40x32xbf16>, vector<1x40xf32> -> vector<1x40xf32>
    %977 = vector.extract_strided_slice %976 {offsets = [0, 0], sizes = [1, 8], strides = [1, 1]} : vector<1x40xf32> to vector<1x8xf32>
    %978 = math.exp %977 : vector<1x8xf32>
    %cst_158 = arith.constant dense<0.000000e+00> : vector<1xf32>
    %979 = vector.multi_reduction <add>, %978, %cst_158 [1] : vector<1x8xf32> to vector<1xf32>
    %980 = vector.shape_cast %979 : vector<1xf32> to vector<1x1xf32>
    %981 = tpu.reciprocal %980 {approx = true} : vector<1x1xf32> -> vector<1x1xf32>
    %982 = vector.broadcast %981 : vector<1x1xf32> to vector<1x8xf32>
    %983 = arith.mulf %978, %982 : vector<1x8xf32>
    %984 = arith.truncf %983 : vector<1x8xf32> to vector<1x8xbf16>
    %cst_159 = arith.constant dense<0.000000e+00> : vector<1x32xf32>
    %985 = tpu.matmul %984, %543, %cst_159 {dimension_numbers = #tpu.dot_dimension_numbers<[1], [0], [0], [1], [0, 0, 1, 1], [], []>} : vector<1x8xbf16>, vector<8x32xbf16>, vector<1x32xf32> -> vector<1x32xf32>
    %986 = vector.extract_strided_slice %976 {offsets = [0, 8], sizes = [1, 32], strides = [1, 1]} : vector<1x40xf32> to vector<1x32xf32>
    %987 = arith.truncf %985 : vector<1x32xf32> to vector<1x32xbf16>
    %cst_160 = arith.constant dense<0.000000e+00> : vector<1x32xf32>
    %988 = tpu.matmul %987, %547, %cst_160 {dimension_numbers = #tpu.dot_dimension_numbers<[1], [0], [0], [1], [0, 0, 1, 1], [], []>} : vector<1x32xbf16>, vector<32x32xbf16>, vector<1x32xf32> -> vector<1x32xf32>
    %989 = arith.addf %986, %988 : vector<1x32xf32>
    %990 = arith.addf %989, %551 : vector<1x32xf32>
    %991 = math.tanh %990 : vector<1x32xf32>
    %992 = arith.truncf %991 : vector<1x32xf32> to vector<1x32xbf16>
    %cst_161 = arith.constant dense<0.000000e+00> : vector<1x64xf32>
    %993 = tpu.matmul %992, %548, %cst_161 {dimension_numbers = #tpu.dot_dimension_numbers<[1], [0], [0], [1], [0, 0, 1, 1], [], []>} : vector<1x32xbf16>, vector<32x64xbf16>, vector<1x64xf32> -> vector<1x64xf32>
    %994 = arith.addf %993, %552 : vector<1x64xf32>
    %cst_162 = arith.constant dense<0xFF800000> : vector<1xf32>
    %995 = vector.multi_reduction <maximumf>, %994, %cst_162 [1] : vector<1x64xf32> to vector<1xf32>
    %996 = vector.shape_cast %995 : vector<1xf32> to vector<1x1xf32>
    %997 = vector.broadcast %996 : vector<1x1xf32> to vector<1x64xf32>
    %998 = arith.subf %994, %997 : vector<1x64xf32>
    %999 = math.exp %998 : vector<1x64xf32>
    %cst_163 = arith.constant dense<0.000000e+00> : vector<1xf32>
    %1000 = vector.multi_reduction <add>, %999, %cst_163 [1] : vector<1x64xf32> to vector<1xf32>
    %1001 = vector.shape_cast %1000 : vector<1xf32> to vector<1x1xf32>
    %1002 = tpu.reciprocal %1001 : vector<1x1xf32> -> vector<1x1xf32>
    %1003 = vector.broadcast %1002 : vector<1x1xf32> to vector<1x64xf32>
    %1004 = arith.mulf %999, %1003 : vector<1x64xf32>
    %cst_164 = arith.constant dense<0xFF800000> : vector<1xf32>
    %1005 = vector.multi_reduction <maximumf>, %1004, %cst_164 [1] : vector<1x64xf32> to vector<1xf32>
    %1006 = vector.shape_cast %1005 : vector<1xf32> to vector<1x1xf32>
    %1007 = vector.broadcast %1006 : vector<1x1xf32> to vector<1x64xf32>
    %1008 = arith.cmpf oge, %1004, %1007 : vector<1x64xf32>
    %c64_i32_165 = arith.constant 64 : i32
    %1009 = vector.broadcast %c64_i32_165 : i32 to vector<1x64xi32>
    %1010 = arith.select %1008, %558, %1009 : vector<1x64xi1>, vector<1x64xi32>
    %cst_166 = arith.constant dense<2147483647> : vector<1xi32>
    %1011 = vector.multi_reduction <minsi>, %1010, %cst_166 [1] : vector<1x64xi32> to vector<1xi32>
    %1012 = vector.shape_cast %1011 : vector<1xi32> to vector<1x1xi32>
    %c4_167 = arith.constant 4 : index
    %c0_168 = arith.constant 0 : index
    %1013 = vector.load %arg4[%c4_167, %c0_168] : memref<10x1xi32, #tpu.memory_space<vmem>>, vector<1x1xi32>
    tpu.vector_store %arg4[%c4_167, %c0_168], %1012 {strides = array<i32>} : memref<10x1xi32, #tpu.memory_space<vmem>>, vector<1x1xi32>,
    %c4_169 = arith.constant 4 : index
    %c0_170 = arith.constant 0 : index
    %1014 = vector.load %arg5[%c4_169, %c0_170] : memref<10x1xf32, #tpu.memory_space<vmem>>, vector<1x1xf32>
    tpu.vector_store %arg5[%c4_169, %c0_170], %1006 {strides = array<i32>} : memref<10x1xf32, #tpu.memory_space<vmem>>, vector<1x1xf32>,
    %1015 = vector.broadcast %1012 : vector<1x1xi32> to vector<1x64xi32>
    %1016 = arith.cmpi eq, %558, %1015 : vector<1x64xi32>
    %1017 = arith.extui %1016 : vector<1x64xi1> to vector<1x64xi32>
    %1018 = arith.sitofp %1017 : vector<1x64xi32> to vector<1x64xf32>
    %1019 = tpu.concatenate %1018, %950, %974 in 1 : vector<1x64xf32>, vector<1x32xf32>, vector<1x32xf32> -> vector<1x128xf32>
    %1020 = arith.truncf %1019 : vector<1x128xf32> to vector<1x128xbf16>
    %cst_171 = arith.constant dense<0.000000e+00> : vector<1x224xf32>
    %1021 = tpu.matmul %1020, %544, %cst_171 {dimension_numbers = #tpu.dot_dimension_numbers<[1], [0], [0], [1], [0, 0, 1, 1], [], []>} : vector<1x128xbf16>, vector<128x224xbf16>, vector<1x224xf32> -> vector<1x224xf32>
    %1022 = arith.addf %1021, %549 : vector<1x224xf32>
    %1023 = vector.extract_strided_slice %1022 {offsets = [0, 0], sizes = [1, 64], strides = [1, 1]} : vector<1x224xf32> to vector<1x64xf32>
    %1024 = arith.negf %1023 : vector<1x64xf32>
    %1025 = math.exp %1024 : vector<1x64xf32>
    %cst_172 = arith.constant 1.000000e+00 : f32
    %1026 = vector.broadcast %cst_172 : f32 to vector<1x64xf32>
    %1027 = arith.addf %1026, %1025 : vector<1x64xf32>
    %1028 = arith.divf %1026, %1027 : vector<1x64xf32>
    %1029 = vector.extract_strided_slice %1022 {offsets = [0, 64], sizes = [1, 32], strides = [1, 1]} : vector<1x224xf32> to vector<1x32xf32>
    %1030 = vector.extract_strided_slice %1028 {offsets = [0, 0], sizes = [1, 32], strides = [1, 1]} : vector<1x64xf32> to vector<1x32xf32>
    %1031 = vector.extract_strided_slice %1022 {offsets = [0, 96], sizes = [1, 32], strides = [1, 1]} : vector<1x224xf32> to vector<1x32xf32>
    %1032 = arith.mulf %1030, %1031 : vector<1x32xf32>
    %1033 = arith.addf %1029, %1032 : vector<1x32xf32>
    %1034 = math.tanh %1033 : vector<1x32xf32>
    %1035 = vector.extract_strided_slice %1028 {offsets = [0, 32], sizes = [1, 32], strides = [1, 1]} : vector<1x64xf32> to vector<1x32xf32>
    %cst_173 = arith.constant 1.000000e+00 : f32
    %1036 = vector.broadcast %cst_173 : f32 to vector<1x32xf32>
    %1037 = arith.subf %1036, %1035 : vector<1x32xf32>
    %1038 = arith.mulf %1037, %1034 : vector<1x32xf32>
    %1039 = vector.extract_strided_slice %1028 {offsets = [0, 32], sizes = [1, 32], strides = [1, 1]} : vector<1x64xf32> to vector<1x32xf32>
    %1040 = arith.mulf %1039, %950 : vector<1x32xf32>
    %1041 = arith.addf %1038, %1040 : vector<1x32xf32>
    %1042 = vector.extract_strided_slice %1022 {offsets = [0, 128], sizes = [1, 96], strides = [1, 1]} : vector<1x224xf32> to vector<1x96xf32>
    %1043 = arith.truncf %1041 : vector<1x32xf32> to vector<1x32xbf16>
    %cst_174 = arith.constant dense<0.000000e+00> : vector<1x96xf32>
    %1044 = tpu.matmul %1043, %545, %cst_174 {dimension_numbers = #tpu.dot_dimension_numbers<[1], [0], [0], [1], [0, 0, 1, 1], [], []>} : vector<1x32xbf16>, vector<32x96xbf16>, vector<1x96xf32> -> vector<1x96xf32>
    %1045 = arith.addf %1044, %550 : vector<1x96xf32>
    %1046 = vector.extract_strided_slice %1045 {offsets = [0, 0], sizes = [1, 64], strides = [1, 1]} : vector<1x96xf32> to vector<1x64xf32>
    %1047 = vector.extract_strided_slice %1042 {offsets = [0, 0], sizes = [1, 64], strides = [1, 1]} : vector<1x96xf32> to vector<1x64xf32>
    %1048 = arith.addf %1046, %1047 : vector<1x64xf32>
    %1049 = arith.negf %1048 : vector<1x64xf32>
    %1050 = math.exp %1049 : vector<1x64xf32>
    %cst_175 = arith.constant 1.000000e+00 : f32
    %1051 = vector.broadcast %cst_175 : f32 to vector<1x64xf32>
    %1052 = arith.addf %1051, %1050 : vector<1x64xf32>
    %1053 = arith.divf %1051, %1052 : vector<1x64xf32>
    %1054 = vector.extract_strided_slice %1045 {offsets = [0, 64], sizes = [1, 32], strides = [1, 1]} : vector<1x96xf32> to vector<1x32xf32>
    %1055 = vector.extract_strided_slice %1053 {offsets = [0, 0], sizes = [1, 32], strides = [1, 1]} : vector<1x64xf32> to vector<1x32xf32>
    %1056 = vector.extract_strided_slice %1042 {offsets = [0, 64], sizes = [1, 32], strides = [1, 1]} : vector<1x96xf32> to vector<1x32xf32>
    %1057 = arith.mulf %1055, %1056 : vector<1x32xf32>
    %1058 = arith.addf %1054, %1057 : vector<1x32xf32>
    %1059 = math.tanh %1058 : vector<1x32xf32>
    %1060 = vector.extract_strided_slice %1053 {offsets = [0, 32], sizes = [1, 32], strides = [1, 1]} : vector<1x64xf32> to vector<1x32xf32>
    %cst_176 = arith.constant 1.000000e+00 : f32
    %1061 = vector.broadcast %cst_176 : f32 to vector<1x32xf32>
    %1062 = arith.subf %1061, %1060 : vector<1x32xf32>
    %1063 = arith.mulf %1062, %1059 : vector<1x32xf32>
    %1064 = arith.mulf %1060, %974 : vector<1x32xf32>
    %1065 = arith.addf %1063, %1064 : vector<1x32xf32>
    %1066 = arith.truncf %1065 : vector<1x32xf32> to vector<1x32xbf16>
    %cst_177 = arith.constant dense<0.000000e+00> : vector<1x40xf32>
    %1067 = tpu.matmul %1066, %555, %cst_177 {dimension_numbers = #tpu.dot_dimension_numbers<[1], [1], [0], [0], [0, 0, 1, 0], [], []>} : vector<1x32xbf16>, vector<40x32xbf16>, vector<1x40xf32> -> vector<1x40xf32>
    %1068 = vector.extract_strided_slice %1067 {offsets = [0, 0], sizes = [1, 8], strides = [1, 1]} : vector<1x40xf32> to vector<1x8xf32>
    %1069 = math.exp %1068 : vector<1x8xf32>
    %cst_178 = arith.constant dense<0.000000e+00> : vector<1xf32>
    %1070 = vector.multi_reduction <add>, %1069, %cst_178 [1] : vector<1x8xf32> to vector<1xf32>
    %1071 = vector.shape_cast %1070 : vector<1xf32> to vector<1x1xf32>
    %1072 = tpu.reciprocal %1071 {approx = true} : vector<1x1xf32> -> vector<1x1xf32>
    %1073 = vector.broadcast %1072 : vector<1x1xf32> to vector<1x8xf32>
    %1074 = arith.mulf %1069, %1073 : vector<1x8xf32>
    %1075 = arith.truncf %1074 : vector<1x8xf32> to vector<1x8xbf16>
    %cst_179 = arith.constant dense<0.000000e+00> : vector<1x32xf32>
    %1076 = tpu.matmul %1075, %543, %cst_179 {dimension_numbers = #tpu.dot_dimension_numbers<[1], [0], [0], [1], [0, 0, 1, 1], [], []>} : vector<1x8xbf16>, vector<8x32xbf16>, vector<1x32xf32> -> vector<1x32xf32>
    %1077 = vector.extract_strided_slice %1067 {offsets = [0, 8], sizes = [1, 32], strides = [1, 1]} : vector<1x40xf32> to vector<1x32xf32>
    %1078 = arith.truncf %1076 : vector<1x32xf32> to vector<1x32xbf16>
    %cst_180 = arith.constant dense<0.000000e+00> : vector<1x32xf32>
    %1079 = tpu.matmul %1078, %547, %cst_180 {dimension_numbers = #tpu.dot_dimension_numbers<[1], [0], [0], [1], [0, 0, 1, 1], [], []>} : vector<1x32xbf16>, vector<32x32xbf16>, vector<1x32xf32> -> vector<1x32xf32>
    %1080 = arith.addf %1077, %1079 : vector<1x32xf32>
    %1081 = arith.addf %1080, %551 : vector<1x32xf32>
    %1082 = math.tanh %1081 : vector<1x32xf32>
    %1083 = arith.truncf %1082 : vector<1x32xf32> to vector<1x32xbf16>
    %cst_181 = arith.constant dense<0.000000e+00> : vector<1x64xf32>
    %1084 = tpu.matmul %1083, %548, %cst_181 {dimension_numbers = #tpu.dot_dimension_numbers<[1], [0], [0], [1], [0, 0, 1, 1], [], []>} : vector<1x32xbf16>, vector<32x64xbf16>, vector<1x64xf32> -> vector<1x64xf32>
    %1085 = arith.addf %1084, %552 : vector<1x64xf32>
    %cst_182 = arith.constant dense<0xFF800000> : vector<1xf32>
    %1086 = vector.multi_reduction <maximumf>, %1085, %cst_182 [1] : vector<1x64xf32> to vector<1xf32>
    %1087 = vector.shape_cast %1086 : vector<1xf32> to vector<1x1xf32>
    %1088 = vector.broadcast %1087 : vector<1x1xf32> to vector<1x64xf32>
    %1089 = arith.subf %1085, %1088 : vector<1x64xf32>
    %1090 = math.exp %1089 : vector<1x64xf32>
    %cst_183 = arith.constant dense<0.000000e+00> : vector<1xf32>
    %1091 = vector.multi_reduction <add>, %1090, %cst_183 [1] : vector<1x64xf32> to vector<1xf32>
    %1092 = vector.shape_cast %1091 : vector<1xf32> to vector<1x1xf32>
    %1093 = tpu.reciprocal %1092 : vector<1x1xf32> -> vector<1x1xf32>
    %1094 = vector.broadcast %1093 : vector<1x1xf32> to vector<1x64xf32>
    %1095 = arith.mulf %1090, %1094 : vector<1x64xf32>
    %cst_184 = arith.constant dense<0xFF800000> : vector<1xf32>
    %1096 = vector.multi_reduction <maximumf>, %1095, %cst_184 [1] : vector<1x64xf32> to vector<1xf32>
    %1097 = vector.shape_cast %1096 : vector<1xf32> to vector<1x1xf32>
    %1098 = vector.broadcast %1097 : vector<1x1xf32> to vector<1x64xf32>
    %1099 = arith.cmpf oge, %1095, %1098 : vector<1x64xf32>
    %c64_i32_185 = arith.constant 64 : i32
    %1100 = vector.broadcast %c64_i32_185 : i32 to vector<1x64xi32>
    %1101 = arith.select %1099, %558, %1100 : vector<1x64xi1>, vector<1x64xi32>
    %cst_186 = arith.constant dense<2147483647> : vector<1xi32>
    %1102 = vector.multi_reduction <minsi>, %1101, %cst_186 [1] : vector<1x64xi32> to vector<1xi32>
    %1103 = vector.shape_cast %1102 : vector<1xi32> to vector<1x1xi32>
    %c5_187 = arith.constant 5 : index
    %c0_188 = arith.constant 0 : index
    %1104 = vector.load %arg4[%c5_187, %c0_188] : memref<10x1xi32, #tpu.memory_space<vmem>>, vector<1x1xi32>
    tpu.vector_store %arg4[%c5_187, %c0_188], %1103 {strides = array<i32>} : memref<10x1xi32, #tpu.memory_space<vmem>>, vector<1x1xi32>,
    %c5_189 = arith.constant 5 : index
    %c0_190 = arith.constant 0 : index
    %1105 = vector.load %arg5[%c5_189, %c0_190] : memref<10x1xf32, #tpu.memory_space<vmem>>, vector<1x1xf32>
    tpu.vector_store %arg5[%c5_189, %c0_190], %1097 {strides = array<i32>} : memref<10x1xf32, #tpu.memory_space<vmem>>, vector<1x1xf32>,
    %1106 = vector.broadcast %1103 : vector<1x1xi32> to vector<1x64xi32>
    %1107 = arith.cmpi eq, %558, %1106 : vector<1x64xi32>
    %1108 = arith.extui %1107 : vector<1x64xi1> to vector<1x64xi32>
    %1109 = arith.sitofp %1108 : vector<1x64xi32> to vector<1x64xf32>
    %1110 = tpu.concatenate %1109, %1041, %1065 in 1 : vector<1x64xf32>, vector<1x32xf32>, vector<1x32xf32> -> vector<1x128xf32>
    %1111 = arith.truncf %1110 : vector<1x128xf32> to vector<1x128xbf16>
    %cst_191 = arith.constant dense<0.000000e+00> : vector<1x224xf32>
    %1112 = tpu.matmul %1111, %544, %cst_191 {dimension_numbers = #tpu.dot_dimension_numbers<[1], [0], [0], [1], [0, 0, 1, 1], [], []>} : vector<1x128xbf16>, vector<128x224xbf16>, vector<1x224xf32> -> vector<1x224xf32>
    %1113 = arith.addf %1112, %549 : vector<1x224xf32>
    %1114 = vector.extract_strided_slice %1113 {offsets = [0, 0], sizes = [1, 64], strides = [1, 1]} : vector<1x224xf32> to vector<1x64xf32>
    %1115 = arith.negf %1114 : vector<1x64xf32>
    %1116 = math.exp %1115 : vector<1x64xf32>
    %cst_192 = arith.constant 1.000000e+00 : f32
    %1117 = vector.broadcast %cst_192 : f32 to vector<1x64xf32>
    %1118 = arith.addf %1117, %1116 : vector<1x64xf32>
    %1119 = arith.divf %1117, %1118 : vector<1x64xf32>
    %1120 = vector.extract_strided_slice %1113 {offsets = [0, 64], sizes = [1, 32], strides = [1, 1]} : vector<1x224xf32> to vector<1x32xf32>
    %1121 = vector.extract_strided_slice %1119 {offsets = [0, 0], sizes = [1, 32], strides = [1, 1]} : vector<1x64xf32> to vector<1x32xf32>
    %1122 = vector.extract_strided_slice %1113 {offsets = [0, 96], sizes = [1, 32], strides = [1, 1]} : vector<1x224xf32> to vector<1x32xf32>
    %1123 = arith.mulf %1121, %1122 : vector<1x32xf32>
    %1124 = arith.addf %1120, %1123 : vector<1x32xf32>
    %1125 = math.tanh %1124 : vector<1x32xf32>
    %1126 = vector.extract_strided_slice %1119 {offsets = [0, 32], sizes = [1, 32], strides = [1, 1]} : vector<1x64xf32> to vector<1x32xf32>
    %cst_193 = arith.constant 1.000000e+00 : f32
    %1127 = vector.broadcast %cst_193 : f32 to vector<1x32xf32>
    %1128 = arith.subf %1127, %1126 : vector<1x32xf32>
    %1129 = arith.mulf %1128, %1125 : vector<1x32xf32>
    %1130 = vector.extract_strided_slice %1119 {offsets = [0, 32], sizes = [1, 32], strides = [1, 1]} : vector<1x64xf32> to vector<1x32xf32>
    %1131 = arith.mulf %1130, %1041 : vector<1x32xf32>
    %1132 = arith.addf %1129, %1131 : vector<1x32xf32>
    %1133 = vector.extract_strided_slice %1113 {offsets = [0, 128], sizes = [1, 96], strides = [1, 1]} : vector<1x224xf32> to vector<1x96xf32>
    %1134 = arith.truncf %1132 : vector<1x32xf32> to vector<1x32xbf16>
    %cst_194 = arith.constant dense<0.000000e+00> : vector<1x96xf32>
    %1135 = tpu.matmul %1134, %545, %cst_194 {dimension_numbers = #tpu.dot_dimension_numbers<[1], [0], [0], [1], [0, 0, 1, 1], [], []>} : vector<1x32xbf16>, vector<32x96xbf16>, vector<1x96xf32> -> vector<1x96xf32>
    %1136 = arith.addf %1135, %550 : vector<1x96xf32>
    %1137 = vector.extract_strided_slice %1136 {offsets = [0, 0], sizes = [1, 64], strides = [1, 1]} : vector<1x96xf32> to vector<1x64xf32>
    %1138 = vector.extract_strided_slice %1133 {offsets = [0, 0], sizes = [1, 64], strides = [1, 1]} : vector<1x96xf32> to vector<1x64xf32>
    %1139 = arith.addf %1137, %1138 : vector<1x64xf32>
    %1140 = arith.negf %1139 : vector<1x64xf32>
    %1141 = math.exp %1140 : vector<1x64xf32>
    %cst_195 = arith.constant 1.000000e+00 : f32
    %1142 = vector.broadcast %cst_195 : f32 to vector<1x64xf32>
    %1143 = arith.addf %1142, %1141 : vector<1x64xf32>
    %1144 = arith.divf %1142, %1143 : vector<1x64xf32>
    %1145 = vector.extract_strided_slice %1136 {offsets = [0, 64], sizes = [1, 32], strides = [1, 1]} : vector<1x96xf32> to vector<1x32xf32>
    %1146 = vector.extract_strided_slice %1144 {offsets = [0, 0], sizes = [1, 32], strides = [1, 1]} : vector<1x64xf32> to vector<1x32xf32>
    %1147 = vector.extract_strided_slice %1133 {offsets = [0, 64], sizes = [1, 32], strides = [1, 1]} : vector<1x96xf32> to vector<1x32xf32>
    %1148 = arith.mulf %1146, %1147 : vector<1x32xf32>
    %1149 = arith.addf %1145, %1148 : vector<1x32xf32>
    %1150 = math.tanh %1149 : vector<1x32xf32>
    %1151 = vector.extract_strided_slice %1144 {offsets = [0, 32], sizes = [1, 32], strides = [1, 1]} : vector<1x64xf32> to vector<1x32xf32>
    %cst_196 = arith.constant 1.000000e+00 : f32
    %1152 = vector.broadcast %cst_196 : f32 to vector<1x32xf32>
    %1153 = arith.subf %1152, %1151 : vector<1x32xf32>
    %1154 = arith.mulf %1153, %1150 : vector<1x32xf32>
    %1155 = arith.mulf %1151, %1065 : vector<1x32xf32>
    %1156 = arith.addf %1154, %1155 : vector<1x32xf32>
    %1157 = arith.truncf %1156 : vector<1x32xf32> to vector<1x32xbf16>
    %cst_197 = arith.constant dense<0.000000e+00> : vector<1x40xf32>
    %1158 = tpu.matmul %1157, %555, %cst_197 {dimension_numbers = #tpu.dot_dimension_numbers<[1], [1], [0], [0], [0, 0, 1, 0], [], []>} : vector<1x32xbf16>, vector<40x32xbf16>, vector<1x40xf32> -> vector<1x40xf32>
    %1159 = vector.extract_strided_slice %1158 {offsets = [0, 0], sizes = [1, 8], strides = [1, 1]} : vector<1x40xf32> to vector<1x8xf32>
    %1160 = math.exp %1159 : vector<1x8xf32>
    %cst_198 = arith.constant dense<0.000000e+00> : vector<1xf32>
    %1161 = vector.multi_reduction <add>, %1160, %cst_198 [1] : vector<1x8xf32> to vector<1xf32>
    %1162 = vector.shape_cast %1161 : vector<1xf32> to vector<1x1xf32>
    %1163 = tpu.reciprocal %1162 {approx = true} : vector<1x1xf32> -> vector<1x1xf32>
    %1164 = vector.broadcast %1163 : vector<1x1xf32> to vector<1x8xf32>
    %1165 = arith.mulf %1160, %1164 : vector<1x8xf32>
    %1166 = arith.truncf %1165 : vector<1x8xf32> to vector<1x8xbf16>
    %cst_199 = arith.constant dense<0.000000e+00> : vector<1x32xf32>
    %1167 = tpu.matmul %1166, %543, %cst_199 {dimension_numbers = #tpu.dot_dimension_numbers<[1], [0], [0], [1], [0, 0, 1, 1], [], []>} : vector<1x8xbf16>, vector<8x32xbf16>, vector<1x32xf32> -> vector<1x32xf32>
    %1168 = vector.extract_strided_slice %1158 {offsets = [0, 8], sizes = [1, 32], strides = [1, 1]} : vector<1x40xf32> to vector<1x32xf32>
    %1169 = arith.truncf %1167 : vector<1x32xf32> to vector<1x32xbf16>
    %cst_200 = arith.constant dense<0.000000e+00> : vector<1x32xf32>
    %1170 = tpu.matmul %1169, %547, %cst_200 {dimension_numbers = #tpu.dot_dimension_numbers<[1], [0], [0], [1], [0, 0, 1, 1], [], []>} : vector<1x32xbf16>, vector<32x32xbf16>, vector<1x32xf32> -> vector<1x32xf32>
    %1171 = arith.addf %1168, %1170 : vector<1x32xf32>
    %1172 = arith.addf %1171, %551 : vector<1x32xf32>
    %1173 = math.tanh %1172 : vector<1x32xf32>
    %1174 = arith.truncf %1173 : vector<1x32xf32> to vector<1x32xbf16>
    %cst_201 = arith.constant dense<0.000000e+00> : vector<1x64xf32>
    %1175 = tpu.matmul %1174, %548, %cst_201 {dimension_numbers = #tpu.dot_dimension_numbers<[1], [0], [0], [1], [0, 0, 1, 1], [], []>} : vector<1x32xbf16>, vector<32x64xbf16>, vector<1x64xf32> -> vector<1x64xf32>
    %1176 = arith.addf %1175, %552 : vector<1x64xf32>
    %cst_202 = arith.constant dense<0xFF800000> : vector<1xf32>
    %1177 = vector.multi_reduction <maximumf>, %1176, %cst_202 [1] : vector<1x64xf32> to vector<1xf32>
    %1178 = vector.shape_cast %1177 : vector<1xf32> to vector<1x1xf32>
    %1179 = vector.broadcast %1178 : vector<1x1xf32> to vector<1x64xf32>
    %1180 = arith.subf %1176, %1179 : vector<1x64xf32>
    %1181 = math.exp %1180 : vector<1x64xf32>
    %cst_203 = arith.constant dense<0.000000e+00> : vector<1xf32>
    %1182 = vector.multi_reduction <add>, %1181, %cst_203 [1] : vector<1x64xf32> to vector<1xf32>
    %1183 = vector.shape_cast %1182 : vector<1xf32> to vector<1x1xf32>
    %1184 = tpu.reciprocal %1183 : vector<1x1xf32> -> vector<1x1xf32>
    %1185 = vector.broadcast %1184 : vector<1x1xf32> to vector<1x64xf32>
    %1186 = arith.mulf %1181, %1185 : vector<1x64xf32>
    %cst_204 = arith.constant dense<0xFF800000> : vector<1xf32>
    %1187 = vector.multi_reduction <maximumf>, %1186, %cst_204 [1] : vector<1x64xf32> to vector<1xf32>
    %1188 = vector.shape_cast %1187 : vector<1xf32> to vector<1x1xf32>
    %1189 = vector.broadcast %1188 : vector<1x1xf32> to vector<1x64xf32>
    %1190 = arith.cmpf oge, %1186, %1189 : vector<1x64xf32>
    %c64_i32_205 = arith.constant 64 : i32
    %1191 = vector.broadcast %c64_i32_205 : i32 to vector<1x64xi32>
    %1192 = arith.select %1190, %558, %1191 : vector<1x64xi1>, vector<1x64xi32>
    %cst_206 = arith.constant dense<2147483647> : vector<1xi32>
    %1193 = vector.multi_reduction <minsi>, %1192, %cst_206 [1] : vector<1x64xi32> to vector<1xi32>
    %1194 = vector.shape_cast %1193 : vector<1xi32> to vector<1x1xi32>
    %c6_207 = arith.constant 6 : index
    %c0_208 = arith.constant 0 : index
    %1195 = vector.load %arg4[%c6_207, %c0_208] : memref<10x1xi32, #tpu.memory_space<vmem>>, vector<1x1xi32>
    tpu.vector_store %arg4[%c6_207, %c0_208], %1194 {strides = array<i32>} : memref<10x1xi32, #tpu.memory_space<vmem>>, vector<1x1xi32>,
    %c6_209 = arith.constant 6 : index
    %c0_210 = arith.constant 0 : index
    %1196 = vector.load %arg5[%c6_209, %c0_210] : memref<10x1xf32, #tpu.memory_space<vmem>>, vector<1x1xf32>
    tpu.vector_store %arg5[%c6_209, %c0_210], %1188 {strides = array<i32>} : memref<10x1xf32, #tpu.memory_space<vmem>>, vector<1x1xf32>,
    %1197 = vector.broadcast %1194 : vector<1x1xi32> to vector<1x64xi32>
    %1198 = arith.cmpi eq, %558, %1197 : vector<1x64xi32>
    %1199 = arith.extui %1198 : vector<1x64xi1> to vector<1x64xi32>
    %1200 = arith.sitofp %1199 : vector<1x64xi32> to vector<1x64xf32>
    %1201 = tpu.concatenate %1200, %1132, %1156 in 1 : vector<1x64xf32>, vector<1x32xf32>, vector<1x32xf32> -> vector<1x128xf32>
    %1202 = arith.truncf %1201 : vector<1x128xf32> to vector<1x128xbf16>
    %cst_211 = arith.constant dense<0.000000e+00> : vector<1x224xf32>
    %1203 = tpu.matmul %1202, %544, %cst_211 {dimension_numbers = #tpu.dot_dimension_numbers<[1], [0], [0], [1], [0, 0, 1, 1], [], []>} : vector<1x128xbf16>, vector<128x224xbf16>, vector<1x224xf32> -> vector<1x224xf32>
    %1204 = arith.addf %1203, %549 : vector<1x224xf32>
    %1205 = vector.extract_strided_slice %1204 {offsets = [0, 0], sizes = [1, 64], strides = [1, 1]} : vector<1x224xf32> to vector<1x64xf32>
    %1206 = arith.negf %1205 : vector<1x64xf32>
    %1207 = math.exp %1206 : vector<1x64xf32>
    %cst_212 = arith.constant 1.000000e+00 : f32
    %1208 = vector.broadcast %cst_212 : f32 to vector<1x64xf32>
    %1209 = arith.addf %1208, %1207 : vector<1x64xf32>
    %1210 = arith.divf %1208, %1209 : vector<1x64xf32>
    %1211 = vector.extract_strided_slice %1204 {offsets = [0, 64], sizes = [1, 32], strides = [1, 1]} : vector<1x224xf32> to vector<1x32xf32>
    %1212 = vector.extract_strided_slice %1210 {offsets = [0, 0], sizes = [1, 32], strides = [1, 1]} : vector<1x64xf32> to vector<1x32xf32>
    %1213 = vector.extract_strided_slice %1204 {offsets = [0, 96], sizes = [1, 32], strides = [1, 1]} : vector<1x224xf32> to vector<1x32xf32>
    %1214 = arith.mulf %1212, %1213 : vector<1x32xf32>
    %1215 = arith.addf %1211, %1214 : vector<1x32xf32>
    %1216 = math.tanh %1215 : vector<1x32xf32>
    %1217 = vector.extract_strided_slice %1210 {offsets = [0, 32], sizes = [1, 32], strides = [1, 1]} : vector<1x64xf32> to vector<1x32xf32>
    %cst_213 = arith.constant 1.000000e+00 : f32
    %1218 = vector.broadcast %cst_213 : f32 to vector<1x32xf32>
    %1219 = arith.subf %1218, %1217 : vector<1x32xf32>
    %1220 = arith.mulf %1219, %1216 : vector<1x32xf32>
    %1221 = vector.extract_strided_slice %1210 {offsets = [0, 32], sizes = [1, 32], strides = [1, 1]} : vector<1x64xf32> to vector<1x32xf32>
    %1222 = arith.mulf %1221, %1132 : vector<1x32xf32>
    %1223 = arith.addf %1220, %1222 : vector<1x32xf32>
    %1224 = vector.extract_strided_slice %1204 {offsets = [0, 128], sizes = [1, 96], strides = [1, 1]} : vector<1x224xf32> to vector<1x96xf32>
    %1225 = arith.truncf %1223 : vector<1x32xf32> to vector<1x32xbf16>
    %cst_214 = arith.constant dense<0.000000e+00> : vector<1x96xf32>
    %1226 = tpu.matmul %1225, %545, %cst_214 {dimension_numbers = #tpu.dot_dimension_numbers<[1], [0], [0], [1], [0, 0, 1, 1], [], []>} : vector<1x32xbf16>, vector<32x96xbf16>, vector<1x96xf32> -> vector<1x96xf32>
    %1227 = arith.addf %1226, %550 : vector<1x96xf32>
    %1228 = vector.extract_strided_slice %1227 {offsets = [0, 0], sizes = [1, 64], strides = [1, 1]} : vector<1x96xf32> to vector<1x64xf32>
    %1229 = vector.extract_strided_slice %1224 {offsets = [0, 0], sizes = [1, 64], strides = [1, 1]} : vector<1x96xf32> to vector<1x64xf32>
    %1230 = arith.addf %1228, %1229 : vector<1x64xf32>
    %1231 = arith.negf %1230 : vector<1x64xf32>
    %1232 = math.exp %1231 : vector<1x64xf32>
    %cst_215 = arith.constant 1.000000e+00 : f32
    %1233 = vector.broadcast %cst_215 : f32 to vector<1x64xf32>
    %1234 = arith.addf %1233, %1232 : vector<1x64xf32>
    %1235 = arith.divf %1233, %1234 : vector<1x64xf32>
    %1236 = vector.extract_strided_slice %1227 {offsets = [0, 64], sizes = [1, 32], strides = [1, 1]} : vector<1x96xf32> to vector<1x32xf32>
    %1237 = vector.extract_strided_slice %1235 {offsets = [0, 0], sizes = [1, 32], strides = [1, 1]} : vector<1x64xf32> to vector<1x32xf32>
    %1238 = vector.extract_strided_slice %1224 {offsets = [0, 64], sizes = [1, 32], strides = [1, 1]} : vector<1x96xf32> to vector<1x32xf32>
    %1239 = arith.mulf %1237, %1238 : vector<1x32xf32>
    %1240 = arith.addf %1236, %1239 : vector<1x32xf32>
    %1241 = math.tanh %1240 : vector<1x32xf32>
    %1242 = vector.extract_strided_slice %1235 {offsets = [0, 32], sizes = [1, 32], strides = [1, 1]} : vector<1x64xf32> to vector<1x32xf32>
    %cst_216 = arith.constant 1.000000e+00 : f32
    %1243 = vector.broadcast %cst_216 : f32 to vector<1x32xf32>
    %1244 = arith.subf %1243, %1242 : vector<1x32xf32>
    %1245 = arith.mulf %1244, %1241 : vector<1x32xf32>
    %1246 = arith.mulf %1242, %1156 : vector<1x32xf32>
    %1247 = arith.addf %1245, %1246 : vector<1x32xf32>
    %1248 = arith.truncf %1247 : vector<1x32xf32> to vector<1x32xbf16>
    %cst_217 = arith.constant dense<0.000000e+00> : vector<1x40xf32>
    %1249 = tpu.matmul %1248, %555, %cst_217 {dimension_numbers = #tpu.dot_dimension_numbers<[1], [1], [0], [0], [0, 0, 1, 0], [], []>} : vector<1x32xbf16>, vector<40x32xbf16>, vector<1x40xf32> -> vector<1x40xf32>
    %1250 = vector.extract_strided_slice %1249 {offsets = [0, 0], sizes = [1, 8], strides = [1, 1]} : vector<1x40xf32> to vector<1x8xf32>
    %1251 = math.exp %1250 : vector<1x8xf32>
    %cst_218 = arith.constant dense<0.000000e+00> : vector<1xf32>
    %1252 = vector.multi_reduction <add>, %1251, %cst_218 [1] : vector<1x8xf32> to vector<1xf32>
    %1253 = vector.shape_cast %1252 : vector<1xf32> to vector<1x1xf32>
    %1254 = tpu.reciprocal %1253 {approx = true} : vector<1x1xf32> -> vector<1x1xf32>
    %1255 = vector.broadcast %1254 : vector<1x1xf32> to vector<1x8xf32>
    %1256 = arith.mulf %1251, %1255 : vector<1x8xf32>
    %1257 = arith.truncf %1256 : vector<1x8xf32> to vector<1x8xbf16>
    %cst_219 = arith.constant dense<0.000000e+00> : vector<1x32xf32>
    %1258 = tpu.matmul %1257, %543, %cst_219 {dimension_numbers = #tpu.dot_dimension_numbers<[1], [0], [0], [1], [0, 0, 1, 1], [], []>} : vector<1x8xbf16>, vector<8x32xbf16>, vector<1x32xf32> -> vector<1x32xf32>
    %1259 = vector.extract_strided_slice %1249 {offsets = [0, 8], sizes = [1, 32], strides = [1, 1]} : vector<1x40xf32> to vector<1x32xf32>
    %1260 = arith.truncf %1258 : vector<1x32xf32> to vector<1x32xbf16>
    %cst_220 = arith.constant dense<0.000000e+00> : vector<1x32xf32>
    %1261 = tpu.matmul %1260, %547, %cst_220 {dimension_numbers = #tpu.dot_dimension_numbers<[1], [0], [0], [1], [0, 0, 1, 1], [], []>} : vector<1x32xbf16>, vector<32x32xbf16>, vector<1x32xf32> -> vector<1x32xf32>
    %1262 = arith.addf %1259, %1261 : vector<1x32xf32>
    %1263 = arith.addf %1262, %551 : vector<1x32xf32>
    %1264 = math.tanh %1263 : vector<1x32xf32>
    %1265 = arith.truncf %1264 : vector<1x32xf32> to vector<1x32xbf16>
    %cst_221 = arith.constant dense<0.000000e+00> : vector<1x64xf32>
    %1266 = tpu.matmul %1265, %548, %cst_221 {dimension_numbers = #tpu.dot_dimension_numbers<[1], [0], [0], [1], [0, 0, 1, 1], [], []>} : vector<1x32xbf16>, vector<32x64xbf16>, vector<1x64xf32> -> vector<1x64xf32>
    %1267 = arith.addf %1266, %552 : vector<1x64xf32>
    %cst_222 = arith.constant dense<0xFF800000> : vector<1xf32>
    %1268 = vector.multi_reduction <maximumf>, %1267, %cst_222 [1] : vector<1x64xf32> to vector<1xf32>
    %1269 = vector.shape_cast %1268 : vector<1xf32> to vector<1x1xf32>
    %1270 = vector.broadcast %1269 : vector<1x1xf32> to vector<1x64xf32>
    %1271 = arith.subf %1267, %1270 : vector<1x64xf32>
    %1272 = math.exp %1271 : vector<1x64xf32>
    %cst_223 = arith.constant dense<0.000000e+00> : vector<1xf32>
    %1273 = vector.multi_reduction <add>, %1272, %cst_223 [1] : vector<1x64xf32> to vector<1xf32>
    %1274 = vector.shape_cast %1273 : vector<1xf32> to vector<1x1xf32>
    %1275 = tpu.reciprocal %1274 : vector<1x1xf32> -> vector<1x1xf32>
    %1276 = vector.broadcast %1275 : vector<1x1xf32> to vector<1x64xf32>
    %1277 = arith.mulf %1272, %1276 : vector<1x64xf32>
    %cst_224 = arith.constant dense<0xFF800000> : vector<1xf32>
    %1278 = vector.multi_reduction <maximumf>, %1277, %cst_224 [1] : vector<1x64xf32> to vector<1xf32>
    %1279 = vector.shape_cast %1278 : vector<1xf32> to vector<1x1xf32>
    %1280 = vector.broadcast %1279 : vector<1x1xf32> to vector<1x64xf32>
    %1281 = arith.cmpf oge, %1277, %1280 : vector<1x64xf32>
    %c64_i32_225 = arith.constant 64 : i32
    %1282 = vector.broadcast %c64_i32_225 : i32 to vector<1x64xi32>
    %1283 = arith.select %1281, %558, %1282 : vector<1x64xi1>, vector<1x64xi32>
    %cst_226 = arith.constant dense<2147483647> : vector<1xi32>
    %1284 = vector.multi_reduction <minsi>, %1283, %cst_226 [1] : vector<1x64xi32> to vector<1xi32>
    %1285 = vector.shape_cast %1284 : vector<1xi32> to vector<1x1xi32>
    %c7_227 = arith.constant 7 : index
    %c0_228 = arith.constant 0 : index
    %1286 = vector.load %arg4[%c7_227, %c0_228] : memref<10x1xi32, #tpu.memory_space<vmem>>, vector<1x1xi32>
    tpu.vector_store %arg4[%c7_227, %c0_228], %1285 {strides = array<i32>} : memref<10x1xi32, #tpu.memory_space<vmem>>, vector<1x1xi32>,
    %c7_229 = arith.constant 7 : index
    %c0_230 = arith.constant 0 : index
    %1287 = vector.load %arg5[%c7_229, %c0_230] : memref<10x1xf32, #tpu.memory_space<vmem>>, vector<1x1xf32>
    tpu.vector_store %arg5[%c7_229, %c0_230], %1279 {strides = array<i32>} : memref<10x1xf32, #tpu.memory_space<vmem>>, vector<1x1xf32>,
    %1288 = vector.broadcast %1285 : vector<1x1xi32> to vector<1x64xi32>
    %1289 = arith.cmpi eq, %558, %1288 : vector<1x64xi32>
    %1290 = arith.extui %1289 : vector<1x64xi1> to vector<1x64xi32>
    %1291 = arith.sitofp %1290 : vector<1x64xi32> to vector<1x64xf32>
    %1292 = tpu.concatenate %1291, %1223, %1247 in 1 : vector<1x64xf32>, vector<1x32xf32>, vector<1x32xf32> -> vector<1x128xf32>
    %1293 = arith.truncf %1292 : vector<1x128xf32> to vector<1x128xbf16>
    %cst_231 = arith.constant dense<0.000000e+00> : vector<1x224xf32>
    %1294 = tpu.matmul %1293, %544, %cst_231 {dimension_numbers = #tpu.dot_dimension_numbers<[1], [0], [0], [1], [0, 0, 1, 1], [], []>} : vector<1x128xbf16>, vector<128x224xbf16>, vector<1x224xf32> -> vector<1x224xf32>
    %1295 = arith.addf %1294, %549 : vector<1x224xf32>
    %1296 = vector.extract_strided_slice %1295 {offsets = [0, 0], sizes = [1, 64], strides = [1, 1]} : vector<1x224xf32> to vector<1x64xf32>
    %1297 = arith.negf %1296 : vector<1x64xf32>
    %1298 = math.exp %1297 : vector<1x64xf32>
    %cst_232 = arith.constant 1.000000e+00 : f32
    %1299 = vector.broadcast %cst_232 : f32 to vector<1x64xf32>
    %1300 = arith.addf %1299, %1298 : vector<1x64xf32>
    %1301 = arith.divf %1299, %1300 : vector<1x64xf32>
    %1302 = vector.extract_strided_slice %1295 {offsets = [0, 64], sizes = [1, 32], strides = [1, 1]} : vector<1x224xf32> to vector<1x32xf32>
    %1303 = vector.extract_strided_slice %1301 {offsets = [0, 0], sizes = [1, 32], strides = [1, 1]} : vector<1x64xf32> to vector<1x32xf32>
    %1304 = vector.extract_strided_slice %1295 {offsets = [0, 96], sizes = [1, 32], strides = [1, 1]} : vector<1x224xf32> to vector<1x32xf32>
    %1305 = arith.mulf %1303, %1304 : vector<1x32xf32>
    %1306 = arith.addf %1302, %1305 : vector<1x32xf32>
    %1307 = math.tanh %1306 : vector<1x32xf32>
    %1308 = vector.extract_strided_slice %1301 {offsets = [0, 32], sizes = [1, 32], strides = [1, 1]} : vector<1x64xf32> to vector<1x32xf32>
    %cst_233 = arith.constant 1.000000e+00 : f32
    %1309 = vector.broadcast %cst_233 : f32 to vector<1x32xf32>
    %1310 = arith.subf %1309, %1308 : vector<1x32xf32>
    %1311 = arith.mulf %1310, %1307 : vector<1x32xf32>
    %1312 = vector.extract_strided_slice %1301 {offsets = [0, 32], sizes = [1, 32], strides = [1, 1]} : vector<1x64xf32> to vector<1x32xf32>
    %1313 = arith.mulf %1312, %1223 : vector<1x32xf32>
    %1314 = arith.addf %1311, %1313 : vector<1x32xf32>
    %1315 = vector.extract_strided_slice %1295 {offsets = [0, 128], sizes = [1, 96], strides = [1, 1]} : vector<1x224xf32> to vector<1x96xf32>
    %1316 = arith.truncf %1314 : vector<1x32xf32> to vector<1x32xbf16>
    %cst_234 = arith.constant dense<0.000000e+00> : vector<1x96xf32>
    %1317 = tpu.matmul %1316, %545, %cst_234 {dimension_numbers = #tpu.dot_dimension_numbers<[1], [0], [0], [1], [0, 0, 1, 1], [], []>} : vector<1x32xbf16>, vector<32x96xbf16>, vector<1x96xf32> -> vector<1x96xf32>
    %1318 = arith.addf %1317, %550 : vector<1x96xf32>
    %1319 = vector.extract_strided_slice %1318 {offsets = [0, 0], sizes = [1, 64], strides = [1, 1]} : vector<1x96xf32> to vector<1x64xf32>
    %1320 = vector.extract_strided_slice %1315 {offsets = [0, 0], sizes = [1, 64], strides = [1, 1]} : vector<1x96xf32> to vector<1x64xf32>
    %1321 = arith.addf %1319, %1320 : vector<1x64xf32>
    %1322 = arith.negf %1321 : vector<1x64xf32>
    %1323 = math.exp %1322 : vector<1x64xf32>
    %cst_235 = arith.constant 1.000000e+00 : f32
    %1324 = vector.broadcast %cst_235 : f32 to vector<1x64xf32>
    %1325 = arith.addf %1324, %1323 : vector<1x64xf32>
    %1326 = arith.divf %1324, %1325 : vector<1x64xf32>
    %1327 = vector.extract_strided_slice %1318 {offsets = [0, 64], sizes = [1, 32], strides = [1, 1]} : vector<1x96xf32> to vector<1x32xf32>
    %1328 = vector.extract_strided_slice %1326 {offsets = [0, 0], sizes = [1, 32], strides = [1, 1]} : vector<1x64xf32> to vector<1x32xf32>
    %1329 = vector.extract_strided_slice %1315 {offsets = [0, 64], sizes = [1, 32], strides = [1, 1]} : vector<1x96xf32> to vector<1x32xf32>
    %1330 = arith.mulf %1328, %1329 : vector<1x32xf32>
    %1331 = arith.addf %1327, %1330 : vector<1x32xf32>
    %1332 = math.tanh %1331 : vector<1x32xf32>
    %1333 = vector.extract_strided_slice %1326 {offsets = [0, 32], sizes = [1, 32], strides = [1, 1]} : vector<1x64xf32> to vector<1x32xf32>
    %cst_236 = arith.constant 1.000000e+00 : f32
    %1334 = vector.broadcast %cst_236 : f32 to vector<1x32xf32>
    %1335 = arith.subf %1334, %1333 : vector<1x32xf32>
    %1336 = arith.mulf %1335, %1332 : vector<1x32xf32>
    %1337 = arith.mulf %1333, %1247 : vector<1x32xf32>
    %1338 = arith.addf %1336, %1337 : vector<1x32xf32>
    %1339 = arith.truncf %1338 : vector<1x32xf32> to vector<1x32xbf16>
    %cst_237 = arith.constant dense<0.000000e+00> : vector<1x40xf32>
    %1340 = tpu.matmul %1339, %555, %cst_237 {dimension_numbers = #tpu.dot_dimension_numbers<[1], [1], [0], [0], [0, 0, 1, 0], [], []>} : vector<1x32xbf16>, vector<40x32xbf16>, vector<1x40xf32> -> vector<1x40xf32>
    %1341 = vector.extract_strided_slice %1340 {offsets = [0, 0], sizes = [1, 8], strides = [1, 1]} : vector<1x40xf32> to vector<1x8xf32>
    %1342 = math.exp %1341 : vector<1x8xf32>
    %cst_238 = arith.constant dense<0.000000e+00> : vector<1xf32>
    %1343 = vector.multi_reduction <add>, %1342, %cst_238 [1] : vector<1x8xf32> to vector<1xf32>
    %1344 = vector.shape_cast %1343 : vector<1xf32> to vector<1x1xf32>
    %1345 = tpu.reciprocal %1344 {approx = true} : vector<1x1xf32> -> vector<1x1xf32>
    %1346 = vector.broadcast %1345 : vector<1x1xf32> to vector<1x8xf32>
    %1347 = arith.mulf %1342, %1346 : vector<1x8xf32>
    %1348 = arith.truncf %1347 : vector<1x8xf32> to vector<1x8xbf16>
    %cst_239 = arith.constant dense<0.000000e+00> : vector<1x32xf32>
    %1349 = tpu.matmul %1348, %543, %cst_239 {dimension_numbers = #tpu.dot_dimension_numbers<[1], [0], [0], [1], [0, 0, 1, 1], [], []>} : vector<1x8xbf16>, vector<8x32xbf16>, vector<1x32xf32> -> vector<1x32xf32>
    %1350 = vector.extract_strided_slice %1340 {offsets = [0, 8], sizes = [1, 32], strides = [1, 1]} : vector<1x40xf32> to vector<1x32xf32>
    %1351 = arith.truncf %1349 : vector<1x32xf32> to vector<1x32xbf16>
    %cst_240 = arith.constant dense<0.000000e+00> : vector<1x32xf32>
    %1352 = tpu.matmul %1351, %547, %cst_240 {dimension_numbers = #tpu.dot_dimension_numbers<[1], [0], [0], [1], [0, 0, 1, 1], [], []>} : vector<1x32xbf16>, vector<32x32xbf16>, vector<1x32xf32> -> vector<1x32xf32>
    %1353 = arith.addf %1350, %1352 : vector<1x32xf32>
    %1354 = arith.addf %1353, %551 : vector<1x32xf32>
    %1355 = math.tanh %1354 : vector<1x32xf32>
    %1356 = arith.truncf %1355 : vector<1x32xf32> to vector<1x32xbf16>
    %cst_241 = arith.constant dense<0.000000e+00> : vector<1x64xf32>
    %1357 = tpu.matmul %1356, %548, %cst_241 {dimension_numbers = #tpu.dot_dimension_numbers<[1], [0], [0], [1], [0, 0, 1, 1], [], []>} : vector<1x32xbf16>, vector<32x64xbf16>, vector<1x64xf32> -> vector<1x64xf32>
    %1358 = arith.addf %1357, %552 : vector<1x64xf32>
    %cst_242 = arith.constant dense<0xFF800000> : vector<1xf32>
    %1359 = vector.multi_reduction <maximumf>, %1358, %cst_242 [1] : vector<1x64xf32> to vector<1xf32>
    %1360 = vector.shape_cast %1359 : vector<1xf32> to vector<1x1xf32>
    %1361 = vector.broadcast %1360 : vector<1x1xf32> to vector<1x64xf32>
    %1362 = arith.subf %1358, %1361 : vector<1x64xf32>
    %1363 = math.exp %1362 : vector<1x64xf32>
    %cst_243 = arith.constant dense<0.000000e+00> : vector<1xf32>
    %1364 = vector.multi_reduction <add>, %1363, %cst_243 [1] : vector<1x64xf32> to vector<1xf32>
    %1365 = vector.shape_cast %1364 : vector<1xf32> to vector<1x1xf32>
    %1366 = tpu.reciprocal %1365 : vector<1x1xf32> -> vector<1x1xf32>
    %1367 = vector.broadcast %1366 : vector<1x1xf32> to vector<1x64xf32>
    %1368 = arith.mulf %1363, %1367 : vector<1x64xf32>
    %cst_244 = arith.constant dense<0xFF800000> : vector<1xf32>
    %1369 = vector.multi_reduction <maximumf>, %1368, %cst_244 [1] : vector<1x64xf32> to vector<1xf32>
    %1370 = vector.shape_cast %1369 : vector<1xf32> to vector<1x1xf32>
    %1371 = vector.broadcast %1370 : vector<1x1xf32> to vector<1x64xf32>
    %1372 = arith.cmpf oge, %1368, %1371 : vector<1x64xf32>
    %c64_i32_245 = arith.constant 64 : i32
    %1373 = vector.broadcast %c64_i32_245 : i32 to vector<1x64xi32>
    %1374 = arith.select %1372, %558, %1373 : vector<1x64xi1>, vector<1x64xi32>
    %cst_246 = arith.constant dense<2147483647> : vector<1xi32>
    %1375 = vector.multi_reduction <minsi>, %1374, %cst_246 [1] : vector<1x64xi32> to vector<1xi32>
    %1376 = vector.shape_cast %1375 : vector<1xi32> to vector<1x1xi32>
    %c8 = arith.constant 8 : index
    %c0_247 = arith.constant 0 : index
    %1377 = vector.load %arg4[%c8, %c0_247] : memref<10x1xi32, #tpu.memory_space<vmem>>, vector<1x1xi32>
    tpu.vector_store %arg4[%c8, %c0_247], %1376 {strides = array<i32>} : memref<10x1xi32, #tpu.memory_space<vmem>>, vector<1x1xi32>,
    %c8_248 = arith.constant 8 : index
    %c0_249 = arith.constant 0 : index
    %1378 = vector.load %arg5[%c8_248, %c0_249] : memref<10x1xf32, #tpu.memory_space<vmem>>, vector<1x1xf32>
    tpu.vector_store %arg5[%c8_248, %c0_249], %1370 {strides = array<i32>} : memref<10x1xf32, #tpu.memory_space<vmem>>, vector<1x1xf32>,
    %1379 = vector.broadcast %1376 : vector<1x1xi32> to vector<1x64xi32>
    %1380 = arith.cmpi eq, %558, %1379 : vector<1x64xi32>
    %1381 = arith.extui %1380 : vector<1x64xi1> to vector<1x64xi32>
    %1382 = arith.sitofp %1381 : vector<1x64xi32> to vector<1x64xf32>
    %1383 = tpu.concatenate %1382, %1314, %1338 in 1 : vector<1x64xf32>, vector<1x32xf32>, vector<1x32xf32> -> vector<1x128xf32>
    %1384 = arith.truncf %1383 : vector<1x128xf32> to vector<1x128xbf16>
    %cst_250 = arith.constant dense<0.000000e+00> : vector<1x224xf32>
    %1385 = tpu.matmul %1384, %544, %cst_250 {dimension_numbers = #tpu.dot_dimension_numbers<[1], [0], [0], [1], [0, 0, 1, 1], [], []>} : vector<1x128xbf16>, vector<128x224xbf16>, vector<1x224xf32> -> vector<1x224xf32>
    %1386 = arith.addf %1385, %549 : vector<1x224xf32>
    %1387 = vector.extract_strided_slice %1386 {offsets = [0, 0], sizes = [1, 64], strides = [1, 1]} : vector<1x224xf32> to vector<1x64xf32>
    %1388 = arith.negf %1387 : vector<1x64xf32>
    %1389 = math.exp %1388 : vector<1x64xf32>
    %cst_251 = arith.constant 1.000000e+00 : f32
    %1390 = vector.broadcast %cst_251 : f32 to vector<1x64xf32>
    %1391 = arith.addf %1390, %1389 : vector<1x64xf32>
    %1392 = arith.divf %1390, %1391 : vector<1x64xf32>
    %1393 = vector.extract_strided_slice %1386 {offsets = [0, 64], sizes = [1, 32], strides = [1, 1]} : vector<1x224xf32> to vector<1x32xf32>
    %1394 = vector.extract_strided_slice %1392 {offsets = [0, 0], sizes = [1, 32], strides = [1, 1]} : vector<1x64xf32> to vector<1x32xf32>
    %1395 = vector.extract_strided_slice %1386 {offsets = [0, 96], sizes = [1, 32], strides = [1, 1]} : vector<1x224xf32> to vector<1x32xf32>
    %1396 = arith.mulf %1394, %1395 : vector<1x32xf32>
    %1397 = arith.addf %1393, %1396 : vector<1x32xf32>
    %1398 = math.tanh %1397 : vector<1x32xf32>
    %1399 = vector.extract_strided_slice %1392 {offsets = [0, 32], sizes = [1, 32], strides = [1, 1]} : vector<1x64xf32> to vector<1x32xf32>
    %cst_252 = arith.constant 1.000000e+00 : f32
    %1400 = vector.broadcast %cst_252 : f32 to vector<1x32xf32>
    %1401 = arith.subf %1400, %1399 : vector<1x32xf32>
    %1402 = arith.mulf %1401, %1398 : vector<1x32xf32>
    %1403 = vector.extract_strided_slice %1392 {offsets = [0, 32], sizes = [1, 32], strides = [1, 1]} : vector<1x64xf32> to vector<1x32xf32>
    %1404 = arith.mulf %1403, %1314 : vector<1x32xf32>
    %1405 = arith.addf %1402, %1404 : vector<1x32xf32>
    %1406 = vector.extract_strided_slice %1386 {offsets = [0, 128], sizes = [1, 96], strides = [1, 1]} : vector<1x224xf32> to vector<1x96xf32>
    %1407 = arith.truncf %1405 : vector<1x32xf32> to vector<1x32xbf16>
    %cst_253 = arith.constant dense<0.000000e+00> : vector<1x96xf32>
    %1408 = tpu.matmul %1407, %545, %cst_253 {dimension_numbers = #tpu.dot_dimension_numbers<[1], [0], [0], [1], [0, 0, 1, 1], [], []>} : vector<1x32xbf16>, vector<32x96xbf16>, vector<1x96xf32> -> vector<1x96xf32>
    %1409 = arith.addf %1408, %550 : vector<1x96xf32>
    %1410 = vector.extract_strided_slice %1409 {offsets = [0, 0], sizes = [1, 64], strides = [1, 1]} : vector<1x96xf32> to vector<1x64xf32>
    %1411 = vector.extract_strided_slice %1406 {offsets = [0, 0], sizes = [1, 64], strides = [1, 1]} : vector<1x96xf32> to vector<1x64xf32>
    %1412 = arith.addf %1410, %1411 : vector<1x64xf32>
    %1413 = arith.negf %1412 : vector<1x64xf32>
    %1414 = math.exp %1413 : vector<1x64xf32>
    %cst_254 = arith.constant 1.000000e+00 : f32
    %1415 = vector.broadcast %cst_254 : f32 to vector<1x64xf32>
    %1416 = arith.addf %1415, %1414 : vector<1x64xf32>
    %1417 = arith.divf %1415, %1416 : vector<1x64xf32>
    %1418 = vector.extract_strided_slice %1409 {offsets = [0, 64], sizes = [1, 32], strides = [1, 1]} : vector<1x96xf32> to vector<1x32xf32>
    %1419 = vector.extract_strided_slice %1417 {offsets = [0, 0], sizes = [1, 32], strides = [1, 1]} : vector<1x64xf32> to vector<1x32xf32>
    %1420 = vector.extract_strided_slice %1406 {offsets = [0, 64], sizes = [1, 32], strides = [1, 1]} : vector<1x96xf32> to vector<1x32xf32>
    %1421 = arith.mulf %1419, %1420 : vector<1x32xf32>
    %1422 = arith.addf %1418, %1421 : vector<1x32xf32>
    %1423 = math.tanh %1422 : vector<1x32xf32>
    %1424 = vector.extract_strided_slice %1417 {offsets = [0, 32], sizes = [1, 32], strides = [1, 1]} : vector<1x64xf32> to vector<1x32xf32>
    %cst_255 = arith.constant 1.000000e+00 : f32
    %1425 = vector.broadcast %cst_255 : f32 to vector<1x32xf32>
    %1426 = arith.subf %1425, %1424 : vector<1x32xf32>
    %1427 = arith.mulf %1426, %1423 : vector<1x32xf32>
    %1428 = arith.mulf %1424, %1338 : vector<1x32xf32>
    %1429 = arith.addf %1427, %1428 : vector<1x32xf32>
    %1430 = arith.truncf %1429 : vector<1x32xf32> to vector<1x32xbf16>
    %cst_256 = arith.constant dense<0.000000e+00> : vector<1x40xf32>
    %1431 = tpu.matmul %1430, %555, %cst_256 {dimension_numbers = #tpu.dot_dimension_numbers<[1], [1], [0], [0], [0, 0, 1, 0], [], []>} : vector<1x32xbf16>, vector<40x32xbf16>, vector<1x40xf32> -> vector<1x40xf32>
    %1432 = vector.extract_strided_slice %1431 {offsets = [0, 0], sizes = [1, 8], strides = [1, 1]} : vector<1x40xf32> to vector<1x8xf32>
    %1433 = math.exp %1432 : vector<1x8xf32>
    %cst_257 = arith.constant dense<0.000000e+00> : vector<1xf32>
    %1434 = vector.multi_reduction <add>, %1433, %cst_257 [1] : vector<1x8xf32> to vector<1xf32>
    %1435 = vector.shape_cast %1434 : vector<1xf32> to vector<1x1xf32>
    %1436 = tpu.reciprocal %1435 {approx = true} : vector<1x1xf32> -> vector<1x1xf32>
    %1437 = vector.broadcast %1436 : vector<1x1xf32> to vector<1x8xf32>
    %1438 = arith.mulf %1433, %1437 : vector<1x8xf32>
    %1439 = arith.truncf %1438 : vector<1x8xf32> to vector<1x8xbf16>
    %cst_258 = arith.constant dense<0.000000e+00> : vector<1x32xf32>
    %1440 = tpu.matmul %1439, %543, %cst_258 {dimension_numbers = #tpu.dot_dimension_numbers<[1], [0], [0], [1], [0, 0, 1, 1], [], []>} : vector<1x8xbf16>, vector<8x32xbf16>, vector<1x32xf32> -> vector<1x32xf32>
    %1441 = vector.extract_strided_slice %1431 {offsets = [0, 8], sizes = [1, 32], strides = [1, 1]} : vector<1x40xf32> to vector<1x32xf32>
    %1442 = arith.truncf %1440 : vector<1x32xf32> to vector<1x32xbf16>
    %cst_259 = arith.constant dense<0.000000e+00> : vector<1x32xf32>
    %1443 = tpu.matmul %1442, %547, %cst_259 {dimension_numbers = #tpu.dot_dimension_numbers<[1], [0], [0], [1], [0, 0, 1, 1], [], []>} : vector<1x32xbf16>, vector<32x32xbf16>, vector<1x32xf32> -> vector<1x32xf32>
    %1444 = arith.addf %1441, %1443 : vector<1x32xf32>
    %1445 = arith.addf %1444, %551 : vector<1x32xf32>
    %1446 = math.tanh %1445 : vector<1x32xf32>
    %1447 = arith.truncf %1446 : vector<1x32xf32> to vector<1x32xbf16>
    %cst_260 = arith.constant dense<0.000000e+00> : vector<1x64xf32>
    %1448 = tpu.matmul %1447, %548, %cst_260 {dimension_numbers = #tpu.dot_dimension_numbers<[1], [0], [0], [1], [0, 0, 1, 1], [], []>} : vector<1x32xbf16>, vector<32x64xbf16>, vector<1x64xf32> -> vector<1x64xf32>
    %1449 = arith.addf %1448, %552 : vector<1x64xf32>
    %cst_261 = arith.constant dense<0xFF800000> : vector<1xf32>
    %1450 = vector.multi_reduction <maximumf>, %1449, %cst_261 [1] : vector<1x64xf32> to vector<1xf32>
    %1451 = vector.shape_cast %1450 : vector<1xf32> to vector<1x1xf32>
    %1452 = vector.broadcast %1451 : vector<1x1xf32> to vector<1x64xf32>
    %1453 = arith.subf %1449, %1452 : vector<1x64xf32>
    %1454 = math.exp %1453 : vector<1x64xf32>
    %cst_262 = arith.constant dense<0.000000e+00> : vector<1xf32>
    %1455 = vector.multi_reduction <add>, %1454, %cst_262 [1] : vector<1x64xf32> to vector<1xf32>
    %1456 = vector.shape_cast %1455 : vector<1xf32> to vector<1x1xf32>
    %1457 = tpu.reciprocal %1456 : vector<1x1xf32> -> vector<1x1xf32>
    %1458 = vector.broadcast %1457 : vector<1x1xf32> to vector<1x64xf32>
    %1459 = arith.mulf %1454, %1458 : vector<1x64xf32>
    %cst_263 = arith.constant dense<0xFF800000> : vector<1xf32>
    %1460 = vector.multi_reduction <maximumf>, %1459, %cst_263 [1] : vector<1x64xf32> to vector<1xf32>
    %1461 = vector.shape_cast %1460 : vector<1xf32> to vector<1x1xf32>
    %1462 = vector.broadcast %1461 : vector<1x1xf32> to vector<1x64xf32>
    %1463 = arith.cmpf oge, %1459, %1462 : vector<1x64xf32>
    %c64_i32_264 = arith.constant 64 : i32
    %1464 = vector.broadcast %c64_i32_264 : i32 to vector<1x64xi32>
    %1465 = arith.select %1463, %558, %1464 : vector<1x64xi1>, vector<1x64xi32>
    %cst_265 = arith.constant dense<2147483647> : vector<1xi32>
    %1466 = vector.multi_reduction <minsi>, %1465, %cst_265 [1] : vector<1x64xi32> to vector<1xi32>
    %1467 = vector.shape_cast %1466 : vector<1xi32> to vector<1x1xi32>
    %c9 = arith.constant 9 : index
    %c0_266 = arith.constant 0 : index
    %1468 = vector.load %arg4[%c9, %c0_266] : memref<10x1xi32, #tpu.memory_space<vmem>>, vector<1x1xi32>
    tpu.vector_store %arg4[%c9, %c0_266], %1467 {strides = array<i32>} : memref<10x1xi32, #tpu.memory_space<vmem>>, vector<1x1xi32>,
    %c9_267 = arith.constant 9 : index
    %c0_268 = arith.constant 0 : index
    %1469 = vector.load %arg5[%c9_267, %c0_268] : memref<10x1xf32, #tpu.memory_space<vmem>>, vector<1x1xf32>
    tpu.vector_store %arg5[%c9_267, %c0_268], %1461 {strides = array<i32>} : memref<10x1xf32, #tpu.memory_space<vmem>>, vector<1x1xf32>,
    return
  }
}

</mosaic_0001>

<llo_original>
// kernel: greedy_search_decode.1
$region0: #{greedy_search_decode.1}
  #allocation0 [shape = 'u32[]', space=smem, size = 0x4, offset = 0x4, fixed_abs, tag = 'smem constant byte address 0x4 - core index']
  #allocation1 [shape = 'u32[144,128]{1,0:T(1,128)}', space=vmem, size = 0x12000, scoped, tag = 'internal scratch']
  %s0 = inlined_call_operand.vmem [shape: s32[8,1], index: 0, kind: input, shape index: {}]
  %s1 = inlined_call_operand.vmem [shape: f32[4,32], index: 1, kind: input, shape index: {}]
  %s2 = inlined_call_operand.vmem [shape: bf16[384,224], index: 2, kind: input, shape index: {}]
  %s3 = inlined_call_operand.vmem [shape: f32[8,224], index: 3, kind: input, shape index: {}]
  %s4 = inlined_call_operand.vmem [shape: s32[10,1], index: 4, kind: output, shape index: {0}]
  %s5 = inlined_call_operand.vmem [shape: f32[10,1], index: 5, kind: output, shape index: {1}]
  %6 = xla_tuple %s4, %s5
  %s7 = sld [smem:[#allocation0]]
  $region34: #{greedy_search_decode.1} parent=0
    _
  %s9 = ssub.s32 1, %s7
  %s10 = scalar_select 0, %s9, %s7
  // Predicated region
  $region2: #{greedy_search_decode.1} parent=0 // pred_check
    _
  $region3: #{greedy_search_decode.1} parent=0 // pred_check_branch
    %12 = sbr.rel (0) target = $region5
  $region4: #{greedy_search_decode.1} parent=0 // pred_region
    _
  $region5: #{greedy_search_decode.1} parent=0 // pred_fallthru
    _
  // Predicated region
  $region6: #{greedy_search_decode.1} parent=0 // pred_check
    _
  $region7: #{greedy_search_decode.1} parent=0 // pred_check_branch
    %14 = sbr.rel (0) target = $region9
  $region8: #{greedy_search_decode.1} parent=0 // pred_region
    _
  $region9: #{greedy_search_decode.1} parent=0 // pred_fallthru
    _
  // Predicated region
  $region10: #{greedy_search_decode.1} parent=0 // pred_check
    _
  $region11: #{greedy_search_decode.1} parent=0 // pred_check_branch
    %16 = sbr.rel (0) target = $region13
  $region12: #{greedy_search_decode.1} parent=0 // pred_region
    _
  $region13: #{greedy_search_decode.1} parent=0 // pred_fallthru
    _
  // Predicated region
  $region14: #{greedy_search_decode.1} parent=0 // pred_check
    _
  $region15: #{greedy_search_decode.1} parent=0 // pred_check_branch
    %18 = sbr.rel (0) target = $region17
  $region16: #{greedy_search_decode.1} parent=0 // pred_region
    _
  $region17: #{greedy_search_decode.1} parent=0 // pred_fallthru
    _
  %v20 = vld [vmem:[%s2] sm:$0xff]
  %v21 = vld [vmem:[%s2 + $0x8] sm:$0xff]
  %v22 = vld [vmem:[%s2 + $0x10] sm:$0xff]
  %v23 = vld [vmem:[%s2 + $0x18] sm:$0xff]
  %v24 = vld [vmem:[%s2 + $0x20] sm:$0xff]
  %v25 = vld [vmem:[%s2 + $0x28] sm:$0xff]
  %v26 = vld [vmem:[%s2 + $0x30] sm:$0xff]
  %v27 = vld [vmem:[%s2 + $0x38] sm:$0xff]
  %v28 = vld [vmem:[%s2 + $0x40] sm:$0xff]
  %v29 = vld [vmem:[%s2 + $0x48] sm:$0xff]
  %v30 = vld [vmem:[%s2 + $0x50] sm:$0xff]
  %v31 = vld [vmem:[%s2 + $0x58] sm:$0xff]
  %v32 = vld [vmem:[%s2 + $0x60] sm:$0xff]
  %v33 = vld [vmem:[%s2 + $0x68] sm:$0xff]
  %v34 = vld [vmem:[%s2 + $0x70] sm:$0xff]
  %v35 = vld [vmem:[%s2 + $0x78] sm:$0xff]
  %v36 = vld [vmem:[%s2 + $0x80] sm:$0xff]
  %v37 = vld [vmem:[%s2 + $0x88] sm:$0xff]
  %v38 = vld [vmem:[%s2 + $0x90] sm:$0xff]
  %v39 = vld [vmem:[%s2 + $0x98] sm:$0xff]
  %v40 = vld [vmem:[%s2 + $0xa0] sm:$0xff]
  %v41 = vld [vmem:[%s2 + $0xa8] sm:$0xff]
  %v42 = vld [vmem:[%s2 + $0xb0] sm:$0xff]
  %v43 = vld [vmem:[%s2 + $0xb8] sm:$0xff]
  %v44 = vld [vmem:[%s3] ss:$8 sm:$0x3]
  %s45 = scalar_lea.vmem %s3, 1
  %v46 = vld [vmem:[%s45] ss:$8 sm:$0x3]
  %s47 = scalar_lea.vmem %s3, 2
  %v48 = vld [vmem:[%s47] ss:$8 sm:$0x3]
  %s49 = scalar_lea.vmem %s3, 3
  %v50 = vld [vmem:[%s49] ss:$8 sm:$0x3]
  %v51 = vld [vmem:[%s0] sm:$0xff]
  %v52 = vlaneseq
  %v53 = vand.u32 %v52, 127
  %54 = vset.pattern.permute.xlu0 0
  %55 = vperm.xlu0 %54, %v51
  %v56 = vpop.permute.xlu0 %55
  %vm57 = vcmp.eq.s32.totalorder %v56, %v53
  %v58 = vsel %vm57, 1, 0
  %v59 = vcvt.s32.f32 %v58
  %v60 = vpack.c.bf16 %v59, %v59
  %v62 = vlaneseq
  %v63 = vshrl.u32 %v62, 7
  %v64 = vsub.s32 0, %v63
  %v65 = vrot.slane %v44, %v64
  %v66 = vlaneseq
  %v67 = vshrl.u32 %v66, 7
  %v68 = vsub.s32 1, %v67
  %v69 = vrot.slane %v44, %v68
  %v80 = vunpack.c.l.b16 %v20
  %v81 = vunpack.c.h.b16 %v20
  %v82 = vunpack.c.l.b16 %v21
  %v83 = vunpack.c.h.b16 %v21
  %v84 = vunpack.c.l.b16 %v22
  %v85 = vunpack.c.h.b16 %v22
  %v86 = vunpack.c.l.b16 %v23
  %v87 = vunpack.c.h.b16 %v23
  %v88 = vunpack.c.l.b16 %v24
  %v89 = vunpack.c.h.b16 %v24
  %v90 = vunpack.c.l.b16 %v25
  %v91 = vunpack.c.h.b16 %v25
  %v92 = vunpack.c.l.b16 %v26
  %v93 = vunpack.c.h.b16 %v26
  %v94 = vunpack.c.l.b16 %v27
  %v95 = vunpack.c.h.b16 %v27
  %v96 = vpack.c.b16 %v82, %v80
  %v97 = vpack.c.b16 %v83, %v81
  %v98 = vpack.c.b16 %v86, %v84
  %v99 = vpack.c.b16 %v87, %v85
  %v100 = vpack.c.b16 %v90, %v88
  %v101 = vpack.c.b16 %v91, %v89
  %v102 = vpack.c.b16 %v94, %v92
  %v103 = vpack.c.b16 %v95, %v93
  %vm112 = vcmask 523264
  %v114 = vsel %vm112, %v60, 0
  %116 = vmatprep.subr.bf16.mxu0 %v97
  %117 = vmatpush1.bf16.msra.mxu0 %v96
  %118 = vmatprep.subr.bf16.mxu0 %v99
  %119 = vmatpush1.bf16.msra.mxu0 %v98
  %120 = vmatprep.subr.bf16.mxu0 %v101
  %121 = vmatpush1.bf16.msra.mxu0 %v100
  %122 = vmatprep.subr.bf16.mxu0 %v103
  %123 = vmatpush1.bf16.msra.mxu0 %v102
  %124 = vmatprep.subr.bf16.mxu0 0
  %125 = vmatpush1.bf16.msra.mxu0 0
  %126 = vmatprep.subr.bf16.mxu0 0
  %127 = vmatpush1.bf16.msra.mxu0 0
  %128 = vmatprep.subr.bf16.mxu0 0
  %129 = vmatpush1.bf16.msra.mxu0 0
  %130 = vmatprep.subr.bf16.mxu0 0
  %131 = vmatpush1.bf16.msra.mxu0 0
  %132 = vmatprep.subr.bf16.mxu0 0
  %133 = vmatpush1.bf16.msra.mxu0 0
  %134 = vmatprep.subr.bf16.mxu0 0
  %135 = vmatpush1.bf16.msra.mxu0 0
  %136 = vmatprep.subr.bf16.mxu0 0
  %137 = vmatpush1.bf16.msra.mxu0 0
  %138 = vmatprep.subr.bf16.mxu0 0
  %139 = vmatpush1.bf16.msra.mxu0 0
  %140 = vmatprep.subr.bf16.mxu0 0
  %141 = vmatpush1.bf16.msra.mxu0 0
  %142 = vmatprep.subr.bf16.mxu0 0
  %143 = vmatpush1.bf16.msra.mxu0 0
  %144 = vmatprep.subr.bf16.mxu0 0
  %145 = vmatpush1.bf16.msra.mxu0 0
  %146 = vmatprep.subr.bf16.mxu0 0
  %147 = vmatpush1.bf16.msra.mxu0 0
  %148 = vmatprep.mubr.bf16.mxu0 0
  %149 = vmatmul.mubr.bf16.gmra.mrb[0].mxu0 %v114
  %v150 = vpop.f32.mrb[0].mxu0
  %v151 = vadd.f32 %v65, %v150
  %v152 = vpop.f32.mrb[0].mxu0
  %v153 = vadd.f32 %v69, %v152
  %v154 = vpop.f32.mrb[0].mxu0
  %v155 = vpop.f32.mrb[0].mxu0
  %156 = vdwg.mxu0
  %v157 = vld [vmem:[%s1] sm:$0xf]
  %v158 = vpack.c.bf16 %v157, %v157
  %v160 = vlaneseq
  %v161 = vshrl.u32 %v160, 7
  %v162 = vsub.s32 0, %v161
  %v163 = vrot.slane %v46, %v162
  %v164 = vlaneseq
  %v165 = vshrl.u32 %v164, 7
  %v166 = vsub.s32 1, %v165
  %v167 = vrot.slane %v46, %v166
  %v174 = vunpack.c.l.b16 %v28
  %v175 = vunpack.c.h.b16 %v28
  %v176 = vunpack.c.l.b16 %v29
  %v177 = vunpack.c.h.b16 %v29
  %v178 = vunpack.c.l.b16 %v30
  %v179 = vunpack.c.h.b16 %v30
  %v180 = vunpack.c.l.b16 %v31
  %v181 = vunpack.c.h.b16 %v31
  %v182 = vpack.c.b16 %v176, %v174
  %v183 = vpack.c.b16 %v177, %v175
  %v184 = vpack.c.b16 %v180, %v178
  %v185 = vpack.c.b16 %v181, %v179
  %vm190 = vcmask 261120
  %v192 = vsel %vm190, %v158, 0
  %194 = vmatprep.subr.bf16.mxu0 %v183
  %195 = vmatpush1.bf16.msra.mxu0 %v182
  %196 = vmatprep.subr.bf16.mxu0 %v185
  %197 = vmatpush1.bf16.msra.mxu0 %v184
  %198 = vmatprep.subr.bf16.mxu0 0
  %199 = vmatpush1.bf16.msra.mxu0 0
  %200 = vmatprep.subr.bf16.mxu0 0
  %201 = vmatpush1.bf16.msra.mxu0 0
  %202 = vmatprep.subr.bf16.mxu0 0
  %203 = vmatpush1.bf16.msra.mxu0 0
  %204 = vmatprep.subr.bf16.mxu0 0
  %205 = vmatpush1.bf16.msra.mxu0 0
  %206 = vmatprep.subr.bf16.mxu0 0
  %207 = vmatpush1.bf16.msra.mxu0 0
  %208 = vmatprep.subr.bf16.mxu0 0
  %209 = vmatpush1.bf16.msra.mxu0 0
  %210 = vmatprep.subr.bf16.mxu0 0
  %211 = vmatpush1.bf16.msra.mxu0 0
  %212 = vmatprep.subr.bf16.mxu0 0
  %213 = vmatpush1.bf16.msra.mxu0 0
  %214 = vmatprep.subr.bf16.mxu0 0
  %215 = vmatpush1.bf16.msra.mxu0 0
  %216 = vmatprep.subr.bf16.mxu0 0
  %217 = vmatpush1.bf16.msra.mxu0 0
  %218 = vmatprep.subr.bf16.mxu0 0
  %219 = vmatpush1.bf16.msra.mxu0 0
  %220 = vmatprep.subr.bf16.mxu0 0
  %221 = vmatpush1.bf16.msra.mxu0 0
  %222 = vmatprep.subr.bf16.mxu0 0
  %223 = vmatpush1.bf16.msra.mxu0 0
  %224 = vmatprep.subr.bf16.mxu0 0
  %225 = vmatpush1.bf16.msra.mxu0 0
  %226 = vmatprep.mubr.bf16.mxu0 0
  %227 = vmatmul.mubr.bf16.gmra.mrb[0].mxu0 %v192
  %v228 = vpop.f32.mrb[0].mxu0
  %v229 = vadd.f32 %v163, %v228
  %v230 = vpop.f32.mrb[0].mxu0
  %v231 = vadd.f32 %v167, %v230
  %v232 = vpop.f32.mrb[0].mxu0
  %v233 = vpop.f32.mrb[0].mxu0
  %234 = vdwg.mxu0
  %v237 = vrot.slane %v151, 6
  %v238 = vrot.slane %v153, 6
  %239 = vrot.lane.b32.xlu0 %v237, 32
  %v240 = vpop.permute.xlu0 %239
  %241 = vrot.lane.b32.xlu0 %v238, 32
  %v242 = vpop.permute.xlu0 %241
  %v243 = vsel %vm190, %v240, %v242
  %vm245 = vcmask 1040384
  %v246 = vsel %vm245, %v151, %v243
  %249 = vrot.lane.b32.xlu0 %v229, 32
  %v250 = vpop.permute.xlu0 %249
  %251 = vrot.lane.b32.xlu0 %v231, 32
  %v252 = vpop.permute.xlu0 %251
  %v253 = vsel %vm190, %v250, %v252
  %v255 = vsel %vm245, %v229, %v253
  %v256 = vadd.f32 %v246, %v255
  %v257 = vxor.u32 %v256, 2147483648
  %v258 = vmul.f32 %v257, 1.442695
  %v259 = vpow.pop %v258
  %v260 = vadd.f32 %v259, 1.0
  %v261 = vrcp.pop %v260
  %v262 = vmul.f32 1.0, %v261
  %264 = vrot.lane.b32.xlu0 %v255, 64
  %v265 = vpop.permute.xlu0 %264
  %v267 = vmul.f32 %v262, %v265
  %269 = vrot.lane.b32.xlu0 %v267, 64
  %v270 = vpop.permute.xlu0 %269
  %v272 = vadd.f32 %v246, %v270
  %v273 = vtanh.pop %v272
  %v274 = vsub.f32 1.0, %v262
  %276 = vrot.lane.b32.xlu0 %v273, 96
  %v277 = vpop.permute.xlu0 %276
  %v279 = vmul.f32 %v274, %v277
  %281 = vrot.lane.b32.xlu0 %v157, 32
  %v282 = vpop.permute.xlu0 %281
  %v284 = vmul.f32 %v262, %v282
  %v285 = vadd.f32 %v279, %v284
  %v286 = vpack.c.bf16 %v285, %v285
  %288 = vrot.lane.b32.xlu0 %v286, 96
  %v289 = vpop.permute.xlu0 %288
  %v291 = vsel %vm190, %v289, 0
  %293 = vmatprep.subr.bf16.mxu0 %v183
  %294 = vmatpush1.bf16.msra.mxu0 %v182
  %295 = vmatprep.subr.bf16.mxu0 %v185
  %296 = vmatpush1.bf16.msra.mxu0 %v184
  %297 = vmatprep.subr.bf16.mxu0 0
  %298 = vmatpush1.bf16.msra.mxu0 0
  %299 = vmatprep.subr.bf16.mxu0 0
  %300 = vmatpush1.bf16.msra.mxu0 0
  %301 = vmatprep.subr.bf16.mxu0 0
  %302 = vmatpush1.bf16.msra.mxu0 0
  %303 = vmatprep.subr.bf16.mxu0 0
  %304 = vmatpush1.bf16.msra.mxu0 0
  %305 = vmatprep.subr.bf16.mxu0 0
  %306 = vmatpush1.bf16.msra.mxu0 0
  %307 = vmatprep.subr.bf16.mxu0 0
  %308 = vmatpush1.bf16.msra.mxu0 0
  %309 = vmatprep.subr.bf16.mxu0 0
  %310 = vmatpush1.bf16.msra.mxu0 0
  %311 = vmatprep.subr.bf16.mxu0 0
  %312 = vmatpush1.bf16.msra.mxu0 0
  %313 = vmatprep.subr.bf16.mxu0 0
  %314 = vmatpush1.bf16.msra.mxu0 0
  %315 = vmatprep.subr.bf16.mxu0 0
  %316 = vmatpush1.bf16.msra.mxu0 0
  %317 = vmatprep.subr.bf16.mxu0 0
  %318 = vmatpush1.bf16.msra.mxu0 0
  %319 = vmatprep.subr.bf16.mxu0 0
  %320 = vmatpush1.bf16.msra.mxu0 0
  %321 = vmatprep.subr.bf16.mxu0 0
  %322 = vmatpush1.bf16.msra.mxu0 0
  %323 = vmatprep.subr.bf16.mxu0 0
  %324 = vmatpush1.bf16.msra.mxu0 0
  %325 = vmatprep.mubr.bf16.mxu0 0
  %326 = vmatmul.mubr.bf16.gmra.mrb[0].mxu0 %v291
  %v327 = vpop.f32.mrb[0].mxu0
  %v328 = vadd.f32 %v163, %v327
  %v329 = vpop.f32.mrb[0].mxu0
  %v330 = vadd.f32 %v167, %v329
  %v331 = vpop.f32.mrb[0].mxu0
  %v332 = vpop.f32.mrb[0].mxu0
  %333 = vdwg.mxu0
  %v334 = vrot.slane %v151, 1
  %v336 = vrot.slane %v151, 5
  %v337 = vrot.slane %v153, 5
  %338 = vrot.lane.b32.xlu0 %v336, 32
  %v339 = vpop.permute.xlu0 %338
  %340 = vrot.lane.b32.xlu0 %v337, 32
  %v341 = vpop.permute.xlu0 %340
  %v342 = vsel %vm190, %v339, %v341
  %v344 = vsel %vm245, %v334, %v342
  %347 = vrot.lane.b32.xlu0 %v328, 32
  %v348 = vpop.permute.xlu0 %347
  %349 = vrot.lane.b32.xlu0 %v330, 32
  %v350 = vpop.permute.xlu0 %349
  %v351 = vsel %vm190, %v348, %v350
  %v353 = vsel %vm245, %v328, %v351
  %v354 = vadd.f32 %v344, %v353
  %v355 = vxor.u32 %v354, 2147483648
  %v356 = vmul.f32 %v355, 1.442695
  %v357 = vpow.pop %v356
  %v358 = vadd.f32 %v357, 1.0
  %v359 = vrcp.pop %v358
  %v360 = vmul.f32 1.0, %v359
  %362 = vrot.lane.b32.xlu0 %v353, 64
  %v363 = vpop.permute.xlu0 %362
  %v365 = vmul.f32 %v360, %v363
  %367 = vrot.lane.b32.xlu0 %v365, 64
  %v368 = vpop.permute.xlu0 %367
  %v370 = vadd.f32 %v344, %v368
  %v371 = vtanh.pop %v370
  %v372 = vsub.f32 1.0, %v360
  %374 = vrot.lane.b32.xlu0 %v371, 96
  %v375 = vpop.permute.xlu0 %374
  %v377 = vmul.f32 %v372, %v375
  %v378 = vmul.f32 %v360, %v285
  %v379 = vadd.f32 %v377, %v378
  %v380 = vpack.c.bf16 %v379, %v379
  %382 = vrot.lane.b32.xlu0 %v380, 96
  %v383 = vpop.permute.xlu0 %382
  %v385 = vsel %vm190, %v383, 0
  %387 = vmatprep.subr.bf16.mxu0 %v183
  %388 = vmatpush1.bf16.msra.mxu0 %v182
  %389 = vmatprep.subr.bf16.mxu0 %v185
  %390 = vmatpush1.bf16.msra.mxu0 %v184
  %391 = vmatprep.subr.bf16.mxu0 0
  %392 = vmatpush1.bf16.msra.mxu0 0
  %393 = vmatprep.subr.bf16.mxu0 0
  %394 = vmatpush1.bf16.msra.mxu0 0
  %395 = vmatprep.subr.bf16.mxu0 0
  %396 = vmatpush1.bf16.msra.mxu0 0
  %397 = vmatprep.subr.bf16.mxu0 0
  %398 = vmatpush1.bf16.msra.mxu0 0
  %399 = vmatprep.subr.bf16.mxu0 0
  %400 = vmatpush1.bf16.msra.mxu0 0
  %401 = vmatprep.subr.bf16.mxu0 0
  %402 = vmatpush1.bf16.msra.mxu0 0
  %403 = vmatprep.subr.bf16.mxu0 0
  %404 = vmatpush1.bf16.msra.mxu0 0
  %405 = vmatprep.subr.bf16.mxu0 0
  %406 = vmatpush1.bf16.msra.mxu0 0
  %407 = vmatprep.subr.bf16.mxu0 0
  %408 = vmatpush1.bf16.msra.mxu0 0
  %409 = vmatprep.subr.bf16.mxu0 0
  %410 = vmatpush1.bf16.msra.mxu0 0
  %411 = vmatprep.subr.bf16.mxu0 0
  %412 = vmatpush1.bf16.msra.mxu0 0
  %413 = vmatprep.subr.bf16.mxu0 0
  %414 = vmatpush1.bf16.msra.mxu0 0
  %415 = vmatprep.subr.bf16.mxu0 0
  %416 = vmatpush1.bf16.msra.mxu0 0
  %417 = vmatprep.subr.bf16.mxu0 0
  %418 = vmatpush1.bf16.msra.mxu0 0
  %419 = vmatprep.mubr.bf16.mxu0 0
  %420 = vmatmul.mubr.bf16.gmra.mrb[0].mxu0 %v385
  %v421 = vpop.f32.mrb[0].mxu0
  %v422 = vadd.f32 %v163, %v421
  %v423 = vpop.f32.mrb[0].mxu0
  %v424 = vadd.f32 %v167, %v423
  %v425 = vpop.f32.mrb[0].mxu0
  %v426 = vpop.f32.mrb[0].mxu0
  %427 = vdwg.mxu0
  %v428 = vrot.slane %v151, 2
  %v430 = vrot.slane %v151, 4
  %v431 = vrot.slane %v153, 4
  %432 = vrot.lane.b32.xlu0 %v430, 32
  %v433 = vpop.permute.xlu0 %432
  %434 = vrot.lane.b32.xlu0 %v431, 32
  %v435 = vpop.permute.xlu0 %434
  %v436 = vsel %vm190, %v433, %v435
  %v438 = vsel %vm245, %v428, %v436
  %441 = vrot.lane.b32.xlu0 %v422, 32
  %v442 = vpop.permute.xlu0 %441
  %443 = vrot.lane.b32.xlu0 %v424, 32
  %v444 = vpop.permute.xlu0 %443
  %v445 = vsel %vm190, %v442, %v444
  %v447 = vsel %vm245, %v422, %v445
  %v448 = vadd.f32 %v438, %v447
  %v449 = vxor.u32 %v448, 2147483648
  %v450 = vmul.f32 %v449, 1.442695
  %v451 = vpow.pop %v450
  %v452 = vadd.f32 %v451, 1.0
  %v453 = vrcp.pop %v452
  %v454 = vmul.f32 1.0, %v453
  %456 = vrot.lane.b32.xlu0 %v447, 64
  %v457 = vpop.permute.xlu0 %456
  %v459 = vmul.f32 %v454, %v457
  %461 = vrot.lane.b32.xlu0 %v459, 64
  %v462 = vpop.permute.xlu0 %461
  %v464 = vadd.f32 %v438, %v462
  %v465 = vtanh.pop %v464
  %v466 = vsub.f32 1.0, %v454
  %468 = vrot.lane.b32.xlu0 %v465, 96
  %v469 = vpop.permute.xlu0 %468
  %v471 = vmul.f32 %v466, %v469
  %v472 = vmul.f32 %v454, %v379
  %v473 = vadd.f32 %v471, %v472
  %v474 = vpack.c.bf16 %v473, %v473
  %476 = vrot.lane.b32.xlu0 %v474, 96
  %v477 = vpop.permute.xlu0 %476
  %v479 = vsel %vm190, %v477, 0
  %481 = vmatprep.subr.bf16.mxu0 %v183
  %482 = vmatpush1.bf16.msra.mxu0 %v182
  %483 = vmatprep.subr.bf16.mxu0 %v185
  %484 = vmatpush1.bf16.msra.mxu0 %v184
  %485 = vmatprep.subr.bf16.mxu0 0
  %486 = vmatpush1.bf16.msra.mxu0 0
  %487 = vmatprep.subr.bf16.mxu0 0
  %488 = vmatpush1.bf16.msra.mxu0 0
  %489 = vmatprep.subr.bf16.mxu0 0
  %490 = vmatpush1.bf16.msra.mxu0 0
  %491 = vmatprep.subr.bf16.mxu0 0
  %492 = vmatpush1.bf16.msra.mxu0 0
  %493 = vmatprep.subr.bf16.mxu0 0
  %494 = vmatpush1.bf16.msra.mxu0 0
  %495 = vmatprep.subr.bf16.mxu0 0
  %496 = vmatpush1.bf16.msra.mxu0 0
  %497 = vmatprep.subr.bf16.mxu0 0
  %498 = vmatpush1.bf16.msra.mxu0 0
  %499 = vmatprep.subr.bf16.mxu0 0
  %500 = vmatpush1.bf16.msra.mxu0 0
  %501 = vmatprep.subr.bf16.mxu0 0
  %502 = vmatpush1.bf16.msra.mxu0 0
  %503 = vmatprep.subr.bf16.mxu0 0
  %504 = vmatpush1.bf16.msra.mxu0 0
  %505 = vmatprep.subr.bf16.mxu0 0
  %506 = vmatpush1.bf16.msra.mxu0 0
  %507 = vmatprep.subr.bf16.mxu0 0
  %508 = vmatpush1.bf16.msra.mxu0 0
  %509 = vmatprep.subr.bf16.mxu0 0
  %510 = vmatpush1.bf16.msra.mxu0 0
  %511 = vmatprep.subr.bf16.mxu0 0
  %512 = vmatpush1.bf16.msra.mxu0 0
  %513 = vmatprep.mubr.bf16.mxu0 0
  %514 = vmatmul.mubr.bf16.gmra.mrb[0].mxu0 %v479
  %v515 = vpop.f32.mrb[0].mxu0
  %v516 = vadd.f32 %v163, %v515
  %v517 = vpop.f32.mrb[0].mxu0
  %v518 = vadd.f32 %v167, %v517
  %v519 = vpop.f32.mrb[0].mxu0
  %v520 = vpop.f32.mrb[0].mxu0
  %521 = vdwg.mxu0
  %v522 = vrot.slane %v151, 3
  %v524 = vrot.slane %v153, 3
  %525 = vrot.lane.b32.xlu0 %v522, 32
  %v526 = vpop.permute.xlu0 %525
  %527 = vrot.lane.b32.xlu0 %v524, 32
  %v528 = vpop.permute.xlu0 %527
  %v529 = vsel %vm190, %v526, %v528
  %v531 = vsel %vm245, %v522, %v529
  %534 = vrot.lane.b32.xlu0 %v516, 32
  %v535 = vpop.permute.xlu0 %534
  %536 = vrot.lane.b32.xlu0 %v518, 32
  %v537 = vpop.permute.xlu0 %536
  %v538 = vsel %vm190, %v535, %v537
  %v540 = vsel %vm245, %v516, %v538
  %v541 = vadd.f32 %v531, %v540
  %v542 = vxor.u32 %v541, 2147483648
  %v543 = vmul.f32 %v542, 1.442695
  %v544 = vpow.pop %v543
  %v545 = vadd.f32 %v544, 1.0
  %v546 = vrcp.pop %v545
  %v547 = vmul.f32 1.0, %v546
  %549 = vrot.lane.b32.xlu0 %v540, 64
  %v550 = vpop.permute.xlu0 %549
  %v552 = vmul.f32 %v547, %v550
  %554 = vrot.lane.b32.xlu0 %v552, 64
  %v555 = vpop.permute.xlu0 %554
  %v557 = vadd.f32 %v531, %v555
  %v558 = vtanh.pop %v557
  %v559 = vsub.f32 1.0, %v547
  %561 = vrot.lane.b32.xlu0 %v558, 96
  %v562 = vpop.permute.xlu0 %561
  %v564 = vmul.f32 %v559, %v562
  %v565 = vmul.f32 %v547, %v473
  %v566 = vadd.f32 %v564, %v565
  %v567 = vpack.c.bf16 %v566, %v566
  %569 = vrot.lane.b32.xlu0 %v567, 96
  %v570 = vpop.permute.xlu0 %569
  %v572 = vsel %vm190, %v570, 0
  %574 = vmatprep.subr.bf16.mxu0 %v183
  %575 = vmatpush1.bf16.msra.mxu0 %v182
  %576 = vmatprep.subr.bf16.mxu0 %v185
  %577 = vmatpush1.bf16.msra.mxu0 %v184
  %578 = vmatprep.subr.bf16.mxu0 0
  %579 = vmatpush1.bf16.msra.mxu0 0
  %580 = vmatprep.subr.bf16.mxu0 0
  %581 = vmatpush1.bf16.msra.mxu0 0
  %582 = vmatprep.subr.bf16.mxu0 0
  %583 = vmatpush1.bf16.msra.mxu0 0
  %584 = vmatprep.subr.bf16.mxu0 0
  %585 = vmatpush1.bf16.msra.mxu0 0
  %586 = vmatprep.subr.bf16.mxu0 0
  %587 = vmatpush1.bf16.msra.mxu0 0
  %588 = vmatprep.subr.bf16.mxu0 0
  %589 = vmatpush1.bf16.msra.mxu0 0
  %590 = vmatprep.subr.bf16.mxu0 0
  %591 = vmatpush1.bf16.msra.mxu0 0
  %592 = vmatprep.subr.bf16.mxu0 0
  %593 = vmatpush1.bf16.msra.mxu0 0
  %594 = vmatprep.subr.bf16.mxu0 0
  %595 = vmatpush1.bf16.msra.mxu0 0
  %596 = vmatprep.subr.bf16.mxu0 0
  %597 = vmatpush1.bf16.msra.mxu0 0
  %598 = vmatprep.subr.bf16.mxu0 0
  %599 = vmatpush1.bf16.msra.mxu0 0
  %600 = vmatprep.subr.bf16.mxu0 0
  %601 = vmatpush1.bf16.msra.mxu0 0
  %602 = vmatprep.subr.bf16.mxu0 0
  %603 = vmatpush1.bf16.msra.mxu0 0
  %604 = vmatprep.subr.bf16.mxu0 0
  %605 = vmatpush1.bf16.msra.mxu0 0
  %606 = vmatprep.mubr.bf16.mxu0 0
  %607 = vmatmul.mubr.bf16.gmra.mrb[0].mxu0 %v572
  %v608 = vpop.f32.mrb[0].mxu0
  %v609 = vadd.f32 %v163, %v608
  %v610 = vpop.f32.mrb[0].mxu0
  %v611 = vadd.f32 %v167, %v610
  %v612 = vpop.f32.mrb[0].mxu0
  %v613 = vpop.f32.mrb[0].mxu0
  %614 = vdwg.mxu0
  %v616 = vrot.slane %v153, 2
  %617 = vrot.lane.b32.xlu0 %v428, 32
  %v618 = vpop.permute.xlu0 %617
  %619 = vrot.lane.b32.xlu0 %v616, 32
  %v620 = vpop.permute.xlu0 %619
  %v621 = vsel %vm190, %v618, %v620
  %v623 = vsel %vm245, %v430, %v621
  %626 = vrot.lane.b32.xlu0 %v609, 32
  %v627 = vpop.permute.xlu0 %626
  %628 = vrot.lane.b32.xlu0 %v611, 32
  %v629 = vpop.permute.xlu0 %628
  %v630 = vsel %vm190, %v627, %v629
  %v632 = vsel %vm245, %v609, %v630
  %v633 = vadd.f32 %v623, %v632
  %v634 = vxor.u32 %v633, 2147483648
  %v635 = vmul.f32 %v634, 1.442695
  %v636 = vpow.pop %v635
  %v637 = vadd.f32 %v636, 1.0
  %v638 = vrcp.pop %v637
  %v639 = vmul.f32 1.0, %v638
  %641 = vrot.lane.b32.xlu0 %v632, 64
  %v642 = vpop.permute.xlu0 %641
  %v644 = vmul.f32 %v639, %v642
  %646 = vrot.lane.b32.xlu0 %v644, 64
  %v647 = vpop.permute.xlu0 %646
  %v649 = vadd.f32 %v623, %v647
  %v650 = vtanh.pop %v649
  %v651 = vsub.f32 1.0, %v639
  %653 = vrot.lane.b32.xlu0 %v650, 96
  %v654 = vpop.permute.xlu0 %653
  %v656 = vmul.f32 %v651, %v654
  %v657 = vmul.f32 %v639, %v566
  %v658 = vadd.f32 %v656, %v657
  %v659 = vpack.c.bf16 %v658, %v658
  %661 = vrot.lane.b32.xlu0 %v659, 96
  %v662 = vpop.permute.xlu0 %661
  %v664 = vsel %vm190, %v662, 0
  %666 = vmatprep.subr.bf16.mxu0 %v183
  %667 = vmatpush1.bf16.msra.mxu0 %v182
  %668 = vmatprep.subr.bf16.mxu0 %v185
  %669 = vmatpush1.bf16.msra.mxu0 %v184
  %670 = vmatprep.subr.bf16.mxu0 0
  %671 = vmatpush1.bf16.msra.mxu0 0
  %672 = vmatprep.subr.bf16.mxu0 0
  %673 = vmatpush1.bf16.msra.mxu0 0
  %674 = vmatprep.subr.bf16.mxu0 0
  %675 = vmatpush1.bf16.msra.mxu0 0
  %676 = vmatprep.subr.bf16.mxu0 0
  %677 = vmatpush1.bf16.msra.mxu0 0
  %678 = vmatprep.subr.bf16.mxu0 0
  %679 = vmatpush1.bf16.msra.mxu0 0
  %680 = vmatprep.subr.bf16.mxu0 0
  %681 = vmatpush1.bf16.msra.mxu0 0
  %682 = vmatprep.subr.bf16.mxu0 0
  %683 = vmatpush1.bf16.msra.mxu0 0
  %684 = vmatprep.subr.bf16.mxu0 0
  %685 = vmatpush1.bf16.msra.mxu0 0
  %686 = vmatprep.subr.bf16.mxu0 0
  %687 = vmatpush1.bf16.msra.mxu0 0
  %688 = vmatprep.subr.bf16.mxu0 0
  %689 = vmatpush1.bf16.msra.mxu0 0
  %690 = vmatprep.subr.bf16.mxu0 0
  %691 = vmatpush1.bf16.msra.mxu0 0
  %692 = vmatprep.subr.bf16.mxu0 0
  %693 = vmatpush1.bf16.msra.mxu0 0
  %694 = vmatprep.subr.bf16.mxu0 0
  %695 = vmatpush1.bf16.msra.mxu0 0
  %696 = vmatprep.subr.bf16.mxu0 0
  %697 = vmatpush1.bf16.msra.mxu0 0
  %698 = vmatprep.mubr.bf16.mxu0 0
  %699 = vmatmul.mubr.bf16.gmra.mrb[0].mxu0 %v664
  %v700 = vpop.f32.mrb[0].mxu0
  %v701 = vadd.f32 %v163, %v700
  %v702 = vpop.f32.mrb[0].mxu0
  %v703 = vadd.f32 %v167, %v702
  %v704 = vpop.f32.mrb[0].mxu0
  %v705 = vpop.f32.mrb[0].mxu0
  %706 = vdwg.mxu0
  %v708 = vrot.slane %v153, 1
  %709 = vrot.lane.b32.xlu0 %v334, 32
  %v710 = vpop.permute.xlu0 %709
  %711 = vrot.lane.b32.xlu0 %v708, 32
  %v712 = vpop.permute.xlu0 %711
  %v713 = vsel %vm190, %v710, %v712
  %v715 = vsel %vm245, %v336, %v713
  %718 = vrot.lane.b32.xlu0 %v701, 32
  %v719 = vpop.permute.xlu0 %718
  %720 = vrot.lane.b32.xlu0 %v703, 32
  %v721 = vpop.permute.xlu0 %720
  %v722 = vsel %vm190, %v719, %v721
  %v724 = vsel %vm245, %v701, %v722
  %v725 = vadd.f32 %v715, %v724
  %v726 = vxor.u32 %v725, 2147483648
  %v727 = vmul.f32 %v726, 1.442695
  %v728 = vpow.pop %v727
  %v729 = vadd.f32 %v728, 1.0
  %v730 = vrcp.pop %v729
  %v731 = vmul.f32 1.0, %v730
  %733 = vrot.lane.b32.xlu0 %v724, 64
  %v734 = vpop.permute.xlu0 %733
  %v736 = vmul.f32 %v731, %v734
  %738 = vrot.lane.b32.xlu0 %v736, 64
  %v739 = vpop.permute.xlu0 %738
  %v741 = vadd.f32 %v715, %v739
  %v742 = vtanh.pop %v741
  %v743 = vsub.f32 1.0, %v731
  %745 = vrot.lane.b32.xlu0 %v742, 96
  %v746 = vpop.permute.xlu0 %745
  %v748 = vmul.f32 %v743, %v746
  %v749 = vmul.f32 %v731, %v658
  %v750 = vadd.f32 %v748, %v749
  %v751 = vpack.c.bf16 %v750, %v750
  %753 = vrot.lane.b32.xlu0 %v751, 96
  %v754 = vpop.permute.xlu0 %753
  %v756 = vsel %vm190, %v754, 0
  %758 = vmatprep.subr.bf16.mxu0 %v183
  %759 = vmatpush1.bf16.msra.mxu0 %v182
  %760 = vmatprep.subr.bf16.mxu0 %v185
  %761 = vmatpush1.bf16.msra.mxu0 %v184
  %762 = vmatprep.subr.bf16.mxu0 0
  %763 = vmatpush1.bf16.msra.mxu0 0
  %764 = vmatprep.subr.bf16.mxu0 0
  %765 = vmatpush1.bf16.msra.mxu0 0
  %766 = vmatprep.subr.bf16.mxu0 0
  %767 = vmatpush1.bf16.msra.mxu0 0
  %768 = vmatprep.subr.bf16.mxu0 0
  %769 = vmatpush1.bf16.msra.mxu0 0
  %770 = vmatprep.subr.bf16.mxu0 0
  %771 = vmatpush1.bf16.msra.mxu0 0
  %772 = vmatprep.subr.bf16.mxu0 0
  %773 = vmatpush1.bf16.msra.mxu0 0
  %774 = vmatprep.subr.bf16.mxu0 0
  %775 = vmatpush1.bf16.msra.mxu0 0
  %776 = vmatprep.subr.bf16.mxu0 0
  %777 = vmatpush1.bf16.msra.mxu0 0
  %778 = vmatprep.subr.bf16.mxu0 0
  %779 = vmatpush1.bf16.msra.mxu0 0
  %780 = vmatprep.subr.bf16.mxu0 0
  %781 = vmatpush1.bf16.msra.mxu0 0
  %782 = vmatprep.subr.bf16.mxu0 0
  %783 = vmatpush1.bf16.msra.mxu0 0
  %784 = vmatprep.subr.bf16.mxu0 0
  %785 = vmatpush1.bf16.msra.mxu0 0
  %786 = vmatprep.subr.bf16.mxu0 0
  %787 = vmatpush1.bf16.msra.mxu0 0
  %788 = vmatprep.subr.bf16.mxu0 0
  %789 = vmatpush1.bf16.msra.mxu0 0
  %790 = vmatprep.mubr.bf16.mxu0 0
  %791 = vmatmul.mubr.bf16.gmra.mrb[0].mxu0 %v756
  %v792 = vpop.f32.mrb[0].mxu0
  %v793 = vadd.f32 %v163, %v792
  %v794 = vpop.f32.mrb[0].mxu0
  %v795 = vadd.f32 %v167, %v794
  %v796 = vpop.f32.mrb[0].mxu0
  %v797 = vpop.f32.mrb[0].mxu0
  %798 = vdwg.mxu0
  %800 = vrot.lane.b32.xlu0 %v151, 32
  %v801 = vpop.permute.xlu0 %800
  %802 = vrot.lane.b32.xlu0 %v153, 32
  %v803 = vpop.permute.xlu0 %802
  %v804 = vsel %vm190, %v801, %v803
  %v806 = vsel %vm245, %v237, %v804
  %809 = vrot.lane.b32.xlu0 %v793, 32
  %v810 = vpop.permute.xlu0 %809
  %811 = vrot.lane.b32.xlu0 %v795, 32
  %v812 = vpop.permute.xlu0 %811
  %v813 = vsel %vm190, %v810, %v812
  %v815 = vsel %vm245, %v793, %v813
  %v816 = vadd.f32 %v806, %v815
  %v817 = vxor.u32 %v816, 2147483648
  %v818 = vmul.f32 %v817, 1.442695
  %v819 = vpow.pop %v818
  %v820 = vadd.f32 %v819, 1.0
  %v821 = vrcp.pop %v820
  %v822 = vmul.f32 1.0, %v821
  %824 = vrot.lane.b32.xlu0 %v815, 64
  %v825 = vpop.permute.xlu0 %824
  %v827 = vmul.f32 %v822, %v825
  %829 = vrot.lane.b32.xlu0 %v827, 64
  %v830 = vpop.permute.xlu0 %829
  %v832 = vadd.f32 %v806, %v830
  %v833 = vtanh.pop %v832
  %v834 = vsub.f32 1.0, %v822
  %836 = vrot.lane.b32.xlu0 %v833, 96
  %v837 = vpop.permute.xlu0 %836
  %v839 = vmul.f32 %v834, %v837
  %v840 = vmul.f32 %v822, %v750
  %v841 = vadd.f32 %v839, %v840
  %v842 = vpack.c.bf16 %v841, %v841
  %844 = vrot.lane.b32.xlu0 %v842, 96
  %v845 = vpop.permute.xlu0 %844
  %v847 = vsel %vm190, %v845, 0
  %849 = vmatprep.subr.bf16.mxu0 %v183
  %850 = vmatpush1.bf16.msra.mxu0 %v182
  %851 = vmatprep.subr.bf16.mxu0 %v185
  %852 = vmatpush1.bf16.msra.mxu0 %v184
  %853 = vmatprep.subr.bf16.mxu0 0
  %854 = vmatpush1.bf16.msra.mxu0 0
  %855 = vmatprep.subr.bf16.mxu0 0
  %856 = vmatpush1.bf16.msra.mxu0 0
  %857 = vmatprep.subr.bf16.mxu0 0
  %858 = vmatpush1.bf16.msra.mxu0 0
  %859 = vmatprep.subr.bf16.mxu0 0
  %860 = vmatpush1.bf16.msra.mxu0 0
  %861 = vmatprep.subr.bf16.mxu0 0
  %862 = vmatpush1.bf16.msra.mxu0 0
  %863 = vmatprep.subr.bf16.mxu0 0
  %864 = vmatpush1.bf16.msra.mxu0 0
  %865 = vmatprep.subr.bf16.mxu0 0
  %866 = vmatpush1.bf16.msra.mxu0 0
  %867 = vmatprep.subr.bf16.mxu0 0
  %868 = vmatpush1.bf16.msra.mxu0 0
  %869 = vmatprep.subr.bf16.mxu0 0
  %870 = vmatpush1.bf16.msra.mxu0 0
  %871 = vmatprep.subr.bf16.mxu0 0
  %872 = vmatpush1.bf16.msra.mxu0 0
  %873 = vmatprep.subr.bf16.mxu0 0
  %874 = vmatpush1.bf16.msra.mxu0 0
  %875 = vmatprep.subr.bf16.mxu0 0
  %876 = vmatpush1.bf16.msra.mxu0 0
  %877 = vmatprep.subr.bf16.mxu0 0
  %878 = vmatpush1.bf16.msra.mxu0 0
  %879 = vmatprep.subr.bf16.mxu0 0
  %880 = vmatpush1.bf16.msra.mxu0 0
  %881 = vmatprep.mubr.bf16.mxu0 0
  %882 = vmatmul.mubr.bf16.gmra.mrb[0].mxu0 %v847
  %v883 = vpop.f32.mrb[0].mxu0
  %v884 = vadd.f32 %v163, %v883
  %v885 = vpop.f32.mrb[0].mxu0
  %v886 = vadd.f32 %v167, %v885
  %v887 = vpop.f32.mrb[0].mxu0
  %v888 = vpop.f32.mrb[0].mxu0
  %889 = vdwg.mxu0
  %v890 = vrot.slane %v151, 7
  %v892 = vrot.slane %v153, 7
  %893 = vrot.lane.b32.xlu0 %v890, 32
  %v894 = vpop.permute.xlu0 %893
  %895 = vrot.lane.b32.xlu0 %v892, 32
  %v896 = vpop.permute.xlu0 %895
  %v897 = vsel %vm190, %v894, %v896
  %v899 = vsel %vm245, %v890, %v897
  %902 = vrot.lane.b32.xlu0 %v884, 32
  %v903 = vpop.permute.xlu0 %902
  %904 = vrot.lane.b32.xlu0 %v886, 32
  %v905 = vpop.permute.xlu0 %904
  %v906 = vsel %vm190, %v903, %v905
  %v908 = vsel %vm245, %v884, %v906
  %v909 = vadd.f32 %v899, %v908
  %v910 = vxor.u32 %v909, 2147483648
  %v911 = vmul.f32 %v910, 1.442695
  %v912 = vpow.pop %v911
  %v913 = vadd.f32 %v912, 1.0
  %v914 = vrcp.pop %v913
  %v915 = vmul.f32 1.0, %v914
  %917 = vrot.lane.b32.xlu0 %v908, 64
  %v918 = vpop.permute.xlu0 %917
  %v920 = vmul.f32 %v915, %v918
  %922 = vrot.lane.b32.xlu0 %v920, 64
  %v923 = vpop.permute.xlu0 %922
  %v925 = vadd.f32 %v899, %v923
  %v926 = vtanh.pop %v925
  %v927 = vsub.f32 1.0, %v915
  %929 = vrot.lane.b32.xlu0 %v926, 96
  %v930 = vpop.permute.xlu0 %929
  %v932 = vmul.f32 %v927, %v930
  %v933 = vmul.f32 %v915, %v841
  %v934 = vadd.f32 %v932, %v933
  %v936 = vrot.slane %v379, 7
  %v939 = vrot.slane %v473, 6
  %v942 = vrot.slane %v566, 5
  %v945 = vrot.slane %v658, 4
  %v948 = vrot.slane %v750, 3
  %v951 = vrot.slane %v841, 2
  %v954 = vrot.slane %v934, 1
  %v956 = vsel %vm245, %v285, %v936
  %vm957 = vcmask 1041408
  %v958 = vsel %vm957, %v956, %v939
  %vm959 = vcmask 1042432
  %v960 = vsel %vm959, %v958, %v942
  %vm961 = vcmask 1043456
  %v962 = vsel %vm961, %v960, %v945
  %vm963 = vcmask 1044480
  %v964 = vsel %vm963, %v962, %v948
  %vm965 = vcmask 1045504
  %v966 = vsel %vm965, %v964, %v951
  %vm967 = vcmask 1046528
  %v968 = vsel %vm967, %v966, %v954
  %v969 = vrot.slane %v750, 7
  %v971 = vrot.slane %v658, 6
  %v973 = vrot.slane %v473, 4
  %v975 = vrot.slane %v379, 3
  %v978 = vrot.slane %v285, 2
  %v980 = vsel %vm245, %v954, %v841
  %v981 = vsel %vm957, %v980, %v969
  %v982 = vsel %vm959, %v981, %v971
  %v983 = vsel %vm961, %v982, %v942
  %v984 = vsel %vm963, %v983, %v973
  %v985 = vsel %vm965, %v984, %v975
  %v986 = vsel %vm967, %v985, %v978
  %988 = vrot.lane.b32.xlu0 %v968, 96
  %v989 = vpop.permute.xlu0 %988
  %v991 = vsel %vm190, %v989, %v986
  %v992 = vpack.c.bf16 %v991, %v991
  %v994 = vlaneseq
  %v995 = vshrl.u32 %v994, 7
  %v996 = vsub.s32 0, %v995
  %v997 = vrot.slane %v48, %v996
  %v998 = vlaneseq
  %v999 = vshrl.u32 %v998, 7
  %v1000 = vsub.s32 1, %v999
  %v1001 = vrot.slane %v48, %v1000
  %v1012 = vunpack.c.l.b16 %v32
  %v1013 = vunpack.c.h.b16 %v32
  %v1014 = vunpack.c.l.b16 %v33
  %v1015 = vunpack.c.h.b16 %v33
  %v1016 = vunpack.c.l.b16 %v34
  %v1017 = vunpack.c.h.b16 %v34
  %v1018 = vunpack.c.l.b16 %v35
  %v1019 = vunpack.c.h.b16 %v35
  %v1020 = vunpack.c.l.b16 %v36
  %v1021 = vunpack.c.h.b16 %v36
  %v1022 = vunpack.c.l.b16 %v37
  %v1023 = vunpack.c.h.b16 %v37
  %v1024 = vunpack.c.l.b16 %v38
  %v1025 = vunpack.c.h.b16 %v38
  %v1026 = vunpack.c.l.b16 %v39
  %v1027 = vunpack.c.h.b16 %v39
  %v1028 = vpack.c.b16 %v1014, %v1012
  %v1029 = vpack.c.b16 %v1015, %v1013
  %v1030 = vpack.c.b16 %v1018, %v1016
  %v1031 = vpack.c.b16 %v1019, %v1017
  %v1032 = vpack.c.b16 %v1022, %v1020
  %v1033 = vpack.c.b16 %v1023, %v1021
  %v1034 = vpack.c.b16 %v1026, %v1024
  %v1035 = vpack.c.b16 %v1027, %v1025
  %v1045 = vsel %vm112, %v992, 0
  %1047 = vmatprep.subr.bf16.mxu0 %v1029
  %1048 = vmatpush1.bf16.msra.mxu0 %v1028
  %1049 = vmatprep.subr.bf16.mxu0 %v1031
  %1050 = vmatpush1.bf16.msra.mxu0 %v1030
  %1051 = vmatprep.subr.bf16.mxu0 %v1033
  %1052 = vmatpush1.bf16.msra.mxu0 %v1032
  %1053 = vmatprep.subr.bf16.mxu0 %v1035
  %1054 = vmatpush1.bf16.msra.mxu0 %v1034
  %1055 = vmatprep.subr.bf16.mxu0 0
  %1056 = vmatpush1.bf16.msra.mxu0 0
  %1057 = vmatprep.subr.bf16.mxu0 0
  %1058 = vmatpush1.bf16.msra.mxu0 0
  %1059 = vmatprep.subr.bf16.mxu0 0
  %1060 = vmatpush1.bf16.msra.mxu0 0
  %1061 = vmatprep.subr.bf16.mxu0 0
  %1062 = vmatpush1.bf16.msra.mxu0 0
  %1063 = vmatprep.subr.bf16.mxu0 0
  %1064 = vmatpush1.bf16.msra.mxu0 0
  %1065 = vmatprep.subr.bf16.mxu0 0
  %1066 = vmatpush1.bf16.msra.mxu0 0
  %1067 = vmatprep.subr.bf16.mxu0 0
  %1068 = vmatpush1.bf16.msra.mxu0 0
  %1069 = vmatprep.subr.bf16.mxu0 0
  %1070 = vmatpush1.bf16.msra.mxu0 0
  %1071 = vmatprep.subr.bf16.mxu0 0
  %1072 = vmatpush1.bf16.msra.mxu0 0
  %1073 = vmatprep.subr.bf16.mxu0 0
  %1074 = vmatpush1.bf16.msra.mxu0 0
  %1075 = vmatprep.subr.bf16.mxu0 0
  %1076 = vmatpush1.bf16.msra.mxu0 0
  %1077 = vmatprep.subr.bf16.mxu0 0
  %1078 = vmatpush1.bf16.msra.mxu0 0
  %1079 = vmatprep.mubr.bf16.mxu0 0
  %1080 = vmatmul.mubr.bf16.gmra.mrb[0].mxu0 %v1045
  %v1081 = vpop.f32.mrb[0].mxu0
  %v1082 = vadd.f32 %v997, %v1081
  %v1083 = vpop.f32.mrb[0].mxu0
  %v1084 = vadd.f32 %v1001, %v1083
  %v1085 = vpop.f32.mrb[0].mxu0
  %v1086 = vpop.f32.mrb[0].mxu0
  %1087 = vdwg.mxu0
  %v1089 = vlaneseq
  %v1090 = vshrl.u32 %v1089, 7
  %v1091 = vsub.s32 0, %v1090
  %v1092 = vrot.slane %v50, %v1091
  %v1093 = vlaneseq
  %v1094 = vshrl.u32 %v1093, 7
  %v1095 = vsub.s32 1, %v1094
  %v1096 = vrot.slane %v50, %v1095
  %v1100 = vrot.slane %v158, 1
  %v1105 = vunpack.c.l.b16 %v40
  %v1106 = vunpack.c.h.b16 %v40
  %v1107 = vunpack.c.l.b16 %v41
  %v1108 = vunpack.c.h.b16 %v41
  %v1109 = vunpack.c.l.b16 %v42
  %v1110 = vunpack.c.h.b16 %v42
  %v1111 = vunpack.c.l.b16 %v43
  %v1112 = vunpack.c.h.b16 %v43
  %v1113 = vpack.c.b16 %v1107, %v1105
  %v1114 = vpack.c.b16 %v1108, %v1106
  %v1115 = vpack.c.b16 %v1111, %v1109
  %v1116 = vpack.c.b16 %v1112, %v1110
  %v1122 = vsel %vm190, %v1100, 0
  %1124 = vmatprep.subr.bf16.mxu0 %v1114
  %1125 = vmatpush1.bf16.msra.mxu0 %v1113
  %1126 = vmatprep.subr.bf16.mxu0 %v1116
  %1127 = vmatpush1.bf16.msra.mxu0 %v1115
  %1128 = vmatprep.subr.bf16.mxu0 0
  %1129 = vmatpush1.bf16.msra.mxu0 0
  %1130 = vmatprep.subr.bf16.mxu0 0
  %1131 = vmatpush1.bf16.msra.mxu0 0
  %1132 = vmatprep.subr.bf16.mxu0 0
  %1133 = vmatpush1.bf16.msra.mxu0 0
  %1134 = vmatprep.subr.bf16.mxu0 0
  %1135 = vmatpush1.bf16.msra.mxu0 0
  %1136 = vmatprep.subr.bf16.mxu0 0
  %1137 = vmatpush1.bf16.msra.mxu0 0
  %1138 = vmatprep.subr.bf16.mxu0 0
  %1139 = vmatpush1.bf16.msra.mxu0 0
  %1140 = vmatprep.subr.bf16.mxu0 0
  %1141 = vmatpush1.bf16.msra.mxu0 0
  %1142 = vmatprep.subr.bf16.mxu0 0
  %1143 = vmatpush1.bf16.msra.mxu0 0
  %1144 = vmatprep.subr.bf16.mxu0 0
  %1145 = vmatpush1.bf16.msra.mxu0 0
  %1146 = vmatprep.subr.bf16.mxu0 0
  %1147 = vmatpush1.bf16.msra.mxu0 0
  %1148 = vmatprep.subr.bf16.mxu0 0
  %1149 = vmatpush1.bf16.msra.mxu0 0
  %1150 = vmatprep.subr.bf16.mxu0 0
  %1151 = vmatpush1.bf16.msra.mxu0 0
  %1152 = vmatprep.subr.bf16.mxu0 0
  %1153 = vmatpush1.bf16.msra.mxu0 0
  %1154 = vmatprep.subr.bf16.mxu0 0
  %1155 = vmatpush1.bf16.msra.mxu0 0
  %1156 = vmatprep.mubr.bf16.mxu0 0
  %1157 = vmatmul.mubr.bf16.gmra.mrb[0].mxu0 %v1122
  %v1158 = vpop.f32.mrb[0].mxu0
  %v1159 = vadd.f32 %v1092, %v1158
  %v1160 = vpop.f32.mrb[0].mxu0
  %v1161 = vadd.f32 %v1096, %v1160
  %v1162 = vpop.f32.mrb[0].mxu0
  %v1163 = vpop.f32.mrb[0].mxu0
  %1164 = vdwg.mxu0
  %v1167 = vrot.slane %v1082, 6
  %v1168 = vrot.slane %v1084, 6
  %1169 = vrot.lane.b32.xlu0 %v1167, 32
  %v1170 = vpop.permute.xlu0 %1169
  %1171 = vrot.lane.b32.xlu0 %v1168, 32
  %v1172 = vpop.permute.xlu0 %1171
  %v1173 = vsel %vm190, %v1170, %v1172
  %v1175 = vsel %vm245, %v1082, %v1173
  %1178 = vrot.lane.b32.xlu0 %v1159, 32
  %v1179 = vpop.permute.xlu0 %1178
  %1180 = vrot.lane.b32.xlu0 %v1161, 32
  %v1181 = vpop.permute.xlu0 %1180
  %v1182 = vsel %vm190, %v1179, %v1181
  %v1184 = vsel %vm245, %v1159, %v1182
  %v1185 = vadd.f32 %v1175, %v1184
  %v1186 = vxor.u32 %v1185, 2147483648
  %v1187 = vmul.f32 %v1186, 1.442695
  %v1188 = vpow.pop %v1187
  %v1189 = vadd.f32 %v1188, 1.0
  %v1190 = vrcp.pop %v1189
  %v1191 = vmul.f32 1.0, %v1190
  %1193 = vrot.lane.b32.xlu0 %v1184, 64
  %v1194 = vpop.permute.xlu0 %1193
  %v1196 = vmul.f32 %v1191, %v1194
  %1198 = vrot.lane.b32.xlu0 %v1196, 64
  %v1199 = vpop.permute.xlu0 %1198
  %v1201 = vadd.f32 %v1175, %v1199
  %v1202 = vtanh.pop %v1201
  %v1203 = vsub.f32 1.0, %v1191
  %1205 = vrot.lane.b32.xlu0 %v1202, 96
  %v1206 = vpop.permute.xlu0 %1205
  %v1208 = vmul.f32 %v1203, %v1206
  %v1209 = vrot.slane %v157, 2
  %1210 = vrot.lane.b32.xlu0 %v1209, 32
  %v1211 = vpop.permute.xlu0 %1210
  %v1213 = vmul.f32 %v1191, %v1211
  %v1214 = vadd.f32 %v1208, %v1213
  %v1215 = vpack.c.bf16 %v1214, %v1214
  %1217 = vrot.lane.b32.xlu0 %v1215, 96
  %v1218 = vpop.permute.xlu0 %1217
  %v1220 = vsel %vm190, %v1218, 0
  %1222 = vmatprep.subr.bf16.mxu0 %v1114
  %1223 = vmatpush1.bf16.msra.mxu0 %v1113
  %1224 = vmatprep.subr.bf16.mxu0 %v1116
  %1225 = vmatpush1.bf16.msra.mxu0 %v1115
  %1226 = vmatprep.subr.bf16.mxu0 0
  %1227 = vmatpush1.bf16.msra.mxu0 0
  %1228 = vmatprep.subr.bf16.mxu0 0
  %1229 = vmatpush1.bf16.msra.mxu0 0
  %1230 = vmatprep.subr.bf16.mxu0 0
  %1231 = vmatpush1.bf16.msra.mxu0 0
  %1232 = vmatprep.subr.bf16.mxu0 0
  %1233 = vmatpush1.bf16.msra.mxu0 0
  %1234 = vmatprep.subr.bf16.mxu0 0
  %1235 = vmatpush1.bf16.msra.mxu0 0
  %1236 = vmatprep.subr.bf16.mxu0 0
  %1237 = vmatpush1.bf16.msra.mxu0 0
  %1238 = vmatprep.subr.bf16.mxu0 0
  %1239 = vmatpush1.bf16.msra.mxu0 0
  %1240 = vmatprep.subr.bf16.mxu0 0
  %1241 = vmatpush1.bf16.msra.mxu0 0
  %1242 = vmatprep.subr.bf16.mxu0 0
  %1243 = vmatpush1.bf16.msra.mxu0 0
  %1244 = vmatprep.subr.bf16.mxu0 0
  %1245 = vmatpush1.bf16.msra.mxu0 0
  %1246 = vmatprep.subr.bf16.mxu0 0
  %1247 = vmatpush1.bf16.msra.mxu0 0
  %1248 = vmatprep.subr.bf16.mxu0 0
  %1249 = vmatpush1.bf16.msra.mxu0 0
  %1250 = vmatprep.subr.bf16.mxu0 0
  %1251 = vmatpush1.bf16.msra.mxu0 0
  %1252 = vmatprep.subr.bf16.mxu0 0
  %1253 = vmatpush1.bf16.msra.mxu0 0
  %1254 = vmatprep.mubr.bf16.mxu0 0
  %1255 = vmatmul.mubr.bf16.gmra.mrb[0].mxu0 %v1220
  %v1256 = vpop.f32.mrb[0].mxu0
  %v1257 = vadd.f32 %v1092, %v1256
  %v1258 = vpop.f32.mrb[0].mxu0
  %v1259 = vadd.f32 %v1096, %v1258
  %v1260 = vpop.f32.mrb[0].mxu0
  %v1261 = vpop.f32.mrb[0].mxu0
  %1262 = vdwg.mxu0
  %v1263 = vrot.slane %v1082, 1
  %v1265 = vrot.slane %v1082, 5
  %v1266 = vrot.slane %v1084, 5
  %1267 = vrot.lane.b32.xlu0 %v1265, 32
  %v1268 = vpop.permute.xlu0 %1267
  %1269 = vrot.lane.b32.xlu0 %v1266, 32
  %v1270 = vpop.permute.xlu0 %1269
  %v1271 = vsel %vm190, %v1268, %v1270
  %v1273 = vsel %vm245, %v1263, %v1271
  %1276 = vrot.lane.b32.xlu0 %v1257, 32
  %v1277 = vpop.permute.xlu0 %1276
  %1278 = vrot.lane.b32.xlu0 %v1259, 32
  %v1279 = vpop.permute.xlu0 %1278
  %v1280 = vsel %vm190, %v1277, %v1279
  %v1282 = vsel %vm245, %v1257, %v1280
  %v1283 = vadd.f32 %v1273, %v1282
  %v1284 = vxor.u32 %v1283, 2147483648
  %v1285 = vmul.f32 %v1284, 1.442695
  %v1286 = vpow.pop %v1285
  %v1287 = vadd.f32 %v1286, 1.0
  %v1288 = vrcp.pop %v1287
  %v1289 = vmul.f32 1.0, %v1288
  %1291 = vrot.lane.b32.xlu0 %v1282, 64
  %v1292 = vpop.permute.xlu0 %1291
  %v1294 = vmul.f32 %v1289, %v1292
  %1296 = vrot.lane.b32.xlu0 %v1294, 64
  %v1297 = vpop.permute.xlu0 %1296
  %v1299 = vadd.f32 %v1273, %v1297
  %v1300 = vtanh.pop %v1299
  %v1301 = vsub.f32 1.0, %v1289
  %1303 = vrot.lane.b32.xlu0 %v1300, 96
  %v1304 = vpop.permute.xlu0 %1303
  %v1306 = vmul.f32 %v1301, %v1304
  %v1307 = vmul.f32 %v1289, %v1214
  %v1308 = vadd.f32 %v1306, %v1307
  %v1309 = vpack.c.bf16 %v1308, %v1308
  %1311 = vrot.lane.b32.xlu0 %v1309, 96
  %v1312 = vpop.permute.xlu0 %1311
  %v1314 = vsel %vm190, %v1312, 0
  %1316 = vmatprep.subr.bf16.mxu0 %v1114
  %1317 = vmatpush1.bf16.msra.mxu0 %v1113
  %1318 = vmatprep.subr.bf16.mxu0 %v1116
  %1319 = vmatpush1.bf16.msra.mxu0 %v1115
  %1320 = vmatprep.subr.bf16.mxu0 0
  %1321 = vmatpush1.bf16.msra.mxu0 0
  %1322 = vmatprep.subr.bf16.mxu0 0
  %1323 = vmatpush1.bf16.msra.mxu0 0
  %1324 = vmatprep.subr.bf16.mxu0 0
  %1325 = vmatpush1.bf16.msra.mxu0 0
  %1326 = vmatprep.subr.bf16.mxu0 0
  %1327 = vmatpush1.bf16.msra.mxu0 0
  %1328 = vmatprep.subr.bf16.mxu0 0
  %1329 = vmatpush1.bf16.msra.mxu0 0
  %1330 = vmatprep.subr.bf16.mxu0 0
  %1331 = vmatpush1.bf16.msra.mxu0 0
  %1332 = vmatprep.subr.bf16.mxu0 0
  %1333 = vmatpush1.bf16.msra.mxu0 0
  %1334 = vmatprep.subr.bf16.mxu0 0
  %1335 = vmatpush1.bf16.msra.mxu0 0
  %1336 = vmatprep.subr.bf16.mxu0 0
  %1337 = vmatpush1.bf16.msra.mxu0 0
  %1338 = vmatprep.subr.bf16.mxu0 0
  %1339 = vmatpush1.bf16.msra.mxu0 0
  %1340 = vmatprep.subr.bf16.mxu0 0
  %1341 = vmatpush1.bf16.msra.mxu0 0
  %1342 = vmatprep.subr.bf16.mxu0 0
  %1343 = vmatpush1.bf16.msra.mxu0 0
  %1344 = vmatprep.subr.bf16.mxu0 0
  %1345 = vmatpush1.bf16.msra.mxu0 0
  %1346 = vmatprep.subr.bf16.mxu0 0
  %1347 = vmatpush1.bf16.msra.mxu0 0
  %1348 = vmatprep.mubr.bf16.mxu0 0
  %1349 = vmatmul.mubr.bf16.gmra.mrb[0].mxu0 %v1314
  %v1350 = vpop.f32.mrb[0].mxu0
  %v1351 = vadd.f32 %v1092, %v1350
  %v1352 = vpop.f32.mrb[0].mxu0
  %v1353 = vadd.f32 %v1096, %v1352
  %v1354 = vpop.f32.mrb[0].mxu0
  %v1355 = vpop.f32.mrb[0].mxu0
  %1356 = vdwg.mxu0
  %v1357 = vrot.slane %v1082, 2
  %v1359 = vrot.slane %v1082, 4
  %v1360 = vrot.slane %v1084, 4
  %1361 = vrot.lane.b32.xlu0 %v1359, 32
  %v1362 = vpop.permute.xlu0 %1361
  %1363 = vrot.lane.b32.xlu0 %v1360, 32
  %v1364 = vpop.permute.xlu0 %1363
  %v1365 = vsel %vm190, %v1362, %v1364
  %v1367 = vsel %vm245, %v1357, %v1365
  %1370 = vrot.lane.b32.xlu0 %v1351, 32
  %v1371 = vpop.permute.xlu0 %1370
  %1372 = vrot.lane.b32.xlu0 %v1353, 32
  %v1373 = vpop.permute.xlu0 %1372
  %v1374 = vsel %vm190, %v1371, %v1373
  %v1376 = vsel %vm245, %v1351, %v1374
  %v1377 = vadd.f32 %v1367, %v1376
  %v1378 = vxor.u32 %v1377, 2147483648
  %v1379 = vmul.f32 %v1378, 1.442695
  %v1380 = vpow.pop %v1379
  %v1381 = vadd.f32 %v1380, 1.0
  %v1382 = vrcp.pop %v1381
  %v1383 = vmul.f32 1.0, %v1382
  %1385 = vrot.lane.b32.xlu0 %v1376, 64
  %v1386 = vpop.permute.xlu0 %1385
  %v1388 = vmul.f32 %v1383, %v1386
  %1390 = vrot.lane.b32.xlu0 %v1388, 64
  %v1391 = vpop.permute.xlu0 %1390
  %v1393 = vadd.f32 %v1367, %v1391
  %v1394 = vtanh.pop %v1393
  %v1395 = vsub.f32 1.0, %v1383
  %1397 = vrot.lane.b32.xlu0 %v1394, 96
  %v1398 = vpop.permute.xlu0 %1397
  %v1400 = vmul.f32 %v1395, %v1398
  %v1401 = vmul.f32 %v1383, %v1308
  %v1402 = vadd.f32 %v1400, %v1401
  %v1403 = vpack.c.bf16 %v1402, %v1402
  %1405 = vrot.lane.b32.xlu0 %v1403, 96
  %v1406 = vpop.permute.xlu0 %1405
  %v1408 = vsel %vm190, %v1406, 0
  %1410 = vmatprep.subr.bf16.mxu0 %v1114
  %1411 = vmatpush1.bf16.msra.mxu0 %v1113
  %1412 = vmatprep.subr.bf16.mxu0 %v1116
  %1413 = vmatpush1.bf16.msra.mxu0 %v1115
  %1414 = vmatprep.subr.bf16.mxu0 0
  %1415 = vmatpush1.bf16.msra.mxu0 0
  %1416 = vmatprep.subr.bf16.mxu0 0
  %1417 = vmatpush1.bf16.msra.mxu0 0
  %1418 = vmatprep.subr.bf16.mxu0 0
  %1419 = vmatpush1.bf16.msra.mxu0 0
  %1420 = vmatprep.subr.bf16.mxu0 0
  %1421 = vmatpush1.bf16.msra.mxu0 0
  %1422 = vmatprep.subr.bf16.mxu0 0
  %1423 = vmatpush1.bf16.msra.mxu0 0
  %1424 = vmatprep.subr.bf16.mxu0 0
  %1425 = vmatpush1.bf16.msra.mxu0 0
  %1426 = vmatprep.subr.bf16.mxu0 0
  %1427 = vmatpush1.bf16.msra.mxu0 0
  %1428 = vmatprep.subr.bf16.mxu0 0
  %1429 = vmatpush1.bf16.msra.mxu0 0
  %1430 = vmatprep.subr.bf16.mxu0 0
  %1431 = vmatpush1.bf16.msra.mxu0 0
  %1432 = vmatprep.subr.bf16.mxu0 0
  %1433 = vmatpush1.bf16.msra.mxu0 0
  %1434 = vmatprep.subr.bf16.mxu0 0
  %1435 = vmatpush1.bf16.msra.mxu0 0
  %1436 = vmatprep.subr.bf16.mxu0 0
  %1437 = vmatpush1.bf16.msra.mxu0 0
  %1438 = vmatprep.subr.bf16.mxu0 0
  %1439 = vmatpush1.bf16.msra.mxu0 0
  %1440 = vmatprep.subr.bf16.mxu0 0
  %1441 = vmatpush1.bf16.msra.mxu0 0
  %1442 = vmatprep.mubr.bf16.mxu0 0
  %1443 = vmatmul.mubr.bf16.gmra.mrb[0].mxu0 %v1408
  %v1444 = vpop.f32.mrb[0].mxu0
  %v1445 = vadd.f32 %v1092, %v1444
  %v1446 = vpop.f32.mrb[0].mxu0
  %v1447 = vadd.f32 %v1096, %v1446
  %v1448 = vpop.f32.mrb[0].mxu0
  %v1449 = vpop.f32.mrb[0].mxu0
  %1450 = vdwg.mxu0
  %v1451 = vrot.slane %v1082, 3
  %v1453 = vrot.slane %v1084, 3
  %1454 = vrot.lane.b32.xlu0 %v1451, 32
  %v1455 = vpop.permute.xlu0 %1454
  %1456 = vrot.lane.b32.xlu0 %v1453, 32
  %v1457 = vpop.permute.xlu0 %1456
  %v1458 = vsel %vm190, %v1455, %v1457
  %v1460 = vsel %vm245, %v1451, %v1458
  %1463 = vrot.lane.b32.xlu0 %v1445, 32
  %v1464 = vpop.permute.xlu0 %1463
  %1465 = vrot.lane.b32.xlu0 %v1447, 32
  %v1466 = vpop.permute.xlu0 %1465
  %v1467 = vsel %vm190, %v1464, %v1466
  %v1469 = vsel %vm245, %v1445, %v1467
  %v1470 = vadd.f32 %v1460, %v1469
  %v1471 = vxor.u32 %v1470, 2147483648
  %v1472 = vmul.f32 %v1471, 1.442695
  %v1473 = vpow.pop %v1472
  %v1474 = vadd.f32 %v1473, 1.0
  %v1475 = vrcp.pop %v1474
  %v1476 = vmul.f32 1.0, %v1475
  %1478 = vrot.lane.b32.xlu0 %v1469, 64
  %v1479 = vpop.permute.xlu0 %1478
  %v1481 = vmul.f32 %v1476, %v1479
  %1483 = vrot.lane.b32.xlu0 %v1481, 64
  %v1484 = vpop.permute.xlu0 %1483
  %v1486 = vadd.f32 %v1460, %v1484
  %v1487 = vtanh.pop %v1486
  %v1488 = vsub.f32 1.0, %v1476
  %1490 = vrot.lane.b32.xlu0 %v1487, 96
  %v1491 = vpop.permute.xlu0 %1490
  %v1493 = vmul.f32 %v1488, %v1491
  %v1494 = vmul.f32 %v1476, %v1402
  %v1495 = vadd.f32 %v1493, %v1494
  %v1496 = vpack.c.bf16 %v1495, %v1495
  %1498 = vrot.lane.b32.xlu0 %v1496, 96
  %v1499 = vpop.permute.xlu0 %1498
  %v1501 = vsel %vm190, %v1499, 0
  %1503 = vmatprep.subr.bf16.mxu0 %v1114
  %1504 = vmatpush1.bf16.msra.mxu0 %v1113
  %1505 = vmatprep.subr.bf16.mxu0 %v1116
  %1506 = vmatpush1.bf16.msra.mxu0 %v1115
  %1507 = vmatprep.subr.bf16.mxu0 0
  %1508 = vmatpush1.bf16.msra.mxu0 0
  %1509 = vmatprep.subr.bf16.mxu0 0
  %1510 = vmatpush1.bf16.msra.mxu0 0
  %1511 = vmatprep.subr.bf16.mxu0 0
  %1512 = vmatpush1.bf16.msra.mxu0 0
  %1513 = vmatprep.subr.bf16.mxu0 0
  %1514 = vmatpush1.bf16.msra.mxu0 0
  %1515 = vmatprep.subr.bf16.mxu0 0
  %1516 = vmatpush1.bf16.msra.mxu0 0
  %1517 = vmatprep.subr.bf16.mxu0 0
  %1518 = vmatpush1.bf16.msra.mxu0 0
  %1519 = vmatprep.subr.bf16.mxu0 0
  %1520 = vmatpush1.bf16.msra.mxu0 0
  %1521 = vmatprep.subr.bf16.mxu0 0
  %1522 = vmatpush1.bf16.msra.mxu0 0
  %1523 = vmatprep.subr.bf16.mxu0 0
  %1524 = vmatpush1.bf16.msra.mxu0 0
  %1525 = vmatprep.subr.bf16.mxu0 0
  %1526 = vmatpush1.bf16.msra.mxu0 0
  %1527 = vmatprep.subr.bf16.mxu0 0
  %1528 = vmatpush1.bf16.msra.mxu0 0
  %1529 = vmatprep.subr.bf16.mxu0 0
  %1530 = vmatpush1.bf16.msra.mxu0 0
  %1531 = vmatprep.subr.bf16.mxu0 0
  %1532 = vmatpush1.bf16.msra.mxu0 0
  %1533 = vmatprep.subr.bf16.mxu0 0
  %1534 = vmatpush1.bf16.msra.mxu0 0
  %1535 = vmatprep.mubr.bf16.mxu0 0
  %1536 = vmatmul.mubr.bf16.gmra.mrb[0].mxu0 %v1501
  %v1537 = vpop.f32.mrb[0].mxu0
  %v1538 = vadd.f32 %v1092, %v1537
  %v1539 = vpop.f32.mrb[0].mxu0
  %v1540 = vadd.f32 %v1096, %v1539
  %v1541 = vpop.f32.mrb[0].mxu0
  %v1542 = vpop.f32.mrb[0].mxu0
  %1543 = vdwg.mxu0
  %v1545 = vrot.slane %v1084, 2
  %1546 = vrot.lane.b32.xlu0 %v1357, 32
  %v1547 = vpop.permute.xlu0 %1546
  %1548 = vrot.lane.b32.xlu0 %v1545, 32
  %v1549 = vpop.permute.xlu0 %1548
  %v1550 = vsel %vm190, %v1547, %v1549
  %v1552 = vsel %vm245, %v1359, %v1550
  %1555 = vrot.lane.b32.xlu0 %v1538, 32
  %v1556 = vpop.permute.xlu0 %1555
  %1557 = vrot.lane.b32.xlu0 %v1540, 32
  %v1558 = vpop.permute.xlu0 %1557
  %v1559 = vsel %vm190, %v1556, %v1558
  %v1561 = vsel %vm245, %v1538, %v1559
  %v1562 = vadd.f32 %v1552, %v1561
  %v1563 = vxor.u32 %v1562, 2147483648
  %v1564 = vmul.f32 %v1563, 1.442695
  %v1565 = vpow.pop %v1564
  %v1566 = vadd.f32 %v1565, 1.0
  %v1567 = vrcp.pop %v1566
  %v1568 = vmul.f32 1.0, %v1567
  %1570 = vrot.lane.b32.xlu0 %v1561, 64
  %v1571 = vpop.permute.xlu0 %1570
  %v1573 = vmul.f32 %v1568, %v1571
  %1575 = vrot.lane.b32.xlu0 %v1573, 64
  %v1576 = vpop.permute.xlu0 %1575
  %v1578 = vadd.f32 %v1552, %v1576
  %v1579 = vtanh.pop %v1578
  %v1580 = vsub.f32 1.0, %v1568
  %1582 = vrot.lane.b32.xlu0 %v1579, 96
  %v1583 = vpop.permute.xlu0 %1582
  %v1585 = vmul.f32 %v1580, %v1583
  %v1586 = vmul.f32 %v1568, %v1495
  %v1587 = vadd.f32 %v1585, %v1586
  %v1588 = vpack.c.bf16 %v1587, %v1587
  %1590 = vrot.lane.b32.xlu0 %v1588, 96
  %v1591 = vpop.permute.xlu0 %1590
  %v1593 = vsel %vm190, %v1591, 0
  %1595 = vmatprep.subr.bf16.mxu0 %v1114
  %1596 = vmatpush1.bf16.msra.mxu0 %v1113
  %1597 = vmatprep.subr.bf16.mxu0 %v1116
  %1598 = vmatpush1.bf16.msra.mxu0 %v1115
  %1599 = vmatprep.subr.bf16.mxu0 0
  %1600 = vmatpush1.bf16.msra.mxu0 0
  %1601 = vmatprep.subr.bf16.mxu0 0
  %1602 = vmatpush1.bf16.msra.mxu0 0
  %1603 = vmatprep.subr.bf16.mxu0 0
  %1604 = vmatpush1.bf16.msra.mxu0 0
  %1605 = vmatprep.subr.bf16.mxu0 0
  %1606 = vmatpush1.bf16.msra.mxu0 0
  %1607 = vmatprep.subr.bf16.mxu0 0
  %1608 = vmatpush1.bf16.msra.mxu0 0
  %1609 = vmatprep.subr.bf16.mxu0 0
  %1610 = vmatpush1.bf16.msra.mxu0 0
  %1611 = vmatprep.subr.bf16.mxu0 0
  %1612 = vmatpush1.bf16.msra.mxu0 0
  %1613 = vmatprep.subr.bf16.mxu0 0
  %1614 = vmatpush1.bf16.msra.mxu0 0
  %1615 = vmatprep.subr.bf16.mxu0 0
  %1616 = vmatpush1.bf16.msra.mxu0 0
  %1617 = vmatprep.subr.bf16.mxu0 0
  %1618 = vmatpush1.bf16.msra.mxu0 0
  %1619 = vmatprep.subr.bf16.mxu0 0
  %1620 = vmatpush1.bf16.msra.mxu0 0
  %1621 = vmatprep.subr.bf16.mxu0 0
  %1622 = vmatpush1.bf16.msra.mxu0 0
  %1623 = vmatprep.subr.bf16.mxu0 0
  %1624 = vmatpush1.bf16.msra.mxu0 0
  %1625 = vmatprep.subr.bf16.mxu0 0
  %1626 = vmatpush1.bf16.msra.mxu0 0
  %1627 = vmatprep.mubr.bf16.mxu0 0
  %1628 = vmatmul.mubr.bf16.gmra.mrb[0].mxu0 %v1593
  %v1629 = vpop.f32.mrb[0].mxu0
  %v1630 = vadd.f32 %v1092, %v1629
  %v1631 = vpop.f32.mrb[0].mxu0
  %v1632 = vadd.f32 %v1096, %v1631
  %v1633 = vpop.f32.mrb[0].mxu0
  %v1634 = vpop.f32.mrb[0].mxu0
  %1635 = vdwg.mxu0
  %v1637 = vrot.slane %v1084, 1
  %1638 = vrot.lane.b32.xlu0 %v1263, 32
  %v1639 = vpop.permute.xlu0 %1638
  %1640 = vrot.lane.b32.xlu0 %v1637, 32
  %v1641 = vpop.permute.xlu0 %1640
  %v1642 = vsel %vm190, %v1639, %v1641
  %v1644 = vsel %vm245, %v1265, %v1642
  %1647 = vrot.lane.b32.xlu0 %v1630, 32
  %v1648 = vpop.permute.xlu0 %1647
  %1649 = vrot.lane.b32.xlu0 %v1632, 32
  %v1650 = vpop.permute.xlu0 %1649
  %v1651 = vsel %vm190, %v1648, %v1650
  %v1653 = vsel %vm245, %v1630, %v1651
  %v1654 = vadd.f32 %v1644, %v1653
  %v1655 = vxor.u32 %v1654, 2147483648
  %v1656 = vmul.f32 %v1655, 1.442695
  %v1657 = vpow.pop %v1656
  %v1658 = vadd.f32 %v1657, 1.0
  %v1659 = vrcp.pop %v1658
  %v1660 = vmul.f32 1.0, %v1659
  %1662 = vrot.lane.b32.xlu0 %v1653, 64
  %v1663 = vpop.permute.xlu0 %1662
  %v1665 = vmul.f32 %v1660, %v1663
  %1667 = vrot.lane.b32.xlu0 %v1665, 64
  %v1668 = vpop.permute.xlu0 %1667
  %v1670 = vadd.f32 %v1644, %v1668
  %v1671 = vtanh.pop %v1670
  %v1672 = vsub.f32 1.0, %v1660
  %1674 = vrot.lane.b32.xlu0 %v1671, 96
  %v1675 = vpop.permute.xlu0 %1674
  %v1677 = vmul.f32 %v1672, %v1675
  %v1678 = vmul.f32 %v1660, %v1587
  %v1679 = vadd.f32 %v1677, %v1678
  %v1680 = vpack.c.bf16 %v1679, %v1679
  %1682 = vrot.lane.b32.xlu0 %v1680, 96
  %v1683 = vpop.permute.xlu0 %1682
  %v1685 = vsel %vm190, %v1683, 0
  %1687 = vmatprep.subr.bf16.mxu0 %v1114
  %1688 = vmatpush1.bf16.msra.mxu0 %v1113
  %1689 = vmatprep.subr.bf16.mxu0 %v1116
  %1690 = vmatpush1.bf16.msra.mxu0 %v1115
  %1691 = vmatprep.subr.bf16.mxu0 0
  %1692 = vmatpush1.bf16.msra.mxu0 0
  %1693 = vmatprep.subr.bf16.mxu0 0
  %1694 = vmatpush1.bf16.msra.mxu0 0
  %1695 = vmatprep.subr.bf16.mxu0 0
  %1696 = vmatpush1.bf16.msra.mxu0 0
  %1697 = vmatprep.subr.bf16.mxu0 0
  %1698 = vmatpush1.bf16.msra.mxu0 0
  %1699 = vmatprep.subr.bf16.mxu0 0
  %1700 = vmatpush1.bf16.msra.mxu0 0
  %1701 = vmatprep.subr.bf16.mxu0 0
  %1702 = vmatpush1.bf16.msra.mxu0 0
  %1703 = vmatprep.subr.bf16.mxu0 0
  %1704 = vmatpush1.bf16.msra.mxu0 0
  %1705 = vmatprep.subr.bf16.mxu0 0
  %1706 = vmatpush1.bf16.msra.mxu0 0
  %1707 = vmatprep.subr.bf16.mxu0 0
  %1708 = vmatpush1.bf16.msra.mxu0 0
  %1709 = vmatprep.subr.bf16.mxu0 0
  %1710 = vmatpush1.bf16.msra.mxu0 0
  %1711 = vmatprep.subr.bf16.mxu0 0
  %1712 = vmatpush1.bf16.msra.mxu0 0
  %1713 = vmatprep.subr.bf16.mxu0 0
  %1714 = vmatpush1.bf16.msra.mxu0 0
  %1715 = vmatprep.subr.bf16.mxu0 0
  %1716 = vmatpush1.bf16.msra.mxu0 0
  %1717 = vmatprep.subr.bf16.mxu0 0
  %1718 = vmatpush1.bf16.msra.mxu0 0
  %1719 = vmatprep.mubr.bf16.mxu0 0
  %1720 = vmatmul.mubr.bf16.gmra.mrb[0].mxu0 %v1685
  %v1721 = vpop.f32.mrb[0].mxu0
  %v1722 = vadd.f32 %v1092, %v1721
  %v1723 = vpop.f32.mrb[0].mxu0
  %v1724 = vadd.f32 %v1096, %v1723
  %v1725 = vpop.f32.mrb[0].mxu0
  %v1726 = vpop.f32.mrb[0].mxu0
  %1727 = vdwg.mxu0
  %1729 = vrot.lane.b32.xlu0 %v1082, 32
  %v1730 = vpop.permute.xlu0 %1729
  %1731 = vrot.lane.b32.xlu0 %v1084, 32
  %v1732 = vpop.permute.xlu0 %1731
  %v1733 = vsel %vm190, %v1730, %v1732
  %v1735 = vsel %vm245, %v1167, %v1733
  %1738 = vrot.lane.b32.xlu0 %v1722, 32
  %v1739 = vpop.permute.xlu0 %1738
  %1740 = vrot.lane.b32.xlu0 %v1724, 32
  %v1741 = vpop.permute.xlu0 %1740
  %v1742 = vsel %vm190, %v1739, %v1741
  %v1744 = vsel %vm245, %v1722, %v1742
  %v1745 = vadd.f32 %v1735, %v1744
  %v1746 = vxor.u32 %v1745, 2147483648
  %v1747 = vmul.f32 %v1746, 1.442695
  %v1748 = vpow.pop %v1747
  %v1749 = vadd.f32 %v1748, 1.0
  %v1750 = vrcp.pop %v1749
  %v1751 = vmul.f32 1.0, %v1750
  %1753 = vrot.lane.b32.xlu0 %v1744, 64
  %v1754 = vpop.permute.xlu0 %1753
  %v1756 = vmul.f32 %v1751, %v1754
  %1758 = vrot.lane.b32.xlu0 %v1756, 64
  %v1759 = vpop.permute.xlu0 %1758
  %v1761 = vadd.f32 %v1735, %v1759
  %v1762 = vtanh.pop %v1761
  %v1763 = vsub.f32 1.0, %v1751
  %1765 = vrot.lane.b32.xlu0 %v1762, 96
  %v1766 = vpop.permute.xlu0 %1765
  %v1768 = vmul.f32 %v1763, %v1766
  %v1769 = vmul.f32 %v1751, %v1679
  %v1770 = vadd.f32 %v1768, %v1769
  %v1771 = vpack.c.bf16 %v1770, %v1770
  %1773 = vrot.lane.b32.xlu0 %v1771, 96
  %v1774 = vpop.permute.xlu0 %1773
  %v1776 = vsel %vm190, %v1774, 0
  %1778 = vmatprep.subr.bf16.mxu0 %v1114
  %1779 = vmatpush1.bf16.msra.mxu0 %v1113
  %1780 = vmatprep.subr.bf16.mxu0 %v1116
  %1781 = vmatpush1.bf16.msra.mxu0 %v1115
  %1782 = vmatprep.subr.bf16.mxu0 0
  %1783 = vmatpush1.bf16.msra.mxu0 0
  %1784 = vmatprep.subr.bf16.mxu0 0
  %1785 = vmatpush1.bf16.msra.mxu0 0
  %1786 = vmatprep.subr.bf16.mxu0 0
  %1787 = vmatpush1.bf16.msra.mxu0 0
  %1788 = vmatprep.subr.bf16.mxu0 0
  %1789 = vmatpush1.bf16.msra.mxu0 0
  %1790 = vmatprep.subr.bf16.mxu0 0
  %1791 = vmatpush1.bf16.msra.mxu0 0
  %1792 = vmatprep.subr.bf16.mxu0 0
  %1793 = vmatpush1.bf16.msra.mxu0 0
  %1794 = vmatprep.subr.bf16.mxu0 0
  %1795 = vmatpush1.bf16.msra.mxu0 0
  %1796 = vmatprep.subr.bf16.mxu0 0
  %1797 = vmatpush1.bf16.msra.mxu0 0
  %1798 = vmatprep.subr.bf16.mxu0 0
  %1799 = vmatpush1.bf16.msra.mxu0 0
  %1800 = vmatprep.subr.bf16.mxu0 0
  %1801 = vmatpush1.bf16.msra.mxu0 0
  %1802 = vmatprep.subr.bf16.mxu0 0
  %1803 = vmatpush1.bf16.msra.mxu0 0
  %1804 = vmatprep.subr.bf16.mxu0 0
  %1805 = vmatpush1.bf16.msra.mxu0 0
  %1806 = vmatprep.subr.bf16.mxu0 0
  %1807 = vmatpush1.bf16.msra.mxu0 0
  %1808 = vmatprep.subr.bf16.mxu0 0
  %1809 = vmatpush1.bf16.msra.mxu0 0
  %1810 = vmatprep.mubr.bf16.mxu0 0
  %1811 = vmatmul.mubr.bf16.gmra.mrb[0].mxu0 %v1776
  %v1812 = vpop.f32.mrb[0].mxu0
  %v1813 = vadd.f32 %v1092, %v1812
  %v1814 = vpop.f32.mrb[0].mxu0
  %v1815 = vadd.f32 %v1096, %v1814
  %v1816 = vpop.f32.mrb[0].mxu0
  %v1817 = vpop.f32.mrb[0].mxu0
  %1818 = vdwg.mxu0
  %v1819 = vrot.slane %v1082, 7
  %v1821 = vrot.slane %v1084, 7
  %1822 = vrot.lane.b32.xlu0 %v1819, 32
  %v1823 = vpop.permute.xlu0 %1822
  %1824 = vrot.lane.b32.xlu0 %v1821, 32
  %v1825 = vpop.permute.xlu0 %1824
  %v1826 = vsel %vm190, %v1823, %v1825
  %v1828 = vsel %vm245, %v1819, %v1826
  %1831 = vrot.lane.b32.xlu0 %v1813, 32
  %v1832 = vpop.permute.xlu0 %1831
  %1833 = vrot.lane.b32.xlu0 %v1815, 32
  %v1834 = vpop.permute.xlu0 %1833
  %v1835 = vsel %vm190, %v1832, %v1834
  %v1837 = vsel %vm245, %v1813, %v1835
  %v1838 = vadd.f32 %v1828, %v1837
  %v1839 = vxor.u32 %v1838, 2147483648
  %v1840 = vmul.f32 %v1839, 1.442695
  %v1841 = vpow.pop %v1840
  %v1842 = vadd.f32 %v1841, 1.0
  %v1843 = vrcp.pop %v1842
  %v1844 = vmul.f32 1.0, %v1843
  %1846 = vrot.lane.b32.xlu0 %v1837, 64
  %v1847 = vpop.permute.xlu0 %1846
  %v1849 = vmul.f32 %v1844, %v1847
  %1851 = vrot.lane.b32.xlu0 %v1849, 64
  %v1852 = vpop.permute.xlu0 %1851
  %v1854 = vadd.f32 %v1828, %v1852
  %v1855 = vtanh.pop %v1854
  %v1856 = vsub.f32 1.0, %v1844
  %1858 = vrot.lane.b32.xlu0 %v1855, 96
  %v1859 = vpop.permute.xlu0 %1858
  %v1861 = vmul.f32 %v1856, %v1859
  %v1862 = vmul.f32 %v1844, %v1770
  %v1863 = vadd.f32 %v1861, %v1862
  %v1865 = vrot.slane %v1308, 7
  %v1868 = vrot.slane %v1402, 6
  %v1871 = vrot.slane %v1495, 5
  %v1874 = vrot.slane %v1587, 4
  %v1877 = vrot.slane %v1679, 3
  %v1880 = vrot.slane %v1770, 2
  %v1883 = vrot.slane %v1863, 1
  %v1885 = vsel %vm245, %v1214, %v1865
  %v1886 = vsel %vm957, %v1885, %v1868
  %v1887 = vsel %vm959, %v1886, %v1871
  %v1888 = vsel %vm961, %v1887, %v1874
  %v1889 = vsel %vm963, %v1888, %v1877
  %v1890 = vsel %vm965, %v1889, %v1880
  %v1891 = vsel %vm967, %v1890, %v1883
  %v1892 = vrot.slane %v1679, 7
  %v1894 = vrot.slane %v1587, 6
  %v1896 = vrot.slane %v1402, 4
  %v1898 = vrot.slane %v1308, 3
  %v1901 = vrot.slane %v1214, 2
  %v1903 = vsel %vm245, %v1883, %v1770
  %v1904 = vsel %vm957, %v1903, %v1892
  %v1905 = vsel %vm959, %v1904, %v1894
  %v1906 = vsel %vm961, %v1905, %v1871
  %v1907 = vsel %vm963, %v1906, %v1896
  %v1908 = vsel %vm965, %v1907, %v1898
  %v1909 = vsel %vm967, %v1908, %v1901
  %v1910 = vadd.f32 %v1891, %v1909
  %v1911 = vpack.c.bf16 %v1910, %v1910
  %v1912 = vld [vmem:[%s2 + $0xc0] sm:$0xff]
  %v1913 = vld [vmem:[%s2 + $0xc8] sm:$0xff]
  %v1914 = vld [vmem:[%s2 + $0xd0] sm:$0xff]
  %v1915 = vld [vmem:[%s2 + $0xd8] sm:$0xff]
  %v1916 = vld [vmem:[%s2 + $0xe0] sm:$0xff]
  %v1917 = vld [vmem:[%s2 + $0xe8] sm:$0xff]
  %v1918 = vld [vmem:[%s2 + $0xf0] sm:$0xff]
  %v1919 = vld [vmem:[%s2 + $0xf8] sm:$0xff]
  %v1920 = vld [vmem:[%s2 + $0x100] sm:$0xff]
  %v1921 = vld [vmem:[%s2 + $0x108] sm:$0xff]
  %v1922 = vld [vmem:[%s2 + $0x110] sm:$0xff]
  %v1923 = vld [vmem:[%s2 + $0x118] sm:$0xff]
  %v1924 = vld [vmem:[%s2 + $0x120] sm:$0xff]
  %v1925 = vld [vmem:[%s2 + $0x128] sm:$0xff]
  %v1926 = vld [vmem:[%s2 + $0x130] sm:$0xff]
  %v1927 = vld [vmem:[%s2 + $0x138] sm:$0xff]
  %v1928 = vld [vmem:[%s2 + $0x140] sm:$0xf]
  %v1929 = vld [vmem:[%s2 + $0x148] sm:$0xf]
  %v1930 = vld [vmem:[%s2 + $0x150] sm:$0xf]
  %v1931 = vld [vmem:[%s2 + $0x158] sm:$0xf]
  %v1932 = vld [vmem:[%s2 + $0x160] sm:$0xf]
  %v1933 = vld [vmem:[%s2 + $0x168] sm:$0xf]
  %v1934 = vld [vmem:[%s2 + $0x170] sm:$0xf]
  %v1935 = vld [vmem:[%s2 + $0x178] sm:$0xf]
  %s1936 = scalar_lea.vmem %s3, 4
  %v1937 = vld [vmem:[%s1936] ss:$8 sm:$0x3]
  %v1938 = vld [vmem:[%s3 + $0x5] ss:$0 sm:$0xff]
  %v1939 = vld [vmem:[%s3 + $0x6] ss:$0 sm:$0xff]
  %v1940 = vld [vmem:[%s3 + $0x7] ss:$0 sm:$0xff]
  %v1941 = vunpack.c.l.bf16 %v1932
  %v1942 = vunpack.c.l.bf16 %v1933
  %v1943 = vunpack.c.l.bf16 %v1934
  %v1944 = vunpack.c.l.bf16 %v1935
  %1949 = vrot.lane.b32.xlu0 %v1941, 32
  %v1950 = vpop.permute.xlu0 %1949
  %1951 = vrot.lane.b32.xlu0 %v1942, 32
  %v1952 = vpop.permute.xlu0 %1951
  %1953 = vrot.lane.b32.xlu0 %v1943, 32
  %v1954 = vpop.permute.xlu0 %1953
  %1955 = vrot.lane.b32.xlu0 %v1944, 32
  %v1956 = vpop.permute.xlu0 %1955
  %v1961 = vpack.c.bf16 %v1950, %v1910
  %v1962 = vpack.c.bf16 %v1954, %v1952
  %v1963 = vpack.c.bf16 %v1956, %v1956
  %vm1964 = vcmp.eq.s32.totalorder %v53, 1
  %v1965 = vsel %vm1964, 1, 0
  %v1966 = vcvt.s32.f32 %v1965
  %1967 = vrot.lane.b32.xlu0 %v934, 32
  %v1968 = vpop.permute.xlu0 %1967
  %1970 = vrot.lane.b32.xlu0 %v954, 64
  %v1971 = vpop.permute.xlu0 %1970
  %v1973 = vsel %vm112, %v1966, %v1968
  %vm1974 = vcmask 785408
  %v1975 = vsel %vm1974, %v1973, %v1971
  %v1976 = vpack.c.bf16 %v1975, %v1975
  %v1993 = vunpack.c.l.b16 %v1912
  %v1994 = vunpack.c.h.b16 %v1912
  %v1995 = vunpack.c.l.b16 %v1913
  %v1996 = vunpack.c.h.b16 %v1913
  %v1997 = vunpack.c.l.b16 %v1914
  %v1998 = vunpack.c.h.b16 %v1914
  %v1999 = vunpack.c.l.b16 %v1915
  %v2000 = vunpack.c.h.b16 %v1915
  %v2001 = vunpack.c.l.b16 %v1916
  %v2002 = vunpack.c.h.b16 %v1916
  %v2003 = vunpack.c.l.b16 %v1917
  %v2004 = vunpack.c.h.b16 %v1917
  %v2005 = vunpack.c.l.b16 %v1918
  %v2006 = vunpack.c.h.b16 %v1918
  %v2007 = vunpack.c.l.b16 %v1919
  %v2008 = vunpack.c.h.b16 %v1919
  %v2009 = vunpack.c.l.b16 %v1920
  %v2010 = vunpack.c.h.b16 %v1920
  %v2011 = vunpack.c.l.b16 %v1921
  %v2012 = vunpack.c.h.b16 %v1921
  %v2013 = vunpack.c.l.b16 %v1922
  %v2014 = vunpack.c.h.b16 %v1922
  %v2015 = vunpack.c.l.b16 %v1923
  %v2016 = vunpack.c.h.b16 %v1923
  %v2017 = vunpack.c.l.b16 %v1924
  %v2018 = vunpack.c.h.b16 %v1924
  %v2019 = vunpack.c.l.b16 %v1925
  %v2020 = vunpack.c.h.b16 %v1925
  %v2021 = vunpack.c.l.b16 %v1926
  %v2022 = vunpack.c.h.b16 %v1926
  %v2023 = vunpack.c.l.b16 %v1927
  %v2024 = vunpack.c.h.b16 %v1927
  %v2025 = vpack.c.b16 %v1995, %v1993
  %v2026 = vpack.c.b16 %v1996, %v1994
  %v2027 = vpack.c.b16 %v1999, %v1997
  %v2028 = vpack.c.b16 %v2000, %v1998
  %v2029 = vpack.c.b16 %v2003, %v2001
  %v2030 = vpack.c.b16 %v2004, %v2002
  %v2031 = vpack.c.b16 %v2007, %v2005
  %v2032 = vpack.c.b16 %v2008, %v2006
  %v2033 = vpack.c.b16 %v2011, %v2009
  %v2034 = vpack.c.b16 %v2012, %v2010
  %v2035 = vpack.c.b16 %v2015, %v2013
  %v2036 = vpack.c.b16 %v2016, %v2014
  %v2037 = vpack.c.b16 %v2019, %v2017
  %v2038 = vpack.c.b16 %v2020, %v2018
  %v2039 = vpack.c.b16 %v2023, %v2021
  %v2040 = vpack.c.b16 %v2024, %v2022
  %v2058 = vlaneseq
  %v2059 = vshrl.u32 %v2058, 7
  %v2060 = vsub.s32 0, %v2059
  %v2061 = vrot.slane %v1937, %v2060
  %v2062 = vlaneseq
  %v2063 = vshrl.u32 %v2062, 7
  %v2064 = vsub.s32 1, %v2063
  %v2065 = vrot.slane %v1937, %v2064
  %2068 = vmatprep.subr.bf16.mxu0 %v2026
  %2069 = vmatpush1.bf16.msra.mxu0 %v2025
  %2070 = vmatprep.subr.bf16.mxu0 %v2028
  %2071 = vmatpush1.bf16.msra.mxu0 %v2027
  %2072 = vmatprep.subr.bf16.mxu0 %v2030
  %2073 = vmatpush1.bf16.msra.mxu0 %v2029
  %2074 = vmatprep.subr.bf16.mxu0 %v2032
  %2075 = vmatpush1.bf16.msra.mxu0 %v2031
  %2076 = vmatprep.subr.bf16.mxu0 %v2034
  %2077 = vmatpush1.bf16.msra.mxu0 %v2033
  %2078 = vmatprep.subr.bf16.mxu0 %v2036
  %2079 = vmatpush1.bf16.msra.mxu0 %v2035
  %2080 = vmatprep.subr.bf16.mxu0 %v2038
  %2081 = vmatpush1.bf16.msra.mxu0 %v2037
  %2082 = vmatprep.subr.bf16.mxu0 %v2040
  %2083 = vmatpush1.bf16.msra.mxu0 %v2039
  %2084 = vmatprep.subr.bf16.mxu0 0
  %2085 = vmatpush1.bf16.msra.mxu0 0
  %2086 = vmatprep.subr.bf16.mxu0 0
  %2087 = vmatpush1.bf16.msra.mxu0 0
  %2088 = vmatprep.subr.bf16.mxu0 0
  %2089 = vmatpush1.bf16.msra.mxu0 0
  %2090 = vmatprep.subr.bf16.mxu0 0
  %2091 = vmatpush1.bf16.msra.mxu0 0
  %2092 = vmatprep.subr.bf16.mxu0 0
  %2093 = vmatpush1.bf16.msra.mxu0 0
  %2094 = vmatprep.subr.bf16.mxu0 0
  %2095 = vmatpush1.bf16.msra.mxu0 0
  %2096 = vmatprep.subr.bf16.mxu0 0
  %2097 = vmatpush1.bf16.msra.mxu0 0
  %2098 = vmatprep.subr.bf16.mxu0 0
  %2099 = vmatpush1.bf16.msra.mxu0 0
  %2100 = vmatprep.mubr.bf16.mxu0 0
  %2101 = vmatmul.mubr.bf16.gmra.mrb[0].mxu0 %v1976
  %v2102 = vpop.f32.mrb[0].mxu0
  %v2103 = vadd.f32 %v2061, %v2102
  %v2104 = vpop.f32.mrb[0].mxu0
  %v2105 = vadd.f32 %v2065, %v2104
  %v2106 = vpop.f32.mrb[0].mxu0
  %v2107 = vpop.f32.mrb[0].mxu0
  %2108 = vdwg.mxu0
  %v2109 = vxor.u32 %v2103, 2147483648
  %v2110 = vmul.f32 %v2109, 1.442695
  %v2111 = vpow.pop %v2110
  %v2112 = vadd.f32 %v2111, 1.0
  %v2113 = vrcp.pop %v2112
  %v2114 = vmul.f32 1.0, %v2113
  %2116 = vrot.lane.b32.xlu0 %v2103, 32
  %v2117 = vpop.permute.xlu0 %2116
  %v2119 = vmul.f32 %v2114, %v2117
  %2121 = vrot.lane.b32.xlu0 %v2119, 64
  %v2122 = vpop.permute.xlu0 %2121
  %v2124 = vadd.f32 %v2103, %v2122
  %v2125 = vtanh.pop %v2124
  %v2126 = vsub.f32 1.0, %v2114
  %2128 = vrot.lane.b32.xlu0 %v2125, 96
  %v2129 = vpop.permute.xlu0 %2128
  %v2131 = vmul.f32 %v2126, %v2129
  %v2132 = vmul.f32 %v2114, %v934
  %v2133 = vadd.f32 %v2131, %v2132
  %v2134 = vpack.c.bf16 %v2133, %v2133
  %2136 = vrot.lane.b32.xlu0 %v2134, 96
  %v2137 = vpop.permute.xlu0 %2136
  %v2142 = vunpack.c.l.b16 %v1928
  %v2143 = vunpack.c.l.b16 %v1929
  %v2144 = vunpack.c.l.b16 %v1930
  %v2145 = vunpack.c.l.b16 %v1931
  %v2146 = vpack.c.b16 %v2143, %v2142
  %v2147 = vpack.c.b16 %v2145, %v2144
  %v2151 = vsel %vm190, %v2137, 0
  %2153 = vmatprep.subr.bf16.mxu0 0
  %2154 = vmatpush1.bf16.msra.mxu0 %v2146
  %2155 = vmatprep.subr.bf16.mxu0 0
  %2156 = vmatpush1.bf16.msra.mxu0 %v2147
  %2157 = vmatprep.subr.bf16.mxu0 0
  %2158 = vmatpush1.bf16.msra.mxu0 0
  %2159 = vmatprep.subr.bf16.mxu0 0
  %2160 = vmatpush1.bf16.msra.mxu0 0
  %2161 = vmatprep.subr.bf16.mxu0 0
  %2162 = vmatpush1.bf16.msra.mxu0 0
  %2163 = vmatprep.subr.bf16.mxu0 0
  %2164 = vmatpush1.bf16.msra.mxu0 0
  %2165 = vmatprep.subr.bf16.mxu0 0
  %2166 = vmatpush1.bf16.msra.mxu0 0
  %2167 = vmatprep.subr.bf16.mxu0 0
  %2168 = vmatpush1.bf16.msra.mxu0 0
  %2169 = vmatprep.subr.bf16.mxu0 0
  %2170 = vmatpush1.bf16.msra.mxu0 0
  %2171 = vmatprep.subr.bf16.mxu0 0
  %2172 = vmatpush1.bf16.msra.mxu0 0
  %2173 = vmatprep.subr.bf16.mxu0 0
  %2174 = vmatpush1.bf16.msra.mxu0 0
  %2175 = vmatprep.subr.bf16.mxu0 0
  %2176 = vmatpush1.bf16.msra.mxu0 0
  %2177 = vmatprep.subr.bf16.mxu0 0
  %2178 = vmatpush1.bf16.msra.mxu0 0
  %2179 = vmatprep.subr.bf16.mxu0 0
  %2180 = vmatpush1.bf16.msra.mxu0 0
  %2181 = vmatprep.subr.bf16.mxu0 0
  %2182 = vmatpush1.bf16.msra.mxu0 0
  %2183 = vmatprep.subr.bf16.mxu0 0
  %2184 = vmatpush1.bf16.msra.mxu0 0
  %2185 = vmatprep.mubr.bf16.mxu0 0
  %2186 = vmatmul.mubr.bf16.gmra.mrb[0].mxu0 %v2151
  %v2187 = vpop.f32.mrb[0].mxu0
  %v2188 = vadd.f32 %v1938, %v2187
  %v2189 = vpop.f32.mrb[0].mxu0
  %v2190 = vpop.f32.mrb[0].mxu0
  %v2191 = vpop.f32.mrb[0].mxu0
  %2192 = vdwg.mxu0
  %v2193 = vadd.f32 %v2188, %v2105
  %v2194 = vxor.u32 %v2193, 2147483648
  %v2195 = vmul.f32 %v2194, 1.442695
  %v2196 = vpow.pop %v2195
  %v2197 = vadd.f32 %v2196, 1.0
  %v2198 = vrcp.pop %v2197
  %v2199 = vmul.f32 1.0, %v2198
  %2201 = vrot.lane.b32.xlu0 %v2105, 64
  %v2202 = vpop.permute.xlu0 %2201
  %v2204 = vmul.f32 %v2199, %v2202
  %2206 = vrot.lane.b32.xlu0 %v2204, 64
  %v2207 = vpop.permute.xlu0 %2206
  %v2209 = vadd.f32 %v2188, %v2207
  %v2210 = vtanh.pop %v2209
  %v2211 = vsub.f32 1.0, %v2199
  %2213 = vrot.lane.b32.xlu0 %v2210, 96
  %v2214 = vpop.permute.xlu0 %2213
  %v2216 = vmul.f32 %v2211, %v2214
  %v2217 = vmul.f32 %v2199, %v954
  %v2218 = vadd.f32 %v2216, %v2217
  %v2219 = vpack.c.bf16 %v2218, %v2218
  %2221 = vrot.lane.b32.xlu0 %v2219, 96
  %v2222 = vpop.permute.xlu0 %2221
  %2226 = vrot.lane.b32.xlu0 %v1961, 96
  %v2227 = vpop.permute.xlu0 %2226
  %2228 = vrot.lane.b32.xlu0 %v1962, 96
  %v2229 = vpop.permute.xlu0 %2228
  %2230 = vrot.lane.b32.xlu0 %v1963, 96
  %v2231 = vpop.permute.xlu0 %2230
  %v2233 = vsel %vm190, %v2222, 0
  %v2236 = vsel %vm190, %v2227, 0
  %v2239 = vsel %vm190, %v2229, 0
  %v2242 = vsel %vm190, %v2231, 0
  %2244 = vmatprep.subr.bf16.mxu0 0
  %2245 = vmatpush1.bf16.xpose.msra.mxu0 %v2236
  %2246 = vmatprep.subr.bf16.mxu0 0
  %2247 = vmatpush1.bf16.xpose.msra.mxu0 %v2239
  %2248 = vmatprep.subr.bf16.mxu0 0
  %2249 = vmatpush1.bf16.xpose.msra.mxu0 %v2242
  %2250 = vmatprep.subr.bf16.mxu0 0
  %2251 = vmatpush1.bf16.xpose.msra.mxu0 0
  %2252 = vmatprep.subr.bf16.mxu0 0
  %2253 = vmatpush1.bf16.xpose.msra.mxu0 0
  %2254 = vmatprep.subr.bf16.mxu0 0
  %2255 = vmatpush1.bf16.xpose.msra.mxu0 0
  %2256 = vmatprep.subr.bf16.mxu0 0
  %2257 = vmatpush1.bf16.xpose.msra.mxu0 0
  %2258 = vmatprep.subr.bf16.mxu0 0
  %2259 = vmatpush1.bf16.xpose.msra.mxu0 0
  %2260 = vmatprep.subr.bf16.mxu0 0
  %2261 = vmatpush1.bf16.xpose.msra.mxu0 0
  %2262 = vmatprep.subr.bf16.mxu0 0
  %2263 = vmatpush1.bf16.xpose.msra.mxu0 0
  %2264 = vmatprep.subr.bf16.mxu0 0
  %2265 = vmatpush1.bf16.xpose.msra.mxu0 0
  %2266 = vmatprep.subr.bf16.mxu0 0
  %2267 = vmatpush1.bf16.xpose.msra.mxu0 0
  %2268 = vmatprep.subr.bf16.mxu0 0
  %2269 = vmatpush1.bf16.xpose.msra.mxu0 0
  %2270 = vmatprep.subr.bf16.mxu0 0
  %2271 = vmatpush1.bf16.xpose.msra.mxu0 0
  %2272 = vmatprep.subr.bf16.mxu0 0
  %2273 = vmatpush1.bf16.xpose.msra.mxu0 0
  %2274 = vmatprep.subr.bf16.mxu0 0
  %2275 = vmatpush1.bf16.xpose.msra.mxu0 0
  %2276 = vmatprep.mubr.bf16.mxu0 0
  %2277 = vmatmul.mubr.bf16.gmra.mrb[0].mxu0 %v2233
  %v2278 = vpop.f32.mrb[0].mxu0
  %v2279 = vadd.f32 0.0, %v2278
  %v2280 = vpop.f32.mrb[0].mxu0
  %v2281 = vpop.f32.mrb[0].mxu0
  %v2282 = vpop.f32.mrb[0].mxu0
  %2283 = vdwg.mxu0
  %v2284 = vmul.f32 %v2279, 1.442695
  %v2285 = vpow.pop %v2284
  %vm2286 = vcmask 57344
  %v2287 = vsel %vm2286, %v2285, 0.0
  %2288 = vadd.xlane.f32.xlu0 %v2287
  %v2289 = vpop.xlane.xlu0 %2288
  %v2290 = vrcp.pop %v2289
  %v2291 = vmul.f32 %v2285, %v2290
  %v2292 = vpack.c.bf16 %v2291, %v2291
  %2294 = vrot.lane.b32.xlu0 %v1911, 96
  %v2295 = vpop.permute.xlu0 %2294
  %vm2296 = vcmask 64512
  %v2298 = vsel %vm2296, %v2292, 0
  %v2301 = vsel %vm961, %v2295, 0
  %2303 = vmatprep.subr.bf16.mxu0 0
  %2304 = vmatpush1.bf16.msra.mxu0 %v2301
  %2305 = vmatprep.subr.bf16.mxu0 0
  %2306 = vmatpush1.bf16.msra.mxu0 0
  %2307 = vmatprep.subr.bf16.mxu0 0
  %2308 = vmatpush1.bf16.msra.mxu0 0
  %2309 = vmatprep.subr.bf16.mxu0 0
  %2310 = vmatpush1.bf16.msra.mxu0 0
  %2311 = vmatprep.subr.bf16.mxu0 0
  %2312 = vmatpush1.bf16.msra.mxu0 0
  %2313 = vmatprep.subr.bf16.mxu0 0
  %2314 = vmatpush1.bf16.msra.mxu0 0
  %2315 = vmatprep.subr.bf16.mxu0 0
  %2316 = vmatpush1.bf16.msra.mxu0 0
  %2317 = vmatprep.subr.bf16.mxu0 0
  %2318 = vmatpush1.bf16.msra.mxu0 0
  %2319 = vmatprep.subr.bf16.mxu0 0
  %2320 = vmatpush1.bf16.msra.mxu0 0
  %2321 = vmatprep.subr.bf16.mxu0 0
  %2322 = vmatpush1.bf16.msra.mxu0 0
  %2323 = vmatprep.subr.bf16.mxu0 0
  %2324 = vmatpush1.bf16.msra.mxu0 0
  %2325 = vmatprep.subr.bf16.mxu0 0
  %2326 = vmatpush1.bf16.msra.mxu0 0
  %2327 = vmatprep.subr.bf16.mxu0 0
  %2328 = vmatpush1.bf16.msra.mxu0 0
  %2329 = vmatprep.subr.bf16.mxu0 0
  %2330 = vmatpush1.bf16.msra.mxu0 0
  %2331 = vmatprep.subr.bf16.mxu0 0
  %2332 = vmatpush1.bf16.msra.mxu0 0
  %2333 = vmatprep.subr.bf16.mxu0 0
  %2334 = vmatpush1.bf16.msra.mxu0 0
  %2335 = vmatprep.mubr.bf16.mxu0 0
  %2336 = vmatmul.mubr.bf16.gmra.mrb[0].mxu0 %v2298
  %v2337 = vpop.f32.mrb[0].mxu0
  %v2338 = vadd.f32 0.0, %v2337
  %v2339 = vpop.f32.mrb[0].mxu0
  %v2340 = vpop.f32.mrb[0].mxu0
  %v2341 = vpop.f32.mrb[0].mxu0
  %2342 = vdwg.mxu0
  %v2343 = vpack.c.bf16 %v2338, %v2338
  %v2348 = vunpack.c.l.b16 %v1932
  %v2349 = vunpack.c.l.b16 %v1933
  %v2350 = vunpack.c.l.b16 %v1934
  %v2351 = vunpack.c.l.b16 %v1935
  %v2352 = vpack.c.b16 %v2349, %v2348
  %v2353 = vpack.c.b16 %v2351, %v2350
  %2354 = vrot.lane.b32.xlu0 %v2352, 96
  %v2355 = vpop.permute.xlu0 %2354
  %2356 = vrot.lane.b32.xlu0 %v2353, 96
  %v2357 = vpop.permute.xlu0 %2356
  %v2361 = vsel %vm190, %v2343, 0
  %2363 = vmatprep.subr.bf16.mxu0 0
  %2364 = vmatpush1.bf16.msra.mxu0 %v2355
  %2365 = vmatprep.subr.bf16.mxu0 0
  %2366 = vmatpush1.bf16.msra.mxu0 %v2357
  %2367 = vmatprep.subr.bf16.mxu0 0
  %2368 = vmatpush1.bf16.msra.mxu0 0
  %2369 = vmatprep.subr.bf16.mxu0 0
  %2370 = vmatpush1.bf16.msra.mxu0 0
  %2371 = vmatprep.subr.bf16.mxu0 0
  %2372 = vmatpush1.bf16.msra.mxu0 0
  %2373 = vmatprep.subr.bf16.mxu0 0
  %2374 = vmatpush1.bf16.msra.mxu0 0
  %2375 = vmatprep.subr.bf16.mxu0 0
  %2376 = vmatpush1.bf16.msra.mxu0 0
  %2377 = vmatprep.subr.bf16.mxu0 0
  %2378 = vmatpush1.bf16.msra.mxu0 0
  %2379 = vmatprep.subr.bf16.mxu0 0
  %2380 = vmatpush1.bf16.msra.mxu0 0
  %2381 = vmatprep.subr.bf16.mxu0 0
  %2382 = vmatpush1.bf16.msra.mxu0 0
  %2383 = vmatprep.subr.bf16.mxu0 0
  %2384 = vmatpush1.bf16.msra.mxu0 0
  %2385 = vmatprep.subr.bf16.mxu0 0
  %2386 = vmatpush1.bf16.msra.mxu0 0
  %2387 = vmatprep.subr.bf16.mxu0 0
  %2388 = vmatpush1.bf16.msra.mxu0 0
  %2389 = vmatprep.subr.bf16.mxu0 0
  %2390 = vmatpush1.bf16.msra.mxu0 0
  %2391 = vmatprep.subr.bf16.mxu0 0
  %2392 = vmatpush1.bf16.msra.mxu0 0
  %2393 = vmatprep.subr.bf16.mxu0 0
  %2394 = vmatpush1.bf16.msra.mxu0 0
  %2395 = vmatprep.mubr.bf16.mxu0 0
  %2396 = vmatmul.mubr.bf16.gmra.mrb[0].mxu0 %v2361
  %v2397 = vpop.f32.mrb[0].mxu0
  %v2398 = vadd.f32 0.0, %v2397
  %v2399 = vpop.f32.mrb[0].mxu0
  %v2400 = vpop.f32.mrb[0].mxu0
  %v2401 = vpop.f32.mrb[0].mxu0
  %2402 = vdwg.mxu0
  %2404 = vrot.lane.b32.xlu0 %v2398, 8
  %v2405 = vpop.permute.xlu0 %2404
  %v2407 = vadd.f32 %v2279, %v2405
  %2409 = vrot.lane.b32.xlu0 %v1939, 8
  %v2410 = vpop.permute.xlu0 %2409
  %v2412 = vadd.f32 %v2407, %v2410
  %v2413 = vtanh.pop %v2412
  %v2414 = vpack.c.bf16 %v2413, %v2413
  %2416 = vrot.lane.b32.xlu0 %v2414, 120
  %v2417 = vpop.permute.xlu0 %2416
  %2418 = vrot.lane.b32.xlu0 %v2352, 64
  %v2419 = vpop.permute.xlu0 %2418
  %2420 = vrot.lane.b32.xlu0 %v2353, 64
  %v2421 = vpop.permute.xlu0 %2420
  %v2425 = vsel %vm190, %v2417, 0
  %2427 = vmatprep.subr.bf16.mxu0 0
  %2428 = vmatpush1.bf16.msra.mxu0 %v2419
  %2429 = vmatprep.subr.bf16.mxu0 0
  %2430 = vmatpush1.bf16.msra.mxu0 %v2421
  %2431 = vmatprep.subr.bf16.mxu0 0
  %2432 = vmatpush1.bf16.msra.mxu0 0
  %2433 = vmatprep.subr.bf16.mxu0 0
  %2434 = vmatpush1.bf16.msra.mxu0 0
  %2435 = vmatprep.subr.bf16.mxu0 0
  %2436 = vmatpush1.bf16.msra.mxu0 0
  %2437 = vmatprep.subr.bf16.mxu0 0
  %2438 = vmatpush1.bf16.msra.mxu0 0
  %2439 = vmatprep.subr.bf16.mxu0 0
  %2440 = vmatpush1.bf16.msra.mxu0 0
  %2441 = vmatprep.subr.bf16.mxu0 0
  %2442 = vmatpush1.bf16.msra.mxu0 0
  %2443 = vmatprep.subr.bf16.mxu0 0
  %2444 = vmatpush1.bf16.msra.mxu0 0
  %2445 = vmatprep.subr.bf16.mxu0 0
  %2446 = vmatpush1.bf16.msra.mxu0 0
  %2447 = vmatprep.subr.bf16.mxu0 0
  %2448 = vmatpush1.bf16.msra.mxu0 0
  %2449 = vmatprep.subr.bf16.mxu0 0
  %2450 = vmatpush1.bf16.msra.mxu0 0
  %2451 = vmatprep.subr.bf16.mxu0 0
  %2452 = vmatpush1.bf16.msra.mxu0 0
  %2453 = vmatprep.subr.bf16.mxu0 0
  %2454 = vmatpush1.bf16.msra.mxu0 0
  %2455 = vmatprep.subr.bf16.mxu0 0
  %2456 = vmatpush1.bf16.msra.mxu0 0
  %2457 = vmatprep.subr.bf16.mxu0 0
  %2458 = vmatpush1.bf16.msra.mxu0 0
  %2459 = vmatprep.mubr.bf16.mxu0 0
  %2460 = vmatmul.mubr.bf16.gmra.mrb[0].mxu0 %v2425
  %v2461 = vpop.f32.mrb[0].mxu0
  %v2462 = vadd.f32 %v1940, %v2461
  %v2463 = vpop.f32.mrb[0].mxu0
  %v2464 = vpop.f32.mrb[0].mxu0
  %v2465 = vpop.f32.mrb[0].mxu0
  %2466 = vdwg.mxu0
  %vm2467 = vcmask 516096
  %v2468 = vsel %vm2467, %v2462, -inf
  %2469 = vmax.xlane.f32.xlu0 %v2468
  %v2470 = vpop.xlane.xlu0 %2469
  %v2471 = vsub.f32 %v2462, %v2470
  %v2472 = vmul.f32 %v2471, 1.442695
  %v2473 = vpow.pop %v2472
  %v2474 = vsel %vm2467, %v2473, 0.0
  %2475 = vadd.xlane.f32.xlu0 %v2474
  %v2476 = vpop.xlane.xlu0 %2475
  %v2477 = vrcp.pop %v2476
  %v2478 = vmul.f32 %v2473, %v2477
  %v2479 = vsel %vm2467, %v2478, -inf
  %2480 = vmax.xlane.f32.xlu0 %v2479
  %v2481 = vpop.xlane.xlu0 %2480
  %vm2482 = vcmp.ge.f32.partialorder %v2478, %v2481
  %v2483 = vsel %vm2482, %v53, 64
  %v2484 = vsel %vm2467, %v2483, 2147483647
  %v2485 = vand.u32 %v2484, 65535
  %v2486 = vshra.s32 %v2484, 16
  %v2487 = vcvt.s32.f32 %v2485
  %v2488 = vcvt.s32.f32 %v2486
  %2489 = vmin.xlane.f32.xlu0 %v2488
  %v2490 = vpop.xlane.xlu0 %2489
  %vm2491 = vcmp.eq.f32.partialorder %v2488, %v2490
  %v2492 = vsel %vm2491, %v2487, inf
  %2493 = vmin.xlane.f32.xlu0 %v2492
  %v2494 = vpop.xlane.xlu0 %2493
  %v2495 = vcvt.f32.s32 %v2494
  %v2496 = vcvt.f32.s32 %v2490
  %v2497 = vshll.u32 %v2496, 16
  %v2498 = vadd.s32 %v2497, %v2495
  %vm2499 = vcmask 0
  %2500 = vst.msk [vmem:[%s4] sm:$0x1] %vm2499, %v2498
  %2501 = vst.msk [vmem:[%s5] sm:$0x1] %vm2499, %v2481
  %vm2502 = vcmp.eq.s32.totalorder %v53, %v2498
  %v2503 = vsel %vm2502, 1, 0
  %v2504 = vcvt.s32.f32 %v2503
  %2506 = vrot.lane.b32.xlu0 %v2133, 32
  %v2507 = vpop.permute.xlu0 %2506
  %2510 = vrot.lane.b32.xlu0 %v2218, 64
  %v2511 = vpop.permute.xlu0 %2510
  %v2513 = vsel %vm112, %v2504, %v2507
  %v2514 = vsel %vm1974, %v2513, %v2511
  %v2515 = vpack.c.bf16 %v2514, %v2514
  %2516 = vmatprep.subr.bf16.mxu0 %v2026
  %2517 = vmatpush1.bf16.msra.mxu0 %v2025
  %2518 = vmatprep.subr.bf16.mxu0 %v2028
  %2519 = vmatpush1.bf16.msra.mxu0 %v2027
  %2520 = vmatprep.subr.bf16.mxu0 %v2030
  %2521 = vmatpush1.bf16.msra.mxu0 %v2029
  %2522 = vmatprep.subr.bf16.mxu0 %v2032
  %2523 = vmatpush1.bf16.msra.mxu0 %v2031
  %2524 = vmatprep.subr.bf16.mxu0 %v2034
  %2525 = vmatpush1.bf16.msra.mxu0 %v2033
  %2526 = vmatprep.subr.bf16.mxu0 %v2036
  %2527 = vmatpush1.bf16.msra.mxu0 %v2035
  %2528 = vmatprep.subr.bf16.mxu0 %v2038
  %2529 = vmatpush1.bf16.msra.mxu0 %v2037
  %2530 = vmatprep.subr.bf16.mxu0 %v2040
  %2531 = vmatpush1.bf16.msra.mxu0 %v2039
  %2532 = vmatprep.subr.bf16.mxu0 0
  %2533 = vmatpush1.bf16.msra.mxu0 0
  %2534 = vmatprep.subr.bf16.mxu0 0
  %2535 = vmatpush1.bf16.msra.mxu0 0
  %2536 = vmatprep.subr.bf16.mxu0 0
  %2537 = vmatpush1.bf16.msra.mxu0 0
  %2538 = vmatprep.subr.bf16.mxu0 0
  %2539 = vmatpush1.bf16.msra.mxu0 0
  %2540 = vmatprep.subr.bf16.mxu0 0
  %2541 = vmatpush1.bf16.msra.mxu0 0
  %2542 = vmatprep.subr.bf16.mxu0 0
  %2543 = vmatpush1.bf16.msra.mxu0 0
  %2544 = vmatprep.subr.bf16.mxu0 0
  %2545 = vmatpush1.bf16.msra.mxu0 0
  %2546 = vmatprep.subr.bf16.mxu0 0
  %2547 = vmatpush1.bf16.msra.mxu0 0
  %2548 = vmatprep.mubr.bf16.mxu0 0
  %2549 = vmatmul.mubr.bf16.gmra.mrb[0].mxu0 %v2515
  %v2550 = vpop.f32.mrb[0].mxu0
  %v2551 = vadd.f32 %v2061, %v2550
  %v2552 = vpop.f32.mrb[0].mxu0
  %v2553 = vadd.f32 %v2065, %v2552
  %v2554 = vpop.f32.mrb[0].mxu0
  %v2555 = vpop.f32.mrb[0].mxu0
  %2556 = vdwg.mxu0
  %v2557 = vxor.u32 %v2551, 2147483648
  %v2558 = vmul.f32 %v2557, 1.442695
  %v2559 = vpow.pop %v2558
  %v2560 = vadd.f32 %v2559, 1.0
  %v2561 = vrcp.pop %v2560
  %v2562 = vmul.f32 1.0, %v2561
  %2564 = vrot.lane.b32.xlu0 %v2551, 32
  %v2565 = vpop.permute.xlu0 %2564
  %v2567 = vmul.f32 %v2562, %v2565
  %2569 = vrot.lane.b32.xlu0 %v2567, 64
  %v2570 = vpop.permute.xlu0 %2569
  %v2572 = vadd.f32 %v2551, %v2570
  %v2573 = vtanh.pop %v2572
  %v2574 = vsub.f32 1.0, %v2562
  %2576 = vrot.lane.b32.xlu0 %v2573, 96
  %v2577 = vpop.permute.xlu0 %2576
  %v2579 = vmul.f32 %v2574, %v2577
  %v2580 = vmul.f32 %v2562, %v2133
  %v2581 = vadd.f32 %v2579, %v2580
  %v2582 = vpack.c.bf16 %v2581, %v2581
  %2584 = vrot.lane.b32.xlu0 %v2582, 96
  %v2585 = vpop.permute.xlu0 %2584
  %v2587 = vsel %vm190, %v2585, 0
  %2589 = vmatprep.subr.bf16.mxu0 0
  %2590 = vmatpush1.bf16.msra.mxu0 %v2146
  %2591 = vmatprep.subr.bf16.mxu0 0
  %2592 = vmatpush1.bf16.msra.mxu0 %v2147
  %2593 = vmatprep.subr.bf16.mxu0 0
  %2594 = vmatpush1.bf16.msra.mxu0 0
  %2595 = vmatprep.subr.bf16.mxu0 0
  %2596 = vmatpush1.bf16.msra.mxu0 0
  %2597 = vmatprep.subr.bf16.mxu0 0
  %2598 = vmatpush1.bf16.msra.mxu0 0
  %2599 = vmatprep.subr.bf16.mxu0 0
  %2600 = vmatpush1.bf16.msra.mxu0 0
  %2601 = vmatprep.subr.bf16.mxu0 0
  %2602 = vmatpush1.bf16.msra.mxu0 0
  %2603 = vmatprep.subr.bf16.mxu0 0
  %2604 = vmatpush1.bf16.msra.mxu0 0
  %2605 = vmatprep.subr.bf16.mxu0 0
  %2606 = vmatpush1.bf16.msra.mxu0 0
  %2607 = vmatprep.subr.bf16.mxu0 0
  %2608 = vmatpush1.bf16.msra.mxu0 0
  %2609 = vmatprep.subr.bf16.mxu0 0
  %2610 = vmatpush1.bf16.msra.mxu0 0
  %2611 = vmatprep.subr.bf16.mxu0 0
  %2612 = vmatpush1.bf16.msra.mxu0 0
  %2613 = vmatprep.subr.bf16.mxu0 0
  %2614 = vmatpush1.bf16.msra.mxu0 0
  %2615 = vmatprep.subr.bf16.mxu0 0
  %2616 = vmatpush1.bf16.msra.mxu0 0
  %2617 = vmatprep.subr.bf16.mxu0 0
  %2618 = vmatpush1.bf16.msra.mxu0 0
  %2619 = vmatprep.subr.bf16.mxu0 0
  %2620 = vmatpush1.bf16.msra.mxu0 0
  %2621 = vmatprep.mubr.bf16.mxu0 0
  %2622 = vmatmul.mubr.bf16.gmra.mrb[0].mxu0 %v2587
  %v2623 = vpop.f32.mrb[0].mxu0
  %v2624 = vadd.f32 %v1938, %v2623
  %v2625 = vpop.f32.mrb[0].mxu0
  %v2626 = vpop.f32.mrb[0].mxu0
  %v2627 = vpop.f32.mrb[0].mxu0
  %2628 = vdwg.mxu0
  %v2629 = vadd.f32 %v2624, %v2553
  %v2630 = vxor.u32 %v2629, 2147483648
  %v2631 = vmul.f32 %v2630, 1.442695
  %v2632 = vpow.pop %v2631
  %v2633 = vadd.f32 %v2632, 1.0
  %v2634 = vrcp.pop %v2633
  %v2635 = vmul.f32 1.0, %v2634
  %2637 = vrot.lane.b32.xlu0 %v2553, 64
  %v2638 = vpop.permute.xlu0 %2637
  %v2640 = vmul.f32 %v2635, %v2638
  %2642 = vrot.lane.b32.xlu0 %v2640, 64
  %v2643 = vpop.permute.xlu0 %2642
  %v2645 = vadd.f32 %v2624, %v2643
  %v2646 = vtanh.pop %v2645
  %v2647 = vsub.f32 1.0, %v2635
  %2649 = vrot.lane.b32.xlu0 %v2646, 96
  %v2650 = vpop.permute.xlu0 %2649
  %v2652 = vmul.f32 %v2647, %v2650
  %v2653 = vmul.f32 %v2635, %v2218
  %v2654 = vadd.f32 %v2652, %v2653
  %v2655 = vpack.c.bf16 %v2654, %v2654
  %2657 = vrot.lane.b32.xlu0 %v2655, 96
  %v2658 = vpop.permute.xlu0 %2657
  %v2660 = vsel %vm190, %v2658, 0
  %2662 = vmatprep.subr.bf16.mxu0 0
  %2663 = vmatpush1.bf16.xpose.msra.mxu0 %v2236
  %2664 = vmatprep.subr.bf16.mxu0 0
  %2665 = vmatpush1.bf16.xpose.msra.mxu0 %v2239
  %2666 = vmatprep.subr.bf16.mxu0 0
  %2667 = vmatpush1.bf16.xpose.msra.mxu0 %v2242
  %2668 = vmatprep.subr.bf16.mxu0 0
  %2669 = vmatpush1.bf16.xpose.msra.mxu0 0
  %2670 = vmatprep.subr.bf16.mxu0 0
  %2671 = vmatpush1.bf16.xpose.msra.mxu0 0
  %2672 = vmatprep.subr.bf16.mxu0 0
  %2673 = vmatpush1.bf16.xpose.msra.mxu0 0
  %2674 = vmatprep.subr.bf16.mxu0 0
  %2675 = vmatpush1.bf16.xpose.msra.mxu0 0
  %2676 = vmatprep.subr.bf16.mxu0 0
  %2677 = vmatpush1.bf16.xpose.msra.mxu0 0
  %2678 = vmatprep.subr.bf16.mxu0 0
  %2679 = vmatpush1.bf16.xpose.msra.mxu0 0
  %2680 = vmatprep.subr.bf16.mxu0 0
  %2681 = vmatpush1.bf16.xpose.msra.mxu0 0
  %2682 = vmatprep.subr.bf16.mxu0 0
  %2683 = vmatpush1.bf16.xpose.msra.mxu0 0
  %2684 = vmatprep.subr.bf16.mxu0 0
  %2685 = vmatpush1.bf16.xpose.msra.mxu0 0
  %2686 = vmatprep.subr.bf16.mxu0 0
  %2687 = vmatpush1.bf16.xpose.msra.mxu0 0
  %2688 = vmatprep.subr.bf16.mxu0 0
  %2689 = vmatpush1.bf16.xpose.msra.mxu0 0
  %2690 = vmatprep.subr.bf16.mxu0 0
  %2691 = vmatpush1.bf16.xpose.msra.mxu0 0
  %2692 = vmatprep.subr.bf16.mxu0 0
  %2693 = vmatpush1.bf16.xpose.msra.mxu0 0
  %2694 = vmatprep.mubr.bf16.mxu0 0
  %2695 = vmatmul.mubr.bf16.gmra.mrb[0].mxu0 %v2660
  %v2696 = vpop.f32.mrb[0].mxu0
  %v2697 = vadd.f32 0.0, %v2696
  %v2698 = vpop.f32.mrb[0].mxu0
  %v2699 = vpop.f32.mrb[0].mxu0
  %v2700 = vpop.f32.mrb[0].mxu0
  %2701 = vdwg.mxu0
  %v2702 = vmul.f32 %v2697, 1.442695
  %v2703 = vpow.pop %v2702
  %v2704 = vsel %vm2286, %v2703, 0.0
  %2705 = vadd.xlane.f32.xlu0 %v2704
  %v2706 = vpop.xlane.xlu0 %2705
  %v2707 = vrcp.pop %v2706
  %v2708 = vmul.f32 %v2703, %v2707
  %v2709 = vpack.c.bf16 %v2708, %v2708
  %v2711 = vsel %vm2296, %v2709, 0
  %2713 = vmatprep.subr.bf16.mxu0 0
  %2714 = vmatpush1.bf16.msra.mxu0 %v2301
  %2715 = vmatprep.subr.bf16.mxu0 0
  %2716 = vmatpush1.bf16.msra.mxu0 0
  %2717 = vmatprep.subr.bf16.mxu0 0
  %2718 = vmatpush1.bf16.msra.mxu0 0
  %2719 = vmatprep.subr.bf16.mxu0 0
  %2720 = vmatpush1.bf16.msra.mxu0 0
  %2721 = vmatprep.subr.bf16.mxu0 0
  %2722 = vmatpush1.bf16.msra.mxu0 0
  %2723 = vmatprep.subr.bf16.mxu0 0
  %2724 = vmatpush1.bf16.msra.mxu0 0
  %2725 = vmatprep.subr.bf16.mxu0 0
  %2726 = vmatpush1.bf16.msra.mxu0 0
  %2727 = vmatprep.subr.bf16.mxu0 0
  %2728 = vmatpush1.bf16.msra.mxu0 0
  %2729 = vmatprep.subr.bf16.mxu0 0
  %2730 = vmatpush1.bf16.msra.mxu0 0
  %2731 = vmatprep.subr.bf16.mxu0 0
  %2732 = vmatpush1.bf16.msra.mxu0 0
  %2733 = vmatprep.subr.bf16.mxu0 0
  %2734 = vmatpush1.bf16.msra.mxu0 0
  %2735 = vmatprep.subr.bf16.mxu0 0
  %2736 = vmatpush1.bf16.msra.mxu0 0
  %2737 = vmatprep.subr.bf16.mxu0 0
  %2738 = vmatpush1.bf16.msra.mxu0 0
  %2739 = vmatprep.subr.bf16.mxu0 0
  %2740 = vmatpush1.bf16.msra.mxu0 0
  %2741 = vmatprep.subr.bf16.mxu0 0
  %2742 = vmatpush1.bf16.msra.mxu0 0
  %2743 = vmatprep.subr.bf16.mxu0 0
  %2744 = vmatpush1.bf16.msra.mxu0 0
  %2745 = vmatprep.mubr.bf16.mxu0 0
  %2746 = vmatmul.mubr.bf16.gmra.mrb[0].mxu0 %v2711
  %v2747 = vpop.f32.mrb[0].mxu0
  %v2748 = vadd.f32 0.0, %v2747
  %v2749 = vpop.f32.mrb[0].mxu0
  %v2750 = vpop.f32.mrb[0].mxu0
  %v2751 = vpop.f32.mrb[0].mxu0
  %2752 = vdwg.mxu0
  %v2753 = vpack.c.bf16 %v2748, %v2748
  %v2755 = vsel %vm190, %v2753, 0
  %2757 = vmatprep.subr.bf16.mxu0 0
  %2758 = vmatpush1.bf16.msra.mxu0 %v2355
  %2759 = vmatprep.subr.bf16.mxu0 0
  %2760 = vmatpush1.bf16.msra.mxu0 %v2357
  %2761 = vmatprep.subr.bf16.mxu0 0
  %2762 = vmatpush1.bf16.msra.mxu0 0
  %2763 = vmatprep.subr.bf16.mxu0 0
  %2764 = vmatpush1.bf16.msra.mxu0 0
  %2765 = vmatprep.subr.bf16.mxu0 0
  %2766 = vmatpush1.bf16.msra.mxu0 0
  %2767 = vmatprep.subr.bf16.mxu0 0
  %2768 = vmatpush1.bf16.msra.mxu0 0
  %2769 = vmatprep.subr.bf16.mxu0 0
  %2770 = vmatpush1.bf16.msra.mxu0 0
  %2771 = vmatprep.subr.bf16.mxu0 0
  %2772 = vmatpush1.bf16.msra.mxu0 0
  %2773 = vmatprep.subr.bf16.mxu0 0
  %2774 = vmatpush1.bf16.msra.mxu0 0
  %2775 = vmatprep.subr.bf16.mxu0 0
  %2776 = vmatpush1.bf16.msra.mxu0 0
  %2777 = vmatprep.subr.bf16.mxu0 0
  %2778 = vmatpush1.bf16.msra.mxu0 0
  %2779 = vmatprep.subr.bf16.mxu0 0
  %2780 = vmatpush1.bf16.msra.mxu0 0
  %2781 = vmatprep.subr.bf16.mxu0 0
  %2782 = vmatpush1.bf16.msra.mxu0 0
  %2783 = vmatprep.subr.bf16.mxu0 0
  %2784 = vmatpush1.bf16.msra.mxu0 0
  %2785 = vmatprep.subr.bf16.mxu0 0
  %2786 = vmatpush1.bf16.msra.mxu0 0
  %2787 = vmatprep.subr.bf16.mxu0 0
  %2788 = vmatpush1.bf16.msra.mxu0 0
  %2789 = vmatprep.mubr.bf16.mxu0 0
  %2790 = vmatmul.mubr.bf16.gmra.mrb[0].mxu0 %v2755
  %v2791 = vpop.f32.mrb[0].mxu0
  %v2792 = vadd.f32 0.0, %v2791
  %v2793 = vpop.f32.mrb[0].mxu0
  %v2794 = vpop.f32.mrb[0].mxu0
  %v2795 = vpop.f32.mrb[0].mxu0
  %2796 = vdwg.mxu0
  %2798 = vrot.lane.b32.xlu0 %v2792, 8
  %v2799 = vpop.permute.xlu0 %2798
  %v2801 = vadd.f32 %v2697, %v2799
  %v2802 = vadd.f32 %v2801, %v2410
  %v2803 = vtanh.pop %v2802
  %v2804 = vpack.c.bf16 %v2803, %v2803
  %2806 = vrot.lane.b32.xlu0 %v2804, 120
  %v2807 = vpop.permute.xlu0 %2806
  %v2809 = vsel %vm190, %v2807, 0
  %2811 = vmatprep.subr.bf16.mxu0 0
  %2812 = vmatpush1.bf16.msra.mxu0 %v2419
  %2813 = vmatprep.subr.bf16.mxu0 0
  %2814 = vmatpush1.bf16.msra.mxu0 %v2421
  %2815 = vmatprep.subr.bf16.mxu0 0
  %2816 = vmatpush1.bf16.msra.mxu0 0
  %2817 = vmatprep.subr.bf16.mxu0 0
  %2818 = vmatpush1.bf16.msra.mxu0 0
  %2819 = vmatprep.subr.bf16.mxu0 0
  %2820 = vmatpush1.bf16.msra.mxu0 0
  %2821 = vmatprep.subr.bf16.mxu0 0
  %2822 = vmatpush1.bf16.msra.mxu0 0
  %2823 = vmatprep.subr.bf16.mxu0 0
  %2824 = vmatpush1.bf16.msra.mxu0 0
  %2825 = vmatprep.subr.bf16.mxu0 0
  %2826 = vmatpush1.bf16.msra.mxu0 0
  %2827 = vmatprep.subr.bf16.mxu0 0
  %2828 = vmatpush1.bf16.msra.mxu0 0
  %2829 = vmatprep.subr.bf16.mxu0 0
  %2830 = vmatpush1.bf16.msra.mxu0 0
  %2831 = vmatprep.subr.bf16.mxu0 0
  %2832 = vmatpush1.bf16.msra.mxu0 0
  %2833 = vmatprep.subr.bf16.mxu0 0
  %2834 = vmatpush1.bf16.msra.mxu0 0
  %2835 = vmatprep.subr.bf16.mxu0 0
  %2836 = vmatpush1.bf16.msra.mxu0 0
  %2837 = vmatprep.subr.bf16.mxu0 0
  %2838 = vmatpush1.bf16.msra.mxu0 0
  %2839 = vmatprep.subr.bf16.mxu0 0
  %2840 = vmatpush1.bf16.msra.mxu0 0
  %2841 = vmatprep.subr.bf16.mxu0 0
  %2842 = vmatpush1.bf16.msra.mxu0 0
  %2843 = vmatprep.mubr.bf16.mxu0 0
  %2844 = vmatmul.mubr.bf16.gmra.mrb[0].mxu0 %v2809
  %v2845 = vpop.f32.mrb[0].mxu0
  %v2846 = vadd.f32 %v1940, %v2845
  %v2847 = vpop.f32.mrb[0].mxu0
  %v2848 = vpop.f32.mrb[0].mxu0
  %v2849 = vpop.f32.mrb[0].mxu0
  %2850 = vdwg.mxu0
  %v2851 = vsel %vm2467, %v2846, -inf
  %2852 = vmax.xlane.f32.xlu0 %v2851
  %v2853 = vpop.xlane.xlu0 %2852
  %v2854 = vsub.f32 %v2846, %v2853
  %v2855 = vmul.f32 %v2854, 1.442695
  %v2856 = vpow.pop %v2855
  %v2857 = vsel %vm2467, %v2856, 0.0
  %2858 = vadd.xlane.f32.xlu0 %v2857
  %v2859 = vpop.xlane.xlu0 %2858
  %v2860 = vrcp.pop %v2859
  %v2861 = vmul.f32 %v2856, %v2860
  %v2862 = vsel %vm2467, %v2861, -inf
  %2863 = vmax.xlane.f32.xlu0 %v2862
  %v2864 = vpop.xlane.xlu0 %2863
  %vm2865 = vcmp.ge.f32.partialorder %v2861, %v2864
  %v2866 = vsel %vm2865, %v53, 64
  %v2867 = vsel %vm2467, %v2866, 2147483647
  %v2868 = vand.u32 %v2867, 65535
  %v2869 = vshra.s32 %v2867, 16
  %v2870 = vcvt.s32.f32 %v2868
  %v2871 = vcvt.s32.f32 %v2869
  %2872 = vmin.xlane.f32.xlu0 %v2871
  %v2873 = vpop.xlane.xlu0 %2872
  %vm2874 = vcmp.eq.f32.partialorder %v2871, %v2873
  %v2875 = vsel %vm2874, %v2870, inf
  %2876 = vmin.xlane.f32.xlu0 %v2875
  %v2877 = vpop.xlane.xlu0 %2876
  %v2878 = vcvt.f32.s32 %v2877
  %v2879 = vcvt.f32.s32 %v2873
  %v2880 = vshll.u32 %v2879, 16
  %v2881 = vadd.s32 %v2880, %v2878
  %2882 = vst.msk [vmem:[%s4 + $0x1] sm:$0x1] %vm2499, %v2881
  %2883 = vst.msk [vmem:[%s5 + $0x1] sm:$0x1] %vm2499, %v2864
  %vm2884 = vcmp.eq.s32.totalorder %v53, %v2881
  %v2885 = vsel %vm2884, 1, 0
  %v2886 = vcvt.s32.f32 %v2885
  %2888 = vrot.lane.b32.xlu0 %v2581, 32
  %v2889 = vpop.permute.xlu0 %2888
  %2892 = vrot.lane.b32.xlu0 %v2654, 64
  %v2893 = vpop.permute.xlu0 %2892
  %v2895 = vsel %vm112, %v2886, %v2889
  %v2896 = vsel %vm1974, %v2895, %v2893
  %v2897 = vpack.c.bf16 %v2896, %v2896
  %2898 = vmatprep.subr.bf16.mxu0 %v2026
  %2899 = vmatpush1.bf16.msra.mxu0 %v2025
  %2900 = vmatprep.subr.bf16.mxu0 %v2028
  %2901 = vmatpush1.bf16.msra.mxu0 %v2027
  %2902 = vmatprep.subr.bf16.mxu0 %v2030
  %2903 = vmatpush1.bf16.msra.mxu0 %v2029
  %2904 = vmatprep.subr.bf16.mxu0 %v2032
  %2905 = vmatpush1.bf16.msra.mxu0 %v2031
  %2906 = vmatprep.subr.bf16.mxu0 %v2034
  %2907 = vmatpush1.bf16.msra.mxu0 %v2033
  %2908 = vmatprep.subr.bf16.mxu0 %v2036
  %2909 = vmatpush1.bf16.msra.mxu0 %v2035
  %2910 = vmatprep.subr.bf16.mxu0 %v2038
  %2911 = vmatpush1.bf16.msra.mxu0 %v2037
  %2912 = vmatprep.subr.bf16.mxu0 %v2040
  %2913 = vmatpush1.bf16.msra.mxu0 %v2039
  %2914 = vmatprep.subr.bf16.mxu0 0
  %2915 = vmatpush1.bf16.msra.mxu0 0
  %2916 = vmatprep.subr.bf16.mxu0 0
  %2917 = vmatpush1.bf16.msra.mxu0 0
  %2918 = vmatprep.subr.bf16.mxu0 0
  %2919 = vmatpush1.bf16.msra.mxu0 0
  %2920 = vmatprep.subr.bf16.mxu0 0
  %2921 = vmatpush1.bf16.msra.mxu0 0
  %2922 = vmatprep.subr.bf16.mxu0 0
  %2923 = vmatpush1.bf16.msra.mxu0 0
  %2924 = vmatprep.subr.bf16.mxu0 0
  %2925 = vmatpush1.bf16.msra.mxu0 0
  %2926 = vmatprep.subr.bf16.mxu0 0
  %2927 = vmatpush1.bf16.msra.mxu0 0
  %2928 = vmatprep.subr.bf16.mxu0 0
  %2929 = vmatpush1.bf16.msra.mxu0 0
  %2930 = vmatprep.mubr.bf16.mxu0 0
  %2931 = vmatmul.mubr.bf16.gmra.mrb[0].mxu0 %v2897
  %v2932 = vpop.f32.mrb[0].mxu0
  %v2933 = vadd.f32 %v2061, %v2932
  %v2934 = vpop.f32.mrb[0].mxu0
  %v2935 = vadd.f32 %v2065, %v2934
  %v2936 = vpop.f32.mrb[0].mxu0
  %v2937 = vpop.f32.mrb[0].mxu0
  %2938 = vdwg.mxu0
  %v2939 = vxor.u32 %v2933, 2147483648
  %v2940 = vmul.f32 %v2939, 1.442695
  %v2941 = vpow.pop %v2940
  %v2942 = vadd.f32 %v2941, 1.0
  %v2943 = vrcp.pop %v2942
  %v2944 = vmul.f32 1.0, %v2943
  %2946 = vrot.lane.b32.xlu0 %v2933, 32
  %v2947 = vpop.permute.xlu0 %2946
  %v2949 = vmul.f32 %v2944, %v2947
  %2951 = vrot.lane.b32.xlu0 %v2949, 64
  %v2952 = vpop.permute.xlu0 %2951
  %v2954 = vadd.f32 %v2933, %v2952
  %v2955 = vtanh.pop %v2954
  %v2956 = vsub.f32 1.0, %v2944
  %2958 = vrot.lane.b32.xlu0 %v2955, 96
  %v2959 = vpop.permute.xlu0 %2958
  %v2961 = vmul.f32 %v2956, %v2959
  %v2962 = vmul.f32 %v2944, %v2581
  %v2963 = vadd.f32 %v2961, %v2962
  %v2964 = vpack.c.bf16 %v2963, %v2963
  %2966 = vrot.lane.b32.xlu0 %v2964, 96
  %v2967 = vpop.permute.xlu0 %2966
  %v2969 = vsel %vm190, %v2967, 0
  %2971 = vmatprep.subr.bf16.mxu0 0
  %2972 = vmatpush1.bf16.msra.mxu0 %v2146
  %2973 = vmatprep.subr.bf16.mxu0 0
  %2974 = vmatpush1.bf16.msra.mxu0 %v2147
  %2975 = vmatprep.subr.bf16.mxu0 0
  %2976 = vmatpush1.bf16.msra.mxu0 0
  %2977 = vmatprep.subr.bf16.mxu0 0
  %2978 = vmatpush1.bf16.msra.mxu0 0
  %2979 = vmatprep.subr.bf16.mxu0 0
  %2980 = vmatpush1.bf16.msra.mxu0 0
  %2981 = vmatprep.subr.bf16.mxu0 0
  %2982 = vmatpush1.bf16.msra.mxu0 0
  %2983 = vmatprep.subr.bf16.mxu0 0
  %2984 = vmatpush1.bf16.msra.mxu0 0
  %2985 = vmatprep.subr.bf16.mxu0 0
  %2986 = vmatpush1.bf16.msra.mxu0 0
  %2987 = vmatprep.subr.bf16.mxu0 0
  %2988 = vmatpush1.bf16.msra.mxu0 0
  %2989 = vmatprep.subr.bf16.mxu0 0
  %2990 = vmatpush1.bf16.msra.mxu0 0
  %2991 = vmatprep.subr.bf16.mxu0 0
  %2992 = vmatpush1.bf16.msra.mxu0 0
  %2993 = vmatprep.subr.bf16.mxu0 0
  %2994 = vmatpush1.bf16.msra.mxu0 0
  %2995 = vmatprep.subr.bf16.mxu0 0
  %2996 = vmatpush1.bf16.msra.mxu0 0
  %2997 = vmatprep.subr.bf16.mxu0 0
  %2998 = vmatpush1.bf16.msra.mxu0 0
  %2999 = vmatprep.subr.bf16.mxu0 0
  %3000 = vmatpush1.bf16.msra.mxu0 0
  %3001 = vmatprep.subr.bf16.mxu0 0
  %3002 = vmatpush1.bf16.msra.mxu0 0
  %3003 = vmatprep.mubr.bf16.mxu0 0
  %3004 = vmatmul.mubr.bf16.gmra.mrb[0].mxu0 %v2969
  %v3005 = vpop.f32.mrb[0].mxu0
  %v3006 = vadd.f32 %v1938, %v3005
  %v3007 = vpop.f32.mrb[0].mxu0
  %v3008 = vpop.f32.mrb[0].mxu0
  %v3009 = vpop.f32.mrb[0].mxu0
  %3010 = vdwg.mxu0
  %v3011 = vadd.f32 %v3006, %v2935
  %v3012 = vxor.u32 %v3011, 2147483648
  %v3013 = vmul.f32 %v3012, 1.442695
  %v3014 = vpow.pop %v3013
  %v3015 = vadd.f32 %v3014, 1.0
  %v3016 = vrcp.pop %v3015
  %v3017 = vmul.f32 1.0, %v3016
  %3019 = vrot.lane.b32.xlu0 %v2935, 64
  %v3020 = vpop.permute.xlu0 %3019
  %v3022 = vmul.f32 %v3017, %v3020
  %3024 = vrot.lane.b32.xlu0 %v3022, 64
  %v3025 = vpop.permute.xlu0 %3024
  %v3027 = vadd.f32 %v3006, %v3025
  %v3028 = vtanh.pop %v3027
  %v3029 = vsub.f32 1.0, %v3017
  %3031 = vrot.lane.b32.xlu0 %v3028, 96
  %v3032 = vpop.permute.xlu0 %3031
  %v3034 = vmul.f32 %v3029, %v3032
  %v3035 = vmul.f32 %v3017, %v2654
  %v3036 = vadd.f32 %v3034, %v3035
  %v3037 = vpack.c.bf16 %v3036, %v3036
  %3039 = vrot.lane.b32.xlu0 %v3037, 96
  %v3040 = vpop.permute.xlu0 %3039
  %v3042 = vsel %vm190, %v3040, 0
  %3044 = vmatprep.subr.bf16.mxu0 0
  %3045 = vmatpush1.bf16.xpose.msra.mxu0 %v2236
  %3046 = vmatprep.subr.bf16.mxu0 0
  %3047 = vmatpush1.bf16.xpose.msra.mxu0 %v2239
  %3048 = vmatprep.subr.bf16.mxu0 0
  %3049 = vmatpush1.bf16.xpose.msra.mxu0 %v2242
  %3050 = vmatprep.subr.bf16.mxu0 0
  %3051 = vmatpush1.bf16.xpose.msra.mxu0 0
  %3052 = vmatprep.subr.bf16.mxu0 0
  %3053 = vmatpush1.bf16.xpose.msra.mxu0 0
  %3054 = vmatprep.subr.bf16.mxu0 0
  %3055 = vmatpush1.bf16.xpose.msra.mxu0 0
  %3056 = vmatprep.subr.bf16.mxu0 0
  %3057 = vmatpush1.bf16.xpose.msra.mxu0 0
  %3058 = vmatprep.subr.bf16.mxu0 0
  %3059 = vmatpush1.bf16.xpose.msra.mxu0 0
  %3060 = vmatprep.subr.bf16.mxu0 0
  %3061 = vmatpush1.bf16.xpose.msra.mxu0 0
  %3062 = vmatprep.subr.bf16.mxu0 0
  %3063 = vmatpush1.bf16.xpose.msra.mxu0 0
  %3064 = vmatprep.subr.bf16.mxu0 0
  %3065 = vmatpush1.bf16.xpose.msra.mxu0 0
  %3066 = vmatprep.subr.bf16.mxu0 0
  %3067 = vmatpush1.bf16.xpose.msra.mxu0 0
  %3068 = vmatprep.subr.bf16.mxu0 0
  %3069 = vmatpush1.bf16.xpose.msra.mxu0 0
  %3070 = vmatprep.subr.bf16.mxu0 0
  %3071 = vmatpush1.bf16.xpose.msra.mxu0 0
  %3072 = vmatprep.subr.bf16.mxu0 0
  %3073 = vmatpush1.bf16.xpose.msra.mxu0 0
  %3074 = vmatprep.subr.bf16.mxu0 0
  %3075 = vmatpush1.bf16.xpose.msra.mxu0 0
  %3076 = vmatprep.mubr.bf16.mxu0 0
  %3077 = vmatmul.mubr.bf16.gmra.mrb[0].mxu0 %v3042
  %v3078 = vpop.f32.mrb[0].mxu0
  %v3079 = vadd.f32 0.0, %v3078
  %v3080 = vpop.f32.mrb[0].mxu0
  %v3081 = vpop.f32.mrb[0].mxu0
  %v3082 = vpop.f32.mrb[0].mxu0
  %3083 = vdwg.mxu0
  %v3084 = vmul.f32 %v3079, 1.442695
  %v3085 = vpow.pop %v3084
  %v3086 = vsel %vm2286, %v3085, 0.0
  %3087 = vadd.xlane.f32.xlu0 %v3086
  %v3088 = vpop.xlane.xlu0 %3087
  %v3089 = vrcp.pop %v3088
  %v3090 = vmul.f32 %v3085, %v3089
  %v3091 = vpack.c.bf16 %v3090, %v3090
  %v3093 = vsel %vm2296, %v3091, 0
  %3095 = vmatprep.subr.bf16.mxu0 0
  %3096 = vmatpush1.bf16.msra.mxu0 %v2301
  %3097 = vmatprep.subr.bf16.mxu0 0
  %3098 = vmatpush1.bf16.msra.mxu0 0
  %3099 = vmatprep.subr.bf16.mxu0 0
  %3100 = vmatpush1.bf16.msra.mxu0 0
  %3101 = vmatprep.subr.bf16.mxu0 0
  %3102 = vmatpush1.bf16.msra.mxu0 0
  %3103 = vmatprep.subr.bf16.mxu0 0
  %3104 = vmatpush1.bf16.msra.mxu0 0
  %3105 = vmatprep.subr.bf16.mxu0 0
  %3106 = vmatpush1.bf16.msra.mxu0 0
  %3107 = vmatprep.subr.bf16.mxu0 0
  %3108 = vmatpush1.bf16.msra.mxu0 0
  %3109 = vmatprep.subr.bf16.mxu0 0
  %3110 = vmatpush1.bf16.msra.mxu0 0
  %3111 = vmatprep.subr.bf16.mxu0 0
  %3112 = vmatpush1.bf16.msra.mxu0 0
  %3113 = vmatprep.subr.bf16.mxu0 0
  %3114 = vmatpush1.bf16.msra.mxu0 0
  %3115 = vmatprep.subr.bf16.mxu0 0
  %3116 = vmatpush1.bf16.msra.mxu0 0
  %3117 = vmatprep.subr.bf16.mxu0 0
  %3118 = vmatpush1.bf16.msra.mxu0 0
  %3119 = vmatprep.subr.bf16.mxu0 0
  %3120 = vmatpush1.bf16.msra.mxu0 0
  %3121 = vmatprep.subr.bf16.mxu0 0
  %3122 = vmatpush1.bf16.msra.mxu0 0
  %3123 = vmatprep.subr.bf16.mxu0 0
  %3124 = vmatpush1.bf16.msra.mxu0 0
  %3125 = vmatprep.subr.bf16.mxu0 0
  %3126 = vmatpush1.bf16.msra.mxu0 0
  %3127 = vmatprep.mubr.bf16.mxu0 0
  %3128 = vmatmul.mubr.bf16.gmra.mrb[0].mxu0 %v3093
  %v3129 = vpop.f32.mrb[0].mxu0
  %v3130 = vadd.f32 0.0, %v3129
  %v3131 = vpop.f32.mrb[0].mxu0
  %v3132 = vpop.f32.mrb[0].mxu0
  %v3133 = vpop.f32.mrb[0].mxu0
  %3134 = vdwg.mxu0
  %v3135 = vpack.c.bf16 %v3130, %v3130
  %v3137 = vsel %vm190, %v3135, 0
  %3139 = vmatprep.subr.bf16.mxu0 0
  %3140 = vmatpush1.bf16.msra.mxu0 %v2355
  %3141 = vmatprep.subr.bf16.mxu0 0
  %3142 = vmatpush1.bf16.msra.mxu0 %v2357
  %3143 = vmatprep.subr.bf16.mxu0 0
  %3144 = vmatpush1.bf16.msra.mxu0 0
  %3145 = vmatprep.subr.bf16.mxu0 0
  %3146 = vmatpush1.bf16.msra.mxu0 0
  %3147 = vmatprep.subr.bf16.mxu0 0
  %3148 = vmatpush1.bf16.msra.mxu0 0
  %3149 = vmatprep.subr.bf16.mxu0 0
  %3150 = vmatpush1.bf16.msra.mxu0 0
  %3151 = vmatprep.subr.bf16.mxu0 0
  %3152 = vmatpush1.bf16.msra.mxu0 0
  %3153 = vmatprep.subr.bf16.mxu0 0
  %3154 = vmatpush1.bf16.msra.mxu0 0
  %3155 = vmatprep.subr.bf16.mxu0 0
  %3156 = vmatpush1.bf16.msra.mxu0 0
  %3157 = vmatprep.subr.bf16.mxu0 0
  %3158 = vmatpush1.bf16.msra.mxu0 0
  %3159 = vmatprep.subr.bf16.mxu0 0
  %3160 = vmatpush1.bf16.msra.mxu0 0
  %3161 = vmatprep.subr.bf16.mxu0 0
  %3162 = vmatpush1.bf16.msra.mxu0 0
  %3163 = vmatprep.subr.bf16.mxu0 0
  %3164 = vmatpush1.bf16.msra.mxu0 0
  %3165 = vmatprep.subr.bf16.mxu0 0
  %3166 = vmatpush1.bf16.msra.mxu0 0
  %3167 = vmatprep.subr.bf16.mxu0 0
  %3168 = vmatpush1.bf16.msra.mxu0 0
  %3169 = vmatprep.subr.bf16.mxu0 0
  %3170 = vmatpush1.bf16.msra.mxu0 0
  %3171 = vmatprep.mubr.bf16.mxu0 0
  %3172 = vmatmul.mubr.bf16.gmra.mrb[0].mxu0 %v3137
  %v3173 = vpop.f32.mrb[0].mxu0
  %v3174 = vadd.f32 0.0, %v3173
  %v3175 = vpop.f32.mrb[0].mxu0
  %v3176 = vpop.f32.mrb[0].mxu0
  %v3177 = vpop.f32.mrb[0].mxu0
  %3178 = vdwg.mxu0
  %3180 = vrot.lane.b32.xlu0 %v3174, 8
  %v3181 = vpop.permute.xlu0 %3180
  %v3183 = vadd.f32 %v3079, %v3181
  %v3184 = vadd.f32 %v3183, %v2410
  %v3185 = vtanh.pop %v3184
  %v3186 = vpack.c.bf16 %v3185, %v3185
  %3188 = vrot.lane.b32.xlu0 %v3186, 120
  %v3189 = vpop.permute.xlu0 %3188
  %v3191 = vsel %vm190, %v3189, 0
  %3193 = vmatprep.subr.bf16.mxu0 0
  %3194 = vmatpush1.bf16.msra.mxu0 %v2419
  %3195 = vmatprep.subr.bf16.mxu0 0
  %3196 = vmatpush1.bf16.msra.mxu0 %v2421
  %3197 = vmatprep.subr.bf16.mxu0 0
  %3198 = vmatpush1.bf16.msra.mxu0 0
  %3199 = vmatprep.subr.bf16.mxu0 0
  %3200 = vmatpush1.bf16.msra.mxu0 0
  %3201 = vmatprep.subr.bf16.mxu0 0
  %3202 = vmatpush1.bf16.msra.mxu0 0
  %3203 = vmatprep.subr.bf16.mxu0 0
  %3204 = vmatpush1.bf16.msra.mxu0 0
  %3205 = vmatprep.subr.bf16.mxu0 0
  %3206 = vmatpush1.bf16.msra.mxu0 0
  %3207 = vmatprep.subr.bf16.mxu0 0
  %3208 = vmatpush1.bf16.msra.mxu0 0
  %3209 = vmatprep.subr.bf16.mxu0 0
  %3210 = vmatpush1.bf16.msra.mxu0 0
  %3211 = vmatprep.subr.bf16.mxu0 0
  %3212 = vmatpush1.bf16.msra.mxu0 0
  %3213 = vmatprep.subr.bf16.mxu0 0
  %3214 = vmatpush1.bf16.msra.mxu0 0
  %3215 = vmatprep.subr.bf16.mxu0 0
  %3216 = vmatpush1.bf16.msra.mxu0 0
  %3217 = vmatprep.subr.bf16.mxu0 0
  %3218 = vmatpush1.bf16.msra.mxu0 0
  %3219 = vmatprep.subr.bf16.mxu0 0
  %3220 = vmatpush1.bf16.msra.mxu0 0
  %3221 = vmatprep.subr.bf16.mxu0 0
  %3222 = vmatpush1.bf16.msra.mxu0 0
  %3223 = vmatprep.subr.bf16.mxu0 0
  %3224 = vmatpush1.bf16.msra.mxu0 0
  %3225 = vmatprep.mubr.bf16.mxu0 0
  %3226 = vmatmul.mubr.bf16.gmra.mrb[0].mxu0 %v3191
  %v3227 = vpop.f32.mrb[0].mxu0
  %v3228 = vadd.f32 %v1940, %v3227
  %v3229 = vpop.f32.mrb[0].mxu0
  %v3230 = vpop.f32.mrb[0].mxu0
  %v3231 = vpop.f32.mrb[0].mxu0
  %3232 = vdwg.mxu0
  %v3233 = vsel %vm2467, %v3228, -inf
  %3234 = vmax.xlane.f32.xlu0 %v3233
  %v3235 = vpop.xlane.xlu0 %3234
  %v3236 = vsub.f32 %v3228, %v3235
  %v3237 = vmul.f32 %v3236, 1.442695
  %v3238 = vpow.pop %v3237
  %v3239 = vsel %vm2467, %v3238, 0.0
  %3240 = vadd.xlane.f32.xlu0 %v3239
  %v3241 = vpop.xlane.xlu0 %3240
  %v3242 = vrcp.pop %v3241
  %v3243 = vmul.f32 %v3238, %v3242
  %v3244 = vsel %vm2467, %v3243, -inf
  %3245 = vmax.xlane.f32.xlu0 %v3244
  %v3246 = vpop.xlane.xlu0 %3245
  %vm3247 = vcmp.ge.f32.partialorder %v3243, %v3246
  %v3248 = vsel %vm3247, %v53, 64
  %v3249 = vsel %vm2467, %v3248, 2147483647
  %v3250 = vand.u32 %v3249, 65535
  %v3251 = vshra.s32 %v3249, 16
  %v3252 = vcvt.s32.f32 %v3250
  %v3253 = vcvt.s32.f32 %v3251
  %3254 = vmin.xlane.f32.xlu0 %v3253
  %v3255 = vpop.xlane.xlu0 %3254
  %vm3256 = vcmp.eq.f32.partialorder %v3253, %v3255
  %v3257 = vsel %vm3256, %v3252, inf
  %3258 = vmin.xlane.f32.xlu0 %v3257
  %v3259 = vpop.xlane.xlu0 %3258
  %v3260 = vcvt.f32.s32 %v3259
  %v3261 = vcvt.f32.s32 %v3255
  %v3262 = vshll.u32 %v3261, 16
  %v3263 = vadd.s32 %v3262, %v3260
  %3264 = vst.msk [vmem:[%s4 + $0x2] sm:$0x1] %vm2499, %v3263
  %3265 = vst.msk [vmem:[%s5 + $0x2] sm:$0x1] %vm2499, %v3246
  %vm3266 = vcmp.eq.s32.totalorder %v53, %v3263
  %v3267 = vsel %vm3266, 1, 0
  %v3268 = vcvt.s32.f32 %v3267
  %3270 = vrot.lane.b32.xlu0 %v2963, 32
  %v3271 = vpop.permute.xlu0 %3270
  %3274 = vrot.lane.b32.xlu0 %v3036, 64
  %v3275 = vpop.permute.xlu0 %3274
  %v3277 = vsel %vm112, %v3268, %v3271
  %v3278 = vsel %vm1974, %v3277, %v3275
  %v3279 = vpack.c.bf16 %v3278, %v3278
  %3280 = vmatprep.subr.bf16.mxu0 %v2026
  %3281 = vmatpush1.bf16.msra.mxu0 %v2025
  %3282 = vmatprep.subr.bf16.mxu0 %v2028
  %3283 = vmatpush1.bf16.msra.mxu0 %v2027
  %3284 = vmatprep.subr.bf16.mxu0 %v2030
  %3285 = vmatpush1.bf16.msra.mxu0 %v2029
  %3286 = vmatprep.subr.bf16.mxu0 %v2032
  %3287 = vmatpush1.bf16.msra.mxu0 %v2031
  %3288 = vmatprep.subr.bf16.mxu0 %v2034
  %3289 = vmatpush1.bf16.msra.mxu0 %v2033
  %3290 = vmatprep.subr.bf16.mxu0 %v2036
  %3291 = vmatpush1.bf16.msra.mxu0 %v2035
  %3292 = vmatprep.subr.bf16.mxu0 %v2038
  %3293 = vmatpush1.bf16.msra.mxu0 %v2037
  %3294 = vmatprep.subr.bf16.mxu0 %v2040
  %3295 = vmatpush1.bf16.msra.mxu0 %v2039
  %3296 = vmatprep.subr.bf16.mxu0 0
  %3297 = vmatpush1.bf16.msra.mxu0 0
  %3298 = vmatprep.subr.bf16.mxu0 0
  %3299 = vmatpush1.bf16.msra.mxu0 0
  %3300 = vmatprep.subr.bf16.mxu0 0
  %3301 = vmatpush1.bf16.msra.mxu0 0
  %3302 = vmatprep.subr.bf16.mxu0 0
  %3303 = vmatpush1.bf16.msra.mxu0 0
  %3304 = vmatprep.subr.bf16.mxu0 0
  %3305 = vmatpush1.bf16.msra.mxu0 0
  %3306 = vmatprep.subr.bf16.mxu0 0
  %3307 = vmatpush1.bf16.msra.mxu0 0
  %3308 = vmatprep.subr.bf16.mxu0 0
  %3309 = vmatpush1.bf16.msra.mxu0 0
  %3310 = vmatprep.subr.bf16.mxu0 0
  %3311 = vmatpush1.bf16.msra.mxu0 0
  %3312 = vmatprep.mubr.bf16.mxu0 0
  %3313 = vmatmul.mubr.bf16.gmra.mrb[0].mxu0 %v3279
  %v3314 = vpop.f32.mrb[0].mxu0
  %v3315 = vadd.f32 %v2061, %v3314
  %v3316 = vpop.f32.mrb[0].mxu0
  %v3317 = vadd.f32 %v2065, %v3316
  %v3318 = vpop.f32.mrb[0].mxu0
  %v3319 = vpop.f32.mrb[0].mxu0
  %3320 = vdwg.mxu0
  %v3321 = vxor.u32 %v3315, 2147483648
  %v3322 = vmul.f32 %v3321, 1.442695
  %v3323 = vpow.pop %v3322
  %v3324 = vadd.f32 %v3323, 1.0
  %v3325 = vrcp.pop %v3324
  %v3326 = vmul.f32 1.0, %v3325
  %3328 = vrot.lane.b32.xlu0 %v3315, 32
  %v3329 = vpop.permute.xlu0 %3328
  %v3331 = vmul.f32 %v3326, %v3329
  %3333 = vrot.lane.b32.xlu0 %v3331, 64
  %v3334 = vpop.permute.xlu0 %3333
  %v3336 = vadd.f32 %v3315, %v3334
  %v3337 = vtanh.pop %v3336
  %v3338 = vsub.f32 1.0, %v3326
  %3340 = vrot.lane.b32.xlu0 %v3337, 96
  %v3341 = vpop.permute.xlu0 %3340
  %v3343 = vmul.f32 %v3338, %v3341
  %v3344 = vmul.f32 %v3326, %v2963
  %v3345 = vadd.f32 %v3343, %v3344
  %v3346 = vpack.c.bf16 %v3345, %v3345
  %3348 = vrot.lane.b32.xlu0 %v3346, 96
  %v3349 = vpop.permute.xlu0 %3348
  %v3351 = vsel %vm190, %v3349, 0
  %3353 = vmatprep.subr.bf16.mxu0 0
  %3354 = vmatpush1.bf16.msra.mxu0 %v2146
  %3355 = vmatprep.subr.bf16.mxu0 0
  %3356 = vmatpush1.bf16.msra.mxu0 %v2147
  %3357 = vmatprep.subr.bf16.mxu0 0
  %3358 = vmatpush1.bf16.msra.mxu0 0
  %3359 = vmatprep.subr.bf16.mxu0 0
  %3360 = vmatpush1.bf16.msra.mxu0 0
  %3361 = vmatprep.subr.bf16.mxu0 0
  %3362 = vmatpush1.bf16.msra.mxu0 0
  %3363 = vmatprep.subr.bf16.mxu0 0
  %3364 = vmatpush1.bf16.msra.mxu0 0
  %3365 = vmatprep.subr.bf16.mxu0 0
  %3366 = vmatpush1.bf16.msra.mxu0 0
  %3367 = vmatprep.subr.bf16.mxu0 0
  %3368 = vmatpush1.bf16.msra.mxu0 0
  %3369 = vmatprep.subr.bf16.mxu0 0
  %3370 = vmatpush1.bf16.msra.mxu0 0
  %3371 = vmatprep.subr.bf16.mxu0 0
  %3372 = vmatpush1.bf16.msra.mxu0 0
  %3373 = vmatprep.subr.bf16.mxu0 0
  %3374 = vmatpush1.bf16.msra.mxu0 0
  %3375 = vmatprep.subr.bf16.mxu0 0
  %3376 = vmatpush1.bf16.msra.mxu0 0
  %3377 = vmatprep.subr.bf16.mxu0 0
  %3378 = vmatpush1.bf16.msra.mxu0 0
  %3379 = vmatprep.subr.bf16.mxu0 0
  %3380 = vmatpush1.bf16.msra.mxu0 0
  %3381 = vmatprep.subr.bf16.mxu0 0
  %3382 = vmatpush1.bf16.msra.mxu0 0
  %3383 = vmatprep.subr.bf16.mxu0 0
  %3384 = vmatpush1.bf16.msra.mxu0 0
  %3385 = vmatprep.mubr.bf16.mxu0 0
  %3386 = vmatmul.mubr.bf16.gmra.mrb[0].mxu0 %v3351
  %v3387 = vpop.f32.mrb[0].mxu0
  %v3388 = vadd.f32 %v1938, %v3387
  %v3389 = vpop.f32.mrb[0].mxu0
  %v3390 = vpop.f32.mrb[0].mxu0
  %v3391 = vpop.f32.mrb[0].mxu0
  %3392 = vdwg.mxu0
  %v3393 = vadd.f32 %v3388, %v3317
  %v3394 = vxor.u32 %v3393, 2147483648
  %v3395 = vmul.f32 %v3394, 1.442695
  %v3396 = vpow.pop %v3395
  %v3397 = vadd.f32 %v3396, 1.0
  %v3398 = vrcp.pop %v3397
  %v3399 = vmul.f32 1.0, %v3398
  %3401 = vrot.lane.b32.xlu0 %v3317, 64
  %v3402 = vpop.permute.xlu0 %3401
  %v3404 = vmul.f32 %v3399, %v3402
  %3406 = vrot.lane.b32.xlu0 %v3404, 64
  %v3407 = vpop.permute.xlu0 %3406
  %v3409 = vadd.f32 %v3388, %v3407
  %v3410 = vtanh.pop %v3409
  %v3411 = vsub.f32 1.0, %v3399
  %3413 = vrot.lane.b32.xlu0 %v3410, 96
  %v3414 = vpop.permute.xlu0 %3413
  %v3416 = vmul.f32 %v3411, %v3414
  %v3417 = vmul.f32 %v3399, %v3036
  %v3418 = vadd.f32 %v3416, %v3417
  %v3419 = vpack.c.bf16 %v3418, %v3418
  %3421 = vrot.lane.b32.xlu0 %v3419, 96
  %v3422 = vpop.permute.xlu0 %3421
  %v3424 = vsel %vm190, %v3422, 0
  %3426 = vmatprep.subr.bf16.mxu0 0
  %3427 = vmatpush1.bf16.xpose.msra.mxu0 %v2236
  %3428 = vmatprep.subr.bf16.mxu0 0
  %3429 = vmatpush1.bf16.xpose.msra.mxu0 %v2239
  %3430 = vmatprep.subr.bf16.mxu0 0
  %3431 = vmatpush1.bf16.xpose.msra.mxu0 %v2242
  %3432 = vmatprep.subr.bf16.mxu0 0
  %3433 = vmatpush1.bf16.xpose.msra.mxu0 0
  %3434 = vmatprep.subr.bf16.mxu0 0
  %3435 = vmatpush1.bf16.xpose.msra.mxu0 0
  %3436 = vmatprep.subr.bf16.mxu0 0
  %3437 = vmatpush1.bf16.xpose.msra.mxu0 0
  %3438 = vmatprep.subr.bf16.mxu0 0
  %3439 = vmatpush1.bf16.xpose.msra.mxu0 0
  %3440 = vmatprep.subr.bf16.mxu0 0
  %3441 = vmatpush1.bf16.xpose.msra.mxu0 0
  %3442 = vmatprep.subr.bf16.mxu0 0
  %3443 = vmatpush1.bf16.xpose.msra.mxu0 0
  %3444 = vmatprep.subr.bf16.mxu0 0
  %3445 = vmatpush1.bf16.xpose.msra.mxu0 0
  %3446 = vmatprep.subr.bf16.mxu0 0
  %3447 = vmatpush1.bf16.xpose.msra.mxu0 0
  %3448 = vmatprep.subr.bf16.mxu0 0
  %3449 = vmatpush1.bf16.xpose.msra.mxu0 0
  %3450 = vmatprep.subr.bf16.mxu0 0
  %3451 = vmatpush1.bf16.xpose.msra.mxu0 0
  %3452 = vmatprep.subr.bf16.mxu0 0
  %3453 = vmatpush1.bf16.xpose.msra.mxu0 0
  %3454 = vmatprep.subr.bf16.mxu0 0
  %3455 = vmatpush1.bf16.xpose.msra.mxu0 0
  %3456 = vmatprep.subr.bf16.mxu0 0
  %3457 = vmatpush1.bf16.xpose.msra.mxu0 0
  %3458 = vmatprep.mubr.bf16.mxu0 0
  %3459 = vmatmul.mubr.bf16.gmra.mrb[0].mxu0 %v3424
  %v3460 = vpop.f32.mrb[0].mxu0
  %v3461 = vadd.f32 0.0, %v3460
  %v3462 = vpop.f32.mrb[0].mxu0
  %v3463 = vpop.f32.mrb[0].mxu0
  %v3464 = vpop.f32.mrb[0].mxu0
  %3465 = vdwg.mxu0
  %v3466 = vmul.f32 %v3461, 1.442695
  %v3467 = vpow.pop %v3466
  %v3468 = vsel %vm2286, %v3467, 0.0
  %3469 = vadd.xlane.f32.xlu0 %v3468
  %v3470 = vpop.xlane.xlu0 %3469
  %v3471 = vrcp.pop %v3470
  %v3472 = vmul.f32 %v3467, %v3471
  %v3473 = vpack.c.bf16 %v3472, %v3472
  %v3475 = vsel %vm2296, %v3473, 0
  %3477 = vmatprep.subr.bf16.mxu0 0
  %3478 = vmatpush1.bf16.msra.mxu0 %v2301
  %3479 = vmatprep.subr.bf16.mxu0 0
  %3480 = vmatpush1.bf16.msra.mxu0 0
  %3481 = vmatprep.subr.bf16.mxu0 0
  %3482 = vmatpush1.bf16.msra.mxu0 0
  %3483 = vmatprep.subr.bf16.mxu0 0
  %3484 = vmatpush1.bf16.msra.mxu0 0
  %3485 = vmatprep.subr.bf16.mxu0 0
  %3486 = vmatpush1.bf16.msra.mxu0 0
  %3487 = vmatprep.subr.bf16.mxu0 0
  %3488 = vmatpush1.bf16.msra.mxu0 0
  %3489 = vmatprep.subr.bf16.mxu0 0
  %3490 = vmatpush1.bf16.msra.mxu0 0
  %3491 = vmatprep.subr.bf16.mxu0 0
  %3492 = vmatpush1.bf16.msra.mxu0 0
  %3493 = vmatprep.subr.bf16.mxu0 0
  %3494 = vmatpush1.bf16.msra.mxu0 0
  %3495 = vmatprep.subr.bf16.mxu0 0
  %3496 = vmatpush1.bf16.msra.mxu0 0
  %3497 = vmatprep.subr.bf16.mxu0 0
  %3498 = vmatpush1.bf16.msra.mxu0 0
  %3499 = vmatprep.subr.bf16.mxu0 0
  %3500 = vmatpush1.bf16.msra.mxu0 0
  %3501 = vmatprep.subr.bf16.mxu0 0
  %3502 = vmatpush1.bf16.msra.mxu0 0
  %3503 = vmatprep.subr.bf16.mxu0 0
  %3504 = vmatpush1.bf16.msra.mxu0 0
  %3505 = vmatprep.subr.bf16.mxu0 0
  %3506 = vmatpush1.bf16.msra.mxu0 0
  %3507 = vmatprep.subr.bf16.mxu0 0
  %3508 = vmatpush1.bf16.msra.mxu0 0
  %3509 = vmatprep.mubr.bf16.mxu0 0
  %3510 = vmatmul.mubr.bf16.gmra.mrb[0].mxu0 %v3475
  %v3511 = vpop.f32.mrb[0].mxu0
  %v3512 = vadd.f32 0.0, %v3511
  %v3513 = vpop.f32.mrb[0].mxu0
  %v3514 = vpop.f32.mrb[0].mxu0
  %v3515 = vpop.f32.mrb[0].mxu0
  %3516 = vdwg.mxu0
  %v3517 = vpack.c.bf16 %v3512, %v3512
  %v3519 = vsel %vm190, %v3517, 0
  %3521 = vmatprep.subr.bf16.mxu0 0
  %3522 = vmatpush1.bf16.msra.mxu0 %v2355
  %3523 = vmatprep.subr.bf16.mxu0 0
  %3524 = vmatpush1.bf16.msra.mxu0 %v2357
  %3525 = vmatprep.subr.bf16.mxu0 0
  %3526 = vmatpush1.bf16.msra.mxu0 0
  %3527 = vmatprep.subr.bf16.mxu0 0
  %3528 = vmatpush1.bf16.msra.mxu0 0
  %3529 = vmatprep.subr.bf16.mxu0 0
  %3530 = vmatpush1.bf16.msra.mxu0 0
  %3531 = vmatprep.subr.bf16.mxu0 0
  %3532 = vmatpush1.bf16.msra.mxu0 0
  %3533 = vmatprep.subr.bf16.mxu0 0
  %3534 = vmatpush1.bf16.msra.mxu0 0
  %3535 = vmatprep.subr.bf16.mxu0 0
  %3536 = vmatpush1.bf16.msra.mxu0 0
  %3537 = vmatprep.subr.bf16.mxu0 0
  %3538 = vmatpush1.bf16.msra.mxu0 0
  %3539 = vmatprep.subr.bf16.mxu0 0
  %3540 = vmatpush1.bf16.msra.mxu0 0
  %3541 = vmatprep.subr.bf16.mxu0 0
  %3542 = vmatpush1.bf16.msra.mxu0 0
  %3543 = vmatprep.subr.bf16.mxu0 0
  %3544 = vmatpush1.bf16.msra.mxu0 0
  %3545 = vmatprep.subr.bf16.mxu0 0
  %3546 = vmatpush1.bf16.msra.mxu0 0
  %3547 = vmatprep.subr.bf16.mxu0 0
  %3548 = vmatpush1.bf16.msra.mxu0 0
  %3549 = vmatprep.subr.bf16.mxu0 0
  %3550 = vmatpush1.bf16.msra.mxu0 0
  %3551 = vmatprep.subr.bf16.mxu0 0
  %3552 = vmatpush1.bf16.msra.mxu0 0
  %3553 = vmatprep.mubr.bf16.mxu0 0
  %3554 = vmatmul.mubr.bf16.gmra.mrb[0].mxu0 %v3519
  %v3555 = vpop.f32.mrb[0].mxu0
  %v3556 = vadd.f32 0.0, %v3555
  %v3557 = vpop.f32.mrb[0].mxu0
  %v3558 = vpop.f32.mrb[0].mxu0
  %v3559 = vpop.f32.mrb[0].mxu0
  %3560 = vdwg.mxu0
  %3562 = vrot.lane.b32.xlu0 %v3556, 8
  %v3563 = vpop.permute.xlu0 %3562
  %v3565 = vadd.f32 %v3461, %v3563
  %v3566 = vadd.f32 %v3565, %v2410
  %v3567 = vtanh.pop %v3566
  %v3568 = vpack.c.bf16 %v3567, %v3567
  %3570 = vrot.lane.b32.xlu0 %v3568, 120
  %v3571 = vpop.permute.xlu0 %3570
  %v3573 = vsel %vm190, %v3571, 0
  %3575 = vmatprep.subr.bf16.mxu0 0
  %3576 = vmatpush1.bf16.msra.mxu0 %v2419
  %3577 = vmatprep.subr.bf16.mxu0 0
  %3578 = vmatpush1.bf16.msra.mxu0 %v2421
  %3579 = vmatprep.subr.bf16.mxu0 0
  %3580 = vmatpush1.bf16.msra.mxu0 0
  %3581 = vmatprep.subr.bf16.mxu0 0
  %3582 = vmatpush1.bf16.msra.mxu0 0
  %3583 = vmatprep.subr.bf16.mxu0 0
  %3584 = vmatpush1.bf16.msra.mxu0 0
  %3585 = vmatprep.subr.bf16.mxu0 0
  %3586 = vmatpush1.bf16.msra.mxu0 0
  %3587 = vmatprep.subr.bf16.mxu0 0
  %3588 = vmatpush1.bf16.msra.mxu0 0
  %3589 = vmatprep.subr.bf16.mxu0 0
  %3590 = vmatpush1.bf16.msra.mxu0 0
  %3591 = vmatprep.subr.bf16.mxu0 0
  %3592 = vmatpush1.bf16.msra.mxu0 0
  %3593 = vmatprep.subr.bf16.mxu0 0
  %3594 = vmatpush1.bf16.msra.mxu0 0
  %3595 = vmatprep.subr.bf16.mxu0 0
  %3596 = vmatpush1.bf16.msra.mxu0 0
  %3597 = vmatprep.subr.bf16.mxu0 0
  %3598 = vmatpush1.bf16.msra.mxu0 0
  %3599 = vmatprep.subr.bf16.mxu0 0
  %3600 = vmatpush1.bf16.msra.mxu0 0
  %3601 = vmatprep.subr.bf16.mxu0 0
  %3602 = vmatpush1.bf16.msra.mxu0 0
  %3603 = vmatprep.subr.bf16.mxu0 0
  %3604 = vmatpush1.bf16.msra.mxu0 0
  %3605 = vmatprep.subr.bf16.mxu0 0
  %3606 = vmatpush1.bf16.msra.mxu0 0
  %3607 = vmatprep.mubr.bf16.mxu0 0
  %3608 = vmatmul.mubr.bf16.gmra.mrb[0].mxu0 %v3573
  %v3609 = vpop.f32.mrb[0].mxu0
  %v3610 = vadd.f32 %v1940, %v3609
  %v3611 = vpop.f32.mrb[0].mxu0
  %v3612 = vpop.f32.mrb[0].mxu0
  %v3613 = vpop.f32.mrb[0].mxu0
  %3614 = vdwg.mxu0
  %v3615 = vsel %vm2467, %v3610, -inf
  %3616 = vmax.xlane.f32.xlu0 %v3615
  %v3617 = vpop.xlane.xlu0 %3616
  %v3618 = vsub.f32 %v3610, %v3617
  %v3619 = vmul.f32 %v3618, 1.442695
  %v3620 = vpow.pop %v3619
  %v3621 = vsel %vm2467, %v3620, 0.0
  %3622 = vadd.xlane.f32.xlu0 %v3621
  %v3623 = vpop.xlane.xlu0 %3622
  %v3624 = vrcp.pop %v3623
  %v3625 = vmul.f32 %v3620, %v3624
  %v3626 = vsel %vm2467, %v3625, -inf
  %3627 = vmax.xlane.f32.xlu0 %v3626
  %v3628 = vpop.xlane.xlu0 %3627
  %vm3629 = vcmp.ge.f32.partialorder %v3625, %v3628
  %v3630 = vsel %vm3629, %v53, 64
  %v3631 = vsel %vm2467, %v3630, 2147483647
  %v3632 = vand.u32 %v3631, 65535
  %v3633 = vshra.s32 %v3631, 16
  %v3634 = vcvt.s32.f32 %v3632
  %v3635 = vcvt.s32.f32 %v3633
  %3636 = vmin.xlane.f32.xlu0 %v3635
  %v3637 = vpop.xlane.xlu0 %3636
  %vm3638 = vcmp.eq.f32.partialorder %v3635, %v3637
  %v3639 = vsel %vm3638, %v3634, inf
  %3640 = vmin.xlane.f32.xlu0 %v3639
  %v3641 = vpop.xlane.xlu0 %3640
  %v3642 = vcvt.f32.s32 %v3641
  %v3643 = vcvt.f32.s32 %v3637
  %v3644 = vshll.u32 %v3643, 16
  %v3645 = vadd.s32 %v3644, %v3642
  %3646 = vst.msk [vmem:[%s4 + $0x3] sm:$0x1] %vm2499, %v3645
  %3647 = vst.msk [vmem:[%s5 + $0x3] sm:$0x1] %vm2499, %v3628
  %vm3648 = vcmp.eq.s32.totalorder %v53, %v3645
  %v3649 = vsel %vm3648, 1, 0
  %v3650 = vcvt.s32.f32 %v3649
  %3652 = vrot.lane.b32.xlu0 %v3345, 32
  %v3653 = vpop.permute.xlu0 %3652
  %3656 = vrot.lane.b32.xlu0 %v3418, 64
  %v3657 = vpop.permute.xlu0 %3656
  %v3659 = vsel %vm112, %v3650, %v3653
  %v3660 = vsel %vm1974, %v3659, %v3657
  %v3661 = vpack.c.bf16 %v3660, %v3660
  %3662 = vmatprep.subr.bf16.mxu0 %v2026
  %3663 = vmatpush1.bf16.msra.mxu0 %v2025
  %3664 = vmatprep.subr.bf16.mxu0 %v2028
  %3665 = vmatpush1.bf16.msra.mxu0 %v2027
  %3666 = vmatprep.subr.bf16.mxu0 %v2030
  %3667 = vmatpush1.bf16.msra.mxu0 %v2029
  %3668 = vmatprep.subr.bf16.mxu0 %v2032
  %3669 = vmatpush1.bf16.msra.mxu0 %v2031
  %3670 = vmatprep.subr.bf16.mxu0 %v2034
  %3671 = vmatpush1.bf16.msra.mxu0 %v2033
  %3672 = vmatprep.subr.bf16.mxu0 %v2036
  %3673 = vmatpush1.bf16.msra.mxu0 %v2035
  %3674 = vmatprep.subr.bf16.mxu0 %v2038
  %3675 = vmatpush1.bf16.msra.mxu0 %v2037
  %3676 = vmatprep.subr.bf16.mxu0 %v2040
  %3677 = vmatpush1.bf16.msra.mxu0 %v2039
  %3678 = vmatprep.subr.bf16.mxu0 0
  %3679 = vmatpush1.bf16.msra.mxu0 0
  %3680 = vmatprep.subr.bf16.mxu0 0
  %3681 = vmatpush1.bf16.msra.mxu0 0
  %3682 = vmatprep.subr.bf16.mxu0 0
  %3683 = vmatpush1.bf16.msra.mxu0 0
  %3684 = vmatprep.subr.bf16.mxu0 0
  %3685 = vmatpush1.bf16.msra.mxu0 0
  %3686 = vmatprep.subr.bf16.mxu0 0
  %3687 = vmatpush1.bf16.msra.mxu0 0
  %3688 = vmatprep.subr.bf16.mxu0 0
  %3689 = vmatpush1.bf16.msra.mxu0 0
  %3690 = vmatprep.subr.bf16.mxu0 0
  %3691 = vmatpush1.bf16.msra.mxu0 0
  %3692 = vmatprep.subr.bf16.mxu0 0
  %3693 = vmatpush1.bf16.msra.mxu0 0
  %3694 = vmatprep.mubr.bf16.mxu0 0
  %3695 = vmatmul.mubr.bf16.gmra.mrb[0].mxu0 %v3661
  %v3696 = vpop.f32.mrb[0].mxu0
  %v3697 = vadd.f32 %v2061, %v3696
  %v3698 = vpop.f32.mrb[0].mxu0
  %v3699 = vadd.f32 %v2065, %v3698
  %v3700 = vpop.f32.mrb[0].mxu0
  %v3701 = vpop.f32.mrb[0].mxu0
  %3702 = vdwg.mxu0
  %v3703 = vxor.u32 %v3697, 2147483648
  %v3704 = vmul.f32 %v3703, 1.442695
  %v3705 = vpow.pop %v3704
  %v3706 = vadd.f32 %v3705, 1.0
  %v3707 = vrcp.pop %v3706
  %v3708 = vmul.f32 1.0, %v3707
  %3710 = vrot.lane.b32.xlu0 %v3697, 32
  %v3711 = vpop.permute.xlu0 %3710
  %v3713 = vmul.f32 %v3708, %v3711
  %3715 = vrot.lane.b32.xlu0 %v3713, 64
  %v3716 = vpop.permute.xlu0 %3715
  %v3718 = vadd.f32 %v3697, %v3716
  %v3719 = vtanh.pop %v3718
  %v3720 = vsub.f32 1.0, %v3708
  %3722 = vrot.lane.b32.xlu0 %v3719, 96
  %v3723 = vpop.permute.xlu0 %3722
  %v3725 = vmul.f32 %v3720, %v3723
  %v3726 = vmul.f32 %v3708, %v3345
  %v3727 = vadd.f32 %v3725, %v3726
  %v3728 = vpack.c.bf16 %v3727, %v3727
  %3730 = vrot.lane.b32.xlu0 %v3728, 96
  %v3731 = vpop.permute.xlu0 %3730
  %v3733 = vsel %vm190, %v3731, 0
  %3735 = vmatprep.subr.bf16.mxu0 0
  %3736 = vmatpush1.bf16.msra.mxu0 %v2146
  %3737 = vmatprep.subr.bf16.mxu0 0
  %3738 = vmatpush1.bf16.msra.mxu0 %v2147
  %3739 = vmatprep.subr.bf16.mxu0 0
  %3740 = vmatpush1.bf16.msra.mxu0 0
  %3741 = vmatprep.subr.bf16.mxu0 0
  %3742 = vmatpush1.bf16.msra.mxu0 0
  %3743 = vmatprep.subr.bf16.mxu0 0
  %3744 = vmatpush1.bf16.msra.mxu0 0
  %3745 = vmatprep.subr.bf16.mxu0 0
  %3746 = vmatpush1.bf16.msra.mxu0 0
  %3747 = vmatprep.subr.bf16.mxu0 0
  %3748 = vmatpush1.bf16.msra.mxu0 0
  %3749 = vmatprep.subr.bf16.mxu0 0
  %3750 = vmatpush1.bf16.msra.mxu0 0
  %3751 = vmatprep.subr.bf16.mxu0 0
  %3752 = vmatpush1.bf16.msra.mxu0 0
  %3753 = vmatprep.subr.bf16.mxu0 0
  %3754 = vmatpush1.bf16.msra.mxu0 0
  %3755 = vmatprep.subr.bf16.mxu0 0
  %3756 = vmatpush1.bf16.msra.mxu0 0
  %3757 = vmatprep.subr.bf16.mxu0 0
  %3758 = vmatpush1.bf16.msra.mxu0 0
  %3759 = vmatprep.subr.bf16.mxu0 0
  %3760 = vmatpush1.bf16.msra.mxu0 0
  %3761 = vmatprep.subr.bf16.mxu0 0
  %3762 = vmatpush1.bf16.msra.mxu0 0
  %3763 = vmatprep.subr.bf16.mxu0 0
  %3764 = vmatpush1.bf16.msra.mxu0 0
  %3765 = vmatprep.subr.bf16.mxu0 0
  %3766 = vmatpush1.bf16.msra.mxu0 0
  %3767 = vmatprep.mubr.bf16.mxu0 0
  %3768 = vmatmul.mubr.bf16.gmra.mrb[0].mxu0 %v3733
  %v3769 = vpop.f32.mrb[0].mxu0
  %v3770 = vadd.f32 %v1938, %v3769
  %v3771 = vpop.f32.mrb[0].mxu0
  %v3772 = vpop.f32.mrb[0].mxu0
  %v3773 = vpop.f32.mrb[0].mxu0
  %3774 = vdwg.mxu0
  %v3775 = vadd.f32 %v3770, %v3699
  %v3776 = vxor.u32 %v3775, 2147483648
  %v3777 = vmul.f32 %v3776, 1.442695
  %v3778 = vpow.pop %v3777
  %v3779 = vadd.f32 %v3778, 1.0
  %v3780 = vrcp.pop %v3779
  %v3781 = vmul.f32 1.0, %v3780
  %3783 = vrot.lane.b32.xlu0 %v3699, 64
  %v3784 = vpop.permute.xlu0 %3783
  %v3786 = vmul.f32 %v3781, %v3784
  %3788 = vrot.lane.b32.xlu0 %v3786, 64
  %v3789 = vpop.permute.xlu0 %3788
  %v3791 = vadd.f32 %v3770, %v3789
  %v3792 = vtanh.pop %v3791
  %v3793 = vsub.f32 1.0, %v3781
  %3795 = vrot.lane.b32.xlu0 %v3792, 96
  %v3796 = vpop.permute.xlu0 %3795
  %v3798 = vmul.f32 %v3793, %v3796
  %v3799 = vmul.f32 %v3781, %v3418
  %v3800 = vadd.f32 %v3798, %v3799
  %v3801 = vpack.c.bf16 %v3800, %v3800
  %3803 = vrot.lane.b32.xlu0 %v3801, 96
  %v3804 = vpop.permute.xlu0 %3803
  %v3806 = vsel %vm190, %v3804, 0
  %3808 = vmatprep.subr.bf16.mxu0 0
  %3809 = vmatpush1.bf16.xpose.msra.mxu0 %v2236
  %3810 = vmatprep.subr.bf16.mxu0 0
  %3811 = vmatpush1.bf16.xpose.msra.mxu0 %v2239
  %3812 = vmatprep.subr.bf16.mxu0 0
  %3813 = vmatpush1.bf16.xpose.msra.mxu0 %v2242
  %3814 = vmatprep.subr.bf16.mxu0 0
  %3815 = vmatpush1.bf16.xpose.msra.mxu0 0
  %3816 = vmatprep.subr.bf16.mxu0 0
  %3817 = vmatpush1.bf16.xpose.msra.mxu0 0
  %3818 = vmatprep.subr.bf16.mxu0 0
  %3819 = vmatpush1.bf16.xpose.msra.mxu0 0
  %3820 = vmatprep.subr.bf16.mxu0 0
  %3821 = vmatpush1.bf16.xpose.msra.mxu0 0
  %3822 = vmatprep.subr.bf16.mxu0 0
  %3823 = vmatpush1.bf16.xpose.msra.mxu0 0
  %3824 = vmatprep.subr.bf16.mxu0 0
  %3825 = vmatpush1.bf16.xpose.msra.mxu0 0
  %3826 = vmatprep.subr.bf16.mxu0 0
  %3827 = vmatpush1.bf16.xpose.msra.mxu0 0
  %3828 = vmatprep.subr.bf16.mxu0 0
  %3829 = vmatpush1.bf16.xpose.msra.mxu0 0
  %3830 = vmatprep.subr.bf16.mxu0 0
  %3831 = vmatpush1.bf16.xpose.msra.mxu0 0
  %3832 = vmatprep.subr.bf16.mxu0 0
  %3833 = vmatpush1.bf16.xpose.msra.mxu0 0
  %3834 = vmatprep.subr.bf16.mxu0 0
  %3835 = vmatpush1.bf16.xpose.msra.mxu0 0
  %3836 = vmatprep.subr.bf16.mxu0 0
  %3837 = vmatpush1.bf16.xpose.msra.mxu0 0
  %3838 = vmatprep.subr.bf16.mxu0 0
  %3839 = vmatpush1.bf16.xpose.msra.mxu0 0
  %3840 = vmatprep.mubr.bf16.mxu0 0
  %3841 = vmatmul.mubr.bf16.gmra.mrb[0].mxu0 %v3806
  %v3842 = vpop.f32.mrb[0].mxu0
  %v3843 = vadd.f32 0.0, %v3842
  %v3844 = vpop.f32.mrb[0].mxu0
  %v3845 = vpop.f32.mrb[0].mxu0
  %v3846 = vpop.f32.mrb[0].mxu0
  %3847 = vdwg.mxu0
  %v3848 = vmul.f32 %v3843, 1.442695
  %v3849 = vpow.pop %v3848
  %v3850 = vsel %vm2286, %v3849, 0.0
  %3851 = vadd.xlane.f32.xlu0 %v3850
  %v3852 = vpop.xlane.xlu0 %3851
  %v3853 = vrcp.pop %v3852
  %v3854 = vmul.f32 %v3849, %v3853
  %v3855 = vpack.c.bf16 %v3854, %v3854
  %v3857 = vsel %vm2296, %v3855, 0
  %3859 = vmatprep.subr.bf16.mxu0 0
  %3860 = vmatpush1.bf16.msra.mxu0 %v2301
  %3861 = vmatprep.subr.bf16.mxu0 0
  %3862 = vmatpush1.bf16.msra.mxu0 0
  %3863 = vmatprep.subr.bf16.mxu0 0
  %3864 = vmatpush1.bf16.msra.mxu0 0
  %3865 = vmatprep.subr.bf16.mxu0 0
  %3866 = vmatpush1.bf16.msra.mxu0 0
  %3867 = vmatprep.subr.bf16.mxu0 0
  %3868 = vmatpush1.bf16.msra.mxu0 0
  %3869 = vmatprep.subr.bf16.mxu0 0
  %3870 = vmatpush1.bf16.msra.mxu0 0
  %3871 = vmatprep.subr.bf16.mxu0 0
  %3872 = vmatpush1.bf16.msra.mxu0 0
  %3873 = vmatprep.subr.bf16.mxu0 0
  %3874 = vmatpush1.bf16.msra.mxu0 0
  %3875 = vmatprep.subr.bf16.mxu0 0
  %3876 = vmatpush1.bf16.msra.mxu0 0
  %3877 = vmatprep.subr.bf16.mxu0 0
  %3878 = vmatpush1.bf16.msra.mxu0 0
  %3879 = vmatprep.subr.bf16.mxu0 0
  %3880 = vmatpush1.bf16.msra.mxu0 0
  %3881 = vmatprep.subr.bf16.mxu0 0
  %3882 = vmatpush1.bf16.msra.mxu0 0
  %3883 = vmatprep.subr.bf16.mxu0 0
  %3884 = vmatpush1.bf16.msra.mxu0 0
  %3885 = vmatprep.subr.bf16.mxu0 0
  %3886 = vmatpush1.bf16.msra.mxu0 0
  %3887 = vmatprep.subr.bf16.mxu0 0
  %3888 = vmatpush1.bf16.msra.mxu0 0
  %3889 = vmatprep.subr.bf16.mxu0 0
  %3890 = vmatpush1.bf16.msra.mxu0 0
  %3891 = vmatprep.mubr.bf16.mxu0 0
  %3892 = vmatmul.mubr.bf16.gmra.mrb[0].mxu0 %v3857
  %v3893 = vpop.f32.mrb[0].mxu0
  %v3894 = vadd.f32 0.0, %v3893
  %v3895 = vpop.f32.mrb[0].mxu0
  %v3896 = vpop.f32.mrb[0].mxu0
  %v3897 = vpop.f32.mrb[0].mxu0
  %3898 = vdwg.mxu0
  %v3899 = vpack.c.bf16 %v3894, %v3894
  %v3901 = vsel %vm190, %v3899, 0
  %3903 = vmatprep.subr.bf16.mxu0 0
  %3904 = vmatpush1.bf16.msra.mxu0 %v2355
  %3905 = vmatprep.subr.bf16.mxu0 0
  %3906 = vmatpush1.bf16.msra.mxu0 %v2357
  %3907 = vmatprep.subr.bf16.mxu0 0
  %3908 = vmatpush1.bf16.msra.mxu0 0
  %3909 = vmatprep.subr.bf16.mxu0 0
  %3910 = vmatpush1.bf16.msra.mxu0 0
  %3911 = vmatprep.subr.bf16.mxu0 0
  %3912 = vmatpush1.bf16.msra.mxu0 0
  %3913 = vmatprep.subr.bf16.mxu0 0
  %3914 = vmatpush1.bf16.msra.mxu0 0
  %3915 = vmatprep.subr.bf16.mxu0 0
  %3916 = vmatpush1.bf16.msra.mxu0 0
  %3917 = vmatprep.subr.bf16.mxu0 0
  %3918 = vmatpush1.bf16.msra.mxu0 0
  %3919 = vmatprep.subr.bf16.mxu0 0
  %3920 = vmatpush1.bf16.msra.mxu0 0
  %3921 = vmatprep.subr.bf16.mxu0 0
  %3922 = vmatpush1.bf16.msra.mxu0 0
  %3923 = vmatprep.subr.bf16.mxu0 0
  %3924 = vmatpush1.bf16.msra.mxu0 0
  %3925 = vmatprep.subr.bf16.mxu0 0
  %3926 = vmatpush1.bf16.msra.mxu0 0
  %3927 = vmatprep.subr.bf16.mxu0 0
  %3928 = vmatpush1.bf16.msra.mxu0 0
  %3929 = vmatprep.subr.bf16.mxu0 0
  %3930 = vmatpush1.bf16.msra.mxu0 0
  %3931 = vmatprep.subr.bf16.mxu0 0
  %3932 = vmatpush1.bf16.msra.mxu0 0
  %3933 = vmatprep.subr.bf16.mxu0 0
  %3934 = vmatpush1.bf16.msra.mxu0 0
  %3935 = vmatprep.mubr.bf16.mxu0 0
  %3936 = vmatmul.mubr.bf16.gmra.mrb[0].mxu0 %v3901
  %v3937 = vpop.f32.mrb[0].mxu0
  %v3938 = vadd.f32 0.0, %v3937
  %v3939 = vpop.f32.mrb[0].mxu0
  %v3940 = vpop.f32.mrb[0].mxu0
  %v3941 = vpop.f32.mrb[0].mxu0
  %3942 = vdwg.mxu0
  %3944 = vrot.lane.b32.xlu0 %v3938, 8
  %v3945 = vpop.permute.xlu0 %3944
  %v3947 = vadd.f32 %v3843, %v3945
  %v3948 = vadd.f32 %v3947, %v2410
  %v3949 = vtanh.pop %v3948
  %v3950 = vpack.c.bf16 %v3949, %v3949
  %3952 = vrot.lane.b32.xlu0 %v3950, 120
  %v3953 = vpop.permute.xlu0 %3952
  %v3955 = vsel %vm190, %v3953, 0
  %3957 = vmatprep.subr.bf16.mxu0 0
  %3958 = vmatpush1.bf16.msra.mxu0 %v2419
  %3959 = vmatprep.subr.bf16.mxu0 0
  %3960 = vmatpush1.bf16.msra.mxu0 %v2421
  %3961 = vmatprep.subr.bf16.mxu0 0
  %3962 = vmatpush1.bf16.msra.mxu0 0
  %3963 = vmatprep.subr.bf16.mxu0 0
  %3964 = vmatpush1.bf16.msra.mxu0 0
  %3965 = vmatprep.subr.bf16.mxu0 0
  %3966 = vmatpush1.bf16.msra.mxu0 0
  %3967 = vmatprep.subr.bf16.mxu0 0
  %3968 = vmatpush1.bf16.msra.mxu0 0
  %3969 = vmatprep.subr.bf16.mxu0 0
  %3970 = vmatpush1.bf16.msra.mxu0 0
  %3971 = vmatprep.subr.bf16.mxu0 0
  %3972 = vmatpush1.bf16.msra.mxu0 0
  %3973 = vmatprep.subr.bf16.mxu0 0
  %3974 = vmatpush1.bf16.msra.mxu0 0
  %3975 = vmatprep.subr.bf16.mxu0 0
  %3976 = vmatpush1.bf16.msra.mxu0 0
  %3977 = vmatprep.subr.bf16.mxu0 0
  %3978 = vmatpush1.bf16.msra.mxu0 0
  %3979 = vmatprep.subr.bf16.mxu0 0
  %3980 = vmatpush1.bf16.msra.mxu0 0
  %3981 = vmatprep.subr.bf16.mxu0 0
  %3982 = vmatpush1.bf16.msra.mxu0 0
  %3983 = vmatprep.subr.bf16.mxu0 0
  %3984 = vmatpush1.bf16.msra.mxu0 0
  %3985 = vmatprep.subr.bf16.mxu0 0
  %3986 = vmatpush1.bf16.msra.mxu0 0
  %3987 = vmatprep.subr.bf16.mxu0 0
  %3988 = vmatpush1.bf16.msra.mxu0 0
  %3989 = vmatprep.mubr.bf16.mxu0 0
  %3990 = vmatmul.mubr.bf16.gmra.mrb[0].mxu0 %v3955
  %v3991 = vpop.f32.mrb[0].mxu0
  %v3992 = vadd.f32 %v1940, %v3991
  %v3993 = vpop.f32.mrb[0].mxu0
  %v3994 = vpop.f32.mrb[0].mxu0
  %v3995 = vpop.f32.mrb[0].mxu0
  %3996 = vdwg.mxu0
  %v3997 = vsel %vm2467, %v3992, -inf
  %3998 = vmax.xlane.f32.xlu0 %v3997
  %v3999 = vpop.xlane.xlu0 %3998
  %v4000 = vsub.f32 %v3992, %v3999
  %v4001 = vmul.f32 %v4000, 1.442695
  %v4002 = vpow.pop %v4001
  %v4003 = vsel %vm2467, %v4002, 0.0
  %4004 = vadd.xlane.f32.xlu0 %v4003
  %v4005 = vpop.xlane.xlu0 %4004
  %v4006 = vrcp.pop %v4005
  %v4007 = vmul.f32 %v4002, %v4006
  %v4008 = vsel %vm2467, %v4007, -inf
  %4009 = vmax.xlane.f32.xlu0 %v4008
  %v4010 = vpop.xlane.xlu0 %4009
  %vm4011 = vcmp.ge.f32.partialorder %v4007, %v4010
  %v4012 = vsel %vm4011, %v53, 64
  %v4013 = vsel %vm2467, %v4012, 2147483647
  %v4014 = vand.u32 %v4013, 65535
  %v4015 = vshra.s32 %v4013, 16
  %v4016 = vcvt.s32.f32 %v4014
  %v4017 = vcvt.s32.f32 %v4015
  %4018 = vmin.xlane.f32.xlu0 %v4017
  %v4019 = vpop.xlane.xlu0 %4018
  %vm4020 = vcmp.eq.f32.partialorder %v4017, %v4019
  %v4021 = vsel %vm4020, %v4016, inf
  %4022 = vmin.xlane.f32.xlu0 %v4021
  %v4023 = vpop.xlane.xlu0 %4022
  %v4024 = vcvt.f32.s32 %v4023
  %v4025 = vcvt.f32.s32 %v4019
  %v4026 = vshll.u32 %v4025, 16
  %v4027 = vadd.s32 %v4026, %v4024
  %4028 = vst.msk [vmem:[%s4 + $0x4] sm:$0x1] %vm2499, %v4027
  %4029 = vst.msk [vmem:[%s5 + $0x4] sm:$0x1] %vm2499, %v4010
  %vm4030 = vcmp.eq.s32.totalorder %v53, %v4027
  %v4031 = vsel %vm4030, 1, 0
  %v4032 = vcvt.s32.f32 %v4031
  %4034 = vrot.lane.b32.xlu0 %v3727, 32
  %v4035 = vpop.permute.xlu0 %4034
  %4038 = vrot.lane.b32.xlu0 %v3800, 64
  %v4039 = vpop.permute.xlu0 %4038
  %v4041 = vsel %vm112, %v4032, %v4035
  %v4042 = vsel %vm1974, %v4041, %v4039
  %v4043 = vpack.c.bf16 %v4042, %v4042
  %4044 = vmatprep.subr.bf16.mxu0 %v2026
  %4045 = vmatpush1.bf16.msra.mxu0 %v2025
  %4046 = vmatprep.subr.bf16.mxu0 %v2028
  %4047 = vmatpush1.bf16.msra.mxu0 %v2027
  %4048 = vmatprep.subr.bf16.mxu0 %v2030
  %4049 = vmatpush1.bf16.msra.mxu0 %v2029
  %4050 = vmatprep.subr.bf16.mxu0 %v2032
  %4051 = vmatpush1.bf16.msra.mxu0 %v2031
  %4052 = vmatprep.subr.bf16.mxu0 %v2034
  %4053 = vmatpush1.bf16.msra.mxu0 %v2033
  %4054 = vmatprep.subr.bf16.mxu0 %v2036
  %4055 = vmatpush1.bf16.msra.mxu0 %v2035
  %4056 = vmatprep.subr.bf16.mxu0 %v2038
  %4057 = vmatpush1.bf16.msra.mxu0 %v2037
  %4058 = vmatprep.subr.bf16.mxu0 %v2040
  %4059 = vmatpush1.bf16.msra.mxu0 %v2039
  %4060 = vmatprep.subr.bf16.mxu0 0
  %4061 = vmatpush1.bf16.msra.mxu0 0
  %4062 = vmatprep.subr.bf16.mxu0 0
  %4063 = vmatpush1.bf16.msra.mxu0 0
  %4064 = vmatprep.subr.bf16.mxu0 0
  %4065 = vmatpush1.bf16.msra.mxu0 0
  %4066 = vmatprep.subr.bf16.mxu0 0
  %4067 = vmatpush1.bf16.msra.mxu0 0
  %4068 = vmatprep.subr.bf16.mxu0 0
  %4069 = vmatpush1.bf16.msra.mxu0 0
  %4070 = vmatprep.subr.bf16.mxu0 0
  %4071 = vmatpush1.bf16.msra.mxu0 0
  %4072 = vmatprep.subr.bf16.mxu0 0
  %4073 = vmatpush1.bf16.msra.mxu0 0
  %4074 = vmatprep.subr.bf16.mxu0 0
  %4075 = vmatpush1.bf16.msra.mxu0 0
  %4076 = vmatprep.mubr.bf16.mxu0 0
  %4077 = vmatmul.mubr.bf16.gmra.mrb[0].mxu0 %v4043
  %v4078 = vpop.f32.mrb[0].mxu0
  %v4079 = vadd.f32 %v2061, %v4078
  %v4080 = vpop.f32.mrb[0].mxu0
  %v4081 = vadd.f32 %v2065, %v4080
  %v4082 = vpop.f32.mrb[0].mxu0
  %v4083 = vpop.f32.mrb[0].mxu0
  %4084 = vdwg.mxu0
  %v4085 = vxor.u32 %v4079, 2147483648
  %v4086 = vmul.f32 %v4085, 1.442695
  %v4087 = vpow.pop %v4086
  %v4088 = vadd.f32 %v4087, 1.0
  %v4089 = vrcp.pop %v4088
  %v4090 = vmul.f32 1.0, %v4089
  %4092 = vrot.lane.b32.xlu0 %v4079, 32
  %v4093 = vpop.permute.xlu0 %4092
  %v4095 = vmul.f32 %v4090, %v4093
  %4097 = vrot.lane.b32.xlu0 %v4095, 64
  %v4098 = vpop.permute.xlu0 %4097
  %v4100 = vadd.f32 %v4079, %v4098
  %v4101 = vtanh.pop %v4100
  %v4102 = vsub.f32 1.0, %v4090
  %4104 = vrot.lane.b32.xlu0 %v4101, 96
  %v4105 = vpop.permute.xlu0 %4104
  %v4107 = vmul.f32 %v4102, %v4105
  %v4108 = vmul.f32 %v4090, %v3727
  %v4109 = vadd.f32 %v4107, %v4108
  %v4110 = vpack.c.bf16 %v4109, %v4109
  %4112 = vrot.lane.b32.xlu0 %v4110, 96
  %v4113 = vpop.permute.xlu0 %4112
  %v4115 = vsel %vm190, %v4113, 0
  %4117 = vmatprep.subr.bf16.mxu0 0
  %4118 = vmatpush1.bf16.msra.mxu0 %v2146
  %4119 = vmatprep.subr.bf16.mxu0 0
  %4120 = vmatpush1.bf16.msra.mxu0 %v2147
  %4121 = vmatprep.subr.bf16.mxu0 0
  %4122 = vmatpush1.bf16.msra.mxu0 0
  %4123 = vmatprep.subr.bf16.mxu0 0
  %4124 = vmatpush1.bf16.msra.mxu0 0
  %4125 = vmatprep.subr.bf16.mxu0 0
  %4126 = vmatpush1.bf16.msra.mxu0 0
  %4127 = vmatprep.subr.bf16.mxu0 0
  %4128 = vmatpush1.bf16.msra.mxu0 0
  %4129 = vmatprep.subr.bf16.mxu0 0
  %4130 = vmatpush1.bf16.msra.mxu0 0
  %4131 = vmatprep.subr.bf16.mxu0 0
  %4132 = vmatpush1.bf16.msra.mxu0 0
  %4133 = vmatprep.subr.bf16.mxu0 0
  %4134 = vmatpush1.bf16.msra.mxu0 0
  %4135 = vmatprep.subr.bf16.mxu0 0
  %4136 = vmatpush1.bf16.msra.mxu0 0
  %4137 = vmatprep.subr.bf16.mxu0 0
  %4138 = vmatpush1.bf16.msra.mxu0 0
  %4139 = vmatprep.subr.bf16.mxu0 0
  %4140 = vmatpush1.bf16.msra.mxu0 0
  %4141 = vmatprep.subr.bf16.mxu0 0
  %4142 = vmatpush1.bf16.msra.mxu0 0
  %4143 = vmatprep.subr.bf16.mxu0 0
  %4144 = vmatpush1.bf16.msra.mxu0 0
  %4145 = vmatprep.subr.bf16.mxu0 0
  %4146 = vmatpush1.bf16.msra.mxu0 0
  %4147 = vmatprep.subr.bf16.mxu0 0
  %4148 = vmatpush1.bf16.msra.mxu0 0
  %4149 = vmatprep.mubr.bf16.mxu0 0
  %4150 = vmatmul.mubr.bf16.gmra.mrb[0].mxu0 %v4115
  %v4151 = vpop.f32.mrb[0].mxu0
  %v4152 = vadd.f32 %v1938, %v4151
  %v4153 = vpop.f32.mrb[0].mxu0
  %v4154 = vpop.f32.mrb[0].mxu0
  %v4155 = vpop.f32.mrb[0].mxu0
  %4156 = vdwg.mxu0
  %v4157 = vadd.f32 %v4152, %v4081
  %v4158 = vxor.u32 %v4157, 2147483648
  %v4159 = vmul.f32 %v4158, 1.442695
  %v4160 = vpow.pop %v4159
  %v4161 = vadd.f32 %v4160, 1.0
  %v4162 = vrcp.pop %v4161
  %v4163 = vmul.f32 1.0, %v4162
  %4165 = vrot.lane.b32.xlu0 %v4081, 64
  %v4166 = vpop.permute.xlu0 %4165
  %v4168 = vmul.f32 %v4163, %v4166
  %4170 = vrot.lane.b32.xlu0 %v4168, 64
  %v4171 = vpop.permute.xlu0 %4170
  %v4173 = vadd.f32 %v4152, %v4171
  %v4174 = vtanh.pop %v4173
  %v4175 = vsub.f32 1.0, %v4163
  %4177 = vrot.lane.b32.xlu0 %v4174, 96
  %v4178 = vpop.permute.xlu0 %4177
  %v4180 = vmul.f32 %v4175, %v4178
  %v4181 = vmul.f32 %v4163, %v3800
  %v4182 = vadd.f32 %v4180, %v4181
  %v4183 = vpack.c.bf16 %v4182, %v4182
  %4185 = vrot.lane.b32.xlu0 %v4183, 96
  %v4186 = vpop.permute.xlu0 %4185
  %v4188 = vsel %vm190, %v4186, 0
  %4190 = vmatprep.subr.bf16.mxu0 0
  %4191 = vmatpush1.bf16.xpose.msra.mxu0 %v2236
  %4192 = vmatprep.subr.bf16.mxu0 0
  %4193 = vmatpush1.bf16.xpose.msra.mxu0 %v2239
  %4194 = vmatprep.subr.bf16.mxu0 0
  %4195 = vmatpush1.bf16.xpose.msra.mxu0 %v2242
  %4196 = vmatprep.subr.bf16.mxu0 0
  %4197 = vmatpush1.bf16.xpose.msra.mxu0 0
  %4198 = vmatprep.subr.bf16.mxu0 0
  %4199 = vmatpush1.bf16.xpose.msra.mxu0 0
  %4200 = vmatprep.subr.bf16.mxu0 0
  %4201 = vmatpush1.bf16.xpose.msra.mxu0 0
  %4202 = vmatprep.subr.bf16.mxu0 0
  %4203 = vmatpush1.bf16.xpose.msra.mxu0 0
  %4204 = vmatprep.subr.bf16.mxu0 0
  %4205 = vmatpush1.bf16.xpose.msra.mxu0 0
  %4206 = vmatprep.subr.bf16.mxu0 0
  %4207 = vmatpush1.bf16.xpose.msra.mxu0 0
  %4208 = vmatprep.subr.bf16.mxu0 0
  %4209 = vmatpush1.bf16.xpose.msra.mxu0 0
  %4210 = vmatprep.subr.bf16.mxu0 0
  %4211 = vmatpush1.bf16.xpose.msra.mxu0 0
  %4212 = vmatprep.subr.bf16.mxu0 0
  %4213 = vmatpush1.bf16.xpose.msra.mxu0 0
  %4214 = vmatprep.subr.bf16.mxu0 0
  %4215 = vmatpush1.bf16.xpose.msra.mxu0 0
  %4216 = vmatprep.subr.bf16.mxu0 0
  %4217 = vmatpush1.bf16.xpose.msra.mxu0 0
  %4218 = vmatprep.subr.bf16.mxu0 0
  %4219 = vmatpush1.bf16.xpose.msra.mxu0 0
  %4220 = vmatprep.subr.bf16.mxu0 0
  %4221 = vmatpush1.bf16.xpose.msra.mxu0 0
  %4222 = vmatprep.mubr.bf16.mxu0 0
  %4223 = vmatmul.mubr.bf16.gmra.mrb[0].mxu0 %v4188
  %v4224 = vpop.f32.mrb[0].mxu0
  %v4225 = vadd.f32 0.0, %v4224
  %v4226 = vpop.f32.mrb[0].mxu0
  %v4227 = vpop.f32.mrb[0].mxu0
  %v4228 = vpop.f32.mrb[0].mxu0
  %4229 = vdwg.mxu0
  %v4230 = vmul.f32 %v4225, 1.442695
  %v4231 = vpow.pop %v4230
  %v4232 = vsel %vm2286, %v4231, 0.0
  %4233 = vadd.xlane.f32.xlu0 %v4232
  %v4234 = vpop.xlane.xlu0 %4233
  %v4235 = vrcp.pop %v4234
  %v4236 = vmul.f32 %v4231, %v4235
  %v4237 = vpack.c.bf16 %v4236, %v4236
  %v4239 = vsel %vm2296, %v4237, 0
  %4241 = vmatprep.subr.bf16.mxu0 0
  %4242 = vmatpush1.bf16.msra.mxu0 %v2301
  %4243 = vmatprep.subr.bf16.mxu0 0
  %4244 = vmatpush1.bf16.msra.mxu0 0
  %4245 = vmatprep.subr.bf16.mxu0 0
  %4246 = vmatpush1.bf16.msra.mxu0 0
  %4247 = vmatprep.subr.bf16.mxu0 0
  %4248 = vmatpush1.bf16.msra.mxu0 0
  %4249 = vmatprep.subr.bf16.mxu0 0
  %4250 = vmatpush1.bf16.msra.mxu0 0
  %4251 = vmatprep.subr.bf16.mxu0 0
  %4252 = vmatpush1.bf16.msra.mxu0 0
  %4253 = vmatprep.subr.bf16.mxu0 0
  %4254 = vmatpush1.bf16.msra.mxu0 0
  %4255 = vmatprep.subr.bf16.mxu0 0
  %4256 = vmatpush1.bf16.msra.mxu0 0
  %4257 = vmatprep.subr.bf16.mxu0 0
  %4258 = vmatpush1.bf16.msra.mxu0 0
  %4259 = vmatprep.subr.bf16.mxu0 0
  %4260 = vmatpush1.bf16.msra.mxu0 0
  %4261 = vmatprep.subr.bf16.mxu0 0
  %4262 = vmatpush1.bf16.msra.mxu0 0
  %4263 = vmatprep.subr.bf16.mxu0 0
  %4264 = vmatpush1.bf16.msra.mxu0 0
  %4265 = vmatprep.subr.bf16.mxu0 0
  %4266 = vmatpush1.bf16.msra.mxu0 0
  %4267 = vmatprep.subr.bf16.mxu0 0
  %4268 = vmatpush1.bf16.msra.mxu0 0
  %4269 = vmatprep.subr.bf16.mxu0 0
  %4270 = vmatpush1.bf16.msra.mxu0 0
  %4271 = vmatprep.subr.bf16.mxu0 0
  %4272 = vmatpush1.bf16.msra.mxu0 0
  %4273 = vmatprep.mubr.bf16.mxu0 0
  %4274 = vmatmul.mubr.bf16.gmra.mrb[0].mxu0 %v4239
  %v4275 = vpop.f32.mrb[0].mxu0
  %v4276 = vadd.f32 0.0, %v4275
  %v4277 = vpop.f32.mrb[0].mxu0
  %v4278 = vpop.f32.mrb[0].mxu0
  %v4279 = vpop.f32.mrb[0].mxu0
  %4280 = vdwg.mxu0
  %v4281 = vpack.c.bf16 %v4276, %v4276
  %v4283 = vsel %vm190, %v4281, 0
  %4285 = vmatprep.subr.bf16.mxu0 0
  %4286 = vmatpush1.bf16.msra.mxu0 %v2355
  %4287 = vmatprep.subr.bf16.mxu0 0
  %4288 = vmatpush1.bf16.msra.mxu0 %v2357
  %4289 = vmatprep.subr.bf16.mxu0 0
  %4290 = vmatpush1.bf16.msra.mxu0 0
  %4291 = vmatprep.subr.bf16.mxu0 0
  %4292 = vmatpush1.bf16.msra.mxu0 0
  %4293 = vmatprep.subr.bf16.mxu0 0
  %4294 = vmatpush1.bf16.msra.mxu0 0
  %4295 = vmatprep.subr.bf16.mxu0 0
  %4296 = vmatpush1.bf16.msra.mxu0 0
  %4297 = vmatprep.subr.bf16.mxu0 0
  %4298 = vmatpush1.bf16.msra.mxu0 0
  %4299 = vmatprep.subr.bf16.mxu0 0
  %4300 = vmatpush1.bf16.msra.mxu0 0
  %4301 = vmatprep.subr.bf16.mxu0 0
  %4302 = vmatpush1.bf16.msra.mxu0 0
  %4303 = vmatprep.subr.bf16.mxu0 0
  %4304 = vmatpush1.bf16.msra.mxu0 0
  %4305 = vmatprep.subr.bf16.mxu0 0
  %4306 = vmatpush1.bf16.msra.mxu0 0
  %4307 = vmatprep.subr.bf16.mxu0 0
  %4308 = vmatpush1.bf16.msra.mxu0 0
  %4309 = vmatprep.subr.bf16.mxu0 0
  %4310 = vmatpush1.bf16.msra.mxu0 0
  %4311 = vmatprep.subr.bf16.mxu0 0
  %4312 = vmatpush1.bf16.msra.mxu0 0
  %4313 = vmatprep.subr.bf16.mxu0 0
  %4314 = vmatpush1.bf16.msra.mxu0 0
  %4315 = vmatprep.subr.bf16.mxu0 0
  %4316 = vmatpush1.bf16.msra.mxu0 0
  %4317 = vmatprep.mubr.bf16.mxu0 0
  %4318 = vmatmul.mubr.bf16.gmra.mrb[0].mxu0 %v4283
  %v4319 = vpop.f32.mrb[0].mxu0
  %v4320 = vadd.f32 0.0, %v4319
  %v4321 = vpop.f32.mrb[0].mxu0
  %v4322 = vpop.f32.mrb[0].mxu0
  %v4323 = vpop.f32.mrb[0].mxu0
  %4324 = vdwg.mxu0
  %4326 = vrot.lane.b32.xlu0 %v4320, 8
  %v4327 = vpop.permute.xlu0 %4326
  %v4329 = vadd.f32 %v4225, %v4327
  %v4330 = vadd.f32 %v4329, %v2410
  %v4331 = vtanh.pop %v4330
  %v4332 = vpack.c.bf16 %v4331, %v4331
  %4334 = vrot.lane.b32.xlu0 %v4332, 120
  %v4335 = vpop.permute.xlu0 %4334
  %v4337 = vsel %vm190, %v4335, 0
  %4339 = vmatprep.subr.bf16.mxu0 0
  %4340 = vmatpush1.bf16.msra.mxu0 %v2419
  %4341 = vmatprep.subr.bf16.mxu0 0
  %4342 = vmatpush1.bf16.msra.mxu0 %v2421
  %4343 = vmatprep.subr.bf16.mxu0 0
  %4344 = vmatpush1.bf16.msra.mxu0 0
  %4345 = vmatprep.subr.bf16.mxu0 0
  %4346 = vmatpush1.bf16.msra.mxu0 0
  %4347 = vmatprep.subr.bf16.mxu0 0
  %4348 = vmatpush1.bf16.msra.mxu0 0
  %4349 = vmatprep.subr.bf16.mxu0 0
  %4350 = vmatpush1.bf16.msra.mxu0 0
  %4351 = vmatprep.subr.bf16.mxu0 0
  %4352 = vmatpush1.bf16.msra.mxu0 0
  %4353 = vmatprep.subr.bf16.mxu0 0
  %4354 = vmatpush1.bf16.msra.mxu0 0
  %4355 = vmatprep.subr.bf16.mxu0 0
  %4356 = vmatpush1.bf16.msra.mxu0 0
  %4357 = vmatprep.subr.bf16.mxu0 0
  %4358 = vmatpush1.bf16.msra.mxu0 0
  %4359 = vmatprep.subr.bf16.mxu0 0
  %4360 = vmatpush1.bf16.msra.mxu0 0
  %4361 = vmatprep.subr.bf16.mxu0 0
  %4362 = vmatpush1.bf16.msra.mxu0 0
  %4363 = vmatprep.subr.bf16.mxu0 0
  %4364 = vmatpush1.bf16.msra.mxu0 0
  %4365 = vmatprep.subr.bf16.mxu0 0
  %4366 = vmatpush1.bf16.msra.mxu0 0
  %4367 = vmatprep.subr.bf16.mxu0 0
  %4368 = vmatpush1.bf16.msra.mxu0 0
  %4369 = vmatprep.subr.bf16.mxu0 0
  %4370 = vmatpush1.bf16.msra.mxu0 0
  %4371 = vmatprep.mubr.bf16.mxu0 0
  %4372 = vmatmul.mubr.bf16.gmra.mrb[0].mxu0 %v4337
  %v4373 = vpop.f32.mrb[0].mxu0
  %v4374 = vadd.f32 %v1940, %v4373
  %v4375 = vpop.f32.mrb[0].mxu0
  %v4376 = vpop.f32.mrb[0].mxu0
  %v4377 = vpop.f32.mrb[0].mxu0
  %4378 = vdwg.mxu0
  %v4379 = vsel %vm2467, %v4374, -inf
  %4380 = vmax.xlane.f32.xlu0 %v4379
  %v4381 = vpop.xlane.xlu0 %4380
  %v4382 = vsub.f32 %v4374, %v4381
  %v4383 = vmul.f32 %v4382, 1.442695
  %v4384 = vpow.pop %v4383
  %v4385 = vsel %vm2467, %v4384, 0.0
  %4386 = vadd.xlane.f32.xlu0 %v4385
  %v4387 = vpop.xlane.xlu0 %4386
  %v4388 = vrcp.pop %v4387
  %v4389 = vmul.f32 %v4384, %v4388
  %v4390 = vsel %vm2467, %v4389, -inf
  %4391 = vmax.xlane.f32.xlu0 %v4390
  %v4392 = vpop.xlane.xlu0 %4391
  %vm4393 = vcmp.ge.f32.partialorder %v4389, %v4392
  %v4394 = vsel %vm4393, %v53, 64
  %v4395 = vsel %vm2467, %v4394, 2147483647
  %v4396 = vand.u32 %v4395, 65535
  %v4397 = vshra.s32 %v4395, 16
  %v4398 = vcvt.s32.f32 %v4396
  %v4399 = vcvt.s32.f32 %v4397
  %4400 = vmin.xlane.f32.xlu0 %v4399
  %v4401 = vpop.xlane.xlu0 %4400
  %vm4402 = vcmp.eq.f32.partialorder %v4399, %v4401
  %v4403 = vsel %vm4402, %v4398, inf
  %4404 = vmin.xlane.f32.xlu0 %v4403
  %v4405 = vpop.xlane.xlu0 %4404
  %v4406 = vcvt.f32.s32 %v4405
  %v4407 = vcvt.f32.s32 %v4401
  %v4408 = vshll.u32 %v4407, 16
  %v4409 = vadd.s32 %v4408, %v4406
  %4410 = vst.msk [vmem:[%s4 + $0x5] sm:$0x1] %vm2499, %v4409
  %4411 = vst.msk [vmem:[%s5 + $0x5] sm:$0x1] %vm2499, %v4392
  %vm4412 = vcmp.eq.s32.totalorder %v53, %v4409
  %v4413 = vsel %vm4412, 1, 0
  %v4414 = vcvt.s32.f32 %v4413
  %4416 = vrot.lane.b32.xlu0 %v4109, 32
  %v4417 = vpop.permute.xlu0 %4416
  %4420 = vrot.lane.b32.xlu0 %v4182, 64
  %v4421 = vpop.permute.xlu0 %4420
  %v4423 = vsel %vm112, %v4414, %v4417
  %v4424 = vsel %vm1974, %v4423, %v4421
  %v4425 = vpack.c.bf16 %v4424, %v4424
  %4426 = vmatprep.subr.bf16.mxu0 %v2026
  %4427 = vmatpush1.bf16.msra.mxu0 %v2025
  %4428 = vmatprep.subr.bf16.mxu0 %v2028
  %4429 = vmatpush1.bf16.msra.mxu0 %v2027
  %4430 = vmatprep.subr.bf16.mxu0 %v2030
  %4431 = vmatpush1.bf16.msra.mxu0 %v2029
  %4432 = vmatprep.subr.bf16.mxu0 %v2032
  %4433 = vmatpush1.bf16.msra.mxu0 %v2031
  %4434 = vmatprep.subr.bf16.mxu0 %v2034
  %4435 = vmatpush1.bf16.msra.mxu0 %v2033
  %4436 = vmatprep.subr.bf16.mxu0 %v2036
  %4437 = vmatpush1.bf16.msra.mxu0 %v2035
  %4438 = vmatprep.subr.bf16.mxu0 %v2038
  %4439 = vmatpush1.bf16.msra.mxu0 %v2037
  %4440 = vmatprep.subr.bf16.mxu0 %v2040
  %4441 = vmatpush1.bf16.msra.mxu0 %v2039
  %4442 = vmatprep.subr.bf16.mxu0 0
  %4443 = vmatpush1.bf16.msra.mxu0 0
  %4444 = vmatprep.subr.bf16.mxu0 0
  %4445 = vmatpush1.bf16.msra.mxu0 0
  %4446 = vmatprep.subr.bf16.mxu0 0
  %4447 = vmatpush1.bf16.msra.mxu0 0
  %4448 = vmatprep.subr.bf16.mxu0 0
  %4449 = vmatpush1.bf16.msra.mxu0 0
  %4450 = vmatprep.subr.bf16.mxu0 0
  %4451 = vmatpush1.bf16.msra.mxu0 0
  %4452 = vmatprep.subr.bf16.mxu0 0
  %4453 = vmatpush1.bf16.msra.mxu0 0
  %4454 = vmatprep.subr.bf16.mxu0 0
  %4455 = vmatpush1.bf16.msra.mxu0 0
  %4456 = vmatprep.subr.bf16.mxu0 0
  %4457 = vmatpush1.bf16.msra.mxu0 0
  %4458 = vmatprep.mubr.bf16.mxu0 0
  %4459 = vmatmul.mubr.bf16.gmra.mrb[0].mxu0 %v4425
  %v4460 = vpop.f32.mrb[0].mxu0
  %v4461 = vadd.f32 %v2061, %v4460
  %v4462 = vpop.f32.mrb[0].mxu0
  %v4463 = vadd.f32 %v2065, %v4462
  %v4464 = vpop.f32.mrb[0].mxu0
  %v4465 = vpop.f32.mrb[0].mxu0
  %4466 = vdwg.mxu0
  %v4467 = vxor.u32 %v4461, 2147483648
  %v4468 = vmul.f32 %v4467, 1.442695
  %v4469 = vpow.pop %v4468
  %v4470 = vadd.f32 %v4469, 1.0
  %v4471 = vrcp.pop %v4470
  %v4472 = vmul.f32 1.0, %v4471
  %4474 = vrot.lane.b32.xlu0 %v4461, 32
  %v4475 = vpop.permute.xlu0 %4474
  %v4477 = vmul.f32 %v4472, %v4475
  %4479 = vrot.lane.b32.xlu0 %v4477, 64
  %v4480 = vpop.permute.xlu0 %4479
  %v4482 = vadd.f32 %v4461, %v4480
  %v4483 = vtanh.pop %v4482
  %v4484 = vsub.f32 1.0, %v4472
  %4486 = vrot.lane.b32.xlu0 %v4483, 96
  %v4487 = vpop.permute.xlu0 %4486
  %v4489 = vmul.f32 %v4484, %v4487
  %v4490 = vmul.f32 %v4472, %v4109
  %v4491 = vadd.f32 %v4489, %v4490
  %v4492 = vpack.c.bf16 %v4491, %v4491
  %4494 = vrot.lane.b32.xlu0 %v4492, 96
  %v4495 = vpop.permute.xlu0 %4494
  %v4497 = vsel %vm190, %v4495, 0
  %4499 = vmatprep.subr.bf16.mxu0 0
  %4500 = vmatpush1.bf16.msra.mxu0 %v2146
  %4501 = vmatprep.subr.bf16.mxu0 0
  %4502 = vmatpush1.bf16.msra.mxu0 %v2147
  %4503 = vmatprep.subr.bf16.mxu0 0
  %4504 = vmatpush1.bf16.msra.mxu0 0
  %4505 = vmatprep.subr.bf16.mxu0 0
  %4506 = vmatpush1.bf16.msra.mxu0 0
  %4507 = vmatprep.subr.bf16.mxu0 0
  %4508 = vmatpush1.bf16.msra.mxu0 0
  %4509 = vmatprep.subr.bf16.mxu0 0
  %4510 = vmatpush1.bf16.msra.mxu0 0
  %4511 = vmatprep.subr.bf16.mxu0 0
  %4512 = vmatpush1.bf16.msra.mxu0 0
  %4513 = vmatprep.subr.bf16.mxu0 0
  %4514 = vmatpush1.bf16.msra.mxu0 0
  %4515 = vmatprep.subr.bf16.mxu0 0
  %4516 = vmatpush1.bf16.msra.mxu0 0
  %4517 = vmatprep.subr.bf16.mxu0 0
  %4518 = vmatpush1.bf16.msra.mxu0 0
  %4519 = vmatprep.subr.bf16.mxu0 0
  %4520 = vmatpush1.bf16.msra.mxu0 0
  %4521 = vmatprep.subr.bf16.mxu0 0
  %4522 = vmatpush1.bf16.msra.mxu0 0
  %4523 = vmatprep.subr.bf16.mxu0 0
  %4524 = vmatpush1.bf16.msra.mxu0 0
  %4525 = vmatprep.subr.bf16.mxu0 0
  %4526 = vmatpush1.bf16.msra.mxu0 0
  %4527 = vmatprep.subr.bf16.mxu0 0
  %4528 = vmatpush1.bf16.msra.mxu0 0
  %4529 = vmatprep.subr.bf16.mxu0 0
  %4530 = vmatpush1.bf16.msra.mxu0 0
  %4531 = vmatprep.mubr.bf16.mxu0 0
  %4532 = vmatmul.mubr.bf16.gmra.mrb[0].mxu0 %v4497
  %v4533 = vpop.f32.mrb[0].mxu0
  %v4534 = vadd.f32 %v1938, %v4533
  %v4535 = vpop.f32.mrb[0].mxu0
  %v4536 = vpop.f32.mrb[0].mxu0
  %v4537 = vpop.f32.mrb[0].mxu0
  %4538 = vdwg.mxu0
  %v4539 = vadd.f32 %v4534, %v4463
  %v4540 = vxor.u32 %v4539, 2147483648
  %v4541 = vmul.f32 %v4540, 1.442695
  %v4542 = vpow.pop %v4541
  %v4543 = vadd.f32 %v4542, 1.0
  %v4544 = vrcp.pop %v4543
  %v4545 = vmul.f32 1.0, %v4544
  %4547 = vrot.lane.b32.xlu0 %v4463, 64
  %v4548 = vpop.permute.xlu0 %4547
  %v4550 = vmul.f32 %v4545, %v4548
  %4552 = vrot.lane.b32.xlu0 %v4550, 64
  %v4553 = vpop.permute.xlu0 %4552
  %v4555 = vadd.f32 %v4534, %v4553
  %v4556 = vtanh.pop %v4555
  %v4557 = vsub.f32 1.0, %v4545
  %4559 = vrot.lane.b32.xlu0 %v4556, 96
  %v4560 = vpop.permute.xlu0 %4559
  %v4562 = vmul.f32 %v4557, %v4560
  %v4563 = vmul.f32 %v4545, %v4182
  %v4564 = vadd.f32 %v4562, %v4563
  %v4565 = vpack.c.bf16 %v4564, %v4564
  %4567 = vrot.lane.b32.xlu0 %v4565, 96
  %v4568 = vpop.permute.xlu0 %4567
  %v4570 = vsel %vm190, %v4568, 0
  %4572 = vmatprep.subr.bf16.mxu0 0
  %4573 = vmatpush1.bf16.xpose.msra.mxu0 %v2236
  %4574 = vmatprep.subr.bf16.mxu0 0
  %4575 = vmatpush1.bf16.xpose.msra.mxu0 %v2239
  %4576 = vmatprep.subr.bf16.mxu0 0
  %4577 = vmatpush1.bf16.xpose.msra.mxu0 %v2242
  %4578 = vmatprep.subr.bf16.mxu0 0
  %4579 = vmatpush1.bf16.xpose.msra.mxu0 0
  %4580 = vmatprep.subr.bf16.mxu0 0
  %4581 = vmatpush1.bf16.xpose.msra.mxu0 0
  %4582 = vmatprep.subr.bf16.mxu0 0
  %4583 = vmatpush1.bf16.xpose.msra.mxu0 0
  %4584 = vmatprep.subr.bf16.mxu0 0
  %4585 = vmatpush1.bf16.xpose.msra.mxu0 0
  %4586 = vmatprep.subr.bf16.mxu0 0
  %4587 = vmatpush1.bf16.xpose.msra.mxu0 0
  %4588 = vmatprep.subr.bf16.mxu0 0
  %4589 = vmatpush1.bf16.xpose.msra.mxu0 0
  %4590 = vmatprep.subr.bf16.mxu0 0
  %4591 = vmatpush1.bf16.xpose.msra.mxu0 0
  %4592 = vmatprep.subr.bf16.mxu0 0
  %4593 = vmatpush1.bf16.xpose.msra.mxu0 0
  %4594 = vmatprep.subr.bf16.mxu0 0
  %4595 = vmatpush1.bf16.xpose.msra.mxu0 0
  %4596 = vmatprep.subr.bf16.mxu0 0
  %4597 = vmatpush1.bf16.xpose.msra.mxu0 0
  %4598 = vmatprep.subr.bf16.mxu0 0
  %4599 = vmatpush1.bf16.xpose.msra.mxu0 0
  %4600 = vmatprep.subr.bf16.mxu0 0
  %4601 = vmatpush1.bf16.xpose.msra.mxu0 0
  %4602 = vmatprep.subr.bf16.mxu0 0
  %4603 = vmatpush1.bf16.xpose.msra.mxu0 0
  %4604 = vmatprep.mubr.bf16.mxu0 0
  %4605 = vmatmul.mubr.bf16.gmra.mrb[0].mxu0 %v4570
  %v4606 = vpop.f32.mrb[0].mxu0
  %v4607 = vadd.f32 0.0, %v4606
  %v4608 = vpop.f32.mrb[0].mxu0
  %v4609 = vpop.f32.mrb[0].mxu0
  %v4610 = vpop.f32.mrb[0].mxu0
  %4611 = vdwg.mxu0
  %v4612 = vmul.f32 %v4607, 1.442695
  %v4613 = vpow.pop %v4612
  %v4614 = vsel %vm2286, %v4613, 0.0
  %4615 = vadd.xlane.f32.xlu0 %v4614
  %v4616 = vpop.xlane.xlu0 %4615
  %v4617 = vrcp.pop %v4616
  %v4618 = vmul.f32 %v4613, %v4617
  %v4619 = vpack.c.bf16 %v4618, %v4618
  %v4621 = vsel %vm2296, %v4619, 0
  %4623 = vmatprep.subr.bf16.mxu0 0
  %4624 = vmatpush1.bf16.msra.mxu0 %v2301
  %4625 = vmatprep.subr.bf16.mxu0 0
  %4626 = vmatpush1.bf16.msra.mxu0 0
  %4627 = vmatprep.subr.bf16.mxu0 0
  %4628 = vmatpush1.bf16.msra.mxu0 0
  %4629 = vmatprep.subr.bf16.mxu0 0
  %4630 = vmatpush1.bf16.msra.mxu0 0
  %4631 = vmatprep.subr.bf16.mxu0 0
  %4632 = vmatpush1.bf16.msra.mxu0 0
  %4633 = vmatprep.subr.bf16.mxu0 0
  %4634 = vmatpush1.bf16.msra.mxu0 0
  %4635 = vmatprep.subr.bf16.mxu0 0
  %4636 = vmatpush1.bf16.msra.mxu0 0
  %4637 = vmatprep.subr.bf16.mxu0 0
  %4638 = vmatpush1.bf16.msra.mxu0 0
  %4639 = vmatprep.subr.bf16.mxu0 0
  %4640 = vmatpush1.bf16.msra.mxu0 0
  %4641 = vmatprep.subr.bf16.mxu0 0
  %4642 = vmatpush1.bf16.msra.mxu0 0
  %4643 = vmatprep.subr.bf16.mxu0 0
  %4644 = vmatpush1.bf16.msra.mxu0 0
  %4645 = vmatprep.subr.bf16.mxu0 0
  %4646 = vmatpush1.bf16.msra.mxu0 0
  %4647 = vmatprep.subr.bf16.mxu0 0
  %4648 = vmatpush1.bf16.msra.mxu0 0
  %4649 = vmatprep.subr.bf16.mxu0 0
  %4650 = vmatpush1.bf16.msra.mxu0 0
  %4651 = vmatprep.subr.bf16.mxu0 0
  %4652 = vmatpush1.bf16.msra.mxu0 0
  %4653 = vmatprep.subr.bf16.mxu0 0
  %4654 = vmatpush1.bf16.msra.mxu0 0
  %4655 = vmatprep.mubr.bf16.mxu0 0
  %4656 = vmatmul.mubr.bf16.gmra.mrb[0].mxu0 %v4621
  %v4657 = vpop.f32.mrb[0].mxu0
  %v4658 = vadd.f32 0.0, %v4657
  %v4659 = vpop.f32.mrb[0].mxu0
  %v4660 = vpop.f32.mrb[0].mxu0
  %v4661 = vpop.f32.mrb[0].mxu0
  %4662 = vdwg.mxu0
  %v4663 = vpack.c.bf16 %v4658, %v4658
  %v4665 = vsel %vm190, %v4663, 0
  %4667 = vmatprep.subr.bf16.mxu0 0
  %4668 = vmatpush1.bf16.msra.mxu0 %v2355
  %4669 = vmatprep.subr.bf16.mxu0 0
  %4670 = vmatpush1.bf16.msra.mxu0 %v2357
  %4671 = vmatprep.subr.bf16.mxu0 0
  %4672 = vmatpush1.bf16.msra.mxu0 0
  %4673 = vmatprep.subr.bf16.mxu0 0
  %4674 = vmatpush1.bf16.msra.mxu0 0
  %4675 = vmatprep.subr.bf16.mxu0 0
  %4676 = vmatpush1.bf16.msra.mxu0 0
  %4677 = vmatprep.subr.bf16.mxu0 0
  %4678 = vmatpush1.bf16.msra.mxu0 0
  %4679 = vmatprep.subr.bf16.mxu0 0
  %4680 = vmatpush1.bf16.msra.mxu0 0
  %4681 = vmatprep.subr.bf16.mxu0 0
  %4682 = vmatpush1.bf16.msra.mxu0 0
  %4683 = vmatprep.subr.bf16.mxu0 0
  %4684 = vmatpush1.bf16.msra.mxu0 0
  %4685 = vmatprep.subr.bf16.mxu0 0
  %4686 = vmatpush1.bf16.msra.mxu0 0
  %4687 = vmatprep.subr.bf16.mxu0 0
  %4688 = vmatpush1.bf16.msra.mxu0 0
  %4689 = vmatprep.subr.bf16.mxu0 0
  %4690 = vmatpush1.bf16.msra.mxu0 0
  %4691 = vmatprep.subr.bf16.mxu0 0
  %4692 = vmatpush1.bf16.msra.mxu0 0
  %4693 = vmatprep.subr.bf16.mxu0 0
  %4694 = vmatpush1.bf16.msra.mxu0 0
  %4695 = vmatprep.subr.bf16.mxu0 0
  %4696 = vmatpush1.bf16.msra.mxu0 0
  %4697 = vmatprep.subr.bf16.mxu0 0
  %4698 = vmatpush1.bf16.msra.mxu0 0
  %4699 = vmatprep.mubr.bf16.mxu0 0
  %4700 = vmatmul.mubr.bf16.gmra.mrb[0].mxu0 %v4665
  %v4701 = vpop.f32.mrb[0].mxu0
  %v4702 = vadd.f32 0.0, %v4701
  %v4703 = vpop.f32.mrb[0].mxu0
  %v4704 = vpop.f32.mrb[0].mxu0
  %v4705 = vpop.f32.mrb[0].mxu0
  %4706 = vdwg.mxu0
  %4708 = vrot.lane.b32.xlu0 %v4702, 8
  %v4709 = vpop.permute.xlu0 %4708
  %v4711 = vadd.f32 %v4607, %v4709
  %v4712 = vadd.f32 %v4711, %v2410
  %v4713 = vtanh.pop %v4712
  %v4714 = vpack.c.bf16 %v4713, %v4713
  %4716 = vrot.lane.b32.xlu0 %v4714, 120
  %v4717 = vpop.permute.xlu0 %4716
  %v4719 = vsel %vm190, %v4717, 0
  %4721 = vmatprep.subr.bf16.mxu0 0
  %4722 = vmatpush1.bf16.msra.mxu0 %v2419
  %4723 = vmatprep.subr.bf16.mxu0 0
  %4724 = vmatpush1.bf16.msra.mxu0 %v2421
  %4725 = vmatprep.subr.bf16.mxu0 0
  %4726 = vmatpush1.bf16.msra.mxu0 0
  %4727 = vmatprep.subr.bf16.mxu0 0
  %4728 = vmatpush1.bf16.msra.mxu0 0
  %4729 = vmatprep.subr.bf16.mxu0 0
  %4730 = vmatpush1.bf16.msra.mxu0 0
  %4731 = vmatprep.subr.bf16.mxu0 0
  %4732 = vmatpush1.bf16.msra.mxu0 0
  %4733 = vmatprep.subr.bf16.mxu0 0
  %4734 = vmatpush1.bf16.msra.mxu0 0
  %4735 = vmatprep.subr.bf16.mxu0 0
  %4736 = vmatpush1.bf16.msra.mxu0 0
  %4737 = vmatprep.subr.bf16.mxu0 0
  %4738 = vmatpush1.bf16.msra.mxu0 0
  %4739 = vmatprep.subr.bf16.mxu0 0
  %4740 = vmatpush1.bf16.msra.mxu0 0
  %4741 = vmatprep.subr.bf16.mxu0 0
  %4742 = vmatpush1.bf16.msra.mxu0 0
  %4743 = vmatprep.subr.bf16.mxu0 0
  %4744 = vmatpush1.bf16.msra.mxu0 0
  %4745 = vmatprep.subr.bf16.mxu0 0
  %4746 = vmatpush1.bf16.msra.mxu0 0
  %4747 = vmatprep.subr.bf16.mxu0 0
  %4748 = vmatpush1.bf16.msra.mxu0 0
  %4749 = vmatprep.subr.bf16.mxu0 0
  %4750 = vmatpush1.bf16.msra.mxu0 0
  %4751 = vmatprep.subr.bf16.mxu0 0
  %4752 = vmatpush1.bf16.msra.mxu0 0
  %4753 = vmatprep.mubr.bf16.mxu0 0
  %4754 = vmatmul.mubr.bf16.gmra.mrb[0].mxu0 %v4719
  %v4755 = vpop.f32.mrb[0].mxu0
  %v4756 = vadd.f32 %v1940, %v4755
  %v4757 = vpop.f32.mrb[0].mxu0
  %v4758 = vpop.f32.mrb[0].mxu0
  %v4759 = vpop.f32.mrb[0].mxu0
  %4760 = vdwg.mxu0
  %v4761 = vsel %vm2467, %v4756, -inf
  %4762 = vmax.xlane.f32.xlu0 %v4761
  %v4763 = vpop.xlane.xlu0 %4762
  %v4764 = vsub.f32 %v4756, %v4763
  %v4765 = vmul.f32 %v4764, 1.442695
  %v4766 = vpow.pop %v4765
  %v4767 = vsel %vm2467, %v4766, 0.0
  %4768 = vadd.xlane.f32.xlu0 %v4767
  %v4769 = vpop.xlane.xlu0 %4768
  %v4770 = vrcp.pop %v4769
  %v4771 = vmul.f32 %v4766, %v4770
  %v4772 = vsel %vm2467, %v4771, -inf
  %4773 = vmax.xlane.f32.xlu0 %v4772
  %v4774 = vpop.xlane.xlu0 %4773
  %vm4775 = vcmp.ge.f32.partialorder %v4771, %v4774
  %v4776 = vsel %vm4775, %v53, 64
  %v4777 = vsel %vm2467, %v4776, 2147483647
  %v4778 = vand.u32 %v4777, 65535
  %v4779 = vshra.s32 %v4777, 16
  %v4780 = vcvt.s32.f32 %v4778
  %v4781 = vcvt.s32.f32 %v4779
  %4782 = vmin.xlane.f32.xlu0 %v4781
  %v4783 = vpop.xlane.xlu0 %4782
  %vm4784 = vcmp.eq.f32.partialorder %v4781, %v4783
  %v4785 = vsel %vm4784, %v4780, inf
  %4786 = vmin.xlane.f32.xlu0 %v4785
  %v4787 = vpop.xlane.xlu0 %4786
  %v4788 = vcvt.f32.s32 %v4787
  %v4789 = vcvt.f32.s32 %v4783
  %v4790 = vshll.u32 %v4789, 16
  %v4791 = vadd.s32 %v4790, %v4788
  %4792 = vst.msk [vmem:[%s4 + $0x6] sm:$0x1] %vm2499, %v4791
  %4793 = vst.msk [vmem:[%s5 + $0x6] sm:$0x1] %vm2499, %v4774
  %vm4794 = vcmp.eq.s32.totalorder %v53, %v4791
  %v4795 = vsel %vm4794, 1, 0
  %v4796 = vcvt.s32.f32 %v4795
  %4798 = vrot.lane.b32.xlu0 %v4491, 32
  %v4799 = vpop.permute.xlu0 %4798
  %4802 = vrot.lane.b32.xlu0 %v4564, 64
  %v4803 = vpop.permute.xlu0 %4802
  %v4805 = vsel %vm112, %v4796, %v4799
  %v4806 = vsel %vm1974, %v4805, %v4803
  %v4807 = vpack.c.bf16 %v4806, %v4806
  %4808 = vmatprep.subr.bf16.mxu0 %v2026
  %4809 = vmatpush1.bf16.msra.mxu0 %v2025
  %4810 = vmatprep.subr.bf16.mxu0 %v2028
  %4811 = vmatpush1.bf16.msra.mxu0 %v2027
  %4812 = vmatprep.subr.bf16.mxu0 %v2030
  %4813 = vmatpush1.bf16.msra.mxu0 %v2029
  %4814 = vmatprep.subr.bf16.mxu0 %v2032
  %4815 = vmatpush1.bf16.msra.mxu0 %v2031
  %4816 = vmatprep.subr.bf16.mxu0 %v2034
  %4817 = vmatpush1.bf16.msra.mxu0 %v2033
  %4818 = vmatprep.subr.bf16.mxu0 %v2036
  %4819 = vmatpush1.bf16.msra.mxu0 %v2035
  %4820 = vmatprep.subr.bf16.mxu0 %v2038
  %4821 = vmatpush1.bf16.msra.mxu0 %v2037
  %4822 = vmatprep.subr.bf16.mxu0 %v2040
  %4823 = vmatpush1.bf16.msra.mxu0 %v2039
  %4824 = vmatprep.subr.bf16.mxu0 0
  %4825 = vmatpush1.bf16.msra.mxu0 0
  %4826 = vmatprep.subr.bf16.mxu0 0
  %4827 = vmatpush1.bf16.msra.mxu0 0
  %4828 = vmatprep.subr.bf16.mxu0 0
  %4829 = vmatpush1.bf16.msra.mxu0 0
  %4830 = vmatprep.subr.bf16.mxu0 0
  %4831 = vmatpush1.bf16.msra.mxu0 0
  %4832 = vmatprep.subr.bf16.mxu0 0
  %4833 = vmatpush1.bf16.msra.mxu0 0
  %4834 = vmatprep.subr.bf16.mxu0 0
  %4835 = vmatpush1.bf16.msra.mxu0 0
  %4836 = vmatprep.subr.bf16.mxu0 0
  %4837 = vmatpush1.bf16.msra.mxu0 0
  %4838 = vmatprep.subr.bf16.mxu0 0
  %4839 = vmatpush1.bf16.msra.mxu0 0
  %4840 = vmatprep.mubr.bf16.mxu0 0
  %4841 = vmatmul.mubr.bf16.gmra.mrb[0].mxu0 %v4807
  %v4842 = vpop.f32.mrb[0].mxu0
  %v4843 = vadd.f32 %v2061, %v4842
  %v4844 = vpop.f32.mrb[0].mxu0
  %v4845 = vadd.f32 %v2065, %v4844
  %v4846 = vpop.f32.mrb[0].mxu0
  %v4847 = vpop.f32.mrb[0].mxu0
  %4848 = vdwg.mxu0
  %v4849 = vxor.u32 %v4843, 2147483648
  %v4850 = vmul.f32 %v4849, 1.442695
  %v4851 = vpow.pop %v4850
  %v4852 = vadd.f32 %v4851, 1.0
  %v4853 = vrcp.pop %v4852
  %v4854 = vmul.f32 1.0, %v4853
  %4856 = vrot.lane.b32.xlu0 %v4843, 32
  %v4857 = vpop.permute.xlu0 %4856
  %v4859 = vmul.f32 %v4854, %v4857
  %4861 = vrot.lane.b32.xlu0 %v4859, 64
  %v4862 = vpop.permute.xlu0 %4861
  %v4864 = vadd.f32 %v4843, %v4862
  %v4865 = vtanh.pop %v4864
  %v4866 = vsub.f32 1.0, %v4854
  %4868 = vrot.lane.b32.xlu0 %v4865, 96
  %v4869 = vpop.permute.xlu0 %4868
  %v4871 = vmul.f32 %v4866, %v4869
  %v4872 = vmul.f32 %v4854, %v4491
  %v4873 = vadd.f32 %v4871, %v4872
  %v4874 = vpack.c.bf16 %v4873, %v4873
  %4876 = vrot.lane.b32.xlu0 %v4874, 96
  %v4877 = vpop.permute.xlu0 %4876
  %v4879 = vsel %vm190, %v4877, 0
  %4881 = vmatprep.subr.bf16.mxu0 0
  %4882 = vmatpush1.bf16.msra.mxu0 %v2146
  %4883 = vmatprep.subr.bf16.mxu0 0
  %4884 = vmatpush1.bf16.msra.mxu0 %v2147
  %4885 = vmatprep.subr.bf16.mxu0 0
  %4886 = vmatpush1.bf16.msra.mxu0 0
  %4887 = vmatprep.subr.bf16.mxu0 0
  %4888 = vmatpush1.bf16.msra.mxu0 0
  %4889 = vmatprep.subr.bf16.mxu0 0
  %4890 = vmatpush1.bf16.msra.mxu0 0
  %4891 = vmatprep.subr.bf16.mxu0 0
  %4892 = vmatpush1.bf16.msra.mxu0 0
  %4893 = vmatprep.subr.bf16.mxu0 0
  %4894 = vmatpush1.bf16.msra.mxu0 0
  %4895 = vmatprep.subr.bf16.mxu0 0
  %4896 = vmatpush1.bf16.msra.mxu0 0
  %4897 = vmatprep.subr.bf16.mxu0 0
  %4898 = vmatpush1.bf16.msra.mxu0 0
  %4899 = vmatprep.subr.bf16.mxu0 0
  %4900 = vmatpush1.bf16.msra.mxu0 0
  %4901 = vmatprep.subr.bf16.mxu0 0
  %4902 = vmatpush1.bf16.msra.mxu0 0
  %4903 = vmatprep.subr.bf16.mxu0 0
  %4904 = vmatpush1.bf16.msra.mxu0 0
  %4905 = vmatprep.subr.bf16.mxu0 0
  %4906 = vmatpush1.bf16.msra.mxu0 0
  %4907 = vmatprep.subr.bf16.mxu0 0
  %4908 = vmatpush1.bf16.msra.mxu0 0
  %4909 = vmatprep.subr.bf16.mxu0 0
  %4910 = vmatpush1.bf16.msra.mxu0 0
  %4911 = vmatprep.subr.bf16.mxu0 0
  %4912 = vmatpush1.bf16.msra.mxu0 0
  %4913 = vmatprep.mubr.bf16.mxu0 0
  %4914 = vmatmul.mubr.bf16.gmra.mrb[0].mxu0 %v4879
  %v4915 = vpop.f32.mrb[0].mxu0
  %v4916 = vadd.f32 %v1938, %v4915
  %v4917 = vpop.f32.mrb[0].mxu0
  %v4918 = vpop.f32.mrb[0].mxu0
  %v4919 = vpop.f32.mrb[0].mxu0
  %4920 = vdwg.mxu0
  %v4921 = vadd.f32 %v4916, %v4845
  %v4922 = vxor.u32 %v4921, 2147483648
  %v4923 = vmul.f32 %v4922, 1.442695
  %v4924 = vpow.pop %v4923
  %v4925 = vadd.f32 %v4924, 1.0
  %v4926 = vrcp.pop %v4925
  %v4927 = vmul.f32 1.0, %v4926
  %4929 = vrot.lane.b32.xlu0 %v4845, 64
  %v4930 = vpop.permute.xlu0 %4929
  %v4932 = vmul.f32 %v4927, %v4930
  %4934 = vrot.lane.b32.xlu0 %v4932, 64
  %v4935 = vpop.permute.xlu0 %4934
  %v4937 = vadd.f32 %v4916, %v4935
  %v4938 = vtanh.pop %v4937
  %v4939 = vsub.f32 1.0, %v4927
  %4941 = vrot.lane.b32.xlu0 %v4938, 96
  %v4942 = vpop.permute.xlu0 %4941
  %v4944 = vmul.f32 %v4939, %v4942
  %v4945 = vmul.f32 %v4927, %v4564
  %v4946 = vadd.f32 %v4944, %v4945
  %v4947 = vpack.c.bf16 %v4946, %v4946
  %4949 = vrot.lane.b32.xlu0 %v4947, 96
  %v4950 = vpop.permute.xlu0 %4949
  %v4952 = vsel %vm190, %v4950, 0
  %4954 = vmatprep.subr.bf16.mxu0 0
  %4955 = vmatpush1.bf16.xpose.msra.mxu0 %v2236
  %4956 = vmatprep.subr.bf16.mxu0 0
  %4957 = vmatpush1.bf16.xpose.msra.mxu0 %v2239
  %4958 = vmatprep.subr.bf16.mxu0 0
  %4959 = vmatpush1.bf16.xpose.msra.mxu0 %v2242
  %4960 = vmatprep.subr.bf16.mxu0 0
  %4961 = vmatpush1.bf16.xpose.msra.mxu0 0
  %4962 = vmatprep.subr.bf16.mxu0 0
  %4963 = vmatpush1.bf16.xpose.msra.mxu0 0
  %4964 = vmatprep.subr.bf16.mxu0 0
  %4965 = vmatpush1.bf16.xpose.msra.mxu0 0
  %4966 = vmatprep.subr.bf16.mxu0 0
  %4967 = vmatpush1.bf16.xpose.msra.mxu0 0
  %4968 = vmatprep.subr.bf16.mxu0 0
  %4969 = vmatpush1.bf16.xpose.msra.mxu0 0
  %4970 = vmatprep.subr.bf16.mxu0 0
  %4971 = vmatpush1.bf16.xpose.msra.mxu0 0
  %4972 = vmatprep.subr.bf16.mxu0 0
  %4973 = vmatpush1.bf16.xpose.msra.mxu0 0
  %4974 = vmatprep.subr.bf16.mxu0 0
  %4975 = vmatpush1.bf16.xpose.msra.mxu0 0
  %4976 = vmatprep.subr.bf16.mxu0 0
  %4977 = vmatpush1.bf16.xpose.msra.mxu0 0
  %4978 = vmatprep.subr.bf16.mxu0 0
  %4979 = vmatpush1.bf16.xpose.msra.mxu0 0
  %4980 = vmatprep.subr.bf16.mxu0 0
  %4981 = vmatpush1.bf16.xpose.msra.mxu0 0
  %4982 = vmatprep.subr.bf16.mxu0 0
  %4983 = vmatpush1.bf16.xpose.msra.mxu0 0
  %4984 = vmatprep.subr.bf16.mxu0 0
  %4985 = vmatpush1.bf16.xpose.msra.mxu0 0
  %4986 = vmatprep.mubr.bf16.mxu0 0
  %4987 = vmatmul.mubr.bf16.gmra.mrb[0].mxu0 %v4952
  %v4988 = vpop.f32.mrb[0].mxu0
  %v4989 = vadd.f32 0.0, %v4988
  %v4990 = vpop.f32.mrb[0].mxu0
  %v4991 = vpop.f32.mrb[0].mxu0
  %v4992 = vpop.f32.mrb[0].mxu0
  %4993 = vdwg.mxu0
  %v4994 = vmul.f32 %v4989, 1.442695
  %v4995 = vpow.pop %v4994
  %v4996 = vsel %vm2286, %v4995, 0.0
  %4997 = vadd.xlane.f32.xlu0 %v4996
  %v4998 = vpop.xlane.xlu0 %4997
  %v4999 = vrcp.pop %v4998
  %v5000 = vmul.f32 %v4995, %v4999
  %v5001 = vpack.c.bf16 %v5000, %v5000
  %v5003 = vsel %vm2296, %v5001, 0
  %5005 = vmatprep.subr.bf16.mxu0 0
  %5006 = vmatpush1.bf16.msra.mxu0 %v2301
  %5007 = vmatprep.subr.bf16.mxu0 0
  %5008 = vmatpush1.bf16.msra.mxu0 0
  %5009 = vmatprep.subr.bf16.mxu0 0
  %5010 = vmatpush1.bf16.msra.mxu0 0
  %5011 = vmatprep.subr.bf16.mxu0 0
  %5012 = vmatpush1.bf16.msra.mxu0 0
  %5013 = vmatprep.subr.bf16.mxu0 0
  %5014 = vmatpush1.bf16.msra.mxu0 0
  %5015 = vmatprep.subr.bf16.mxu0 0
  %5016 = vmatpush1.bf16.msra.mxu0 0
  %5017 = vmatprep.subr.bf16.mxu0 0
  %5018 = vmatpush1.bf16.msra.mxu0 0
  %5019 = vmatprep.subr.bf16.mxu0 0
  %5020 = vmatpush1.bf16.msra.mxu0 0
  %5021 = vmatprep.subr.bf16.mxu0 0
  %5022 = vmatpush1.bf16.msra.mxu0 0
  %5023 = vmatprep.subr.bf16.mxu0 0
  %5024 = vmatpush1.bf16.msra.mxu0 0
  %5025 = vmatprep.subr.bf16.mxu0 0
  %5026 = vmatpush1.bf16.msra.mxu0 0
  %5027 = vmatprep.subr.bf16.mxu0 0
  %5028 = vmatpush1.bf16.msra.mxu0 0
  %5029 = vmatprep.subr.bf16.mxu0 0
  %5030 = vmatpush1.bf16.msra.mxu0 0
  %5031 = vmatprep.subr.bf16.mxu0 0
  %5032 = vmatpush1.bf16.msra.mxu0 0
  %5033 = vmatprep.subr.bf16.mxu0 0
  %5034 = vmatpush1.bf16.msra.mxu0 0
  %5035 = vmatprep.subr.bf16.mxu0 0
  %5036 = vmatpush1.bf16.msra.mxu0 0
  %5037 = vmatprep.mubr.bf16.mxu0 0
  %5038 = vmatmul.mubr.bf16.gmra.mrb[0].mxu0 %v5003
  %v5039 = vpop.f32.mrb[0].mxu0
  %v5040 = vadd.f32 0.0, %v5039
  %v5041 = vpop.f32.mrb[0].mxu0
  %v5042 = vpop.f32.mrb[0].mxu0
  %v5043 = vpop.f32.mrb[0].mxu0
  %5044 = vdwg.mxu0
  %v5045 = vpack.c.bf16 %v5040, %v5040
  %v5047 = vsel %vm190, %v5045, 0
  %5049 = vmatprep.subr.bf16.mxu0 0
  %5050 = vmatpush1.bf16.msra.mxu0 %v2355
  %5051 = vmatprep.subr.bf16.mxu0 0
  %5052 = vmatpush1.bf16.msra.mxu0 %v2357
  %5053 = vmatprep.subr.bf16.mxu0 0
  %5054 = vmatpush1.bf16.msra.mxu0 0
  %5055 = vmatprep.subr.bf16.mxu0 0
  %5056 = vmatpush1.bf16.msra.mxu0 0
  %5057 = vmatprep.subr.bf16.mxu0 0
  %5058 = vmatpush1.bf16.msra.mxu0 0
  %5059 = vmatprep.subr.bf16.mxu0 0
  %5060 = vmatpush1.bf16.msra.mxu0 0
  %5061 = vmatprep.subr.bf16.mxu0 0
  %5062 = vmatpush1.bf16.msra.mxu0 0
  %5063 = vmatprep.subr.bf16.mxu0 0
  %5064 = vmatpush1.bf16.msra.mxu0 0
  %5065 = vmatprep.subr.bf16.mxu0 0
  %5066 = vmatpush1.bf16.msra.mxu0 0
  %5067 = vmatprep.subr.bf16.mxu0 0
  %5068 = vmatpush1.bf16.msra.mxu0 0
  %5069 = vmatprep.subr.bf16.mxu0 0
  %5070 = vmatpush1.bf16.msra.mxu0 0
  %5071 = vmatprep.subr.bf16.mxu0 0
  %5072 = vmatpush1.bf16.msra.mxu0 0
  %5073 = vmatprep.subr.bf16.mxu0 0
  %5074 = vmatpush1.bf16.msra.mxu0 0
  %5075 = vmatprep.subr.bf16.mxu0 0
  %5076 = vmatpush1.bf16.msra.mxu0 0
  %5077 = vmatprep.subr.bf16.mxu0 0
  %5078 = vmatpush1.bf16.msra.mxu0 0
  %5079 = vmatprep.subr.bf16.mxu0 0
  %5080 = vmatpush1.bf16.msra.mxu0 0
  %5081 = vmatprep.mubr.bf16.mxu0 0
  %5082 = vmatmul.mubr.bf16.gmra.mrb[0].mxu0 %v5047
  %v5083 = vpop.f32.mrb[0].mxu0
  %v5084 = vadd.f32 0.0, %v5083
  %v5085 = vpop.f32.mrb[0].mxu0
  %v5086 = vpop.f32.mrb[0].mxu0
  %v5087 = vpop.f32.mrb[0].mxu0
  %5088 = vdwg.mxu0
  %5090 = vrot.lane.b32.xlu0 %v5084, 8
  %v5091 = vpop.permute.xlu0 %5090
  %v5093 = vadd.f32 %v4989, %v5091
  %v5094 = vadd.f32 %v5093, %v2410
  %v5095 = vtanh.pop %v5094
  %v5096 = vpack.c.bf16 %v5095, %v5095
  %5098 = vrot.lane.b32.xlu0 %v5096, 120
  %v5099 = vpop.permute.xlu0 %5098
  %v5101 = vsel %vm190, %v5099, 0
  %5103 = vmatprep.subr.bf16.mxu0 0
  %5104 = vmatpush1.bf16.msra.mxu0 %v2419
  %5105 = vmatprep.subr.bf16.mxu0 0
  %5106 = vmatpush1.bf16.msra.mxu0 %v2421
  %5107 = vmatprep.subr.bf16.mxu0 0
  %5108 = vmatpush1.bf16.msra.mxu0 0
  %5109 = vmatprep.subr.bf16.mxu0 0
  %5110 = vmatpush1.bf16.msra.mxu0 0
  %5111 = vmatprep.subr.bf16.mxu0 0
  %5112 = vmatpush1.bf16.msra.mxu0 0
  %5113 = vmatprep.subr.bf16.mxu0 0
  %5114 = vmatpush1.bf16.msra.mxu0 0
  %5115 = vmatprep.subr.bf16.mxu0 0
  %5116 = vmatpush1.bf16.msra.mxu0 0
  %5117 = vmatprep.subr.bf16.mxu0 0
  %5118 = vmatpush1.bf16.msra.mxu0 0
  %5119 = vmatprep.subr.bf16.mxu0 0
  %5120 = vmatpush1.bf16.msra.mxu0 0
  %5121 = vmatprep.subr.bf16.mxu0 0
  %5122 = vmatpush1.bf16.msra.mxu0 0
  %5123 = vmatprep.subr.bf16.mxu0 0
  %5124 = vmatpush1.bf16.msra.mxu0 0
  %5125 = vmatprep.subr.bf16.mxu0 0
  %5126 = vmatpush1.bf16.msra.mxu0 0
  %5127 = vmatprep.subr.bf16.mxu0 0
  %5128 = vmatpush1.bf16.msra.mxu0 0
  %5129 = vmatprep.subr.bf16.mxu0 0
  %5130 = vmatpush1.bf16.msra.mxu0 0
  %5131 = vmatprep.subr.bf16.mxu0 0
  %5132 = vmatpush1.bf16.msra.mxu0 0
  %5133 = vmatprep.subr.bf16.mxu0 0
  %5134 = vmatpush1.bf16.msra.mxu0 0
  %5135 = vmatprep.mubr.bf16.mxu0 0
  %5136 = vmatmul.mubr.bf16.gmra.mrb[0].mxu0 %v5101
  %v5137 = vpop.f32.mrb[0].mxu0
  %v5138 = vadd.f32 %v1940, %v5137
  %v5139 = vpop.f32.mrb[0].mxu0
  %v5140 = vpop.f32.mrb[0].mxu0
  %v5141 = vpop.f32.mrb[0].mxu0
  %5142 = vdwg.mxu0
  %v5143 = vsel %vm2467, %v5138, -inf
  %5144 = vmax.xlane.f32.xlu0 %v5143
  %v5145 = vpop.xlane.xlu0 %5144
  %v5146 = vsub.f32 %v5138, %v5145
  %v5147 = vmul.f32 %v5146, 1.442695
  %v5148 = vpow.pop %v5147
  %v5149 = vsel %vm2467, %v5148, 0.0
  %5150 = vadd.xlane.f32.xlu0 %v5149
  %v5151 = vpop.xlane.xlu0 %5150
  %v5152 = vrcp.pop %v5151
  %v5153 = vmul.f32 %v5148, %v5152
  %v5154 = vsel %vm2467, %v5153, -inf
  %5155 = vmax.xlane.f32.xlu0 %v5154
  %v5156 = vpop.xlane.xlu0 %5155
  %vm5157 = vcmp.ge.f32.partialorder %v5153, %v5156
  %v5158 = vsel %vm5157, %v53, 64
  %v5159 = vsel %vm2467, %v5158, 2147483647
  %v5160 = vand.u32 %v5159, 65535
  %v5161 = vshra.s32 %v5159, 16
  %v5162 = vcvt.s32.f32 %v5160
  %v5163 = vcvt.s32.f32 %v5161
  %5164 = vmin.xlane.f32.xlu0 %v5163
  %v5165 = vpop.xlane.xlu0 %5164
  %vm5166 = vcmp.eq.f32.partialorder %v5163, %v5165
  %v5167 = vsel %vm5166, %v5162, inf
  %5168 = vmin.xlane.f32.xlu0 %v5167
  %v5169 = vpop.xlane.xlu0 %5168
  %v5170 = vcvt.f32.s32 %v5169
  %v5171 = vcvt.f32.s32 %v5165
  %v5172 = vshll.u32 %v5171, 16
  %v5173 = vadd.s32 %v5172, %v5170
  %5174 = vst.msk [vmem:[%s4 + $0x7] sm:$0x1] %vm2499, %v5173
  %5175 = vst.msk [vmem:[%s5 + $0x7] sm:$0x1] %vm2499, %v5156
  %vm5176 = vcmp.eq.s32.totalorder %v53, %v5173
  %v5177 = vsel %vm5176, 1, 0
  %v5178 = vcvt.s32.f32 %v5177
  %5180 = vrot.lane.b32.xlu0 %v4873, 32
  %v5181 = vpop.permute.xlu0 %5180
  %5184 = vrot.lane.b32.xlu0 %v4946, 64
  %v5185 = vpop.permute.xlu0 %5184
  %v5187 = vsel %vm112, %v5178, %v5181
  %v5188 = vsel %vm1974, %v5187, %v5185
  %v5189 = vpack.c.bf16 %v5188, %v5188
  %5190 = vmatprep.subr.bf16.mxu0 %v2026
  %5191 = vmatpush1.bf16.msra.mxu0 %v2025
  %5192 = vmatprep.subr.bf16.mxu0 %v2028
  %5193 = vmatpush1.bf16.msra.mxu0 %v2027
  %5194 = vmatprep.subr.bf16.mxu0 %v2030
  %5195 = vmatpush1.bf16.msra.mxu0 %v2029
  %5196 = vmatprep.subr.bf16.mxu0 %v2032
  %5197 = vmatpush1.bf16.msra.mxu0 %v2031
  %5198 = vmatprep.subr.bf16.mxu0 %v2034
  %5199 = vmatpush1.bf16.msra.mxu0 %v2033
  %5200 = vmatprep.subr.bf16.mxu0 %v2036
  %5201 = vmatpush1.bf16.msra.mxu0 %v2035
  %5202 = vmatprep.subr.bf16.mxu0 %v2038
  %5203 = vmatpush1.bf16.msra.mxu0 %v2037
  %5204 = vmatprep.subr.bf16.mxu0 %v2040
  %5205 = vmatpush1.bf16.msra.mxu0 %v2039
  %5206 = vmatprep.subr.bf16.mxu0 0
  %5207 = vmatpush1.bf16.msra.mxu0 0
  %5208 = vmatprep.subr.bf16.mxu0 0
  %5209 = vmatpush1.bf16.msra.mxu0 0
  %5210 = vmatprep.subr.bf16.mxu0 0
  %5211 = vmatpush1.bf16.msra.mxu0 0
  %5212 = vmatprep.subr.bf16.mxu0 0
  %5213 = vmatpush1.bf16.msra.mxu0 0
  %5214 = vmatprep.subr.bf16.mxu0 0
  %5215 = vmatpush1.bf16.msra.mxu0 0
  %5216 = vmatprep.subr.bf16.mxu0 0
  %5217 = vmatpush1.bf16.msra.mxu0 0
  %5218 = vmatprep.subr.bf16.mxu0 0
  %5219 = vmatpush1.bf16.msra.mxu0 0
  %5220 = vmatprep.subr.bf16.mxu0 0
  %5221 = vmatpush1.bf16.msra.mxu0 0
  %5222 = vmatprep.mubr.bf16.mxu0 0
  %5223 = vmatmul.mubr.bf16.gmra.mrb[0].mxu0 %v5189
  %v5224 = vpop.f32.mrb[0].mxu0
  %v5225 = vadd.f32 %v2061, %v5224
  %v5226 = vpop.f32.mrb[0].mxu0
  %v5227 = vadd.f32 %v2065, %v5226
  %v5228 = vpop.f32.mrb[0].mxu0
  %v5229 = vpop.f32.mrb[0].mxu0
  %5230 = vdwg.mxu0
  %v5231 = vxor.u32 %v5225, 2147483648
  %v5232 = vmul.f32 %v5231, 1.442695
  %v5233 = vpow.pop %v5232
  %v5234 = vadd.f32 %v5233, 1.0
  %v5235 = vrcp.pop %v5234
  %v5236 = vmul.f32 1.0, %v5235
  %5238 = vrot.lane.b32.xlu0 %v5225, 32
  %v5239 = vpop.permute.xlu0 %5238
  %v5241 = vmul.f32 %v5236, %v5239
  %5243 = vrot.lane.b32.xlu0 %v5241, 64
  %v5244 = vpop.permute.xlu0 %5243
  %v5246 = vadd.f32 %v5225, %v5244
  %v5247 = vtanh.pop %v5246
  %v5248 = vsub.f32 1.0, %v5236
  %5250 = vrot.lane.b32.xlu0 %v5247, 96
  %v5251 = vpop.permute.xlu0 %5250
  %v5253 = vmul.f32 %v5248, %v5251
  %v5254 = vmul.f32 %v5236, %v4873
  %v5255 = vadd.f32 %v5253, %v5254
  %v5256 = vpack.c.bf16 %v5255, %v5255
  %5258 = vrot.lane.b32.xlu0 %v5256, 96
  %v5259 = vpop.permute.xlu0 %5258
  %v5261 = vsel %vm190, %v5259, 0
  %5263 = vmatprep.subr.bf16.mxu0 0
  %5264 = vmatpush1.bf16.msra.mxu0 %v2146
  %5265 = vmatprep.subr.bf16.mxu0 0
  %5266 = vmatpush1.bf16.msra.mxu0 %v2147
  %5267 = vmatprep.subr.bf16.mxu0 0
  %5268 = vmatpush1.bf16.msra.mxu0 0
  %5269 = vmatprep.subr.bf16.mxu0 0
  %5270 = vmatpush1.bf16.msra.mxu0 0
  %5271 = vmatprep.subr.bf16.mxu0 0
  %5272 = vmatpush1.bf16.msra.mxu0 0
  %5273 = vmatprep.subr.bf16.mxu0 0
  %5274 = vmatpush1.bf16.msra.mxu0 0
  %5275 = vmatprep.subr.bf16.mxu0 0
  %5276 = vmatpush1.bf16.msra.mxu0 0
  %5277 = vmatprep.subr.bf16.mxu0 0
  %5278 = vmatpush1.bf16.msra.mxu0 0
  %5279 = vmatprep.subr.bf16.mxu0 0
  %5280 = vmatpush1.bf16.msra.mxu0 0
  %5281 = vmatprep.subr.bf16.mxu0 0
  %5282 = vmatpush1.bf16.msra.mxu0 0
  %5283 = vmatprep.subr.bf16.mxu0 0
  %5284 = vmatpush1.bf16.msra.mxu0 0
  %5285 = vmatprep.subr.bf16.mxu0 0
  %5286 = vmatpush1.bf16.msra.mxu0 0
  %5287 = vmatprep.subr.bf16.mxu0 0
  %5288 = vmatpush1.bf16.msra.mxu0 0
  %5289 = vmatprep.subr.bf16.mxu0 0
  %5290 = vmatpush1.bf16.msra.mxu0 0
  %5291 = vmatprep.subr.bf16.mxu0 0
  %5292 = vmatpush1.bf16.msra.mxu0 0
  %5293 = vmatprep.subr.bf16.mxu0 0
  %5294 = vmatpush1.bf16.msra.mxu0 0
  %5295 = vmatprep.mubr.bf16.mxu0 0
  %5296 = vmatmul.mubr.bf16.gmra.mrb[0].mxu0 %v5261
  %v5297 = vpop.f32.mrb[0].mxu0
  %v5298 = vadd.f32 %v1938, %v5297
  %v5299 = vpop.f32.mrb[0].mxu0
  %v5300 = vpop.f32.mrb[0].mxu0
  %v5301 = vpop.f32.mrb[0].mxu0
  %5302 = vdwg.mxu0
  %v5303 = vadd.f32 %v5298, %v5227
  %v5304 = vxor.u32 %v5303, 2147483648
  %v5305 = vmul.f32 %v5304, 1.442695
  %v5306 = vpow.pop %v5305
  %v5307 = vadd.f32 %v5306, 1.0
  %v5308 = vrcp.pop %v5307
  %v5309 = vmul.f32 1.0, %v5308
  %5311 = vrot.lane.b32.xlu0 %v5227, 64
  %v5312 = vpop.permute.xlu0 %5311
  %v5314 = vmul.f32 %v5309, %v5312
  %5316 = vrot.lane.b32.xlu0 %v5314, 64
  %v5317 = vpop.permute.xlu0 %5316
  %v5319 = vadd.f32 %v5298, %v5317
  %v5320 = vtanh.pop %v5319
  %v5321 = vsub.f32 1.0, %v5309
  %5323 = vrot.lane.b32.xlu0 %v5320, 96
  %v5324 = vpop.permute.xlu0 %5323
  %v5326 = vmul.f32 %v5321, %v5324
  %v5327 = vmul.f32 %v5309, %v4946
  %v5328 = vadd.f32 %v5326, %v5327
  %v5329 = vpack.c.bf16 %v5328, %v5328
  %5331 = vrot.lane.b32.xlu0 %v5329, 96
  %v5332 = vpop.permute.xlu0 %5331
  %v5334 = vsel %vm190, %v5332, 0
  %5336 = vmatprep.subr.bf16.mxu0 0
  %5337 = vmatpush1.bf16.xpose.msra.mxu0 %v2236
  %5338 = vmatprep.subr.bf16.mxu0 0
  %5339 = vmatpush1.bf16.xpose.msra.mxu0 %v2239
  %5340 = vmatprep.subr.bf16.mxu0 0
  %5341 = vmatpush1.bf16.xpose.msra.mxu0 %v2242
  %5342 = vmatprep.subr.bf16.mxu0 0
  %5343 = vmatpush1.bf16.xpose.msra.mxu0 0
  %5344 = vmatprep.subr.bf16.mxu0 0
  %5345 = vmatpush1.bf16.xpose.msra.mxu0 0
  %5346 = vmatprep.subr.bf16.mxu0 0
  %5347 = vmatpush1.bf16.xpose.msra.mxu0 0
  %5348 = vmatprep.subr.bf16.mxu0 0
  %5349 = vmatpush1.bf16.xpose.msra.mxu0 0
  %5350 = vmatprep.subr.bf16.mxu0 0
  %5351 = vmatpush1.bf16.xpose.msra.mxu0 0
  %5352 = vmatprep.subr.bf16.mxu0 0
  %5353 = vmatpush1.bf16.xpose.msra.mxu0 0
  %5354 = vmatprep.subr.bf16.mxu0 0
  %5355 = vmatpush1.bf16.xpose.msra.mxu0 0
  %5356 = vmatprep.subr.bf16.mxu0 0
  %5357 = vmatpush1.bf16.xpose.msra.mxu0 0
  %5358 = vmatprep.subr.bf16.mxu0 0
  %5359 = vmatpush1.bf16.xpose.msra.mxu0 0
  %5360 = vmatprep.subr.bf16.mxu0 0
  %5361 = vmatpush1.bf16.xpose.msra.mxu0 0
  %5362 = vmatprep.subr.bf16.mxu0 0
  %5363 = vmatpush1.bf16.xpose.msra.mxu0 0
  %5364 = vmatprep.subr.bf16.mxu0 0
  %5365 = vmatpush1.bf16.xpose.msra.mxu0 0
  %5366 = vmatprep.subr.bf16.mxu0 0
  %5367 = vmatpush1.bf16.xpose.msra.mxu0 0
  %5368 = vmatprep.mubr.bf16.mxu0 0
  %5369 = vmatmul.mubr.bf16.gmra.mrb[0].mxu0 %v5334
  %v5370 = vpop.f32.mrb[0].mxu0
  %v5371 = vadd.f32 0.0, %v5370
  %v5372 = vpop.f32.mrb[0].mxu0
  %v5373 = vpop.f32.mrb[0].mxu0
  %v5374 = vpop.f32.mrb[0].mxu0
  %5375 = vdwg.mxu0
  %v5376 = vmul.f32 %v5371, 1.442695
  %v5377 = vpow.pop %v5376
  %v5378 = vsel %vm2286, %v5377, 0.0
  %5379 = vadd.xlane.f32.xlu0 %v5378
  %v5380 = vpop.xlane.xlu0 %5379
  %v5381 = vrcp.pop %v5380
  %v5382 = vmul.f32 %v5377, %v5381
  %v5383 = vpack.c.bf16 %v5382, %v5382
  %v5385 = vsel %vm2296, %v5383, 0
  %5387 = vmatprep.subr.bf16.mxu0 0
  %5388 = vmatpush1.bf16.msra.mxu0 %v2301
  %5389 = vmatprep.subr.bf16.mxu0 0
  %5390 = vmatpush1.bf16.msra.mxu0 0
  %5391 = vmatprep.subr.bf16.mxu0 0
  %5392 = vmatpush1.bf16.msra.mxu0 0
  %5393 = vmatprep.subr.bf16.mxu0 0
  %5394 = vmatpush1.bf16.msra.mxu0 0
  %5395 = vmatprep.subr.bf16.mxu0 0
  %5396 = vmatpush1.bf16.msra.mxu0 0
  %5397 = vmatprep.subr.bf16.mxu0 0
  %5398 = vmatpush1.bf16.msra.mxu0 0
  %5399 = vmatprep.subr.bf16.mxu0 0
  %5400 = vmatpush1.bf16.msra.mxu0 0
  %5401 = vmatprep.subr.bf16.mxu0 0
  %5402 = vmatpush1.bf16.msra.mxu0 0
  %5403 = vmatprep.subr.bf16.mxu0 0
  %5404 = vmatpush1.bf16.msra.mxu0 0
  %5405 = vmatprep.subr.bf16.mxu0 0
  %5406 = vmatpush1.bf16.msra.mxu0 0
  %5407 = vmatprep.subr.bf16.mxu0 0
  %5408 = vmatpush1.bf16.msra.mxu0 0
  %5409 = vmatprep.subr.bf16.mxu0 0
  %5410 = vmatpush1.bf16.msra.mxu0 0
  %5411 = vmatprep.subr.bf16.mxu0 0
  %5412 = vmatpush1.bf16.msra.mxu0 0
  %5413 = vmatprep.subr.bf16.mxu0 0
  %5414 = vmatpush1.bf16.msra.mxu0 0
  %5415 = vmatprep.subr.bf16.mxu0 0
  %5416 = vmatpush1.bf16.msra.mxu0 0
  %5417 = vmatprep.subr.bf16.mxu0 0
  %5418 = vmatpush1.bf16.msra.mxu0 0
  %5419 = vmatprep.mubr.bf16.mxu0 0
  %5420 = vmatmul.mubr.bf16.gmra.mrb[0].mxu0 %v5385
  %v5421 = vpop.f32.mrb[0].mxu0
  %v5422 = vadd.f32 0.0, %v5421
  %v5423 = vpop.f32.mrb[0].mxu0
  %v5424 = vpop.f32.mrb[0].mxu0
  %v5425 = vpop.f32.mrb[0].mxu0
  %5426 = vdwg.mxu0
  %v5427 = vpack.c.bf16 %v5422, %v5422
  %v5429 = vsel %vm190, %v5427, 0
  %5431 = vmatprep.subr.bf16.mxu0 0
  %5432 = vmatpush1.bf16.msra.mxu0 %v2355
  %5433 = vmatprep.subr.bf16.mxu0 0
  %5434 = vmatpush1.bf16.msra.mxu0 %v2357
  %5435 = vmatprep.subr.bf16.mxu0 0
  %5436 = vmatpush1.bf16.msra.mxu0 0
  %5437 = vmatprep.subr.bf16.mxu0 0
  %5438 = vmatpush1.bf16.msra.mxu0 0
  %5439 = vmatprep.subr.bf16.mxu0 0
  %5440 = vmatpush1.bf16.msra.mxu0 0
  %5441 = vmatprep.subr.bf16.mxu0 0
  %5442 = vmatpush1.bf16.msra.mxu0 0
  %5443 = vmatprep.subr.bf16.mxu0 0
  %5444 = vmatpush1.bf16.msra.mxu0 0
  %5445 = vmatprep.subr.bf16.mxu0 0
  %5446 = vmatpush1.bf16.msra.mxu0 0
  %5447 = vmatprep.subr.bf16.mxu0 0
  %5448 = vmatpush1.bf16.msra.mxu0 0
  %5449 = vmatprep.subr.bf16.mxu0 0
  %5450 = vmatpush1.bf16.msra.mxu0 0
  %5451 = vmatprep.subr.bf16.mxu0 0
  %5452 = vmatpush1.bf16.msra.mxu0 0
  %5453 = vmatprep.subr.bf16.mxu0 0
  %5454 = vmatpush1.bf16.msra.mxu0 0
  %5455 = vmatprep.subr.bf16.mxu0 0
  %5456 = vmatpush1.bf16.msra.mxu0 0
  %5457 = vmatprep.subr.bf16.mxu0 0
  %5458 = vmatpush1.bf16.msra.mxu0 0
  %5459 = vmatprep.subr.bf16.mxu0 0
  %5460 = vmatpush1.bf16.msra.mxu0 0
  %5461 = vmatprep.subr.bf16.mxu0 0
  %5462 = vmatpush1.bf16.msra.mxu0 0
  %5463 = vmatprep.mubr.bf16.mxu0 0
  %5464 = vmatmul.mubr.bf16.gmra.mrb[0].mxu0 %v5429
  %v5465 = vpop.f32.mrb[0].mxu0
  %v5466 = vadd.f32 0.0, %v5465
  %v5467 = vpop.f32.mrb[0].mxu0
  %v5468 = vpop.f32.mrb[0].mxu0
  %v5469 = vpop.f32.mrb[0].mxu0
  %5470 = vdwg.mxu0
  %5472 = vrot.lane.b32.xlu0 %v5466, 8
  %v5473 = vpop.permute.xlu0 %5472
  %v5475 = vadd.f32 %v5371, %v5473
  %v5476 = vadd.f32 %v5475, %v2410
  %v5477 = vtanh.pop %v5476
  %v5478 = vpack.c.bf16 %v5477, %v5477
  %5480 = vrot.lane.b32.xlu0 %v5478, 120
  %v5481 = vpop.permute.xlu0 %5480
  %v5483 = vsel %vm190, %v5481, 0
  %5485 = vmatprep.subr.bf16.mxu0 0
  %5486 = vmatpush1.bf16.msra.mxu0 %v2419
  %5487 = vmatprep.subr.bf16.mxu0 0
  %5488 = vmatpush1.bf16.msra.mxu0 %v2421
  %5489 = vmatprep.subr.bf16.mxu0 0
  %5490 = vmatpush1.bf16.msra.mxu0 0
  %5491 = vmatprep.subr.bf16.mxu0 0
  %5492 = vmatpush1.bf16.msra.mxu0 0
  %5493 = vmatprep.subr.bf16.mxu0 0
  %5494 = vmatpush1.bf16.msra.mxu0 0
  %5495 = vmatprep.subr.bf16.mxu0 0
  %5496 = vmatpush1.bf16.msra.mxu0 0
  %5497 = vmatprep.subr.bf16.mxu0 0
  %5498 = vmatpush1.bf16.msra.mxu0 0
  %5499 = vmatprep.subr.bf16.mxu0 0
  %5500 = vmatpush1.bf16.msra.mxu0 0
  %5501 = vmatprep.subr.bf16.mxu0 0
  %5502 = vmatpush1.bf16.msra.mxu0 0
  %5503 = vmatprep.subr.bf16.mxu0 0
  %5504 = vmatpush1.bf16.msra.mxu0 0
  %5505 = vmatprep.subr.bf16.mxu0 0
  %5506 = vmatpush1.bf16.msra.mxu0 0
  %5507 = vmatprep.subr.bf16.mxu0 0
  %5508 = vmatpush1.bf16.msra.mxu0 0
  %5509 = vmatprep.subr.bf16.mxu0 0
  %5510 = vmatpush1.bf16.msra.mxu0 0
  %5511 = vmatprep.subr.bf16.mxu0 0
  %5512 = vmatpush1.bf16.msra.mxu0 0
  %5513 = vmatprep.subr.bf16.mxu0 0
  %5514 = vmatpush1.bf16.msra.mxu0 0
  %5515 = vmatprep.subr.bf16.mxu0 0
  %5516 = vmatpush1.bf16.msra.mxu0 0
  %5517 = vmatprep.mubr.bf16.mxu0 0
  %5518 = vmatmul.mubr.bf16.gmra.mrb[0].mxu0 %v5483
  %v5519 = vpop.f32.mrb[0].mxu0
  %v5520 = vadd.f32 %v1940, %v5519
  %v5521 = vpop.f32.mrb[0].mxu0
  %v5522 = vpop.f32.mrb[0].mxu0
  %v5523 = vpop.f32.mrb[0].mxu0
  %5524 = vdwg.mxu0
  %v5525 = vsel %vm2467, %v5520, -inf
  %5526 = vmax.xlane.f32.xlu0 %v5525
  %v5527 = vpop.xlane.xlu0 %5526
  %v5528 = vsub.f32 %v5520, %v5527
  %v5529 = vmul.f32 %v5528, 1.442695
  %v5530 = vpow.pop %v5529
  %v5531 = vsel %vm2467, %v5530, 0.0
  %5532 = vadd.xlane.f32.xlu0 %v5531
  %v5533 = vpop.xlane.xlu0 %5532
  %v5534 = vrcp.pop %v5533
  %v5535 = vmul.f32 %v5530, %v5534
  %v5536 = vsel %vm2467, %v5535, -inf
  %5537 = vmax.xlane.f32.xlu0 %v5536
  %v5538 = vpop.xlane.xlu0 %5537
  %vm5539 = vcmp.ge.f32.partialorder %v5535, %v5538
  %v5540 = vsel %vm5539, %v53, 64
  %v5541 = vsel %vm2467, %v5540, 2147483647
  %v5542 = vand.u32 %v5541, 65535
  %v5543 = vshra.s32 %v5541, 16
  %v5544 = vcvt.s32.f32 %v5542
  %v5545 = vcvt.s32.f32 %v5543
  %5546 = vmin.xlane.f32.xlu0 %v5545
  %v5547 = vpop.xlane.xlu0 %5546
  %vm5548 = vcmp.eq.f32.partialorder %v5545, %v5547
  %v5549 = vsel %vm5548, %v5544, inf
  %5550 = vmin.xlane.f32.xlu0 %v5549
  %v5551 = vpop.xlane.xlu0 %5550
  %v5552 = vcvt.f32.s32 %v5551
  %v5553 = vcvt.f32.s32 %v5547
  %v5554 = vshll.u32 %v5553, 16
  %v5555 = vadd.s32 %v5554, %v5552
  %5556 = vst.msk [vmem:[%s4 + $0x8] sm:$0x1] %vm2499, %v5555
  %5557 = vst.msk [vmem:[%s5 + $0x8] sm:$0x1] %vm2499, %v5538
  %vm5558 = vcmp.eq.s32.totalorder %v53, %v5555
  %v5559 = vsel %vm5558, 1, 0
  %v5560 = vcvt.s32.f32 %v5559
  %5562 = vrot.lane.b32.xlu0 %v5255, 32
  %v5563 = vpop.permute.xlu0 %5562
  %5566 = vrot.lane.b32.xlu0 %v5328, 64
  %v5567 = vpop.permute.xlu0 %5566
  %v5569 = vsel %vm112, %v5560, %v5563
  %v5570 = vsel %vm1974, %v5569, %v5567
  %v5571 = vpack.c.bf16 %v5570, %v5570
  %5572 = vmatprep.subr.bf16.mxu0 %v2026
  %5573 = vmatpush1.bf16.msra.mxu0 %v2025
  %5574 = vmatprep.subr.bf16.mxu0 %v2028
  %5575 = vmatpush1.bf16.msra.mxu0 %v2027
  %5576 = vmatprep.subr.bf16.mxu0 %v2030
  %5577 = vmatpush1.bf16.msra.mxu0 %v2029
  %5578 = vmatprep.subr.bf16.mxu0 %v2032
  %5579 = vmatpush1.bf16.msra.mxu0 %v2031
  %5580 = vmatprep.subr.bf16.mxu0 %v2034
  %5581 = vmatpush1.bf16.msra.mxu0 %v2033
  %5582 = vmatprep.subr.bf16.mxu0 %v2036
  %5583 = vmatpush1.bf16.msra.mxu0 %v2035
  %5584 = vmatprep.subr.bf16.mxu0 %v2038
  %5585 = vmatpush1.bf16.msra.mxu0 %v2037
  %5586 = vmatprep.subr.bf16.mxu0 %v2040
  %5587 = vmatpush1.bf16.msra.mxu0 %v2039
  %5588 = vmatprep.subr.bf16.mxu0 0
  %5589 = vmatpush1.bf16.msra.mxu0 0
  %5590 = vmatprep.subr.bf16.mxu0 0
  %5591 = vmatpush1.bf16.msra.mxu0 0
  %5592 = vmatprep.subr.bf16.mxu0 0
  %5593 = vmatpush1.bf16.msra.mxu0 0
  %5594 = vmatprep.subr.bf16.mxu0 0
  %5595 = vmatpush1.bf16.msra.mxu0 0
  %5596 = vmatprep.subr.bf16.mxu0 0
  %5597 = vmatpush1.bf16.msra.mxu0 0
  %5598 = vmatprep.subr.bf16.mxu0 0
  %5599 = vmatpush1.bf16.msra.mxu0 0
  %5600 = vmatprep.subr.bf16.mxu0 0
  %5601 = vmatpush1.bf16.msra.mxu0 0
  %5602 = vmatprep.subr.bf16.mxu0 0
  %5603 = vmatpush1.bf16.msra.mxu0 0
  %5604 = vmatprep.mubr.bf16.mxu0 0
  %5605 = vmatmul.mubr.bf16.gmra.mrb[0].mxu0 %v5571
  %v5606 = vpop.f32.mrb[0].mxu0
  %v5607 = vadd.f32 %v2061, %v5606
  %v5608 = vpop.f32.mrb[0].mxu0
  %v5609 = vadd.f32 %v2065, %v5608
  %v5610 = vpop.f32.mrb[0].mxu0
  %v5611 = vpop.f32.mrb[0].mxu0
  %5612 = vdwg.mxu0
  %v5613 = vxor.u32 %v5607, 2147483648
  %v5614 = vmul.f32 %v5613, 1.442695
  %v5615 = vpow.pop %v5614
  %v5616 = vadd.f32 %v5615, 1.0
  %v5617 = vrcp.pop %v5616
  %v5618 = vmul.f32 1.0, %v5617
  %5620 = vrot.lane.b32.xlu0 %v5607, 32
  %v5621 = vpop.permute.xlu0 %5620
  %v5623 = vmul.f32 %v5618, %v5621
  %5625 = vrot.lane.b32.xlu0 %v5623, 64
  %v5626 = vpop.permute.xlu0 %5625
  %v5628 = vadd.f32 %v5607, %v5626
  %v5629 = vtanh.pop %v5628
  %v5630 = vsub.f32 1.0, %v5618
  %5632 = vrot.lane.b32.xlu0 %v5629, 96
  %v5633 = vpop.permute.xlu0 %5632
  %v5635 = vmul.f32 %v5630, %v5633
  %v5636 = vmul.f32 %v5618, %v5255
  %v5637 = vadd.f32 %v5635, %v5636
  %v5638 = vpack.c.bf16 %v5637, %v5637
  %5640 = vrot.lane.b32.xlu0 %v5638, 96
  %v5641 = vpop.permute.xlu0 %5640
  %v5643 = vsel %vm190, %v5641, 0
  %5645 = vmatprep.subr.bf16.mxu0 0
  %5646 = vmatpush1.bf16.msra.mxu0 %v2146
  %5647 = vmatprep.subr.bf16.mxu0 0
  %5648 = vmatpush1.bf16.msra.mxu0 %v2147
  %5649 = vmatprep.subr.bf16.mxu0 0
  %5650 = vmatpush1.bf16.msra.mxu0 0
  %5651 = vmatprep.subr.bf16.mxu0 0
  %5652 = vmatpush1.bf16.msra.mxu0 0
  %5653 = vmatprep.subr.bf16.mxu0 0
  %5654 = vmatpush1.bf16.msra.mxu0 0
  %5655 = vmatprep.subr.bf16.mxu0 0
  %5656 = vmatpush1.bf16.msra.mxu0 0
  %5657 = vmatprep.subr.bf16.mxu0 0
  %5658 = vmatpush1.bf16.msra.mxu0 0
  %5659 = vmatprep.subr.bf16.mxu0 0
  %5660 = vmatpush1.bf16.msra.mxu0 0
  %5661 = vmatprep.subr.bf16.mxu0 0
  %5662 = vmatpush1.bf16.msra.mxu0 0
  %5663 = vmatprep.subr.bf16.mxu0 0
  %5664 = vmatpush1.bf16.msra.mxu0 0
  %5665 = vmatprep.subr.bf16.mxu0 0
  %5666 = vmatpush1.bf16.msra.mxu0 0
  %5667 = vmatprep.subr.bf16.mxu0 0
  %5668 = vmatpush1.bf16.msra.mxu0 0
  %5669 = vmatprep.subr.bf16.mxu0 0
  %5670 = vmatpush1.bf16.msra.mxu0 0
  %5671 = vmatprep.subr.bf16.mxu0 0
  %5672 = vmatpush1.bf16.msra.mxu0 0
  %5673 = vmatprep.subr.bf16.mxu0 0
  %5674 = vmatpush1.bf16.msra.mxu0 0
  %5675 = vmatprep.subr.bf16.mxu0 0
  %5676 = vmatpush1.bf16.msra.mxu0 0
  %5677 = vmatprep.mubr.bf16.mxu0 0
  %5678 = vmatmul.mubr.bf16.gmra.mrb[0].mxu0 %v5643
  %v5679 = vpop.f32.mrb[0].mxu0
  %v5680 = vadd.f32 %v1938, %v5679
  %v5681 = vpop.f32.mrb[0].mxu0
  %v5682 = vpop.f32.mrb[0].mxu0
  %v5683 = vpop.f32.mrb[0].mxu0
  %5684 = vdwg.mxu0
  %v5685 = vadd.f32 %v5680, %v5609
  %v5686 = vxor.u32 %v5685, 2147483648
  %v5687 = vmul.f32 %v5686, 1.442695
  %v5688 = vpow.pop %v5687
  %v5689 = vadd.f32 %v5688, 1.0
  %v5690 = vrcp.pop %v5689
  %v5691 = vmul.f32 1.0, %v5690
  %5693 = vrot.lane.b32.xlu0 %v5609, 64
  %v5694 = vpop.permute.xlu0 %5693
  %v5696 = vmul.f32 %v5691, %v5694
  %5698 = vrot.lane.b32.xlu0 %v5696, 64
  %v5699 = vpop.permute.xlu0 %5698
  %v5701 = vadd.f32 %v5680, %v5699
  %v5702 = vtanh.pop %v5701
  %v5703 = vsub.f32 1.0, %v5691
  %5705 = vrot.lane.b32.xlu0 %v5702, 96
  %v5706 = vpop.permute.xlu0 %5705
  %v5708 = vmul.f32 %v5703, %v5706
  %v5709 = vmul.f32 %v5691, %v5328
  %v5710 = vadd.f32 %v5708, %v5709
  %v5711 = vpack.c.bf16 %v5710, %v5710
  %5713 = vrot.lane.b32.xlu0 %v5711, 96
  %v5714 = vpop.permute.xlu0 %5713
  %v5716 = vsel %vm190, %v5714, 0
  %5718 = vmatprep.subr.bf16.mxu0 0
  %5719 = vmatpush1.bf16.xpose.msra.mxu0 %v2236
  %5720 = vmatprep.subr.bf16.mxu0 0
  %5721 = vmatpush1.bf16.xpose.msra.mxu0 %v2239
  %5722 = vmatprep.subr.bf16.mxu0 0
  %5723 = vmatpush1.bf16.xpose.msra.mxu0 %v2242
  %5724 = vmatprep.subr.bf16.mxu0 0
  %5725 = vmatpush1.bf16.xpose.msra.mxu0 0
  %5726 = vmatprep.subr.bf16.mxu0 0
  %5727 = vmatpush1.bf16.xpose.msra.mxu0 0
  %5728 = vmatprep.subr.bf16.mxu0 0
  %5729 = vmatpush1.bf16.xpose.msra.mxu0 0
  %5730 = vmatprep.subr.bf16.mxu0 0
  %5731 = vmatpush1.bf16.xpose.msra.mxu0 0
  %5732 = vmatprep.subr.bf16.mxu0 0
  %5733 = vmatpush1.bf16.xpose.msra.mxu0 0
  %5734 = vmatprep.subr.bf16.mxu0 0
  %5735 = vmatpush1.bf16.xpose.msra.mxu0 0
  %5736 = vmatprep.subr.bf16.mxu0 0
  %5737 = vmatpush1.bf16.xpose.msra.mxu0 0
  %5738 = vmatprep.subr.bf16.mxu0 0
  %5739 = vmatpush1.bf16.xpose.msra.mxu0 0
  %5740 = vmatprep.subr.bf16.mxu0 0
  %5741 = vmatpush1.bf16.xpose.msra.mxu0 0
  %5742 = vmatprep.subr.bf16.mxu0 0
  %5743 = vmatpush1.bf16.xpose.msra.mxu0 0
  %5744 = vmatprep.subr.bf16.mxu0 0
  %5745 = vmatpush1.bf16.xpose.msra.mxu0 0
  %5746 = vmatprep.subr.bf16.mxu0 0
  %5747 = vmatpush1.bf16.xpose.msra.mxu0 0
  %5748 = vmatprep.subr.bf16.mxu0 0
  %5749 = vmatpush1.bf16.xpose.msra.mxu0 0
  %5750 = vmatprep.mubr.bf16.mxu0 0
  %5751 = vmatmul.mubr.bf16.gmra.mrb[0].mxu0 %v5716
  %v5752 = vpop.f32.mrb[0].mxu0
  %v5753 = vadd.f32 0.0, %v5752
  %v5754 = vpop.f32.mrb[0].mxu0
  %v5755 = vpop.f32.mrb[0].mxu0
  %v5756 = vpop.f32.mrb[0].mxu0
  %5757 = vdwg.mxu0
  %v5758 = vmul.f32 %v5753, 1.442695
  %v5759 = vpow.pop %v5758
  %v5760 = vsel %vm2286, %v5759, 0.0
  %5761 = vadd.xlane.f32.xlu0 %v5760
  %v5762 = vpop.xlane.xlu0 %5761
  %v5763 = vrcp.pop %v5762
  %v5764 = vmul.f32 %v5759, %v5763
  %v5765 = vpack.c.bf16 %v5764, %v5764
  %v5767 = vsel %vm2296, %v5765, 0
  %5769 = vmatprep.subr.bf16.mxu0 0
  %5770 = vmatpush1.bf16.msra.mxu0 %v2301
  %5771 = vmatprep.subr.bf16.mxu0 0
  %5772 = vmatpush1.bf16.msra.mxu0 0
  %5773 = vmatprep.subr.bf16.mxu0 0
  %5774 = vmatpush1.bf16.msra.mxu0 0
  %5775 = vmatprep.subr.bf16.mxu0 0
  %5776 = vmatpush1.bf16.msra.mxu0 0
  %5777 = vmatprep.subr.bf16.mxu0 0
  %5778 = vmatpush1.bf16.msra.mxu0 0
  %5779 = vmatprep.subr.bf16.mxu0 0
  %5780 = vmatpush1.bf16.msra.mxu0 0
  %5781 = vmatprep.subr.bf16.mxu0 0
  %5782 = vmatpush1.bf16.msra.mxu0 0
  %5783 = vmatprep.subr.bf16.mxu0 0
  %5784 = vmatpush1.bf16.msra.mxu0 0
  %5785 = vmatprep.subr.bf16.mxu0 0
  %5786 = vmatpush1.bf16.msra.mxu0 0
  %5787 = vmatprep.subr.bf16.mxu0 0
  %5788 = vmatpush1.bf16.msra.mxu0 0
  %5789 = vmatprep.subr.bf16.mxu0 0
  %5790 = vmatpush1.bf16.msra.mxu0 0
  %5791 = vmatprep.subr.bf16.mxu0 0
  %5792 = vmatpush1.bf16.msra.mxu0 0
  %5793 = vmatprep.subr.bf16.mxu0 0
  %5794 = vmatpush1.bf16.msra.mxu0 0
  %5795 = vmatprep.subr.bf16.mxu0 0
  %5796 = vmatpush1.bf16.msra.mxu0 0
  %5797 = vmatprep.subr.bf16.mxu0 0
  %5798 = vmatpush1.bf16.msra.mxu0 0
  %5799 = vmatprep.subr.bf16.mxu0 0
  %5800 = vmatpush1.bf16.msra.mxu0 0
  %5801 = vmatprep.mubr.bf16.mxu0 0
  %5802 = vmatmul.mubr.bf16.gmra.mrb[0].mxu0 %v5767
  %v5803 = vpop.f32.mrb[0].mxu0
  %v5804 = vadd.f32 0.0, %v5803
  %v5805 = vpop.f32.mrb[0].mxu0
  %v5806 = vpop.f32.mrb[0].mxu0
  %v5807 = vpop.f32.mrb[0].mxu0
  %5808 = vdwg.mxu0
  %v5809 = vpack.c.bf16 %v5804, %v5804
  %v5811 = vsel %vm190, %v5809, 0
  %5813 = vmatprep.subr.bf16.mxu0 0
  %5814 = vmatpush1.bf16.msra.mxu0 %v2355
  %5815 = vmatprep.subr.bf16.mxu0 0
  %5816 = vmatpush1.bf16.msra.mxu0 %v2357
  %5817 = vmatprep.subr.bf16.mxu0 0
  %5818 = vmatpush1.bf16.msra.mxu0 0
  %5819 = vmatprep.subr.bf16.mxu0 0
  %5820 = vmatpush1.bf16.msra.mxu0 0
  %5821 = vmatprep.subr.bf16.mxu0 0
  %5822 = vmatpush1.bf16.msra.mxu0 0
  %5823 = vmatprep.subr.bf16.mxu0 0
  %5824 = vmatpush1.bf16.msra.mxu0 0
  %5825 = vmatprep.subr.bf16.mxu0 0
  %5826 = vmatpush1.bf16.msra.mxu0 0
  %5827 = vmatprep.subr.bf16.mxu0 0
  %5828 = vmatpush1.bf16.msra.mxu0 0
  %5829 = vmatprep.subr.bf16.mxu0 0
  %5830 = vmatpush1.bf16.msra.mxu0 0
  %5831 = vmatprep.subr.bf16.mxu0 0
  %5832 = vmatpush1.bf16.msra.mxu0 0
  %5833 = vmatprep.subr.bf16.mxu0 0
  %5834 = vmatpush1.bf16.msra.mxu0 0
  %5835 = vmatprep.subr.bf16.mxu0 0
  %5836 = vmatpush1.bf16.msra.mxu0 0
  %5837 = vmatprep.subr.bf16.mxu0 0
  %5838 = vmatpush1.bf16.msra.mxu0 0
  %5839 = vmatprep.subr.bf16.mxu0 0
  %5840 = vmatpush1.bf16.msra.mxu0 0
  %5841 = vmatprep.subr.bf16.mxu0 0
  %5842 = vmatpush1.bf16.msra.mxu0 0
  %5843 = vmatprep.subr.bf16.mxu0 0
  %5844 = vmatpush1.bf16.msra.mxu0 0
  %5845 = vmatprep.mubr.bf16.mxu0 0
  %5846 = vmatmul.mubr.bf16.gmra.mrb[0].mxu0 %v5811
  %v5847 = vpop.f32.mrb[0].mxu0
  %v5848 = vadd.f32 0.0, %v5847
  %v5849 = vpop.f32.mrb[0].mxu0
  %v5850 = vpop.f32.mrb[0].mxu0
  %v5851 = vpop.f32.mrb[0].mxu0
  %5852 = vdwg.mxu0
  %5854 = vrot.lane.b32.xlu0 %v5848, 8
  %v5855 = vpop.permute.xlu0 %5854
  %v5857 = vadd.f32 %v5753, %v5855
  %v5858 = vadd.f32 %v5857, %v2410
  %v5859 = vtanh.pop %v5858
  %v5860 = vpack.c.bf16 %v5859, %v5859
  %5862 = vrot.lane.b32.xlu0 %v5860, 120
  %v5863 = vpop.permute.xlu0 %5862
  %v5865 = vsel %vm190, %v5863, 0
  %5867 = vmatprep.subr.bf16.mxu0 0
  %5868 = vmatpush1.bf16.msra.mxu0 %v2419
  %5869 = vmatprep.subr.bf16.mxu0 0
  %5870 = vmatpush1.bf16.msra.mxu0 %v2421
  %5871 = vmatprep.subr.bf16.mxu0 0
  %5872 = vmatpush1.bf16.msra.mxu0 0
  %5873 = vmatprep.subr.bf16.mxu0 0
  %5874 = vmatpush1.bf16.msra.mxu0 0
  %5875 = vmatprep.subr.bf16.mxu0 0
  %5876 = vmatpush1.bf16.msra.mxu0 0
  %5877 = vmatprep.subr.bf16.mxu0 0
  %5878 = vmatpush1.bf16.msra.mxu0 0
  %5879 = vmatprep.subr.bf16.mxu0 0
  %5880 = vmatpush1.bf16.msra.mxu0 0
  %5881 = vmatprep.subr.bf16.mxu0 0
  %5882 = vmatpush1.bf16.msra.mxu0 0
  %5883 = vmatprep.subr.bf16.mxu0 0
  %5884 = vmatpush1.bf16.msra.mxu0 0
  %5885 = vmatprep.subr.bf16.mxu0 0
  %5886 = vmatpush1.bf16.msra.mxu0 0
  %5887 = vmatprep.subr.bf16.mxu0 0
  %5888 = vmatpush1.bf16.msra.mxu0 0
  %5889 = vmatprep.subr.bf16.mxu0 0
  %5890 = vmatpush1.bf16.msra.mxu0 0
  %5891 = vmatprep.subr.bf16.mxu0 0
  %5892 = vmatpush1.bf16.msra.mxu0 0
  %5893 = vmatprep.subr.bf16.mxu0 0
  %5894 = vmatpush1.bf16.msra.mxu0 0
  %5895 = vmatprep.subr.bf16.mxu0 0
  %5896 = vmatpush1.bf16.msra.mxu0 0
  %5897 = vmatprep.subr.bf16.mxu0 0
  %5898 = vmatpush1.bf16.msra.mxu0 0
  %5899 = vmatprep.mubr.bf16.mxu0 0
  %5900 = vmatmul.mubr.bf16.gmra.mrb[0].mxu0 %v5865
  %v5901 = vpop.f32.mrb[0].mxu0
  %v5902 = vadd.f32 %v1940, %v5901
  %v5903 = vpop.f32.mrb[0].mxu0
  %v5904 = vpop.f32.mrb[0].mxu0
  %v5905 = vpop.f32.mrb[0].mxu0
  %5906 = vdwg.mxu0
  %v5907 = vsel %vm2467, %v5902, -inf
  %5908 = vmax.xlane.f32.xlu0 %v5907
  %v5909 = vpop.xlane.xlu0 %5908
  %v5910 = vsub.f32 %v5902, %v5909
  %v5911 = vmul.f32 %v5910, 1.442695
  %v5912 = vpow.pop %v5911
  %v5913 = vsel %vm2467, %v5912, 0.0
  %5914 = vadd.xlane.f32.xlu0 %v5913
  %v5915 = vpop.xlane.xlu0 %5914
  %v5916 = vrcp.pop %v5915
  %v5917 = vmul.f32 %v5912, %v5916
  %v5918 = vsel %vm2467, %v5917, -inf
  %5919 = vmax.xlane.f32.xlu0 %v5918
  %v5920 = vpop.xlane.xlu0 %5919
  %vm5921 = vcmp.ge.f32.partialorder %v5917, %v5920
  %v5922 = vsel %vm5921, %v53, 64
  %v5923 = vsel %vm2467, %v5922, 2147483647
  %v5924 = vand.u32 %v5923, 65535
  %v5925 = vshra.s32 %v5923, 16
  %v5926 = vcvt.s32.f32 %v5924
  %v5927 = vcvt.s32.f32 %v5925
  %5928 = vmin.xlane.f32.xlu0 %v5927
  %v5929 = vpop.xlane.xlu0 %5928
  %vm5930 = vcmp.eq.f32.partialorder %v5927, %v5929
  %v5931 = vsel %vm5930, %v5926, inf
  %5932 = vmin.xlane.f32.xlu0 %v5931
  %v5933 = vpop.xlane.xlu0 %5932
  %v5934 = vcvt.f32.s32 %v5933
  %v5935 = vcvt.f32.s32 %v5929
  %v5936 = vshll.u32 %v5935, 16
  %v5937 = vadd.s32 %v5936, %v5934
  %5938 = vst.msk [vmem:[%s4 + $0x9] sm:$0x1] %vm2499, %v5937
  %5939 = vst.msk [vmem:[%s5 + $0x9] sm:$0x1] %vm2499, %v5920
  // Predicated region
  $region18: #{greedy_search_decode.1} parent=0 // pred_check
    _
  $region19: #{greedy_search_decode.1} parent=0 // pred_check_branch
    %5941 = sbr.rel (0) target = $region21
  $region20: #{greedy_search_decode.1} parent=0 // pred_region
    _
  $region21: #{greedy_search_decode.1} parent=0 // pred_fallthru
    _
  // Predicated region
  $region22: #{greedy_search_decode.1} parent=0 // pred_check
    _
  $region23: #{greedy_search_decode.1} parent=0 // pred_check_branch
    %5943 = sbr.rel (0) target = $region25
  $region24: #{greedy_search_decode.1} parent=0 // pred_region
    _
  $region25: #{greedy_search_decode.1} parent=0 // pred_fallthru
    _
  // Predicated region
  $region26: #{greedy_search_decode.1} parent=0 // pred_check
    _
  $region27: #{greedy_search_decode.1} parent=0 // pred_check_branch
    %5945 = sbr.rel (0) target = $region29
  $region28: #{greedy_search_decode.1} parent=0 // pred_region
    _
  $region29: #{greedy_search_decode.1} parent=0 // pred_fallthru
    _
  // Predicated region
  $region30: #{greedy_search_decode.1} parent=0 // pred_check
    _
  $region31: #{greedy_search_decode.1} parent=0 // pred_check_branch
    %5947 = sbr.rel (0) target = $region33
  $region32: #{greedy_search_decode.1} parent=0 // pred_region
    _
  $region33: #{greedy_search_decode.1} parent=0 // pred_fallthru
    _

</llo_original>
